<compile_context>
chip_gen: v7x
topology: tpu7x:2x2x1
jax: 0.10.0
libtpu: 0.0.40
codegen_flags: <defaults>
</compile_context>

<pallas_src>
import jax
import jax.numpy as jnp
from jax.experimental import pallas as pl
from jax.experimental.pallas import tpu as pltpu

NZ = 100
EPS = 1e-5


# ---------------------------------------------------------------------------
# The single fused kernel.
# ---------------------------------------------------------------------------
def _generator_kernel(x_ref, wlin_ref, g1_ref, b1_ref, w1_ref, g2_ref, b2_ref,
                      w2_ref, o_ref, xpad_ref, spad_ref):
    n = x_ref.shape[0]                                          # batch
    m = n * 49                                                  # compact 7x7 rows

    # ---- Linear (bias dropped: cancelled by BN) + BatchNorm1d + ReLU ------
    x = x_ref[...].astype(jnp.bfloat16)                         # (N, nz)
    z = jnp.dot(x, wlin_ref[...], preferred_element_type=jnp.float32)  # (N, 6272)
    s1 = jnp.sum(z, axis=0, keepdims=True)                      # single-pass
    s2 = jnp.sum(z * z, axis=0, keepdims=True)                  # batch stats
    mu = s1 / n
    var = s2 / n - mu * mu                                      # biased (PyTorch BN)
    h0 = (z - mu) * jax.lax.rsqrt(var + EPS) * g1_ref[...] + b1_ref[...]
    h0 = jnp.maximum(h0, 0.0)                                   # cols ordered (h, w, c1)

    # ---- Scatter into the 1-padded compact grid scratch (9, 9, N, 128) ----
    xpad_ref[...] = jnp.zeros(xpad_ref.shape, xpad_ref.dtype)
    for hh in range(7):
        for ww in range(7):
            k = hh * 7 + ww
            xpad_ref[hh + 1, ww + 1] = h0[:, k * 128:(k + 1) * 128]
    xp = xpad_ref[...]                                          # (9, 9, N, 128) f32

    # ---- ConvTranspose2d(128->64, k4, s2, p1): one im2col matmul ----------
    taps1 = jnp.concatenate(
        [xp[dh:dh + 7, dw:dw + 7].reshape(m, 128).astype(jnp.bfloat16)
         for dh in range(3) for dw in range(3)], axis=1)        # (m, 1152)
    acc1 = jnp.dot(taps1, w1_ref[...], preferred_element_type=jnp.float32)
    # acc1: (m, 256); rows (oh, ow, n), cols a*128 + b*64 + c2 (phase-major).

    # ---- BatchNorm2d over all N*14*14 positions (fold the 4 phase groups) -
    t1 = jnp.sum(acc1, axis=0, keepdims=True)
    t2 = jnp.sum(acc1 * acc1, axis=0, keepdims=True)
    t1c = t1[:, 0:64] + t1[:, 64:128] + t1[:, 128:192] + t1[:, 192:256]
    t2c = t2[:, 0:64] + t2[:, 64:128] + t2[:, 128:192] + t2[:, 192:256]
    cnt = 4.0 * m
    mu2 = t1c / cnt
    var2 = t2c / cnt - mu2 * mu2                                # biased
    scale = jax.lax.rsqrt(var2 + EPS) * g2_ref[...]             # (1, 64)
    shift = b2_ref[...] - mu2 * scale
    scale4 = jnp.concatenate([scale] * 4, axis=1)               # (1, 256)
    shift4 = jnp.concatenate([shift] * 4, axis=1)
    h1 = jnp.maximum(acc1 * scale4 + shift4, 0.0)               # (m, 256)

    # ---- Scatter conv1 phase slab into 1-padded scratch (9, 9, N, 256) ----
    spad_ref[...] = jnp.zeros(spad_ref.shape, spad_ref.dtype)
    for oh in range(7):
        for ow in range(7):
            r0 = (oh * 7 + ow) * n
            spad_ref[oh + 1, ow + 1] = h1[r0:r0 + n, :]
    sp = spad_ref[...]                                          # (9, 9, N, 256) f32

    # ---- ConvTranspose2d(64->1, k4, s2, p1) + Tanh, composed onto the
    #      compact 7x7 phase grid; only the 16 real output columns exist -----
    taps2 = jnp.concatenate(
        [sp[dh:dh + 7, dw:dw + 7].reshape(m, 256).astype(jnp.bfloat16)
         for dh in range(3) for dw in range(3)], axis=1)        # (m, 2304)
    acc2 = jnp.dot(taps2, w2_ref[...], preferred_element_type=jnp.float32)
    o_ref[...] = jnp.tanh(acc2)                                 # (m, 16)


# ---------------------------------------------------------------------------
# Wrapper.
# ---------------------------------------------------------------------------
def generator_pallas(params, x):
    n = x.shape[0]
    nz = x.shape[1]
    m = n * 49
    y2d = pl.pallas_call(
        _generator_kernel,
        out_shape=jax.ShapeDtypeStruct((m, 16), jnp.float32),
        grid=(1,),
        in_specs=[
            pl.BlockSpec((n, nz), lambda i: (0, 0)),
            pl.BlockSpec((nz, 6272), lambda i: (0, 0)),
            pl.BlockSpec((1, 6272), lambda i: (0, 0)),
            pl.BlockSpec((1, 6272), lambda i: (0, 0)),
            pl.BlockSpec((1152, 256), lambda i: (0, 0)),
            pl.BlockSpec((1, 64), lambda i: (0, 0)),
            pl.BlockSpec((1, 64), lambda i: (0, 0)),
            pl.BlockSpec((2304, 16), lambda i: (0, 0)),
        ],
        out_specs=pl.BlockSpec((m, 16), lambda i: (0, 0)),
        scratch_shapes=[
            pltpu.VMEM((9, 9, n, 128), jnp.float32),
            pltpu.VMEM((9, 9, n, 256), jnp.float32),
        ],
        compiler_params=pltpu.CompilerParams(
            dimension_semantics=("arbitrary",)),
    )(x, params["w_lin"], params["bn1_g"], params["bn1_b"],
      params["w_ct1"], params["bn2_g"], params["bn2_b"], params["w_ct2"])
    # Pixel shuffle on the 6 KB result (rows (r, q, n), cols (Hlo, Wlo)):
    # out[n, 4r+Hlo, 4q+Wlo] = y2d[(r,q,n), Hlo*4+Wlo].  With C=1 the final
    # NCHW layout is a pure reshape.
    y = y2d.reshape(7, 7, n, 4, 4).transpose(2, 0, 3, 1, 4)
    return y.reshape(n, 1, 28, 28)


# ---------------------------------------------------------------------------
# Weight preprocessing.
# ---------------------------------------------------------------------------
def _make_conv1_weight(wt):
    """PyTorch ConvTranspose2d weight (128, 64, 4, 4), stride 2, pad 1 ->
    im2col sub-pixel weight (9*128, 256) bf16.

    Rows: tap q = dh*3 + dw over the 3x3 neighbourhood of the 1-padded 7x7
    input, then c1.  Columns: phase-major p*64 + c2 with p = 2a + b:
      h1[n, 2oh+a, 2ow+b, c2] = sum_{dh,dw,c1}
          xpad[oh+dh, ow+dw, n, c1] * W[q*128+c1, p*64+c2]
    Phase p only uses taps dh in {a, a+1}, dw in {b, b+1}; others are zero.
    """
    cin, cout = wt.shape[0], wt.shape[1]
    wk = jnp.zeros((9, cin, 4, cout), jnp.float32)
    for a in range(2):
        for b in range(2):
            p = 2 * a + b
            for dh in (a, a + 1):
                for dw in (b, b + 1):
                    q = dh * 3 + dw
                    kh = 3 + a - 2 * dh
                    kw = 3 + b - 2 * dw
                    wk = wk.at[q, :, p, :].set(wt[:, :, kh, kw])
    return wk.reshape(9 * cin, 4 * cout).astype(jnp.bfloat16)


def _make_conv2_weight(wt):
    """PyTorch ConvTranspose2d weight (64, 1, 4, 4), stride 2, pad 1 ->
    composed weight (9*256, 16) bf16 acting directly on conv1's compact 7x7
    phase slab (columns A*128 + B*64 + c2).

    Final pixel (4r + 2s + a2, 4q + 2t + b2) = column (2s+a2)*4 + (2t+b2) of
    row (r, q); taps are the 3x3 neighbourhood of the 1-padded 7x7 slab.
    """
    cin = wt.shape[0]
    wk = jnp.zeros((9, 2, 2, cin, 16), jnp.float32)
    for s in range(2):
        for a2 in range(2):
            for t in range(2):
                for b2 in range(2):
                    col = (2 * s + a2) * 4 + (2 * t + b2)
                    for dh2 in (a2, a2 + 1):
                        e = s + dh2 - 1
                        A, dH = e % 2, e // 2          # conv1 row phase / offset
                        for dw2 in (b2, b2 + 1):
                            f = t + dw2 - 1
                            B, dW = f % 2, f // 2      # conv1 col phase / offset
                            q2 = (dH + 1) * 3 + (dW + 1)
                            kh2 = 3 + a2 - 2 * dh2
                            kw2 = 3 + b2 - 2 * dw2
                            wk = wk.at[q2, A, B, :, col].add(wt[:, 0, kh2, kw2])
    return wk.reshape(9 * 4 * cin, 16).astype(jnp.bfloat16)


def init_params(key, nz=NZ):
    k1, k2, k3 = jax.random.split(key, 3)
    bound = 1.0 / float(nz) ** 0.5
    # PyTorch-shaped raw parameters (deterministic).
    w_lin = jax.random.uniform(k1, (nz, 128 * 7 * 7), jnp.float32, -bound, bound)
    # Linear bias omitted: a per-feature constant ahead of training-mode
    # BatchNorm1d is exactly cancelled by the batch mean.
    w_ct1 = 0.05 * jax.random.normal(k2, (128, 64, 4, 4), jnp.float32)
    w_ct2 = 0.05 * jax.random.normal(k3, (64, 1, 4, 4), jnp.float32)

    # Pre-permute Linear columns from PyTorch (c, h, w) feature order to
    # (h, w, c) so the kernel's column slices are directly NHWC positions.
    # BN1d params (here ones/zeros) would need the identical permutation if
    # loaded from a trained PyTorch checkpoint.
    perm = jnp.transpose(jnp.arange(128 * 7 * 7).reshape(128, 7, 7),
                         (1, 2, 0)).reshape(-1)
    return {
        "w_lin": w_lin[:, perm].astype(jnp.bfloat16),           # (100, 6272)
        "bn1_g": jnp.ones((1, 128 * 7 * 7), jnp.float32),
        "bn1_b": jnp.zeros((1, 128 * 7 * 7), jnp.float32),
        "w_ct1": _make_conv1_weight(w_ct1),                     # (1152, 256) bf16
        "bn2_g": jnp.ones((1, 64), jnp.float32),
        "bn2_b": jnp.zeros((1, 64), jnp.float32),
        "w_ct2": _make_conv2_weight(w_ct2),                     # (2304, 16) bf16
    }


@jax.jit
def generator_forward(params, x):
    return generator_pallas(params, x)                          # (N, 1, 28, 28)


if __name__ == "__main__":
    key = jax.random.PRNGKey(0)
    pkey, xkey = jax.random.split(key)
    params = init_params(pkey, NZ)
    x = jax.random.normal(xkey, (2, NZ), jnp.float32)           # batch=2 latent
    out = jax.block_until_ready(generator_forward(params, x))
    assert out.shape == (2, 1, 28, 28), out.shape
    assert bool(jnp.all(jnp.isfinite(out)))
    assert bool(jnp.all(jnp.abs(out) <= 1.0 + 1e-6))            # tanh range
    print("KERNEL_OK")
</pallas_src>

<mosaic_0001>
module attributes {stable_mosaic.version = 11 : i64} {
  func.func @_generator_kernel(%arg0: i32, %arg1: memref<2x100xf32, #tpu.memory_space<vmem>>, %arg2: memref<100x6272xbf16, #tpu.memory_space<vmem>>, %arg3: memref<1x6272xf32, #tpu.memory_space<vmem>>, %arg4: memref<1x6272xf32, #tpu.memory_space<vmem>>, %arg5: memref<1152x256xbf16, #tpu.memory_space<vmem>>, %arg6: memref<1x64xf32, #tpu.memory_space<vmem>>, %arg7: memref<1x64xf32, #tpu.memory_space<vmem>>, %arg8: memref<2304x16xbf16, #tpu.memory_space<vmem>>, %arg9: memref<98x16xf32, #tpu.memory_space<vmem>>, %arg10: memref<9x9x2x128xf32, #tpu.memory_space<vmem>>, %arg11: memref<9x9x2x256xf32, #tpu.memory_space<vmem>>) attributes {dimension_semantics = [#tpu.dimension_semantics<arbitrary>], iteration_bounds = array<i64: 1>, scalar_prefetch = 0 : i64, scratch_operands = 2 : i64, tpu.core_type = #tpu.core_type<tc>, window_params = [{pipeline_mode = #tpu.pipeline_mode<synchronous>, transform_indices = @transform_0, window_bounds = array<i64: 2, 100>}, {pipeline_mode = #tpu.pipeline_mode<synchronous>, transform_indices = @transform_1, window_bounds = array<i64: 100, 6272>}, {pipeline_mode = #tpu.pipeline_mode<synchronous>, transform_indices = @transform_2, window_bounds = array<i64: 1, 6272>}, {pipeline_mode = #tpu.pipeline_mode<synchronous>, transform_indices = @transform_3, window_bounds = array<i64: 1, 6272>}, {pipeline_mode = #tpu.pipeline_mode<synchronous>, transform_indices = @transform_4, window_bounds = array<i64: 1152, 256>}, {pipeline_mode = #tpu.pipeline_mode<synchronous>, transform_indices = @transform_5, window_bounds = array<i64: 1, 64>}, {pipeline_mode = #tpu.pipeline_mode<synchronous>, transform_indices = @transform_6, window_bounds = array<i64: 1, 64>}, {pipeline_mode = #tpu.pipeline_mode<synchronous>, transform_indices = @transform_7, window_bounds = array<i64: 2304, 16>}, {pipeline_mode = #tpu.pipeline_mode<synchronous>, transform_indices = @transform_8, window_bounds = array<i64: 98, 16>}]} {
    %c0 = arith.constant 0 : index
    %c0_0 = arith.constant 0 : index
    %0 = vector.load %arg1[%c0, %c0_0] : memref<2x100xf32, #tpu.memory_space<vmem>>, vector<2x100xf32>
    %1 = arith.truncf %0 : vector<2x100xf32> to vector<2x100xbf16>
    %c0_1 = arith.constant 0 : index
    %c0_2 = arith.constant 0 : index
    %2 = vector.load %arg2[%c0_1, %c0_2] : memref<100x6272xbf16, #tpu.memory_space<vmem>>, vector<100x6272xbf16>
    %cst = arith.constant dense<0.000000e+00> : vector<2x6272xf32>
    %3 = tpu.matmul %1, %2, %cst {dimension_numbers = #tpu.dot_dimension_numbers<[1], [0], [0], [1], [0, 0, 1, 1], [], []>} : vector<2x100xbf16>, vector<100x6272xbf16>, vector<2x6272xf32> -> vector<2x6272xf32>
    %cst_3 = arith.constant dense<0.000000e+00> : vector<6272xf32>
    %4 = vector.multi_reduction <add>, %3, %cst_3 [0] : vector<2x6272xf32> to vector<6272xf32>
    %5 = vector.shape_cast %4 : vector<6272xf32> to vector<1x6272xf32>
    %6 = arith.mulf %3, %3 : vector<2x6272xf32>
    %cst_4 = arith.constant dense<0.000000e+00> : vector<6272xf32>
    %7 = vector.multi_reduction <add>, %6, %cst_4 [0] : vector<2x6272xf32> to vector<6272xf32>
    %8 = vector.shape_cast %7 : vector<6272xf32> to vector<1x6272xf32>
    %cst_5 = arith.constant 2.000000e+00 : f32
    %9 = vector.broadcast %cst_5 : f32 to vector<1x6272xf32>
    %10 = arith.divf %5, %9 : vector<1x6272xf32>
    %cst_6 = arith.constant 2.000000e+00 : f32
    %11 = vector.broadcast %cst_6 : f32 to vector<1x6272xf32>
    %12 = arith.divf %8, %11 : vector<1x6272xf32>
    %13 = arith.mulf %10, %10 : vector<1x6272xf32>
    %14 = arith.subf %12, %13 : vector<1x6272xf32>
    %15 = vector.broadcast %10 : vector<1x6272xf32> to vector<2x6272xf32>
    %16 = arith.subf %3, %15 : vector<2x6272xf32>
    %cst_7 = arith.constant 9.99999974E-6 : f32
    %17 = vector.broadcast %cst_7 : f32 to vector<1x6272xf32>
    %18 = arith.addf %14, %17 : vector<1x6272xf32>
    %19 = math.rsqrt %18 : vector<1x6272xf32>
    %20 = vector.broadcast %19 : vector<1x6272xf32> to vector<2x6272xf32>
    %21 = arith.mulf %16, %20 : vector<2x6272xf32>
    %c0_8 = arith.constant 0 : index
    %c0_9 = arith.constant 0 : index
    %22 = vector.load %arg3[%c0_8, %c0_9] : memref<1x6272xf32, #tpu.memory_space<vmem>>, vector<1x6272xf32>
    %23 = vector.broadcast %22 : vector<1x6272xf32> to vector<2x6272xf32>
    %24 = arith.mulf %21, %23 : vector<2x6272xf32>
    %c0_10 = arith.constant 0 : index
    %c0_11 = arith.constant 0 : index
    %25 = vector.load %arg4[%c0_10, %c0_11] : memref<1x6272xf32, #tpu.memory_space<vmem>>, vector<1x6272xf32>
    %26 = vector.broadcast %25 : vector<1x6272xf32> to vector<2x6272xf32>
    %27 = arith.addf %24, %26 : vector<2x6272xf32>
    %cst_12 = arith.constant 0.000000e+00 : f32
    %28 = vector.broadcast %cst_12 : f32 to vector<2x6272xf32>
    %29 = arith.maximumf %27, %28 : vector<2x6272xf32>
    %cst_13 = arith.constant 0.000000e+00 : f32
    %30 = vector.broadcast %cst_13 : f32 to vector<9x9x2x128xf32>
    %c0_14 = arith.constant 0 : index
    %c0_15 = arith.constant 0 : index
    %c0_16 = arith.constant 0 : index
    %c0_17 = arith.constant 0 : index
    %31 = vector.load %arg10[%c0_14, %c0_15, %c0_16, %c0_17] : memref<9x9x2x128xf32, #tpu.memory_space<vmem>>, vector<9x9x2x128xf32>
    tpu.vector_store %arg10[%c0_14, %c0_15, %c0_16, %c0_17], %30 {strides = array<i32>} : memref<9x9x2x128xf32, #tpu.memory_space<vmem>>, vector<9x9x2x128xf32>,
    %32 = vector.extract_strided_slice %29 {offsets = [0, 0], sizes = [2, 128], strides = [1, 1]} : vector<2x6272xf32> to vector<2x128xf32>
    %c1 = arith.constant 1 : index
    %c1_18 = arith.constant 1 : index
    %c0_19 = arith.constant 0 : index
    %c0_20 = arith.constant 0 : index
    %33 = vector.load %arg10[%c1, %c1_18, %c0_19, %c0_20] : memref<9x9x2x128xf32, #tpu.memory_space<vmem>>, vector<1x1x2x128xf32>
    %34 = vector.shape_cast %33 : vector<1x1x2x128xf32> to vector<2x128xf32>
    %35 = vector.shape_cast %32 : vector<2x128xf32> to vector<1x1x2x128xf32>
    tpu.vector_store %arg10[%c1, %c1_18, %c0_19, %c0_20], %35 {strides = array<i32>} : memref<9x9x2x128xf32, #tpu.memory_space<vmem>>, vector<1x1x2x128xf32>,
    %36 = vector.extract_strided_slice %29 {offsets = [0, 128], sizes = [2, 128], strides = [1, 1]} : vector<2x6272xf32> to vector<2x128xf32>
    %c1_21 = arith.constant 1 : index
    %c2 = arith.constant 2 : index
    %c0_22 = arith.constant 0 : index
    %c0_23 = arith.constant 0 : index
    %37 = vector.load %arg10[%c1_21, %c2, %c0_22, %c0_23] : memref<9x9x2x128xf32, #tpu.memory_space<vmem>>, vector<1x1x2x128xf32>
    %38 = vector.shape_cast %37 : vector<1x1x2x128xf32> to vector<2x128xf32>
    %39 = vector.shape_cast %36 : vector<2x128xf32> to vector<1x1x2x128xf32>
    tpu.vector_store %arg10[%c1_21, %c2, %c0_22, %c0_23], %39 {strides = array<i32>} : memref<9x9x2x128xf32, #tpu.memory_space<vmem>>, vector<1x1x2x128xf32>,
    %40 = vector.extract_strided_slice %29 {offsets = [0, 256], sizes = [2, 128], strides = [1, 1]} : vector<2x6272xf32> to vector<2x128xf32>
    %c1_24 = arith.constant 1 : index
    %c3 = arith.constant 3 : index
    %c0_25 = arith.constant 0 : index
    %c0_26 = arith.constant 0 : index
    %41 = vector.load %arg10[%c1_24, %c3, %c0_25, %c0_26] : memref<9x9x2x128xf32, #tpu.memory_space<vmem>>, vector<1x1x2x128xf32>
    %42 = vector.shape_cast %41 : vector<1x1x2x128xf32> to vector<2x128xf32>
    %43 = vector.shape_cast %40 : vector<2x128xf32> to vector<1x1x2x128xf32>
    tpu.vector_store %arg10[%c1_24, %c3, %c0_25, %c0_26], %43 {strides = array<i32>} : memref<9x9x2x128xf32, #tpu.memory_space<vmem>>, vector<1x1x2x128xf32>,
    %44 = vector.extract_strided_slice %29 {offsets = [0, 384], sizes = [2, 128], strides = [1, 1]} : vector<2x6272xf32> to vector<2x128xf32>
    %c1_27 = arith.constant 1 : index
    %c4 = arith.constant 4 : index
    %c0_28 = arith.constant 0 : index
    %c0_29 = arith.constant 0 : index
    %45 = vector.load %arg10[%c1_27, %c4, %c0_28, %c0_29] : memref<9x9x2x128xf32, #tpu.memory_space<vmem>>, vector<1x1x2x128xf32>
    %46 = vector.shape_cast %45 : vector<1x1x2x128xf32> to vector<2x128xf32>
    %47 = vector.shape_cast %44 : vector<2x128xf32> to vector<1x1x2x128xf32>
    tpu.vector_store %arg10[%c1_27, %c4, %c0_28, %c0_29], %47 {strides = array<i32>} : memref<9x9x2x128xf32, #tpu.memory_space<vmem>>, vector<1x1x2x128xf32>,
    %48 = vector.extract_strided_slice %29 {offsets = [0, 512], sizes = [2, 128], strides = [1, 1]} : vector<2x6272xf32> to vector<2x128xf32>
    %c1_30 = arith.constant 1 : index
    %c5 = arith.constant 5 : index
    %c0_31 = arith.constant 0 : index
    %c0_32 = arith.constant 0 : index
    %49 = vector.load %arg10[%c1_30, %c5, %c0_31, %c0_32] : memref<9x9x2x128xf32, #tpu.memory_space<vmem>>, vector<1x1x2x128xf32>
    %50 = vector.shape_cast %49 : vector<1x1x2x128xf32> to vector<2x128xf32>
    %51 = vector.shape_cast %48 : vector<2x128xf32> to vector<1x1x2x128xf32>
    tpu.vector_store %arg10[%c1_30, %c5, %c0_31, %c0_32], %51 {strides = array<i32>} : memref<9x9x2x128xf32, #tpu.memory_space<vmem>>, vector<1x1x2x128xf32>,
    %52 = vector.extract_strided_slice %29 {offsets = [0, 640], sizes = [2, 128], strides = [1, 1]} : vector<2x6272xf32> to vector<2x128xf32>
    %c1_33 = arith.constant 1 : index
    %c6 = arith.constant 6 : index
    %c0_34 = arith.constant 0 : index
    %c0_35 = arith.constant 0 : index
    %53 = vector.load %arg10[%c1_33, %c6, %c0_34, %c0_35] : memref<9x9x2x128xf32, #tpu.memory_space<vmem>>, vector<1x1x2x128xf32>
    %54 = vector.shape_cast %53 : vector<1x1x2x128xf32> to vector<2x128xf32>
    %55 = vector.shape_cast %52 : vector<2x128xf32> to vector<1x1x2x128xf32>
    tpu.vector_store %arg10[%c1_33, %c6, %c0_34, %c0_35], %55 {strides = array<i32>} : memref<9x9x2x128xf32, #tpu.memory_space<vmem>>, vector<1x1x2x128xf32>,
    %56 = vector.extract_strided_slice %29 {offsets = [0, 768], sizes = [2, 128], strides = [1, 1]} : vector<2x6272xf32> to vector<2x128xf32>
    %c1_36 = arith.constant 1 : index
    %c7 = arith.constant 7 : index
    %c0_37 = arith.constant 0 : index
    %c0_38 = arith.constant 0 : index
    %57 = vector.load %arg10[%c1_36, %c7, %c0_37, %c0_38] : memref<9x9x2x128xf32, #tpu.memory_space<vmem>>, vector<1x1x2x128xf32>
    %58 = vector.shape_cast %57 : vector<1x1x2x128xf32> to vector<2x128xf32>
    %59 = vector.shape_cast %56 : vector<2x128xf32> to vector<1x1x2x128xf32>
    tpu.vector_store %arg10[%c1_36, %c7, %c0_37, %c0_38], %59 {strides = array<i32>} : memref<9x9x2x128xf32, #tpu.memory_space<vmem>>, vector<1x1x2x128xf32>,
    %60 = vector.extract_strided_slice %29 {offsets = [0, 896], sizes = [2, 128], strides = [1, 1]} : vector<2x6272xf32> to vector<2x128xf32>
    %c2_39 = arith.constant 2 : index
    %c1_40 = arith.constant 1 : index
    %c0_41 = arith.constant 0 : index
    %c0_42 = arith.constant 0 : index
    %61 = vector.load %arg10[%c2_39, %c1_40, %c0_41, %c0_42] : memref<9x9x2x128xf32, #tpu.memory_space<vmem>>, vector<1x1x2x128xf32>
    %62 = vector.shape_cast %61 : vector<1x1x2x128xf32> to vector<2x128xf32>
    %63 = vector.shape_cast %60 : vector<2x128xf32> to vector<1x1x2x128xf32>
    tpu.vector_store %arg10[%c2_39, %c1_40, %c0_41, %c0_42], %63 {strides = array<i32>} : memref<9x9x2x128xf32, #tpu.memory_space<vmem>>, vector<1x1x2x128xf32>,
    %64 = vector.extract_strided_slice %29 {offsets = [0, 1024], sizes = [2, 128], strides = [1, 1]} : vector<2x6272xf32> to vector<2x128xf32>
    %c2_43 = arith.constant 2 : index
    %c2_44 = arith.constant 2 : index
    %c0_45 = arith.constant 0 : index
    %c0_46 = arith.constant 0 : index
    %65 = vector.load %arg10[%c2_43, %c2_44, %c0_45, %c0_46] : memref<9x9x2x128xf32, #tpu.memory_space<vmem>>, vector<1x1x2x128xf32>
    %66 = vector.shape_cast %65 : vector<1x1x2x128xf32> to vector<2x128xf32>
    %67 = vector.shape_cast %64 : vector<2x128xf32> to vector<1x1x2x128xf32>
    tpu.vector_store %arg10[%c2_43, %c2_44, %c0_45, %c0_46], %67 {strides = array<i32>} : memref<9x9x2x128xf32, #tpu.memory_space<vmem>>, vector<1x1x2x128xf32>,
    %68 = vector.extract_strided_slice %29 {offsets = [0, 1152], sizes = [2, 128], strides = [1, 1]} : vector<2x6272xf32> to vector<2x128xf32>
    %c2_47 = arith.constant 2 : index
    %c3_48 = arith.constant 3 : index
    %c0_49 = arith.constant 0 : index
    %c0_50 = arith.constant 0 : index
    %69 = vector.load %arg10[%c2_47, %c3_48, %c0_49, %c0_50] : memref<9x9x2x128xf32, #tpu.memory_space<vmem>>, vector<1x1x2x128xf32>
    %70 = vector.shape_cast %69 : vector<1x1x2x128xf32> to vector<2x128xf32>
    %71 = vector.shape_cast %68 : vector<2x128xf32> to vector<1x1x2x128xf32>
    tpu.vector_store %arg10[%c2_47, %c3_48, %c0_49, %c0_50], %71 {strides = array<i32>} : memref<9x9x2x128xf32, #tpu.memory_space<vmem>>, vector<1x1x2x128xf32>,
    %72 = vector.extract_strided_slice %29 {offsets = [0, 1280], sizes = [2, 128], strides = [1, 1]} : vector<2x6272xf32> to vector<2x128xf32>
    %c2_51 = arith.constant 2 : index
    %c4_52 = arith.constant 4 : index
    %c0_53 = arith.constant 0 : index
    %c0_54 = arith.constant 0 : index
    %73 = vector.load %arg10[%c2_51, %c4_52, %c0_53, %c0_54] : memref<9x9x2x128xf32, #tpu.memory_space<vmem>>, vector<1x1x2x128xf32>
    %74 = vector.shape_cast %73 : vector<1x1x2x128xf32> to vector<2x128xf32>
    %75 = vector.shape_cast %72 : vector<2x128xf32> to vector<1x1x2x128xf32>
    tpu.vector_store %arg10[%c2_51, %c4_52, %c0_53, %c0_54], %75 {strides = array<i32>} : memref<9x9x2x128xf32, #tpu.memory_space<vmem>>, vector<1x1x2x128xf32>,
    %76 = vector.extract_strided_slice %29 {offsets = [0, 1408], sizes = [2, 128], strides = [1, 1]} : vector<2x6272xf32> to vector<2x128xf32>
    %c2_55 = arith.constant 2 : index
    %c5_56 = arith.constant 5 : index
    %c0_57 = arith.constant 0 : index
    %c0_58 = arith.constant 0 : index
    %77 = vector.load %arg10[%c2_55, %c5_56, %c0_57, %c0_58] : memref<9x9x2x128xf32, #tpu.memory_space<vmem>>, vector<1x1x2x128xf32>
    %78 = vector.shape_cast %77 : vector<1x1x2x128xf32> to vector<2x128xf32>
    %79 = vector.shape_cast %76 : vector<2x128xf32> to vector<1x1x2x128xf32>
    tpu.vector_store %arg10[%c2_55, %c5_56, %c0_57, %c0_58], %79 {strides = array<i32>} : memref<9x9x2x128xf32, #tpu.memory_space<vmem>>, vector<1x1x2x128xf32>,
    %80 = vector.extract_strided_slice %29 {offsets = [0, 1536], sizes = [2, 128], strides = [1, 1]} : vector<2x6272xf32> to vector<2x128xf32>
    %c2_59 = arith.constant 2 : index
    %c6_60 = arith.constant 6 : index
    %c0_61 = arith.constant 0 : index
    %c0_62 = arith.constant 0 : index
    %81 = vector.load %arg10[%c2_59, %c6_60, %c0_61, %c0_62] : memref<9x9x2x128xf32, #tpu.memory_space<vmem>>, vector<1x1x2x128xf32>
    %82 = vector.shape_cast %81 : vector<1x1x2x128xf32> to vector<2x128xf32>
    %83 = vector.shape_cast %80 : vector<2x128xf32> to vector<1x1x2x128xf32>
    tpu.vector_store %arg10[%c2_59, %c6_60, %c0_61, %c0_62], %83 {strides = array<i32>} : memref<9x9x2x128xf32, #tpu.memory_space<vmem>>, vector<1x1x2x128xf32>,
    %84 = vector.extract_strided_slice %29 {offsets = [0, 1664], sizes = [2, 128], strides = [1, 1]} : vector<2x6272xf32> to vector<2x128xf32>
    %c2_63 = arith.constant 2 : index
    %c7_64 = arith.constant 7 : index
    %c0_65 = arith.constant 0 : index
    %c0_66 = arith.constant 0 : index
    %85 = vector.load %arg10[%c2_63, %c7_64, %c0_65, %c0_66] : memref<9x9x2x128xf32, #tpu.memory_space<vmem>>, vector<1x1x2x128xf32>
    %86 = vector.shape_cast %85 : vector<1x1x2x128xf32> to vector<2x128xf32>
    %87 = vector.shape_cast %84 : vector<2x128xf32> to vector<1x1x2x128xf32>
    tpu.vector_store %arg10[%c2_63, %c7_64, %c0_65, %c0_66], %87 {strides = array<i32>} : memref<9x9x2x128xf32, #tpu.memory_space<vmem>>, vector<1x1x2x128xf32>,
    %88 = vector.extract_strided_slice %29 {offsets = [0, 1792], sizes = [2, 128], strides = [1, 1]} : vector<2x6272xf32> to vector<2x128xf32>
    %c3_67 = arith.constant 3 : index
    %c1_68 = arith.constant 1 : index
    %c0_69 = arith.constant 0 : index
    %c0_70 = arith.constant 0 : index
    %89 = vector.load %arg10[%c3_67, %c1_68, %c0_69, %c0_70] : memref<9x9x2x128xf32, #tpu.memory_space<vmem>>, vector<1x1x2x128xf32>
    %90 = vector.shape_cast %89 : vector<1x1x2x128xf32> to vector<2x128xf32>
    %91 = vector.shape_cast %88 : vector<2x128xf32> to vector<1x1x2x128xf32>
    tpu.vector_store %arg10[%c3_67, %c1_68, %c0_69, %c0_70], %91 {strides = array<i32>} : memref<9x9x2x128xf32, #tpu.memory_space<vmem>>, vector<1x1x2x128xf32>,
    %92 = vector.extract_strided_slice %29 {offsets = [0, 1920], sizes = [2, 128], strides = [1, 1]} : vector<2x6272xf32> to vector<2x128xf32>
    %c3_71 = arith.constant 3 : index
    %c2_72 = arith.constant 2 : index
    %c0_73 = arith.constant 0 : index
    %c0_74 = arith.constant 0 : index
    %93 = vector.load %arg10[%c3_71, %c2_72, %c0_73, %c0_74] : memref<9x9x2x128xf32, #tpu.memory_space<vmem>>, vector<1x1x2x128xf32>
    %94 = vector.shape_cast %93 : vector<1x1x2x128xf32> to vector<2x128xf32>
    %95 = vector.shape_cast %92 : vector<2x128xf32> to vector<1x1x2x128xf32>
    tpu.vector_store %arg10[%c3_71, %c2_72, %c0_73, %c0_74], %95 {strides = array<i32>} : memref<9x9x2x128xf32, #tpu.memory_space<vmem>>, vector<1x1x2x128xf32>,
    %96 = vector.extract_strided_slice %29 {offsets = [0, 2048], sizes = [2, 128], strides = [1, 1]} : vector<2x6272xf32> to vector<2x128xf32>
    %c3_75 = arith.constant 3 : index
    %c3_76 = arith.constant 3 : index
    %c0_77 = arith.constant 0 : index
    %c0_78 = arith.constant 0 : index
    %97 = vector.load %arg10[%c3_75, %c3_76, %c0_77, %c0_78] : memref<9x9x2x128xf32, #tpu.memory_space<vmem>>, vector<1x1x2x128xf32>
    %98 = vector.shape_cast %97 : vector<1x1x2x128xf32> to vector<2x128xf32>
    %99 = vector.shape_cast %96 : vector<2x128xf32> to vector<1x1x2x128xf32>
    tpu.vector_store %arg10[%c3_75, %c3_76, %c0_77, %c0_78], %99 {strides = array<i32>} : memref<9x9x2x128xf32, #tpu.memory_space<vmem>>, vector<1x1x2x128xf32>,
    %100 = vector.extract_strided_slice %29 {offsets = [0, 2176], sizes = [2, 128], strides = [1, 1]} : vector<2x6272xf32> to vector<2x128xf32>
    %c3_79 = arith.constant 3 : index
    %c4_80 = arith.constant 4 : index
    %c0_81 = arith.constant 0 : index
    %c0_82 = arith.constant 0 : index
    %101 = vector.load %arg10[%c3_79, %c4_80, %c0_81, %c0_82] : memref<9x9x2x128xf32, #tpu.memory_space<vmem>>, vector<1x1x2x128xf32>
    %102 = vector.shape_cast %101 : vector<1x1x2x128xf32> to vector<2x128xf32>
    %103 = vector.shape_cast %100 : vector<2x128xf32> to vector<1x1x2x128xf32>
    tpu.vector_store %arg10[%c3_79, %c4_80, %c0_81, %c0_82], %103 {strides = array<i32>} : memref<9x9x2x128xf32, #tpu.memory_space<vmem>>, vector<1x1x2x128xf32>,
    %104 = vector.extract_strided_slice %29 {offsets = [0, 2304], sizes = [2, 128], strides = [1, 1]} : vector<2x6272xf32> to vector<2x128xf32>
    %c3_83 = arith.constant 3 : index
    %c5_84 = arith.constant 5 : index
    %c0_85 = arith.constant 0 : index
    %c0_86 = arith.constant 0 : index
    %105 = vector.load %arg10[%c3_83, %c5_84, %c0_85, %c0_86] : memref<9x9x2x128xf32, #tpu.memory_space<vmem>>, vector<1x1x2x128xf32>
    %106 = vector.shape_cast %105 : vector<1x1x2x128xf32> to vector<2x128xf32>
    %107 = vector.shape_cast %104 : vector<2x128xf32> to vector<1x1x2x128xf32>
    tpu.vector_store %arg10[%c3_83, %c5_84, %c0_85, %c0_86], %107 {strides = array<i32>} : memref<9x9x2x128xf32, #tpu.memory_space<vmem>>, vector<1x1x2x128xf32>,
    %108 = vector.extract_strided_slice %29 {offsets = [0, 2432], sizes = [2, 128], strides = [1, 1]} : vector<2x6272xf32> to vector<2x128xf32>
    %c3_87 = arith.constant 3 : index
    %c6_88 = arith.constant 6 : index
    %c0_89 = arith.constant 0 : index
    %c0_90 = arith.constant 0 : index
    %109 = vector.load %arg10[%c3_87, %c6_88, %c0_89, %c0_90] : memref<9x9x2x128xf32, #tpu.memory_space<vmem>>, vector<1x1x2x128xf32>
    %110 = vector.shape_cast %109 : vector<1x1x2x128xf32> to vector<2x128xf32>
    %111 = vector.shape_cast %108 : vector<2x128xf32> to vector<1x1x2x128xf32>
    tpu.vector_store %arg10[%c3_87, %c6_88, %c0_89, %c0_90], %111 {strides = array<i32>} : memref<9x9x2x128xf32, #tpu.memory_space<vmem>>, vector<1x1x2x128xf32>,
    %112 = vector.extract_strided_slice %29 {offsets = [0, 2560], sizes = [2, 128], strides = [1, 1]} : vector<2x6272xf32> to vector<2x128xf32>
    %c3_91 = arith.constant 3 : index
    %c7_92 = arith.constant 7 : index
    %c0_93 = arith.constant 0 : index
    %c0_94 = arith.constant 0 : index
    %113 = vector.load %arg10[%c3_91, %c7_92, %c0_93, %c0_94] : memref<9x9x2x128xf32, #tpu.memory_space<vmem>>, vector<1x1x2x128xf32>
    %114 = vector.shape_cast %113 : vector<1x1x2x128xf32> to vector<2x128xf32>
    %115 = vector.shape_cast %112 : vector<2x128xf32> to vector<1x1x2x128xf32>
    tpu.vector_store %arg10[%c3_91, %c7_92, %c0_93, %c0_94], %115 {strides = array<i32>} : memref<9x9x2x128xf32, #tpu.memory_space<vmem>>, vector<1x1x2x128xf32>,
    %116 = vector.extract_strided_slice %29 {offsets = [0, 2688], sizes = [2, 128], strides = [1, 1]} : vector<2x6272xf32> to vector<2x128xf32>
    %c4_95 = arith.constant 4 : index
    %c1_96 = arith.constant 1 : index
    %c0_97 = arith.constant 0 : index
    %c0_98 = arith.constant 0 : index
    %117 = vector.load %arg10[%c4_95, %c1_96, %c0_97, %c0_98] : memref<9x9x2x128xf32, #tpu.memory_space<vmem>>, vector<1x1x2x128xf32>
    %118 = vector.shape_cast %117 : vector<1x1x2x128xf32> to vector<2x128xf32>
    %119 = vector.shape_cast %116 : vector<2x128xf32> to vector<1x1x2x128xf32>
    tpu.vector_store %arg10[%c4_95, %c1_96, %c0_97, %c0_98], %119 {strides = array<i32>} : memref<9x9x2x128xf32, #tpu.memory_space<vmem>>, vector<1x1x2x128xf32>,
    %120 = vector.extract_strided_slice %29 {offsets = [0, 2816], sizes = [2, 128], strides = [1, 1]} : vector<2x6272xf32> to vector<2x128xf32>
    %c4_99 = arith.constant 4 : index
    %c2_100 = arith.constant 2 : index
    %c0_101 = arith.constant 0 : index
    %c0_102 = arith.constant 0 : index
    %121 = vector.load %arg10[%c4_99, %c2_100, %c0_101, %c0_102] : memref<9x9x2x128xf32, #tpu.memory_space<vmem>>, vector<1x1x2x128xf32>
    %122 = vector.shape_cast %121 : vector<1x1x2x128xf32> to vector<2x128xf32>
    %123 = vector.shape_cast %120 : vector<2x128xf32> to vector<1x1x2x128xf32>
    tpu.vector_store %arg10[%c4_99, %c2_100, %c0_101, %c0_102], %123 {strides = array<i32>} : memref<9x9x2x128xf32, #tpu.memory_space<vmem>>, vector<1x1x2x128xf32>,
    %124 = vector.extract_strided_slice %29 {offsets = [0, 2944], sizes = [2, 128], strides = [1, 1]} : vector<2x6272xf32> to vector<2x128xf32>
    %c4_103 = arith.constant 4 : index
    %c3_104 = arith.constant 3 : index
    %c0_105 = arith.constant 0 : index
    %c0_106 = arith.constant 0 : index
    %125 = vector.load %arg10[%c4_103, %c3_104, %c0_105, %c0_106] : memref<9x9x2x128xf32, #tpu.memory_space<vmem>>, vector<1x1x2x128xf32>
    %126 = vector.shape_cast %125 : vector<1x1x2x128xf32> to vector<2x128xf32>
    %127 = vector.shape_cast %124 : vector<2x128xf32> to vector<1x1x2x128xf32>
    tpu.vector_store %arg10[%c4_103, %c3_104, %c0_105, %c0_106], %127 {strides = array<i32>} : memref<9x9x2x128xf32, #tpu.memory_space<vmem>>, vector<1x1x2x128xf32>,
    %128 = vector.extract_strided_slice %29 {offsets = [0, 3072], sizes = [2, 128], strides = [1, 1]} : vector<2x6272xf32> to vector<2x128xf32>
    %c4_107 = arith.constant 4 : index
    %c4_108 = arith.constant 4 : index
    %c0_109 = arith.constant 0 : index
    %c0_110 = arith.constant 0 : index
    %129 = vector.load %arg10[%c4_107, %c4_108, %c0_109, %c0_110] : memref<9x9x2x128xf32, #tpu.memory_space<vmem>>, vector<1x1x2x128xf32>
    %130 = vector.shape_cast %129 : vector<1x1x2x128xf32> to vector<2x128xf32>
    %131 = vector.shape_cast %128 : vector<2x128xf32> to vector<1x1x2x128xf32>
    tpu.vector_store %arg10[%c4_107, %c4_108, %c0_109, %c0_110], %131 {strides = array<i32>} : memref<9x9x2x128xf32, #tpu.memory_space<vmem>>, vector<1x1x2x128xf32>,
    %132 = vector.extract_strided_slice %29 {offsets = [0, 3200], sizes = [2, 128], strides = [1, 1]} : vector<2x6272xf32> to vector<2x128xf32>
    %c4_111 = arith.constant 4 : index
    %c5_112 = arith.constant 5 : index
    %c0_113 = arith.constant 0 : index
    %c0_114 = arith.constant 0 : index
    %133 = vector.load %arg10[%c4_111, %c5_112, %c0_113, %c0_114] : memref<9x9x2x128xf32, #tpu.memory_space<vmem>>, vector<1x1x2x128xf32>
    %134 = vector.shape_cast %133 : vector<1x1x2x128xf32> to vector<2x128xf32>
    %135 = vector.shape_cast %132 : vector<2x128xf32> to vector<1x1x2x128xf32>
    tpu.vector_store %arg10[%c4_111, %c5_112, %c0_113, %c0_114], %135 {strides = array<i32>} : memref<9x9x2x128xf32, #tpu.memory_space<vmem>>, vector<1x1x2x128xf32>,
    %136 = vector.extract_strided_slice %29 {offsets = [0, 3328], sizes = [2, 128], strides = [1, 1]} : vector<2x6272xf32> to vector<2x128xf32>
    %c4_115 = arith.constant 4 : index
    %c6_116 = arith.constant 6 : index
    %c0_117 = arith.constant 0 : index
    %c0_118 = arith.constant 0 : index
    %137 = vector.load %arg10[%c4_115, %c6_116, %c0_117, %c0_118] : memref<9x9x2x128xf32, #tpu.memory_space<vmem>>, vector<1x1x2x128xf32>
    %138 = vector.shape_cast %137 : vector<1x1x2x128xf32> to vector<2x128xf32>
    %139 = vector.shape_cast %136 : vector<2x128xf32> to vector<1x1x2x128xf32>
    tpu.vector_store %arg10[%c4_115, %c6_116, %c0_117, %c0_118], %139 {strides = array<i32>} : memref<9x9x2x128xf32, #tpu.memory_space<vmem>>, vector<1x1x2x128xf32>,
    %140 = vector.extract_strided_slice %29 {offsets = [0, 3456], sizes = [2, 128], strides = [1, 1]} : vector<2x6272xf32> to vector<2x128xf32>
    %c4_119 = arith.constant 4 : index
    %c7_120 = arith.constant 7 : index
    %c0_121 = arith.constant 0 : index
    %c0_122 = arith.constant 0 : index
    %141 = vector.load %arg10[%c4_119, %c7_120, %c0_121, %c0_122] : memref<9x9x2x128xf32, #tpu.memory_space<vmem>>, vector<1x1x2x128xf32>
    %142 = vector.shape_cast %141 : vector<1x1x2x128xf32> to vector<2x128xf32>
    %143 = vector.shape_cast %140 : vector<2x128xf32> to vector<1x1x2x128xf32>
    tpu.vector_store %arg10[%c4_119, %c7_120, %c0_121, %c0_122], %143 {strides = array<i32>} : memref<9x9x2x128xf32, #tpu.memory_space<vmem>>, vector<1x1x2x128xf32>,
    %144 = vector.extract_strided_slice %29 {offsets = [0, 3584], sizes = [2, 128], strides = [1, 1]} : vector<2x6272xf32> to vector<2x128xf32>
    %c5_123 = arith.constant 5 : index
    %c1_124 = arith.constant 1 : index
    %c0_125 = arith.constant 0 : index
    %c0_126 = arith.constant 0 : index
    %145 = vector.load %arg10[%c5_123, %c1_124, %c0_125, %c0_126] : memref<9x9x2x128xf32, #tpu.memory_space<vmem>>, vector<1x1x2x128xf32>
    %146 = vector.shape_cast %145 : vector<1x1x2x128xf32> to vector<2x128xf32>
    %147 = vector.shape_cast %144 : vector<2x128xf32> to vector<1x1x2x128xf32>
    tpu.vector_store %arg10[%c5_123, %c1_124, %c0_125, %c0_126], %147 {strides = array<i32>} : memref<9x9x2x128xf32, #tpu.memory_space<vmem>>, vector<1x1x2x128xf32>,
    %148 = vector.extract_strided_slice %29 {offsets = [0, 3712], sizes = [2, 128], strides = [1, 1]} : vector<2x6272xf32> to vector<2x128xf32>
    %c5_127 = arith.constant 5 : index
    %c2_128 = arith.constant 2 : index
    %c0_129 = arith.constant 0 : index
    %c0_130 = arith.constant 0 : index
    %149 = vector.load %arg10[%c5_127, %c2_128, %c0_129, %c0_130] : memref<9x9x2x128xf32, #tpu.memory_space<vmem>>, vector<1x1x2x128xf32>
    %150 = vector.shape_cast %149 : vector<1x1x2x128xf32> to vector<2x128xf32>
    %151 = vector.shape_cast %148 : vector<2x128xf32> to vector<1x1x2x128xf32>
    tpu.vector_store %arg10[%c5_127, %c2_128, %c0_129, %c0_130], %151 {strides = array<i32>} : memref<9x9x2x128xf32, #tpu.memory_space<vmem>>, vector<1x1x2x128xf32>,
    %152 = vector.extract_strided_slice %29 {offsets = [0, 3840], sizes = [2, 128], strides = [1, 1]} : vector<2x6272xf32> to vector<2x128xf32>
    %c5_131 = arith.constant 5 : index
    %c3_132 = arith.constant 3 : index
    %c0_133 = arith.constant 0 : index
    %c0_134 = arith.constant 0 : index
    %153 = vector.load %arg10[%c5_131, %c3_132, %c0_133, %c0_134] : memref<9x9x2x128xf32, #tpu.memory_space<vmem>>, vector<1x1x2x128xf32>
    %154 = vector.shape_cast %153 : vector<1x1x2x128xf32> to vector<2x128xf32>
    %155 = vector.shape_cast %152 : vector<2x128xf32> to vector<1x1x2x128xf32>
    tpu.vector_store %arg10[%c5_131, %c3_132, %c0_133, %c0_134], %155 {strides = array<i32>} : memref<9x9x2x128xf32, #tpu.memory_space<vmem>>, vector<1x1x2x128xf32>,
    %156 = vector.extract_strided_slice %29 {offsets = [0, 3968], sizes = [2, 128], strides = [1, 1]} : vector<2x6272xf32> to vector<2x128xf32>
    %c5_135 = arith.constant 5 : index
    %c4_136 = arith.constant 4 : index
    %c0_137 = arith.constant 0 : index
    %c0_138 = arith.constant 0 : index
    %157 = vector.load %arg10[%c5_135, %c4_136, %c0_137, %c0_138] : memref<9x9x2x128xf32, #tpu.memory_space<vmem>>, vector<1x1x2x128xf32>
    %158 = vector.shape_cast %157 : vector<1x1x2x128xf32> to vector<2x128xf32>
    %159 = vector.shape_cast %156 : vector<2x128xf32> to vector<1x1x2x128xf32>
    tpu.vector_store %arg10[%c5_135, %c4_136, %c0_137, %c0_138], %159 {strides = array<i32>} : memref<9x9x2x128xf32, #tpu.memory_space<vmem>>, vector<1x1x2x128xf32>,
    %160 = vector.extract_strided_slice %29 {offsets = [0, 4096], sizes = [2, 128], strides = [1, 1]} : vector<2x6272xf32> to vector<2x128xf32>
    %c5_139 = arith.constant 5 : index
    %c5_140 = arith.constant 5 : index
    %c0_141 = arith.constant 0 : index
    %c0_142 = arith.constant 0 : index
    %161 = vector.load %arg10[%c5_139, %c5_140, %c0_141, %c0_142] : memref<9x9x2x128xf32, #tpu.memory_space<vmem>>, vector<1x1x2x128xf32>
    %162 = vector.shape_cast %161 : vector<1x1x2x128xf32> to vector<2x128xf32>
    %163 = vector.shape_cast %160 : vector<2x128xf32> to vector<1x1x2x128xf32>
    tpu.vector_store %arg10[%c5_139, %c5_140, %c0_141, %c0_142], %163 {strides = array<i32>} : memref<9x9x2x128xf32, #tpu.memory_space<vmem>>, vector<1x1x2x128xf32>,
    %164 = vector.extract_strided_slice %29 {offsets = [0, 4224], sizes = [2, 128], strides = [1, 1]} : vector<2x6272xf32> to vector<2x128xf32>
    %c5_143 = arith.constant 5 : index
    %c6_144 = arith.constant 6 : index
    %c0_145 = arith.constant 0 : index
    %c0_146 = arith.constant 0 : index
    %165 = vector.load %arg10[%c5_143, %c6_144, %c0_145, %c0_146] : memref<9x9x2x128xf32, #tpu.memory_space<vmem>>, vector<1x1x2x128xf32>
    %166 = vector.shape_cast %165 : vector<1x1x2x128xf32> to vector<2x128xf32>
    %167 = vector.shape_cast %164 : vector<2x128xf32> to vector<1x1x2x128xf32>
    tpu.vector_store %arg10[%c5_143, %c6_144, %c0_145, %c0_146], %167 {strides = array<i32>} : memref<9x9x2x128xf32, #tpu.memory_space<vmem>>, vector<1x1x2x128xf32>,
    %168 = vector.extract_strided_slice %29 {offsets = [0, 4352], sizes = [2, 128], strides = [1, 1]} : vector<2x6272xf32> to vector<2x128xf32>
    %c5_147 = arith.constant 5 : index
    %c7_148 = arith.constant 7 : index
    %c0_149 = arith.constant 0 : index
    %c0_150 = arith.constant 0 : index
    %169 = vector.load %arg10[%c5_147, %c7_148, %c0_149, %c0_150] : memref<9x9x2x128xf32, #tpu.memory_space<vmem>>, vector<1x1x2x128xf32>
    %170 = vector.shape_cast %169 : vector<1x1x2x128xf32> to vector<2x128xf32>
    %171 = vector.shape_cast %168 : vector<2x128xf32> to vector<1x1x2x128xf32>
    tpu.vector_store %arg10[%c5_147, %c7_148, %c0_149, %c0_150], %171 {strides = array<i32>} : memref<9x9x2x128xf32, #tpu.memory_space<vmem>>, vector<1x1x2x128xf32>,
    %172 = vector.extract_strided_slice %29 {offsets = [0, 4480], sizes = [2, 128], strides = [1, 1]} : vector<2x6272xf32> to vector<2x128xf32>
    %c6_151 = arith.constant 6 : index
    %c1_152 = arith.constant 1 : index
    %c0_153 = arith.constant 0 : index
    %c0_154 = arith.constant 0 : index
    %173 = vector.load %arg10[%c6_151, %c1_152, %c0_153, %c0_154] : memref<9x9x2x128xf32, #tpu.memory_space<vmem>>, vector<1x1x2x128xf32>
    %174 = vector.shape_cast %173 : vector<1x1x2x128xf32> to vector<2x128xf32>
    %175 = vector.shape_cast %172 : vector<2x128xf32> to vector<1x1x2x128xf32>
    tpu.vector_store %arg10[%c6_151, %c1_152, %c0_153, %c0_154], %175 {strides = array<i32>} : memref<9x9x2x128xf32, #tpu.memory_space<vmem>>, vector<1x1x2x128xf32>,
    %176 = vector.extract_strided_slice %29 {offsets = [0, 4608], sizes = [2, 128], strides = [1, 1]} : vector<2x6272xf32> to vector<2x128xf32>
    %c6_155 = arith.constant 6 : index
    %c2_156 = arith.constant 2 : index
    %c0_157 = arith.constant 0 : index
    %c0_158 = arith.constant 0 : index
    %177 = vector.load %arg10[%c6_155, %c2_156, %c0_157, %c0_158] : memref<9x9x2x128xf32, #tpu.memory_space<vmem>>, vector<1x1x2x128xf32>
    %178 = vector.shape_cast %177 : vector<1x1x2x128xf32> to vector<2x128xf32>
    %179 = vector.shape_cast %176 : vector<2x128xf32> to vector<1x1x2x128xf32>
    tpu.vector_store %arg10[%c6_155, %c2_156, %c0_157, %c0_158], %179 {strides = array<i32>} : memref<9x9x2x128xf32, #tpu.memory_space<vmem>>, vector<1x1x2x128xf32>,
    %180 = vector.extract_strided_slice %29 {offsets = [0, 4736], sizes = [2, 128], strides = [1, 1]} : vector<2x6272xf32> to vector<2x128xf32>
    %c6_159 = arith.constant 6 : index
    %c3_160 = arith.constant 3 : index
    %c0_161 = arith.constant 0 : index
    %c0_162 = arith.constant 0 : index
    %181 = vector.load %arg10[%c6_159, %c3_160, %c0_161, %c0_162] : memref<9x9x2x128xf32, #tpu.memory_space<vmem>>, vector<1x1x2x128xf32>
    %182 = vector.shape_cast %181 : vector<1x1x2x128xf32> to vector<2x128xf32>
    %183 = vector.shape_cast %180 : vector<2x128xf32> to vector<1x1x2x128xf32>
    tpu.vector_store %arg10[%c6_159, %c3_160, %c0_161, %c0_162], %183 {strides = array<i32>} : memref<9x9x2x128xf32, #tpu.memory_space<vmem>>, vector<1x1x2x128xf32>,
    %184 = vector.extract_strided_slice %29 {offsets = [0, 4864], sizes = [2, 128], strides = [1, 1]} : vector<2x6272xf32> to vector<2x128xf32>
    %c6_163 = arith.constant 6 : index
    %c4_164 = arith.constant 4 : index
    %c0_165 = arith.constant 0 : index
    %c0_166 = arith.constant 0 : index
    %185 = vector.load %arg10[%c6_163, %c4_164, %c0_165, %c0_166] : memref<9x9x2x128xf32, #tpu.memory_space<vmem>>, vector<1x1x2x128xf32>
    %186 = vector.shape_cast %185 : vector<1x1x2x128xf32> to vector<2x128xf32>
    %187 = vector.shape_cast %184 : vector<2x128xf32> to vector<1x1x2x128xf32>
    tpu.vector_store %arg10[%c6_163, %c4_164, %c0_165, %c0_166], %187 {strides = array<i32>} : memref<9x9x2x128xf32, #tpu.memory_space<vmem>>, vector<1x1x2x128xf32>,
    %188 = vector.extract_strided_slice %29 {offsets = [0, 4992], sizes = [2, 128], strides = [1, 1]} : vector<2x6272xf32> to vector<2x128xf32>
    %c6_167 = arith.constant 6 : index
    %c5_168 = arith.constant 5 : index
    %c0_169 = arith.constant 0 : index
    %c0_170 = arith.constant 0 : index
    %189 = vector.load %arg10[%c6_167, %c5_168, %c0_169, %c0_170] : memref<9x9x2x128xf32, #tpu.memory_space<vmem>>, vector<1x1x2x128xf32>
    %190 = vector.shape_cast %189 : vector<1x1x2x128xf32> to vector<2x128xf32>
    %191 = vector.shape_cast %188 : vector<2x128xf32> to vector<1x1x2x128xf32>
    tpu.vector_store %arg10[%c6_167, %c5_168, %c0_169, %c0_170], %191 {strides = array<i32>} : memref<9x9x2x128xf32, #tpu.memory_space<vmem>>, vector<1x1x2x128xf32>,
    %192 = vector.extract_strided_slice %29 {offsets = [0, 5120], sizes = [2, 128], strides = [1, 1]} : vector<2x6272xf32> to vector<2x128xf32>
    %c6_171 = arith.constant 6 : index
    %c6_172 = arith.constant 6 : index
    %c0_173 = arith.constant 0 : index
    %c0_174 = arith.constant 0 : index
    %193 = vector.load %arg10[%c6_171, %c6_172, %c0_173, %c0_174] : memref<9x9x2x128xf32, #tpu.memory_space<vmem>>, vector<1x1x2x128xf32>
    %194 = vector.shape_cast %193 : vector<1x1x2x128xf32> to vector<2x128xf32>
    %195 = vector.shape_cast %192 : vector<2x128xf32> to vector<1x1x2x128xf32>
    tpu.vector_store %arg10[%c6_171, %c6_172, %c0_173, %c0_174], %195 {strides = array<i32>} : memref<9x9x2x128xf32, #tpu.memory_space<vmem>>, vector<1x1x2x128xf32>,
    %196 = vector.extract_strided_slice %29 {offsets = [0, 5248], sizes = [2, 128], strides = [1, 1]} : vector<2x6272xf32> to vector<2x128xf32>
    %c6_175 = arith.constant 6 : index
    %c7_176 = arith.constant 7 : index
    %c0_177 = arith.constant 0 : index
    %c0_178 = arith.constant 0 : index
    %197 = vector.load %arg10[%c6_175, %c7_176, %c0_177, %c0_178] : memref<9x9x2x128xf32, #tpu.memory_space<vmem>>, vector<1x1x2x128xf32>
    %198 = vector.shape_cast %197 : vector<1x1x2x128xf32> to vector<2x128xf32>
    %199 = vector.shape_cast %196 : vector<2x128xf32> to vector<1x1x2x128xf32>
    tpu.vector_store %arg10[%c6_175, %c7_176, %c0_177, %c0_178], %199 {strides = array<i32>} : memref<9x9x2x128xf32, #tpu.memory_space<vmem>>, vector<1x1x2x128xf32>,
    %200 = vector.extract_strided_slice %29 {offsets = [0, 5376], sizes = [2, 128], strides = [1, 1]} : vector<2x6272xf32> to vector<2x128xf32>
    %c7_179 = arith.constant 7 : index
    %c1_180 = arith.constant 1 : index
    %c0_181 = arith.constant 0 : index
    %c0_182 = arith.constant 0 : index
    %201 = vector.load %arg10[%c7_179, %c1_180, %c0_181, %c0_182] : memref<9x9x2x128xf32, #tpu.memory_space<vmem>>, vector<1x1x2x128xf32>
    %202 = vector.shape_cast %201 : vector<1x1x2x128xf32> to vector<2x128xf32>
    %203 = vector.shape_cast %200 : vector<2x128xf32> to vector<1x1x2x128xf32>
    tpu.vector_store %arg10[%c7_179, %c1_180, %c0_181, %c0_182], %203 {strides = array<i32>} : memref<9x9x2x128xf32, #tpu.memory_space<vmem>>, vector<1x1x2x128xf32>,
    %204 = vector.extract_strided_slice %29 {offsets = [0, 5504], sizes = [2, 128], strides = [1, 1]} : vector<2x6272xf32> to vector<2x128xf32>
    %c7_183 = arith.constant 7 : index
    %c2_184 = arith.constant 2 : index
    %c0_185 = arith.constant 0 : index
    %c0_186 = arith.constant 0 : index
    %205 = vector.load %arg10[%c7_183, %c2_184, %c0_185, %c0_186] : memref<9x9x2x128xf32, #tpu.memory_space<vmem>>, vector<1x1x2x128xf32>
    %206 = vector.shape_cast %205 : vector<1x1x2x128xf32> to vector<2x128xf32>
    %207 = vector.shape_cast %204 : vector<2x128xf32> to vector<1x1x2x128xf32>
    tpu.vector_store %arg10[%c7_183, %c2_184, %c0_185, %c0_186], %207 {strides = array<i32>} : memref<9x9x2x128xf32, #tpu.memory_space<vmem>>, vector<1x1x2x128xf32>,
    %208 = vector.extract_strided_slice %29 {offsets = [0, 5632], sizes = [2, 128], strides = [1, 1]} : vector<2x6272xf32> to vector<2x128xf32>
    %c7_187 = arith.constant 7 : index
    %c3_188 = arith.constant 3 : index
    %c0_189 = arith.constant 0 : index
    %c0_190 = arith.constant 0 : index
    %209 = vector.load %arg10[%c7_187, %c3_188, %c0_189, %c0_190] : memref<9x9x2x128xf32, #tpu.memory_space<vmem>>, vector<1x1x2x128xf32>
    %210 = vector.shape_cast %209 : vector<1x1x2x128xf32> to vector<2x128xf32>
    %211 = vector.shape_cast %208 : vector<2x128xf32> to vector<1x1x2x128xf32>
    tpu.vector_store %arg10[%c7_187, %c3_188, %c0_189, %c0_190], %211 {strides = array<i32>} : memref<9x9x2x128xf32, #tpu.memory_space<vmem>>, vector<1x1x2x128xf32>,
    %212 = vector.extract_strided_slice %29 {offsets = [0, 5760], sizes = [2, 128], strides = [1, 1]} : vector<2x6272xf32> to vector<2x128xf32>
    %c7_191 = arith.constant 7 : index
    %c4_192 = arith.constant 4 : index
    %c0_193 = arith.constant 0 : index
    %c0_194 = arith.constant 0 : index
    %213 = vector.load %arg10[%c7_191, %c4_192, %c0_193, %c0_194] : memref<9x9x2x128xf32, #tpu.memory_space<vmem>>, vector<1x1x2x128xf32>
    %214 = vector.shape_cast %213 : vector<1x1x2x128xf32> to vector<2x128xf32>
    %215 = vector.shape_cast %212 : vector<2x128xf32> to vector<1x1x2x128xf32>
    tpu.vector_store %arg10[%c7_191, %c4_192, %c0_193, %c0_194], %215 {strides = array<i32>} : memref<9x9x2x128xf32, #tpu.memory_space<vmem>>, vector<1x1x2x128xf32>,
    %216 = vector.extract_strided_slice %29 {offsets = [0, 5888], sizes = [2, 128], strides = [1, 1]} : vector<2x6272xf32> to vector<2x128xf32>
    %c7_195 = arith.constant 7 : index
    %c5_196 = arith.constant 5 : index
    %c0_197 = arith.constant 0 : index
    %c0_198 = arith.constant 0 : index
    %217 = vector.load %arg10[%c7_195, %c5_196, %c0_197, %c0_198] : memref<9x9x2x128xf32, #tpu.memory_space<vmem>>, vector<1x1x2x128xf32>
    %218 = vector.shape_cast %217 : vector<1x1x2x128xf32> to vector<2x128xf32>
    %219 = vector.shape_cast %216 : vector<2x128xf32> to vector<1x1x2x128xf32>
    tpu.vector_store %arg10[%c7_195, %c5_196, %c0_197, %c0_198], %219 {strides = array<i32>} : memref<9x9x2x128xf32, #tpu.memory_space<vmem>>, vector<1x1x2x128xf32>,
    %220 = vector.extract_strided_slice %29 {offsets = [0, 6016], sizes = [2, 128], strides = [1, 1]} : vector<2x6272xf32> to vector<2x128xf32>
    %c7_199 = arith.constant 7 : index
    %c6_200 = arith.constant 6 : index
    %c0_201 = arith.constant 0 : index
    %c0_202 = arith.constant 0 : index
    %221 = vector.load %arg10[%c7_199, %c6_200, %c0_201, %c0_202] : memref<9x9x2x128xf32, #tpu.memory_space<vmem>>, vector<1x1x2x128xf32>
    %222 = vector.shape_cast %221 : vector<1x1x2x128xf32> to vector<2x128xf32>
    %223 = vector.shape_cast %220 : vector<2x128xf32> to vector<1x1x2x128xf32>
    tpu.vector_store %arg10[%c7_199, %c6_200, %c0_201, %c0_202], %223 {strides = array<i32>} : memref<9x9x2x128xf32, #tpu.memory_space<vmem>>, vector<1x1x2x128xf32>,
    %224 = vector.extract_strided_slice %29 {offsets = [0, 6144], sizes = [2, 128], strides = [1, 1]} : vector<2x6272xf32> to vector<2x128xf32>
    %c7_203 = arith.constant 7 : index
    %c7_204 = arith.constant 7 : index
    %c0_205 = arith.constant 0 : index
    %c0_206 = arith.constant 0 : index
    %225 = vector.load %arg10[%c7_203, %c7_204, %c0_205, %c0_206] : memref<9x9x2x128xf32, #tpu.memory_space<vmem>>, vector<1x1x2x128xf32>
    %226 = vector.shape_cast %225 : vector<1x1x2x128xf32> to vector<2x128xf32>
    %227 = vector.shape_cast %224 : vector<2x128xf32> to vector<1x1x2x128xf32>
    tpu.vector_store %arg10[%c7_203, %c7_204, %c0_205, %c0_206], %227 {strides = array<i32>} : memref<9x9x2x128xf32, #tpu.memory_space<vmem>>, vector<1x1x2x128xf32>,
    %c0_207 = arith.constant 0 : index
    %c0_208 = arith.constant 0 : index
    %c0_209 = arith.constant 0 : index
    %c0_210 = arith.constant 0 : index
    %228 = vector.load %arg10[%c0_207, %c0_208, %c0_209, %c0_210] : memref<9x9x2x128xf32, #tpu.memory_space<vmem>>, vector<9x9x2x128xf32>
    %229 = vector.extract_strided_slice %228 {offsets = [0, 0, 0, 0], sizes = [7, 7, 2, 128], strides = [1, 1, 1, 1]} : vector<9x9x2x128xf32> to vector<7x7x2x128xf32>
    %230 = vector.shape_cast %229 : vector<7x7x2x128xf32> to vector<98x128xf32>
    %231 = arith.truncf %230 : vector<98x128xf32> to vector<98x128xbf16>
    %232 = vector.extract_strided_slice %228 {offsets = [0, 1, 0, 0], sizes = [7, 7, 2, 128], strides = [1, 1, 1, 1]} : vector<9x9x2x128xf32> to vector<7x7x2x128xf32>
    %233 = vector.shape_cast %232 : vector<7x7x2x128xf32> to vector<98x128xf32>
    %234 = arith.truncf %233 : vector<98x128xf32> to vector<98x128xbf16>
    %235 = vector.extract_strided_slice %228 {offsets = [0, 2, 0, 0], sizes = [7, 7, 2, 128], strides = [1, 1, 1, 1]} : vector<9x9x2x128xf32> to vector<7x7x2x128xf32>
    %236 = vector.shape_cast %235 : vector<7x7x2x128xf32> to vector<98x128xf32>
    %237 = arith.truncf %236 : vector<98x128xf32> to vector<98x128xbf16>
    %238 = vector.extract_strided_slice %228 {offsets = [1, 0, 0, 0], sizes = [7, 7, 2, 128], strides = [1, 1, 1, 1]} : vector<9x9x2x128xf32> to vector<7x7x2x128xf32>
    %239 = vector.shape_cast %238 : vector<7x7x2x128xf32> to vector<98x128xf32>
    %240 = arith.truncf %239 : vector<98x128xf32> to vector<98x128xbf16>
    %241 = vector.extract_strided_slice %228 {offsets = [1, 1, 0, 0], sizes = [7, 7, 2, 128], strides = [1, 1, 1, 1]} : vector<9x9x2x128xf32> to vector<7x7x2x128xf32>
    %242 = vector.shape_cast %241 : vector<7x7x2x128xf32> to vector<98x128xf32>
    %243 = arith.truncf %242 : vector<98x128xf32> to vector<98x128xbf16>
    %244 = vector.extract_strided_slice %228 {offsets = [1, 2, 0, 0], sizes = [7, 7, 2, 128], strides = [1, 1, 1, 1]} : vector<9x9x2x128xf32> to vector<7x7x2x128xf32>
    %245 = vector.shape_cast %244 : vector<7x7x2x128xf32> to vector<98x128xf32>
    %246 = arith.truncf %245 : vector<98x128xf32> to vector<98x128xbf16>
    %247 = vector.extract_strided_slice %228 {offsets = [2, 0, 0, 0], sizes = [7, 7, 2, 128], strides = [1, 1, 1, 1]} : vector<9x9x2x128xf32> to vector<7x7x2x128xf32>
    %248 = vector.shape_cast %247 : vector<7x7x2x128xf32> to vector<98x128xf32>
    %249 = arith.truncf %248 : vector<98x128xf32> to vector<98x128xbf16>
    %250 = vector.extract_strided_slice %228 {offsets = [2, 1, 0, 0], sizes = [7, 7, 2, 128], strides = [1, 1, 1, 1]} : vector<9x9x2x128xf32> to vector<7x7x2x128xf32>
    %251 = vector.shape_cast %250 : vector<7x7x2x128xf32> to vector<98x128xf32>
    %252 = arith.truncf %251 : vector<98x128xf32> to vector<98x128xbf16>
    %253 = vector.extract_strided_slice %228 {offsets = [2, 2, 0, 0], sizes = [7, 7, 2, 128], strides = [1, 1, 1, 1]} : vector<9x9x2x128xf32> to vector<7x7x2x128xf32>
    %254 = vector.shape_cast %253 : vector<7x7x2x128xf32> to vector<98x128xf32>
    %255 = arith.truncf %254 : vector<98x128xf32> to vector<98x128xbf16>
    %256 = tpu.concatenate %231, %234, %237, %240, %243, %246, %249, %252, %255 in 1 : vector<98x128xbf16>, vector<98x128xbf16>, vector<98x128xbf16>, vector<98x128xbf16>, vector<98x128xbf16>, vector<98x128xbf16>, vector<98x128xbf16>, vector<98x128xbf16>, vector<98x128xbf16> -> vector<98x1152xbf16>
    %c0_211 = arith.constant 0 : index
    %c0_212 = arith.constant 0 : index
    %257 = vector.load %arg5[%c0_211, %c0_212] : memref<1152x256xbf16, #tpu.memory_space<vmem>>, vector<1152x256xbf16>
    %cst_213 = arith.constant dense<0.000000e+00> : vector<98x256xf32>
    %258 = tpu.matmul %256, %257, %cst_213 {dimension_numbers = #tpu.dot_dimension_numbers<[1], [0], [0], [1], [0, 0, 1, 1], [], []>} : vector<98x1152xbf16>, vector<1152x256xbf16>, vector<98x256xf32> -> vector<98x256xf32>
    %cst_214 = arith.constant dense<0.000000e+00> : vector<256xf32>
    %259 = vector.multi_reduction <add>, %258, %cst_214 [0] : vector<98x256xf32> to vector<256xf32>
    %260 = vector.shape_cast %259 : vector<256xf32> to vector<1x256xf32>
    %261 = arith.mulf %258, %258 : vector<98x256xf32>
    %cst_215 = arith.constant dense<0.000000e+00> : vector<256xf32>
    %262 = vector.multi_reduction <add>, %261, %cst_215 [0] : vector<98x256xf32> to vector<256xf32>
    %263 = vector.shape_cast %262 : vector<256xf32> to vector<1x256xf32>
    %264 = vector.extract_strided_slice %260 {offsets = [0, 0], sizes = [1, 64], strides = [1, 1]} : vector<1x256xf32> to vector<1x64xf32>
    %265 = vector.extract_strided_slice %260 {offsets = [0, 64], sizes = [1, 64], strides = [1, 1]} : vector<1x256xf32> to vector<1x64xf32>
    %266 = arith.addf %264, %265 : vector<1x64xf32>
    %267 = vector.extract_strided_slice %260 {offsets = [0, 128], sizes = [1, 64], strides = [1, 1]} : vector<1x256xf32> to vector<1x64xf32>
    %268 = arith.addf %266, %267 : vector<1x64xf32>
    %269 = vector.extract_strided_slice %260 {offsets = [0, 192], sizes = [1, 64], strides = [1, 1]} : vector<1x256xf32> to vector<1x64xf32>
    %270 = arith.addf %268, %269 : vector<1x64xf32>
    %271 = vector.extract_strided_slice %263 {offsets = [0, 0], sizes = [1, 64], strides = [1, 1]} : vector<1x256xf32> to vector<1x64xf32>
    %272 = vector.extract_strided_slice %263 {offsets = [0, 64], sizes = [1, 64], strides = [1, 1]} : vector<1x256xf32> to vector<1x64xf32>
    %273 = arith.addf %271, %272 : vector<1x64xf32>
    %274 = vector.extract_strided_slice %263 {offsets = [0, 128], sizes = [1, 64], strides = [1, 1]} : vector<1x256xf32> to vector<1x64xf32>
    %275 = arith.addf %273, %274 : vector<1x64xf32>
    %276 = vector.extract_strided_slice %263 {offsets = [0, 192], sizes = [1, 64], strides = [1, 1]} : vector<1x256xf32> to vector<1x64xf32>
    %277 = arith.addf %275, %276 : vector<1x64xf32>
    %cst_216 = arith.constant 3.920000e+02 : f32
    %278 = vector.broadcast %cst_216 : f32 to vector<1x64xf32>
    %279 = arith.divf %270, %278 : vector<1x64xf32>
    %cst_217 = arith.constant 3.920000e+02 : f32
    %280 = vector.broadcast %cst_217 : f32 to vector<1x64xf32>
    %281 = arith.divf %277, %280 : vector<1x64xf32>
    %282 = arith.mulf %279, %279 : vector<1x64xf32>
    %283 = arith.subf %281, %282 : vector<1x64xf32>
    %cst_218 = arith.constant 9.99999974E-6 : f32
    %284 = vector.broadcast %cst_218 : f32 to vector<1x64xf32>
    %285 = arith.addf %283, %284 : vector<1x64xf32>
    %286 = math.rsqrt %285 : vector<1x64xf32>
    %c0_219 = arith.constant 0 : index
    %c0_220 = arith.constant 0 : index
    %287 = vector.load %arg6[%c0_219, %c0_220] : memref<1x64xf32, #tpu.memory_space<vmem>>, vector<1x64xf32>
    %288 = arith.mulf %286, %287 : vector<1x64xf32>
    %c0_221 = arith.constant 0 : index
    %c0_222 = arith.constant 0 : index
    %289 = vector.load %arg7[%c0_221, %c0_222] : memref<1x64xf32, #tpu.memory_space<vmem>>, vector<1x64xf32>
    %290 = arith.mulf %279, %288 : vector<1x64xf32>
    %291 = arith.subf %289, %290 : vector<1x64xf32>
    %292 = tpu.concatenate %288, %288, %288, %288 in 1 : vector<1x64xf32>, vector<1x64xf32>, vector<1x64xf32>, vector<1x64xf32> -> vector<1x256xf32>
    %293 = tpu.concatenate %291, %291, %291, %291 in 1 : vector<1x64xf32>, vector<1x64xf32>, vector<1x64xf32>, vector<1x64xf32> -> vector<1x256xf32>
    %294 = vector.broadcast %292 : vector<1x256xf32> to vector<98x256xf32>
    %295 = arith.mulf %258, %294 : vector<98x256xf32>
    %296 = vector.broadcast %293 : vector<1x256xf32> to vector<98x256xf32>
    %297 = arith.addf %295, %296 : vector<98x256xf32>
    %cst_223 = arith.constant 0.000000e+00 : f32
    %298 = vector.broadcast %cst_223 : f32 to vector<98x256xf32>
    %299 = arith.maximumf %297, %298 : vector<98x256xf32>
    %cst_224 = arith.constant 0.000000e+00 : f32
    %300 = vector.broadcast %cst_224 : f32 to vector<9x9x2x256xf32>
    %c0_225 = arith.constant 0 : index
    %c0_226 = arith.constant 0 : index
    %c0_227 = arith.constant 0 : index
    %c0_228 = arith.constant 0 : index
    %301 = vector.load %arg11[%c0_225, %c0_226, %c0_227, %c0_228] : memref<9x9x2x256xf32, #tpu.memory_space<vmem>>, vector<9x9x2x256xf32>
    tpu.vector_store %arg11[%c0_225, %c0_226, %c0_227, %c0_228], %300 {strides = array<i32>} : memref<9x9x2x256xf32, #tpu.memory_space<vmem>>, vector<9x9x2x256xf32>,
    %302 = vector.extract_strided_slice %299 {offsets = [0, 0], sizes = [2, 256], strides = [1, 1]} : vector<98x256xf32> to vector<2x256xf32>
    %c1_229 = arith.constant 1 : index
    %c1_230 = arith.constant 1 : index
    %c0_231 = arith.constant 0 : index
    %c0_232 = arith.constant 0 : index
    %303 = vector.load %arg11[%c1_229, %c1_230, %c0_231, %c0_232] : memref<9x9x2x256xf32, #tpu.memory_space<vmem>>, vector<1x1x2x256xf32>
    %304 = vector.shape_cast %303 : vector<1x1x2x256xf32> to vector<2x256xf32>
    %305 = vector.shape_cast %302 : vector<2x256xf32> to vector<1x1x2x256xf32>
    tpu.vector_store %arg11[%c1_229, %c1_230, %c0_231, %c0_232], %305 {strides = array<i32>} : memref<9x9x2x256xf32, #tpu.memory_space<vmem>>, vector<1x1x2x256xf32>,
    %306 = vector.extract_strided_slice %299 {offsets = [2, 0], sizes = [2, 256], strides = [1, 1]} : vector<98x256xf32> to vector<2x256xf32>
    %c1_233 = arith.constant 1 : index
    %c2_234 = arith.constant 2 : index
    %c0_235 = arith.constant 0 : index
    %c0_236 = arith.constant 0 : index
    %307 = vector.load %arg11[%c1_233, %c2_234, %c0_235, %c0_236] : memref<9x9x2x256xf32, #tpu.memory_space<vmem>>, vector<1x1x2x256xf32>
    %308 = vector.shape_cast %307 : vector<1x1x2x256xf32> to vector<2x256xf32>
    %309 = vector.shape_cast %306 : vector<2x256xf32> to vector<1x1x2x256xf32>
    tpu.vector_store %arg11[%c1_233, %c2_234, %c0_235, %c0_236], %309 {strides = array<i32>} : memref<9x9x2x256xf32, #tpu.memory_space<vmem>>, vector<1x1x2x256xf32>,
    %310 = vector.extract_strided_slice %299 {offsets = [4, 0], sizes = [2, 256], strides = [1, 1]} : vector<98x256xf32> to vector<2x256xf32>
    %c1_237 = arith.constant 1 : index
    %c3_238 = arith.constant 3 : index
    %c0_239 = arith.constant 0 : index
    %c0_240 = arith.constant 0 : index
    %311 = vector.load %arg11[%c1_237, %c3_238, %c0_239, %c0_240] : memref<9x9x2x256xf32, #tpu.memory_space<vmem>>, vector<1x1x2x256xf32>
    %312 = vector.shape_cast %311 : vector<1x1x2x256xf32> to vector<2x256xf32>
    %313 = vector.shape_cast %310 : vector<2x256xf32> to vector<1x1x2x256xf32>
    tpu.vector_store %arg11[%c1_237, %c3_238, %c0_239, %c0_240], %313 {strides = array<i32>} : memref<9x9x2x256xf32, #tpu.memory_space<vmem>>, vector<1x1x2x256xf32>,
    %314 = vector.extract_strided_slice %299 {offsets = [6, 0], sizes = [2, 256], strides = [1, 1]} : vector<98x256xf32> to vector<2x256xf32>
    %c1_241 = arith.constant 1 : index
    %c4_242 = arith.constant 4 : index
    %c0_243 = arith.constant 0 : index
    %c0_244 = arith.constant 0 : index
    %315 = vector.load %arg11[%c1_241, %c4_242, %c0_243, %c0_244] : memref<9x9x2x256xf32, #tpu.memory_space<vmem>>, vector<1x1x2x256xf32>
    %316 = vector.shape_cast %315 : vector<1x1x2x256xf32> to vector<2x256xf32>
    %317 = vector.shape_cast %314 : vector<2x256xf32> to vector<1x1x2x256xf32>
    tpu.vector_store %arg11[%c1_241, %c4_242, %c0_243, %c0_244], %317 {strides = array<i32>} : memref<9x9x2x256xf32, #tpu.memory_space<vmem>>, vector<1x1x2x256xf32>,
    %318 = vector.extract_strided_slice %299 {offsets = [8, 0], sizes = [2, 256], strides = [1, 1]} : vector<98x256xf32> to vector<2x256xf32>
    %c1_245 = arith.constant 1 : index
    %c5_246 = arith.constant 5 : index
    %c0_247 = arith.constant 0 : index
    %c0_248 = arith.constant 0 : index
    %319 = vector.load %arg11[%c1_245, %c5_246, %c0_247, %c0_248] : memref<9x9x2x256xf32, #tpu.memory_space<vmem>>, vector<1x1x2x256xf32>
    %320 = vector.shape_cast %319 : vector<1x1x2x256xf32> to vector<2x256xf32>
    %321 = vector.shape_cast %318 : vector<2x256xf32> to vector<1x1x2x256xf32>
    tpu.vector_store %arg11[%c1_245, %c5_246, %c0_247, %c0_248], %321 {strides = array<i32>} : memref<9x9x2x256xf32, #tpu.memory_space<vmem>>, vector<1x1x2x256xf32>,
    %322 = vector.extract_strided_slice %299 {offsets = [10, 0], sizes = [2, 256], strides = [1, 1]} : vector<98x256xf32> to vector<2x256xf32>
    %c1_249 = arith.constant 1 : index
    %c6_250 = arith.constant 6 : index
    %c0_251 = arith.constant 0 : index
    %c0_252 = arith.constant 0 : index
    %323 = vector.load %arg11[%c1_249, %c6_250, %c0_251, %c0_252] : memref<9x9x2x256xf32, #tpu.memory_space<vmem>>, vector<1x1x2x256xf32>
    %324 = vector.shape_cast %323 : vector<1x1x2x256xf32> to vector<2x256xf32>
    %325 = vector.shape_cast %322 : vector<2x256xf32> to vector<1x1x2x256xf32>
    tpu.vector_store %arg11[%c1_249, %c6_250, %c0_251, %c0_252], %325 {strides = array<i32>} : memref<9x9x2x256xf32, #tpu.memory_space<vmem>>, vector<1x1x2x256xf32>,
    %326 = vector.extract_strided_slice %299 {offsets = [12, 0], sizes = [2, 256], strides = [1, 1]} : vector<98x256xf32> to vector<2x256xf32>
    %c1_253 = arith.constant 1 : index
    %c7_254 = arith.constant 7 : index
    %c0_255 = arith.constant 0 : index
    %c0_256 = arith.constant 0 : index
    %327 = vector.load %arg11[%c1_253, %c7_254, %c0_255, %c0_256] : memref<9x9x2x256xf32, #tpu.memory_space<vmem>>, vector<1x1x2x256xf32>
    %328 = vector.shape_cast %327 : vector<1x1x2x256xf32> to vector<2x256xf32>
    %329 = vector.shape_cast %326 : vector<2x256xf32> to vector<1x1x2x256xf32>
    tpu.vector_store %arg11[%c1_253, %c7_254, %c0_255, %c0_256], %329 {strides = array<i32>} : memref<9x9x2x256xf32, #tpu.memory_space<vmem>>, vector<1x1x2x256xf32>,
    %330 = vector.extract_strided_slice %299 {offsets = [14, 0], sizes = [2, 256], strides = [1, 1]} : vector<98x256xf32> to vector<2x256xf32>
    %c2_257 = arith.constant 2 : index
    %c1_258 = arith.constant 1 : index
    %c0_259 = arith.constant 0 : index
    %c0_260 = arith.constant 0 : index
    %331 = vector.load %arg11[%c2_257, %c1_258, %c0_259, %c0_260] : memref<9x9x2x256xf32, #tpu.memory_space<vmem>>, vector<1x1x2x256xf32>
    %332 = vector.shape_cast %331 : vector<1x1x2x256xf32> to vector<2x256xf32>
    %333 = vector.shape_cast %330 : vector<2x256xf32> to vector<1x1x2x256xf32>
    tpu.vector_store %arg11[%c2_257, %c1_258, %c0_259, %c0_260], %333 {strides = array<i32>} : memref<9x9x2x256xf32, #tpu.memory_space<vmem>>, vector<1x1x2x256xf32>,
    %334 = vector.extract_strided_slice %299 {offsets = [16, 0], sizes = [2, 256], strides = [1, 1]} : vector<98x256xf32> to vector<2x256xf32>
    %c2_261 = arith.constant 2 : index
    %c2_262 = arith.constant 2 : index
    %c0_263 = arith.constant 0 : index
    %c0_264 = arith.constant 0 : index
    %335 = vector.load %arg11[%c2_261, %c2_262, %c0_263, %c0_264] : memref<9x9x2x256xf32, #tpu.memory_space<vmem>>, vector<1x1x2x256xf32>
    %336 = vector.shape_cast %335 : vector<1x1x2x256xf32> to vector<2x256xf32>
    %337 = vector.shape_cast %334 : vector<2x256xf32> to vector<1x1x2x256xf32>
    tpu.vector_store %arg11[%c2_261, %c2_262, %c0_263, %c0_264], %337 {strides = array<i32>} : memref<9x9x2x256xf32, #tpu.memory_space<vmem>>, vector<1x1x2x256xf32>,
    %338 = vector.extract_strided_slice %299 {offsets = [18, 0], sizes = [2, 256], strides = [1, 1]} : vector<98x256xf32> to vector<2x256xf32>
    %c2_265 = arith.constant 2 : index
    %c3_266 = arith.constant 3 : index
    %c0_267 = arith.constant 0 : index
    %c0_268 = arith.constant 0 : index
    %339 = vector.load %arg11[%c2_265, %c3_266, %c0_267, %c0_268] : memref<9x9x2x256xf32, #tpu.memory_space<vmem>>, vector<1x1x2x256xf32>
    %340 = vector.shape_cast %339 : vector<1x1x2x256xf32> to vector<2x256xf32>
    %341 = vector.shape_cast %338 : vector<2x256xf32> to vector<1x1x2x256xf32>
    tpu.vector_store %arg11[%c2_265, %c3_266, %c0_267, %c0_268], %341 {strides = array<i32>} : memref<9x9x2x256xf32, #tpu.memory_space<vmem>>, vector<1x1x2x256xf32>,
    %342 = vector.extract_strided_slice %299 {offsets = [20, 0], sizes = [2, 256], strides = [1, 1]} : vector<98x256xf32> to vector<2x256xf32>
    %c2_269 = arith.constant 2 : index
    %c4_270 = arith.constant 4 : index
    %c0_271 = arith.constant 0 : index
    %c0_272 = arith.constant 0 : index
    %343 = vector.load %arg11[%c2_269, %c4_270, %c0_271, %c0_272] : memref<9x9x2x256xf32, #tpu.memory_space<vmem>>, vector<1x1x2x256xf32>
    %344 = vector.shape_cast %343 : vector<1x1x2x256xf32> to vector<2x256xf32>
    %345 = vector.shape_cast %342 : vector<2x256xf32> to vector<1x1x2x256xf32>
    tpu.vector_store %arg11[%c2_269, %c4_270, %c0_271, %c0_272], %345 {strides = array<i32>} : memref<9x9x2x256xf32, #tpu.memory_space<vmem>>, vector<1x1x2x256xf32>,
    %346 = vector.extract_strided_slice %299 {offsets = [22, 0], sizes = [2, 256], strides = [1, 1]} : vector<98x256xf32> to vector<2x256xf32>
    %c2_273 = arith.constant 2 : index
    %c5_274 = arith.constant 5 : index
    %c0_275 = arith.constant 0 : index
    %c0_276 = arith.constant 0 : index
    %347 = vector.load %arg11[%c2_273, %c5_274, %c0_275, %c0_276] : memref<9x9x2x256xf32, #tpu.memory_space<vmem>>, vector<1x1x2x256xf32>
    %348 = vector.shape_cast %347 : vector<1x1x2x256xf32> to vector<2x256xf32>
    %349 = vector.shape_cast %346 : vector<2x256xf32> to vector<1x1x2x256xf32>
    tpu.vector_store %arg11[%c2_273, %c5_274, %c0_275, %c0_276], %349 {strides = array<i32>} : memref<9x9x2x256xf32, #tpu.memory_space<vmem>>, vector<1x1x2x256xf32>,
    %350 = vector.extract_strided_slice %299 {offsets = [24, 0], sizes = [2, 256], strides = [1, 1]} : vector<98x256xf32> to vector<2x256xf32>
    %c2_277 = arith.constant 2 : index
    %c6_278 = arith.constant 6 : index
    %c0_279 = arith.constant 0 : index
    %c0_280 = arith.constant 0 : index
    %351 = vector.load %arg11[%c2_277, %c6_278, %c0_279, %c0_280] : memref<9x9x2x256xf32, #tpu.memory_space<vmem>>, vector<1x1x2x256xf32>
    %352 = vector.shape_cast %351 : vector<1x1x2x256xf32> to vector<2x256xf32>
    %353 = vector.shape_cast %350 : vector<2x256xf32> to vector<1x1x2x256xf32>
    tpu.vector_store %arg11[%c2_277, %c6_278, %c0_279, %c0_280], %353 {strides = array<i32>} : memref<9x9x2x256xf32, #tpu.memory_space<vmem>>, vector<1x1x2x256xf32>,
    %354 = vector.extract_strided_slice %299 {offsets = [26, 0], sizes = [2, 256], strides = [1, 1]} : vector<98x256xf32> to vector<2x256xf32>
    %c2_281 = arith.constant 2 : index
    %c7_282 = arith.constant 7 : index
    %c0_283 = arith.constant 0 : index
    %c0_284 = arith.constant 0 : index
    %355 = vector.load %arg11[%c2_281, %c7_282, %c0_283, %c0_284] : memref<9x9x2x256xf32, #tpu.memory_space<vmem>>, vector<1x1x2x256xf32>
    %356 = vector.shape_cast %355 : vector<1x1x2x256xf32> to vector<2x256xf32>
    %357 = vector.shape_cast %354 : vector<2x256xf32> to vector<1x1x2x256xf32>
    tpu.vector_store %arg11[%c2_281, %c7_282, %c0_283, %c0_284], %357 {strides = array<i32>} : memref<9x9x2x256xf32, #tpu.memory_space<vmem>>, vector<1x1x2x256xf32>,
    %358 = vector.extract_strided_slice %299 {offsets = [28, 0], sizes = [2, 256], strides = [1, 1]} : vector<98x256xf32> to vector<2x256xf32>
    %c3_285 = arith.constant 3 : index
    %c1_286 = arith.constant 1 : index
    %c0_287 = arith.constant 0 : index
    %c0_288 = arith.constant 0 : index
    %359 = vector.load %arg11[%c3_285, %c1_286, %c0_287, %c0_288] : memref<9x9x2x256xf32, #tpu.memory_space<vmem>>, vector<1x1x2x256xf32>
    %360 = vector.shape_cast %359 : vector<1x1x2x256xf32> to vector<2x256xf32>
    %361 = vector.shape_cast %358 : vector<2x256xf32> to vector<1x1x2x256xf32>
    tpu.vector_store %arg11[%c3_285, %c1_286, %c0_287, %c0_288], %361 {strides = array<i32>} : memref<9x9x2x256xf32, #tpu.memory_space<vmem>>, vector<1x1x2x256xf32>,
    %362 = vector.extract_strided_slice %299 {offsets = [30, 0], sizes = [2, 256], strides = [1, 1]} : vector<98x256xf32> to vector<2x256xf32>
    %c3_289 = arith.constant 3 : index
    %c2_290 = arith.constant 2 : index
    %c0_291 = arith.constant 0 : index
    %c0_292 = arith.constant 0 : index
    %363 = vector.load %arg11[%c3_289, %c2_290, %c0_291, %c0_292] : memref<9x9x2x256xf32, #tpu.memory_space<vmem>>, vector<1x1x2x256xf32>
    %364 = vector.shape_cast %363 : vector<1x1x2x256xf32> to vector<2x256xf32>
    %365 = vector.shape_cast %362 : vector<2x256xf32> to vector<1x1x2x256xf32>
    tpu.vector_store %arg11[%c3_289, %c2_290, %c0_291, %c0_292], %365 {strides = array<i32>} : memref<9x9x2x256xf32, #tpu.memory_space<vmem>>, vector<1x1x2x256xf32>,
    %366 = vector.extract_strided_slice %299 {offsets = [32, 0], sizes = [2, 256], strides = [1, 1]} : vector<98x256xf32> to vector<2x256xf32>
    %c3_293 = arith.constant 3 : index
    %c3_294 = arith.constant 3 : index
    %c0_295 = arith.constant 0 : index
    %c0_296 = arith.constant 0 : index
    %367 = vector.load %arg11[%c3_293, %c3_294, %c0_295, %c0_296] : memref<9x9x2x256xf32, #tpu.memory_space<vmem>>, vector<1x1x2x256xf32>
    %368 = vector.shape_cast %367 : vector<1x1x2x256xf32> to vector<2x256xf32>
    %369 = vector.shape_cast %366 : vector<2x256xf32> to vector<1x1x2x256xf32>
    tpu.vector_store %arg11[%c3_293, %c3_294, %c0_295, %c0_296], %369 {strides = array<i32>} : memref<9x9x2x256xf32, #tpu.memory_space<vmem>>, vector<1x1x2x256xf32>,
    %370 = vector.extract_strided_slice %299 {offsets = [34, 0], sizes = [2, 256], strides = [1, 1]} : vector<98x256xf32> to vector<2x256xf32>
    %c3_297 = arith.constant 3 : index
    %c4_298 = arith.constant 4 : index
    %c0_299 = arith.constant 0 : index
    %c0_300 = arith.constant 0 : index
    %371 = vector.load %arg11[%c3_297, %c4_298, %c0_299, %c0_300] : memref<9x9x2x256xf32, #tpu.memory_space<vmem>>, vector<1x1x2x256xf32>
    %372 = vector.shape_cast %371 : vector<1x1x2x256xf32> to vector<2x256xf32>
    %373 = vector.shape_cast %370 : vector<2x256xf32> to vector<1x1x2x256xf32>
    tpu.vector_store %arg11[%c3_297, %c4_298, %c0_299, %c0_300], %373 {strides = array<i32>} : memref<9x9x2x256xf32, #tpu.memory_space<vmem>>, vector<1x1x2x256xf32>,
    %374 = vector.extract_strided_slice %299 {offsets = [36, 0], sizes = [2, 256], strides = [1, 1]} : vector<98x256xf32> to vector<2x256xf32>
    %c3_301 = arith.constant 3 : index
    %c5_302 = arith.constant 5 : index
    %c0_303 = arith.constant 0 : index
    %c0_304 = arith.constant 0 : index
    %375 = vector.load %arg11[%c3_301, %c5_302, %c0_303, %c0_304] : memref<9x9x2x256xf32, #tpu.memory_space<vmem>>, vector<1x1x2x256xf32>
    %376 = vector.shape_cast %375 : vector<1x1x2x256xf32> to vector<2x256xf32>
    %377 = vector.shape_cast %374 : vector<2x256xf32> to vector<1x1x2x256xf32>
    tpu.vector_store %arg11[%c3_301, %c5_302, %c0_303, %c0_304], %377 {strides = array<i32>} : memref<9x9x2x256xf32, #tpu.memory_space<vmem>>, vector<1x1x2x256xf32>,
    %378 = vector.extract_strided_slice %299 {offsets = [38, 0], sizes = [2, 256], strides = [1, 1]} : vector<98x256xf32> to vector<2x256xf32>
    %c3_305 = arith.constant 3 : index
    %c6_306 = arith.constant 6 : index
    %c0_307 = arith.constant 0 : index
    %c0_308 = arith.constant 0 : index
    %379 = vector.load %arg11[%c3_305, %c6_306, %c0_307, %c0_308] : memref<9x9x2x256xf32, #tpu.memory_space<vmem>>, vector<1x1x2x256xf32>
    %380 = vector.shape_cast %379 : vector<1x1x2x256xf32> to vector<2x256xf32>
    %381 = vector.shape_cast %378 : vector<2x256xf32> to vector<1x1x2x256xf32>
    tpu.vector_store %arg11[%c3_305, %c6_306, %c0_307, %c0_308], %381 {strides = array<i32>} : memref<9x9x2x256xf32, #tpu.memory_space<vmem>>, vector<1x1x2x256xf32>,
    %382 = vector.extract_strided_slice %299 {offsets = [40, 0], sizes = [2, 256], strides = [1, 1]} : vector<98x256xf32> to vector<2x256xf32>
    %c3_309 = arith.constant 3 : index
    %c7_310 = arith.constant 7 : index
    %c0_311 = arith.constant 0 : index
    %c0_312 = arith.constant 0 : index
    %383 = vector.load %arg11[%c3_309, %c7_310, %c0_311, %c0_312] : memref<9x9x2x256xf32, #tpu.memory_space<vmem>>, vector<1x1x2x256xf32>
    %384 = vector.shape_cast %383 : vector<1x1x2x256xf32> to vector<2x256xf32>
    %385 = vector.shape_cast %382 : vector<2x256xf32> to vector<1x1x2x256xf32>
    tpu.vector_store %arg11[%c3_309, %c7_310, %c0_311, %c0_312], %385 {strides = array<i32>} : memref<9x9x2x256xf32, #tpu.memory_space<vmem>>, vector<1x1x2x256xf32>,
    %386 = vector.extract_strided_slice %299 {offsets = [42, 0], sizes = [2, 256], strides = [1, 1]} : vector<98x256xf32> to vector<2x256xf32>
    %c4_313 = arith.constant 4 : index
    %c1_314 = arith.constant 1 : index
    %c0_315 = arith.constant 0 : index
    %c0_316 = arith.constant 0 : index
    %387 = vector.load %arg11[%c4_313, %c1_314, %c0_315, %c0_316] : memref<9x9x2x256xf32, #tpu.memory_space<vmem>>, vector<1x1x2x256xf32>
    %388 = vector.shape_cast %387 : vector<1x1x2x256xf32> to vector<2x256xf32>
    %389 = vector.shape_cast %386 : vector<2x256xf32> to vector<1x1x2x256xf32>
    tpu.vector_store %arg11[%c4_313, %c1_314, %c0_315, %c0_316], %389 {strides = array<i32>} : memref<9x9x2x256xf32, #tpu.memory_space<vmem>>, vector<1x1x2x256xf32>,
    %390 = vector.extract_strided_slice %299 {offsets = [44, 0], sizes = [2, 256], strides = [1, 1]} : vector<98x256xf32> to vector<2x256xf32>
    %c4_317 = arith.constant 4 : index
    %c2_318 = arith.constant 2 : index
    %c0_319 = arith.constant 0 : index
    %c0_320 = arith.constant 0 : index
    %391 = vector.load %arg11[%c4_317, %c2_318, %c0_319, %c0_320] : memref<9x9x2x256xf32, #tpu.memory_space<vmem>>, vector<1x1x2x256xf32>
    %392 = vector.shape_cast %391 : vector<1x1x2x256xf32> to vector<2x256xf32>
    %393 = vector.shape_cast %390 : vector<2x256xf32> to vector<1x1x2x256xf32>
    tpu.vector_store %arg11[%c4_317, %c2_318, %c0_319, %c0_320], %393 {strides = array<i32>} : memref<9x9x2x256xf32, #tpu.memory_space<vmem>>, vector<1x1x2x256xf32>,
    %394 = vector.extract_strided_slice %299 {offsets = [46, 0], sizes = [2, 256], strides = [1, 1]} : vector<98x256xf32> to vector<2x256xf32>
    %c4_321 = arith.constant 4 : index
    %c3_322 = arith.constant 3 : index
    %c0_323 = arith.constant 0 : index
    %c0_324 = arith.constant 0 : index
    %395 = vector.load %arg11[%c4_321, %c3_322, %c0_323, %c0_324] : memref<9x9x2x256xf32, #tpu.memory_space<vmem>>, vector<1x1x2x256xf32>
    %396 = vector.shape_cast %395 : vector<1x1x2x256xf32> to vector<2x256xf32>
    %397 = vector.shape_cast %394 : vector<2x256xf32> to vector<1x1x2x256xf32>
    tpu.vector_store %arg11[%c4_321, %c3_322, %c0_323, %c0_324], %397 {strides = array<i32>} : memref<9x9x2x256xf32, #tpu.memory_space<vmem>>, vector<1x1x2x256xf32>,
    %398 = vector.extract_strided_slice %299 {offsets = [48, 0], sizes = [2, 256], strides = [1, 1]} : vector<98x256xf32> to vector<2x256xf32>
    %c4_325 = arith.constant 4 : index
    %c4_326 = arith.constant 4 : index
    %c0_327 = arith.constant 0 : index
    %c0_328 = arith.constant 0 : index
    %399 = vector.load %arg11[%c4_325, %c4_326, %c0_327, %c0_328] : memref<9x9x2x256xf32, #tpu.memory_space<vmem>>, vector<1x1x2x256xf32>
    %400 = vector.shape_cast %399 : vector<1x1x2x256xf32> to vector<2x256xf32>
    %401 = vector.shape_cast %398 : vector<2x256xf32> to vector<1x1x2x256xf32>
    tpu.vector_store %arg11[%c4_325, %c4_326, %c0_327, %c0_328], %401 {strides = array<i32>} : memref<9x9x2x256xf32, #tpu.memory_space<vmem>>, vector<1x1x2x256xf32>,
    %402 = vector.extract_strided_slice %299 {offsets = [50, 0], sizes = [2, 256], strides = [1, 1]} : vector<98x256xf32> to vector<2x256xf32>
    %c4_329 = arith.constant 4 : index
    %c5_330 = arith.constant 5 : index
    %c0_331 = arith.constant 0 : index
    %c0_332 = arith.constant 0 : index
    %403 = vector.load %arg11[%c4_329, %c5_330, %c0_331, %c0_332] : memref<9x9x2x256xf32, #tpu.memory_space<vmem>>, vector<1x1x2x256xf32>
    %404 = vector.shape_cast %403 : vector<1x1x2x256xf32> to vector<2x256xf32>
    %405 = vector.shape_cast %402 : vector<2x256xf32> to vector<1x1x2x256xf32>
    tpu.vector_store %arg11[%c4_329, %c5_330, %c0_331, %c0_332], %405 {strides = array<i32>} : memref<9x9x2x256xf32, #tpu.memory_space<vmem>>, vector<1x1x2x256xf32>,
    %406 = vector.extract_strided_slice %299 {offsets = [52, 0], sizes = [2, 256], strides = [1, 1]} : vector<98x256xf32> to vector<2x256xf32>
    %c4_333 = arith.constant 4 : index
    %c6_334 = arith.constant 6 : index
    %c0_335 = arith.constant 0 : index
    %c0_336 = arith.constant 0 : index
    %407 = vector.load %arg11[%c4_333, %c6_334, %c0_335, %c0_336] : memref<9x9x2x256xf32, #tpu.memory_space<vmem>>, vector<1x1x2x256xf32>
    %408 = vector.shape_cast %407 : vector<1x1x2x256xf32> to vector<2x256xf32>
    %409 = vector.shape_cast %406 : vector<2x256xf32> to vector<1x1x2x256xf32>
    tpu.vector_store %arg11[%c4_333, %c6_334, %c0_335, %c0_336], %409 {strides = array<i32>} : memref<9x9x2x256xf32, #tpu.memory_space<vmem>>, vector<1x1x2x256xf32>,
    %410 = vector.extract_strided_slice %299 {offsets = [54, 0], sizes = [2, 256], strides = [1, 1]} : vector<98x256xf32> to vector<2x256xf32>
    %c4_337 = arith.constant 4 : index
    %c7_338 = arith.constant 7 : index
    %c0_339 = arith.constant 0 : index
    %c0_340 = arith.constant 0 : index
    %411 = vector.load %arg11[%c4_337, %c7_338, %c0_339, %c0_340] : memref<9x9x2x256xf32, #tpu.memory_space<vmem>>, vector<1x1x2x256xf32>
    %412 = vector.shape_cast %411 : vector<1x1x2x256xf32> to vector<2x256xf32>
    %413 = vector.shape_cast %410 : vector<2x256xf32> to vector<1x1x2x256xf32>
    tpu.vector_store %arg11[%c4_337, %c7_338, %c0_339, %c0_340], %413 {strides = array<i32>} : memref<9x9x2x256xf32, #tpu.memory_space<vmem>>, vector<1x1x2x256xf32>,
    %414 = vector.extract_strided_slice %299 {offsets = [56, 0], sizes = [2, 256], strides = [1, 1]} : vector<98x256xf32> to vector<2x256xf32>
    %c5_341 = arith.constant 5 : index
    %c1_342 = arith.constant 1 : index
    %c0_343 = arith.constant 0 : index
    %c0_344 = arith.constant 0 : index
    %415 = vector.load %arg11[%c5_341, %c1_342, %c0_343, %c0_344] : memref<9x9x2x256xf32, #tpu.memory_space<vmem>>, vector<1x1x2x256xf32>
    %416 = vector.shape_cast %415 : vector<1x1x2x256xf32> to vector<2x256xf32>
    %417 = vector.shape_cast %414 : vector<2x256xf32> to vector<1x1x2x256xf32>
    tpu.vector_store %arg11[%c5_341, %c1_342, %c0_343, %c0_344], %417 {strides = array<i32>} : memref<9x9x2x256xf32, #tpu.memory_space<vmem>>, vector<1x1x2x256xf32>,
    %418 = vector.extract_strided_slice %299 {offsets = [58, 0], sizes = [2, 256], strides = [1, 1]} : vector<98x256xf32> to vector<2x256xf32>
    %c5_345 = arith.constant 5 : index
    %c2_346 = arith.constant 2 : index
    %c0_347 = arith.constant 0 : index
    %c0_348 = arith.constant 0 : index
    %419 = vector.load %arg11[%c5_345, %c2_346, %c0_347, %c0_348] : memref<9x9x2x256xf32, #tpu.memory_space<vmem>>, vector<1x1x2x256xf32>
    %420 = vector.shape_cast %419 : vector<1x1x2x256xf32> to vector<2x256xf32>
    %421 = vector.shape_cast %418 : vector<2x256xf32> to vector<1x1x2x256xf32>
    tpu.vector_store %arg11[%c5_345, %c2_346, %c0_347, %c0_348], %421 {strides = array<i32>} : memref<9x9x2x256xf32, #tpu.memory_space<vmem>>, vector<1x1x2x256xf32>,
    %422 = vector.extract_strided_slice %299 {offsets = [60, 0], sizes = [2, 256], strides = [1, 1]} : vector<98x256xf32> to vector<2x256xf32>
    %c5_349 = arith.constant 5 : index
    %c3_350 = arith.constant 3 : index
    %c0_351 = arith.constant 0 : index
    %c0_352 = arith.constant 0 : index
    %423 = vector.load %arg11[%c5_349, %c3_350, %c0_351, %c0_352] : memref<9x9x2x256xf32, #tpu.memory_space<vmem>>, vector<1x1x2x256xf32>
    %424 = vector.shape_cast %423 : vector<1x1x2x256xf32> to vector<2x256xf32>
    %425 = vector.shape_cast %422 : vector<2x256xf32> to vector<1x1x2x256xf32>
    tpu.vector_store %arg11[%c5_349, %c3_350, %c0_351, %c0_352], %425 {strides = array<i32>} : memref<9x9x2x256xf32, #tpu.memory_space<vmem>>, vector<1x1x2x256xf32>,
    %426 = vector.extract_strided_slice %299 {offsets = [62, 0], sizes = [2, 256], strides = [1, 1]} : vector<98x256xf32> to vector<2x256xf32>
    %c5_353 = arith.constant 5 : index
    %c4_354 = arith.constant 4 : index
    %c0_355 = arith.constant 0 : index
    %c0_356 = arith.constant 0 : index
    %427 = vector.load %arg11[%c5_353, %c4_354, %c0_355, %c0_356] : memref<9x9x2x256xf32, #tpu.memory_space<vmem>>, vector<1x1x2x256xf32>
    %428 = vector.shape_cast %427 : vector<1x1x2x256xf32> to vector<2x256xf32>
    %429 = vector.shape_cast %426 : vector<2x256xf32> to vector<1x1x2x256xf32>
    tpu.vector_store %arg11[%c5_353, %c4_354, %c0_355, %c0_356], %429 {strides = array<i32>} : memref<9x9x2x256xf32, #tpu.memory_space<vmem>>, vector<1x1x2x256xf32>,
    %430 = vector.extract_strided_slice %299 {offsets = [64, 0], sizes = [2, 256], strides = [1, 1]} : vector<98x256xf32> to vector<2x256xf32>
    %c5_357 = arith.constant 5 : index
    %c5_358 = arith.constant 5 : index
    %c0_359 = arith.constant 0 : index
    %c0_360 = arith.constant 0 : index
    %431 = vector.load %arg11[%c5_357, %c5_358, %c0_359, %c0_360] : memref<9x9x2x256xf32, #tpu.memory_space<vmem>>, vector<1x1x2x256xf32>
    %432 = vector.shape_cast %431 : vector<1x1x2x256xf32> to vector<2x256xf32>
    %433 = vector.shape_cast %430 : vector<2x256xf32> to vector<1x1x2x256xf32>
    tpu.vector_store %arg11[%c5_357, %c5_358, %c0_359, %c0_360], %433 {strides = array<i32>} : memref<9x9x2x256xf32, #tpu.memory_space<vmem>>, vector<1x1x2x256xf32>,
    %434 = vector.extract_strided_slice %299 {offsets = [66, 0], sizes = [2, 256], strides = [1, 1]} : vector<98x256xf32> to vector<2x256xf32>
    %c5_361 = arith.constant 5 : index
    %c6_362 = arith.constant 6 : index
    %c0_363 = arith.constant 0 : index
    %c0_364 = arith.constant 0 : index
    %435 = vector.load %arg11[%c5_361, %c6_362, %c0_363, %c0_364] : memref<9x9x2x256xf32, #tpu.memory_space<vmem>>, vector<1x1x2x256xf32>
    %436 = vector.shape_cast %435 : vector<1x1x2x256xf32> to vector<2x256xf32>
    %437 = vector.shape_cast %434 : vector<2x256xf32> to vector<1x1x2x256xf32>
    tpu.vector_store %arg11[%c5_361, %c6_362, %c0_363, %c0_364], %437 {strides = array<i32>} : memref<9x9x2x256xf32, #tpu.memory_space<vmem>>, vector<1x1x2x256xf32>,
    %438 = vector.extract_strided_slice %299 {offsets = [68, 0], sizes = [2, 256], strides = [1, 1]} : vector<98x256xf32> to vector<2x256xf32>
    %c5_365 = arith.constant 5 : index
    %c7_366 = arith.constant 7 : index
    %c0_367 = arith.constant 0 : index
    %c0_368 = arith.constant 0 : index
    %439 = vector.load %arg11[%c5_365, %c7_366, %c0_367, %c0_368] : memref<9x9x2x256xf32, #tpu.memory_space<vmem>>, vector<1x1x2x256xf32>
    %440 = vector.shape_cast %439 : vector<1x1x2x256xf32> to vector<2x256xf32>
    %441 = vector.shape_cast %438 : vector<2x256xf32> to vector<1x1x2x256xf32>
    tpu.vector_store %arg11[%c5_365, %c7_366, %c0_367, %c0_368], %441 {strides = array<i32>} : memref<9x9x2x256xf32, #tpu.memory_space<vmem>>, vector<1x1x2x256xf32>,
    %442 = vector.extract_strided_slice %299 {offsets = [70, 0], sizes = [2, 256], strides = [1, 1]} : vector<98x256xf32> to vector<2x256xf32>
    %c6_369 = arith.constant 6 : index
    %c1_370 = arith.constant 1 : index
    %c0_371 = arith.constant 0 : index
    %c0_372 = arith.constant 0 : index
    %443 = vector.load %arg11[%c6_369, %c1_370, %c0_371, %c0_372] : memref<9x9x2x256xf32, #tpu.memory_space<vmem>>, vector<1x1x2x256xf32>
    %444 = vector.shape_cast %443 : vector<1x1x2x256xf32> to vector<2x256xf32>
    %445 = vector.shape_cast %442 : vector<2x256xf32> to vector<1x1x2x256xf32>
    tpu.vector_store %arg11[%c6_369, %c1_370, %c0_371, %c0_372], %445 {strides = array<i32>} : memref<9x9x2x256xf32, #tpu.memory_space<vmem>>, vector<1x1x2x256xf32>,
    %446 = vector.extract_strided_slice %299 {offsets = [72, 0], sizes = [2, 256], strides = [1, 1]} : vector<98x256xf32> to vector<2x256xf32>
    %c6_373 = arith.constant 6 : index
    %c2_374 = arith.constant 2 : index
    %c0_375 = arith.constant 0 : index
    %c0_376 = arith.constant 0 : index
    %447 = vector.load %arg11[%c6_373, %c2_374, %c0_375, %c0_376] : memref<9x9x2x256xf32, #tpu.memory_space<vmem>>, vector<1x1x2x256xf32>
    %448 = vector.shape_cast %447 : vector<1x1x2x256xf32> to vector<2x256xf32>
    %449 = vector.shape_cast %446 : vector<2x256xf32> to vector<1x1x2x256xf32>
    tpu.vector_store %arg11[%c6_373, %c2_374, %c0_375, %c0_376], %449 {strides = array<i32>} : memref<9x9x2x256xf32, #tpu.memory_space<vmem>>, vector<1x1x2x256xf32>,
    %450 = vector.extract_strided_slice %299 {offsets = [74, 0], sizes = [2, 256], strides = [1, 1]} : vector<98x256xf32> to vector<2x256xf32>
    %c6_377 = arith.constant 6 : index
    %c3_378 = arith.constant 3 : index
    %c0_379 = arith.constant 0 : index
    %c0_380 = arith.constant 0 : index
    %451 = vector.load %arg11[%c6_377, %c3_378, %c0_379, %c0_380] : memref<9x9x2x256xf32, #tpu.memory_space<vmem>>, vector<1x1x2x256xf32>
    %452 = vector.shape_cast %451 : vector<1x1x2x256xf32> to vector<2x256xf32>
    %453 = vector.shape_cast %450 : vector<2x256xf32> to vector<1x1x2x256xf32>
    tpu.vector_store %arg11[%c6_377, %c3_378, %c0_379, %c0_380], %453 {strides = array<i32>} : memref<9x9x2x256xf32, #tpu.memory_space<vmem>>, vector<1x1x2x256xf32>,
    %454 = vector.extract_strided_slice %299 {offsets = [76, 0], sizes = [2, 256], strides = [1, 1]} : vector<98x256xf32> to vector<2x256xf32>
    %c6_381 = arith.constant 6 : index
    %c4_382 = arith.constant 4 : index
    %c0_383 = arith.constant 0 : index
    %c0_384 = arith.constant 0 : index
    %455 = vector.load %arg11[%c6_381, %c4_382, %c0_383, %c0_384] : memref<9x9x2x256xf32, #tpu.memory_space<vmem>>, vector<1x1x2x256xf32>
    %456 = vector.shape_cast %455 : vector<1x1x2x256xf32> to vector<2x256xf32>
    %457 = vector.shape_cast %454 : vector<2x256xf32> to vector<1x1x2x256xf32>
    tpu.vector_store %arg11[%c6_381, %c4_382, %c0_383, %c0_384], %457 {strides = array<i32>} : memref<9x9x2x256xf32, #tpu.memory_space<vmem>>, vector<1x1x2x256xf32>,
    %458 = vector.extract_strided_slice %299 {offsets = [78, 0], sizes = [2, 256], strides = [1, 1]} : vector<98x256xf32> to vector<2x256xf32>
    %c6_385 = arith.constant 6 : index
    %c5_386 = arith.constant 5 : index
    %c0_387 = arith.constant 0 : index
    %c0_388 = arith.constant 0 : index
    %459 = vector.load %arg11[%c6_385, %c5_386, %c0_387, %c0_388] : memref<9x9x2x256xf32, #tpu.memory_space<vmem>>, vector<1x1x2x256xf32>
    %460 = vector.shape_cast %459 : vector<1x1x2x256xf32> to vector<2x256xf32>
    %461 = vector.shape_cast %458 : vector<2x256xf32> to vector<1x1x2x256xf32>
    tpu.vector_store %arg11[%c6_385, %c5_386, %c0_387, %c0_388], %461 {strides = array<i32>} : memref<9x9x2x256xf32, #tpu.memory_space<vmem>>, vector<1x1x2x256xf32>,
    %462 = vector.extract_strided_slice %299 {offsets = [80, 0], sizes = [2, 256], strides = [1, 1]} : vector<98x256xf32> to vector<2x256xf32>
    %c6_389 = arith.constant 6 : index
    %c6_390 = arith.constant 6 : index
    %c0_391 = arith.constant 0 : index
    %c0_392 = arith.constant 0 : index
    %463 = vector.load %arg11[%c6_389, %c6_390, %c0_391, %c0_392] : memref<9x9x2x256xf32, #tpu.memory_space<vmem>>, vector<1x1x2x256xf32>
    %464 = vector.shape_cast %463 : vector<1x1x2x256xf32> to vector<2x256xf32>
    %465 = vector.shape_cast %462 : vector<2x256xf32> to vector<1x1x2x256xf32>
    tpu.vector_store %arg11[%c6_389, %c6_390, %c0_391, %c0_392], %465 {strides = array<i32>} : memref<9x9x2x256xf32, #tpu.memory_space<vmem>>, vector<1x1x2x256xf32>,
    %466 = vector.extract_strided_slice %299 {offsets = [82, 0], sizes = [2, 256], strides = [1, 1]} : vector<98x256xf32> to vector<2x256xf32>
    %c6_393 = arith.constant 6 : index
    %c7_394 = arith.constant 7 : index
    %c0_395 = arith.constant 0 : index
    %c0_396 = arith.constant 0 : index
    %467 = vector.load %arg11[%c6_393, %c7_394, %c0_395, %c0_396] : memref<9x9x2x256xf32, #tpu.memory_space<vmem>>, vector<1x1x2x256xf32>
    %468 = vector.shape_cast %467 : vector<1x1x2x256xf32> to vector<2x256xf32>
    %469 = vector.shape_cast %466 : vector<2x256xf32> to vector<1x1x2x256xf32>
    tpu.vector_store %arg11[%c6_393, %c7_394, %c0_395, %c0_396], %469 {strides = array<i32>} : memref<9x9x2x256xf32, #tpu.memory_space<vmem>>, vector<1x1x2x256xf32>,
    %470 = vector.extract_strided_slice %299 {offsets = [84, 0], sizes = [2, 256], strides = [1, 1]} : vector<98x256xf32> to vector<2x256xf32>
    %c7_397 = arith.constant 7 : index
    %c1_398 = arith.constant 1 : index
    %c0_399 = arith.constant 0 : index
    %c0_400 = arith.constant 0 : index
    %471 = vector.load %arg11[%c7_397, %c1_398, %c0_399, %c0_400] : memref<9x9x2x256xf32, #tpu.memory_space<vmem>>, vector<1x1x2x256xf32>
    %472 = vector.shape_cast %471 : vector<1x1x2x256xf32> to vector<2x256xf32>
    %473 = vector.shape_cast %470 : vector<2x256xf32> to vector<1x1x2x256xf32>
    tpu.vector_store %arg11[%c7_397, %c1_398, %c0_399, %c0_400], %473 {strides = array<i32>} : memref<9x9x2x256xf32, #tpu.memory_space<vmem>>, vector<1x1x2x256xf32>,
    %474 = vector.extract_strided_slice %299 {offsets = [86, 0], sizes = [2, 256], strides = [1, 1]} : vector<98x256xf32> to vector<2x256xf32>
    %c7_401 = arith.constant 7 : index
    %c2_402 = arith.constant 2 : index
    %c0_403 = arith.constant 0 : index
    %c0_404 = arith.constant 0 : index
    %475 = vector.load %arg11[%c7_401, %c2_402, %c0_403, %c0_404] : memref<9x9x2x256xf32, #tpu.memory_space<vmem>>, vector<1x1x2x256xf32>
    %476 = vector.shape_cast %475 : vector<1x1x2x256xf32> to vector<2x256xf32>
    %477 = vector.shape_cast %474 : vector<2x256xf32> to vector<1x1x2x256xf32>
    tpu.vector_store %arg11[%c7_401, %c2_402, %c0_403, %c0_404], %477 {strides = array<i32>} : memref<9x9x2x256xf32, #tpu.memory_space<vmem>>, vector<1x1x2x256xf32>,
    %478 = vector.extract_strided_slice %299 {offsets = [88, 0], sizes = [2, 256], strides = [1, 1]} : vector<98x256xf32> to vector<2x256xf32>
    %c7_405 = arith.constant 7 : index
    %c3_406 = arith.constant 3 : index
    %c0_407 = arith.constant 0 : index
    %c0_408 = arith.constant 0 : index
    %479 = vector.load %arg11[%c7_405, %c3_406, %c0_407, %c0_408] : memref<9x9x2x256xf32, #tpu.memory_space<vmem>>, vector<1x1x2x256xf32>
    %480 = vector.shape_cast %479 : vector<1x1x2x256xf32> to vector<2x256xf32>
    %481 = vector.shape_cast %478 : vector<2x256xf32> to vector<1x1x2x256xf32>
    tpu.vector_store %arg11[%c7_405, %c3_406, %c0_407, %c0_408], %481 {strides = array<i32>} : memref<9x9x2x256xf32, #tpu.memory_space<vmem>>, vector<1x1x2x256xf32>,
    %482 = vector.extract_strided_slice %299 {offsets = [90, 0], sizes = [2, 256], strides = [1, 1]} : vector<98x256xf32> to vector<2x256xf32>
    %c7_409 = arith.constant 7 : index
    %c4_410 = arith.constant 4 : index
    %c0_411 = arith.constant 0 : index
    %c0_412 = arith.constant 0 : index
    %483 = vector.load %arg11[%c7_409, %c4_410, %c0_411, %c0_412] : memref<9x9x2x256xf32, #tpu.memory_space<vmem>>, vector<1x1x2x256xf32>
    %484 = vector.shape_cast %483 : vector<1x1x2x256xf32> to vector<2x256xf32>
    %485 = vector.shape_cast %482 : vector<2x256xf32> to vector<1x1x2x256xf32>
    tpu.vector_store %arg11[%c7_409, %c4_410, %c0_411, %c0_412], %485 {strides = array<i32>} : memref<9x9x2x256xf32, #tpu.memory_space<vmem>>, vector<1x1x2x256xf32>,
    %486 = vector.extract_strided_slice %299 {offsets = [92, 0], sizes = [2, 256], strides = [1, 1]} : vector<98x256xf32> to vector<2x256xf32>
    %c7_413 = arith.constant 7 : index
    %c5_414 = arith.constant 5 : index
    %c0_415 = arith.constant 0 : index
    %c0_416 = arith.constant 0 : index
    %487 = vector.load %arg11[%c7_413, %c5_414, %c0_415, %c0_416] : memref<9x9x2x256xf32, #tpu.memory_space<vmem>>, vector<1x1x2x256xf32>
    %488 = vector.shape_cast %487 : vector<1x1x2x256xf32> to vector<2x256xf32>
    %489 = vector.shape_cast %486 : vector<2x256xf32> to vector<1x1x2x256xf32>
    tpu.vector_store %arg11[%c7_413, %c5_414, %c0_415, %c0_416], %489 {strides = array<i32>} : memref<9x9x2x256xf32, #tpu.memory_space<vmem>>, vector<1x1x2x256xf32>,
    %490 = vector.extract_strided_slice %299 {offsets = [94, 0], sizes = [2, 256], strides = [1, 1]} : vector<98x256xf32> to vector<2x256xf32>
    %c7_417 = arith.constant 7 : index
    %c6_418 = arith.constant 6 : index
    %c0_419 = arith.constant 0 : index
    %c0_420 = arith.constant 0 : index
    %491 = vector.load %arg11[%c7_417, %c6_418, %c0_419, %c0_420] : memref<9x9x2x256xf32, #tpu.memory_space<vmem>>, vector<1x1x2x256xf32>
    %492 = vector.shape_cast %491 : vector<1x1x2x256xf32> to vector<2x256xf32>
    %493 = vector.shape_cast %490 : vector<2x256xf32> to vector<1x1x2x256xf32>
    tpu.vector_store %arg11[%c7_417, %c6_418, %c0_419, %c0_420], %493 {strides = array<i32>} : memref<9x9x2x256xf32, #tpu.memory_space<vmem>>, vector<1x1x2x256xf32>,
    %494 = vector.extract_strided_slice %299 {offsets = [96, 0], sizes = [2, 256], strides = [1, 1]} : vector<98x256xf32> to vector<2x256xf32>
    %c7_421 = arith.constant 7 : index
    %c7_422 = arith.constant 7 : index
    %c0_423 = arith.constant 0 : index
    %c0_424 = arith.constant 0 : index
    %495 = vector.load %arg11[%c7_421, %c7_422, %c0_423, %c0_424] : memref<9x9x2x256xf32, #tpu.memory_space<vmem>>, vector<1x1x2x256xf32>
    %496 = vector.shape_cast %495 : vector<1x1x2x256xf32> to vector<2x256xf32>
    %497 = vector.shape_cast %494 : vector<2x256xf32> to vector<1x1x2x256xf32>
    tpu.vector_store %arg11[%c7_421, %c7_422, %c0_423, %c0_424], %497 {strides = array<i32>} : memref<9x9x2x256xf32, #tpu.memory_space<vmem>>, vector<1x1x2x256xf32>,
    %c0_425 = arith.constant 0 : index
    %c0_426 = arith.constant 0 : index
    %c0_427 = arith.constant 0 : index
    %c0_428 = arith.constant 0 : index
    %498 = vector.load %arg11[%c0_425, %c0_426, %c0_427, %c0_428] : memref<9x9x2x256xf32, #tpu.memory_space<vmem>>, vector<9x9x2x256xf32>
    %499 = vector.extract_strided_slice %498 {offsets = [0, 0, 0, 0], sizes = [7, 7, 2, 256], strides = [1, 1, 1, 1]} : vector<9x9x2x256xf32> to vector<7x7x2x256xf32>
    %500 = vector.shape_cast %499 : vector<7x7x2x256xf32> to vector<98x256xf32>
    %501 = arith.truncf %500 : vector<98x256xf32> to vector<98x256xbf16>
    %502 = vector.extract_strided_slice %498 {offsets = [0, 1, 0, 0], sizes = [7, 7, 2, 256], strides = [1, 1, 1, 1]} : vector<9x9x2x256xf32> to vector<7x7x2x256xf32>
    %503 = vector.shape_cast %502 : vector<7x7x2x256xf32> to vector<98x256xf32>
    %504 = arith.truncf %503 : vector<98x256xf32> to vector<98x256xbf16>
    %505 = vector.extract_strided_slice %498 {offsets = [0, 2, 0, 0], sizes = [7, 7, 2, 256], strides = [1, 1, 1, 1]} : vector<9x9x2x256xf32> to vector<7x7x2x256xf32>
    %506 = vector.shape_cast %505 : vector<7x7x2x256xf32> to vector<98x256xf32>
    %507 = arith.truncf %506 : vector<98x256xf32> to vector<98x256xbf16>
    %508 = vector.extract_strided_slice %498 {offsets = [1, 0, 0, 0], sizes = [7, 7, 2, 256], strides = [1, 1, 1, 1]} : vector<9x9x2x256xf32> to vector<7x7x2x256xf32>
    %509 = vector.shape_cast %508 : vector<7x7x2x256xf32> to vector<98x256xf32>
    %510 = arith.truncf %509 : vector<98x256xf32> to vector<98x256xbf16>
    %511 = vector.extract_strided_slice %498 {offsets = [1, 1, 0, 0], sizes = [7, 7, 2, 256], strides = [1, 1, 1, 1]} : vector<9x9x2x256xf32> to vector<7x7x2x256xf32>
    %512 = vector.shape_cast %511 : vector<7x7x2x256xf32> to vector<98x256xf32>
    %513 = arith.truncf %512 : vector<98x256xf32> to vector<98x256xbf16>
    %514 = vector.extract_strided_slice %498 {offsets = [1, 2, 0, 0], sizes = [7, 7, 2, 256], strides = [1, 1, 1, 1]} : vector<9x9x2x256xf32> to vector<7x7x2x256xf32>
    %515 = vector.shape_cast %514 : vector<7x7x2x256xf32> to vector<98x256xf32>
    %516 = arith.truncf %515 : vector<98x256xf32> to vector<98x256xbf16>
    %517 = vector.extract_strided_slice %498 {offsets = [2, 0, 0, 0], sizes = [7, 7, 2, 256], strides = [1, 1, 1, 1]} : vector<9x9x2x256xf32> to vector<7x7x2x256xf32>
    %518 = vector.shape_cast %517 : vector<7x7x2x256xf32> to vector<98x256xf32>
    %519 = arith.truncf %518 : vector<98x256xf32> to vector<98x256xbf16>
    %520 = vector.extract_strided_slice %498 {offsets = [2, 1, 0, 0], sizes = [7, 7, 2, 256], strides = [1, 1, 1, 1]} : vector<9x9x2x256xf32> to vector<7x7x2x256xf32>
    %521 = vector.shape_cast %520 : vector<7x7x2x256xf32> to vector<98x256xf32>
    %522 = arith.truncf %521 : vector<98x256xf32> to vector<98x256xbf16>
    %523 = vector.extract_strided_slice %498 {offsets = [2, 2, 0, 0], sizes = [7, 7, 2, 256], strides = [1, 1, 1, 1]} : vector<9x9x2x256xf32> to vector<7x7x2x256xf32>
    %524 = vector.shape_cast %523 : vector<7x7x2x256xf32> to vector<98x256xf32>
    %525 = arith.truncf %524 : vector<98x256xf32> to vector<98x256xbf16>
    %526 = tpu.concatenate %501, %504, %507, %510, %513, %516, %519, %522, %525 in 1 : vector<98x256xbf16>, vector<98x256xbf16>, vector<98x256xbf16>, vector<98x256xbf16>, vector<98x256xbf16>, vector<98x256xbf16>, vector<98x256xbf16>, vector<98x256xbf16>, vector<98x256xbf16> -> vector<98x2304xbf16>
    %c0_429 = arith.constant 0 : index
    %c0_430 = arith.constant 0 : index
    %527 = vector.load %arg8[%c0_429, %c0_430] : memref<2304x16xbf16, #tpu.memory_space<vmem>>, vector<2304x16xbf16>
    %cst_431 = arith.constant dense<0.000000e+00> : vector<98x16xf32>
    %528 = tpu.matmul %526, %527, %cst_431 {dimension_numbers = #tpu.dot_dimension_numbers<[1], [0], [0], [1], [0, 0, 1, 1], [], []>} : vector<98x2304xbf16>, vector<2304x16xbf16>, vector<98x16xf32> -> vector<98x16xf32>
    %529 = math.tanh %528 : vector<98x16xf32>
    %c0_432 = arith.constant 0 : index
    %c0_433 = arith.constant 0 : index
    %530 = vector.load %arg9[%c0_432, %c0_433] : memref<98x16xf32, #tpu.memory_space<vmem>>, vector<98x16xf32>
    tpu.vector_store %arg9[%c0_432, %c0_433], %529 {strides = array<i32>} : memref<98x16xf32, #tpu.memory_space<vmem>>, vector<98x16xf32>,
    return
  }
  func.func @transform_0(%arg0: i32) -> (i32, i32) {
    %c0_i32 = arith.constant 0 : i32
    %c0_i32_0 = arith.constant 0 : i32
    %c0_i32_1 = arith.constant 0 : i32
    return %c0_i32, %c0_i32_0 : i32, i32
  }
  func.func @transform_1(%arg0: i32) -> (i32, i32) {
    %c0_i32 = arith.constant 0 : i32
    %c0_i32_0 = arith.constant 0 : i32
    %c0_i32_1 = arith.constant 0 : i32
    return %c0_i32, %c0_i32_0 : i32, i32
  }
  func.func @transform_2(%arg0: i32) -> (i32, i32) {
    %c0_i32 = arith.constant 0 : i32
    %c0_i32_0 = arith.constant 0 : i32
    %c0_i32_1 = arith.constant 0 : i32
    return %c0_i32, %c0_i32_0 : i32, i32
  }
  func.func @transform_3(%arg0: i32) -> (i32, i32) {
    %c0_i32 = arith.constant 0 : i32
    %c0_i32_0 = arith.constant 0 : i32
    %c0_i32_1 = arith.constant 0 : i32
    return %c0_i32, %c0_i32_0 : i32, i32
  }
  func.func @transform_4(%arg0: i32) -> (i32, i32) {
    %c0_i32 = arith.constant 0 : i32
    %c0_i32_0 = arith.constant 0 : i32
    %c0_i32_1 = arith.constant 0 : i32
    return %c0_i32, %c0_i32_0 : i32, i32
  }
  func.func @transform_5(%arg0: i32) -> (i32, i32) {
    %c0_i32 = arith.constant 0 : i32
    %c0_i32_0 = arith.constant 0 : i32
    %c0_i32_1 = arith.constant 0 : i32
    return %c0_i32, %c0_i32_0 : i32, i32
  }
  func.func @transform_6(%arg0: i32) -> (i32, i32) {
    %c0_i32 = arith.constant 0 : i32
    %c0_i32_0 = arith.constant 0 : i32
    %c0_i32_1 = arith.constant 0 : i32
    return %c0_i32, %c0_i32_0 : i32, i32
  }
  func.func @transform_7(%arg0: i32) -> (i32, i32) {
    %c0_i32 = arith.constant 0 : i32
    %c0_i32_0 = arith.constant 0 : i32
    %c0_i32_1 = arith.constant 0 : i32
    return %c0_i32, %c0_i32_0 : i32, i32
  }
  func.func @transform_8(%arg0: i32) -> (i32, i32) {
    %c0_i32 = arith.constant 0 : i32
    %c0_i32_0 = arith.constant 0 : i32
    %c0_i32_1 = arith.constant 0 : i32
    return %c0_i32, %c0_i32_0 : i32, i32
  }
}

</mosaic_0001>

<llo_original>
// kernel: generator_forward.1
$region0: #{generator_forward.1}
  #allocation0 [shape = 'u32[]', space=smem, size = 0x4, offset = 0x4, fixed_abs, tag = 'smem constant byte address 0x4 - core index']
  #allocation1 [shape = 'u32[144,128]{1,0:T(1,128)}', space=vmem, size = 0x12000, scoped, tag = 'internal scratch']
  #allocation2 [shape = 'f32[9,9,2,128]{3,2,1,0:T(2,128)}', space=vmem, size = 0x14400, scoped, tag = 'scratch operand']
  #allocation3 [shape = 'f32[9,9,2,256]{3,2,1,0:T(2,128)}', space=vmem, size = 0x28800, scoped, tag = 'scratch operand']
  %s0 = inlined_call_operand.hbm [shape: f32[2,100], index: 0, kind: input, shape index: {}]
  %s1 = inlined_call_operand.hbm [shape: bf16[100,6272], index: 1, kind: input, shape index: {}]
  %s2 = inlined_call_operand.hbm [shape: f32[1,6272], index: 2, kind: input, shape index: {}]
  %s3 = inlined_call_operand.hbm [shape: f32[1,6272], index: 3, kind: input, shape index: {}]
  %s4 = inlined_call_operand.hbm [shape: bf16[1152,256], index: 4, kind: input, shape index: {}]
  %s5 = inlined_call_operand.hbm [shape: f32[1,64], index: 5, kind: input, shape index: {}]
  %s6 = inlined_call_operand.hbm [shape: f32[1,64], index: 6, kind: input, shape index: {}]
  %s7 = inlined_call_operand.vmem [shape: bf16[2304,16], index: 7, kind: input, shape index: {}]
  %s8 = inlined_call_operand.vmem [shape: f32[98,16], index: 8, kind: output, shape index: {}]
  %s9 = sld [smem:[#allocation0]]
  $region70: #{generator_forward.1} parent=0
    _
  %s11 = ssub.s32 1, %s9
  %s12 = scalar_select 0, %s11, %s9
  $region1: #{generator_forward.1} parent=0
    #allocation4 [shape = 'u8[1024]{0}', space=vmem, size = 0x400, scoped, tag = 'input window, operand 0, single buffered']
    #allocation5 [shape = 's32[1]{0}', space=sflag, size = 0x4, scoped, tag = 'scoped memory for generator_forward.1']
    #allocation6 [shape = 'u8[1304576]{0}', space=vmem, size = 0x13e800, scoped, tag = 'input window, operand 1, single buffered']
    #allocation7 [shape = 's32[1]{0}', space=sflag, size = 0x4, scoped, tag = 'scoped memory for generator_forward.1']
    #allocation8 [shape = 'u8[25088]{0}', space=vmem, size = 0x6400, scoped, tag = 'input window, operand 2, single buffered']
    #allocation9 [shape = 'u8[25088]{0}', space=vmem, size = 0x6400, scoped, tag = 'input window, operand 3, single buffered']
    #allocation10 [shape = 's32[1]{0}', space=sflag, size = 0x4, scoped, tag = 'scoped memory for generator_forward.1']
    #allocation11 [shape = 'u8[589824]{0}', space=vmem, size = 0x90000, scoped, tag = 'input window, operand 4, single buffered']
    #allocation12 [shape = 'u8[512]{0}', space=vmem, size = 0x400, scoped, tag = 'input window, operand 5, single buffered']
    #allocation13 [shape = 's32[1]{0}', space=sflag, size = 0x4, scoped, tag = 'scoped memory for generator_forward.1']
    #allocation14 [shape = 'u8[512]{0}', space=vmem, size = 0x400, scoped, tag = 'input window, operand 6, single buffered']
    %13 = vsyncpa [#allocation5], 0
    %14 = vsyncpa [#allocation7], 0
    %15 = vsyncpa [#allocation10], 0
    %16 = vsyncpa [#allocation13], 0
    // Predicated region
    $region2: #{generator_forward.1} parent=1 // pred_check
      _
    $region3: #{generator_forward.1} parent=1 // pred_check_branch
      %18 = sbr.rel (0) target = $region5
    $region4: #{generator_forward.1} parent=1 // pred_region
      %s20 = ssub.s32 32, 32
      %21 = vsyncadd [#allocation5], %s20
      %s23 = sshll.u32 [#allocation4], 4
      %s24 = int_to_ptr.vmem [resolvable:$true] %s23
      %26 = dma.hbm_to_vmem [thread:$0]  %s0, 32, %s24, [#allocation5]
    $region5: #{generator_forward.1} parent=1 // pred_fallthru
      _
    // Predicated region
    $region6: #{generator_forward.1} parent=1 // pred_check
      _
    $region7: #{generator_forward.1} parent=1 // pred_check_branch
      %28 = sbr.rel (0) target = $region9
    $region8: #{generator_forward.1} parent=1 // pred_region
      %s30 = ssub.s32 40768, 40768
      %31 = vsyncadd [#allocation7], %s30
      %s32 = sshll.u32 [#allocation6], 4
      %s33 = int_to_ptr.vmem [resolvable:$true] %s32
      %38 = dma.hbm_to_vmem [thread:$0]  %s1, 40768, %s33, [#allocation7], 3136, 3136, 196
    $region9: #{generator_forward.1} parent=1 // pred_fallthru
      _
    // Predicated region
    $region10: #{generator_forward.1} parent=1 // pred_check
      _
    $region11: #{generator_forward.1} parent=1 // pred_check_branch
      %40 = sbr.rel (0) target = $region13
    $region12: #{generator_forward.1} parent=1 // pred_region
      %s42 = ssub.s32 784, 784
      %43 = vsyncadd [#allocation7], %s42
      %s45 = sshll.u32 [#allocation8], 4
      %s46 = int_to_ptr.vmem [resolvable:$true] %s45
      %48 = dma.hbm_to_vmem [thread:$0]  %s2, 784, %s46, [#allocation7]
    $region13: #{generator_forward.1} parent=1 // pred_fallthru
      _
    // Predicated region
    $region14: #{generator_forward.1} parent=1 // pred_check
      _
    $region15: #{generator_forward.1} parent=1 // pred_check_branch
      %50 = sbr.rel (0) target = $region17
    $region16: #{generator_forward.1} parent=1 // pred_region
      %s52 = ssub.s32 784, 784
      %53 = vsyncadd [#allocation10], %s52
      %s55 = sshll.u32 [#allocation9], 4
      %s56 = int_to_ptr.vmem [resolvable:$true] %s55
      %58 = dma.hbm_to_vmem [thread:$0]  %s3, 784, %s56, [#allocation10]
    $region17: #{generator_forward.1} parent=1 // pred_fallthru
      _
    // Predicated region
    $region18: #{generator_forward.1} parent=1 // pred_check
      _
    $region19: #{generator_forward.1} parent=1 // pred_check_branch
      %60 = sbr.rel (0) target = $region21
    $region20: #{generator_forward.1} parent=1 // pred_region
      %s62 = ssub.s32 18432, 18432
      %63 = vsyncadd [#allocation10], %s62
      %s64 = sshll.u32 [#allocation11], 4
      %s65 = int_to_ptr.vmem [resolvable:$true] %s64
      %70 = dma.hbm_to_vmem [thread:$0]  %s4, 18432, %s65, [#allocation10], 128, 128, 8
    $region21: #{generator_forward.1} parent=1 // pred_fallthru
      _
    // Predicated region
    $region22: #{generator_forward.1} parent=1 // pred_check
      _
    $region23: #{generator_forward.1} parent=1 // pred_check_branch
      %72 = sbr.rel (0) target = $region25
    $region24: #{generator_forward.1} parent=1 // pred_region
      %s74 = ssub.s32 16, 16
      %75 = vsyncadd [#allocation13], %s74
      %s77 = sshll.u32 [#allocation12], 4
      %s78 = int_to_ptr.vmem [resolvable:$true] %s77
      %80 = dma.hbm_to_vmem [thread:$0]  %s5, 16, %s78, [#allocation13]
    $region25: #{generator_forward.1} parent=1 // pred_fallthru
      _
    // Predicated region
    $region26: #{generator_forward.1} parent=1 // pred_check
      _
    $region27: #{generator_forward.1} parent=1 // pred_check_branch
      %82 = sbr.rel (0) target = $region29
    $region28: #{generator_forward.1} parent=1 // pred_region
      %s84 = ssub.s32 16, 16
      %85 = vsyncadd [#allocation13], %s84
      %s87 = sshll.u32 [#allocation14], 4
      %s88 = int_to_ptr.vmem [resolvable:$true] %s87
      %90 = dma.hbm_to_vmem [thread:$0]  %s6, 16, %s88, [#allocation13]
    $region29: #{generator_forward.1} parent=1 // pred_fallthru
      _
    // Predicated region
    $region30: #{generator_forward.1} parent=1 // pred_check
      _
    $region31: #{generator_forward.1} parent=1 // pred_check_branch
      %92 = sbr.rel (0) target = $region33
    $region32: #{generator_forward.1} parent=1 // pred_region
      _
    $region33: #{generator_forward.1} parent=1 // pred_fallthru
      _
    // Predicated region
    $region34: #{generator_forward.1} parent=1 // pred_check
      _
    $region35: #{generator_forward.1} parent=1 // pred_check_branch
      %94 = sbr.rel (0) target = $region37
    $region36: #{generator_forward.1} parent=1 // pred_region
      %95 = dma.done [#allocation5], 32
    $region37: #{generator_forward.1} parent=1 // pred_fallthru
      _
    // Predicated region
    $region38: #{generator_forward.1} parent=1 // pred_check
      _
    $region39: #{generator_forward.1} parent=1 // pred_check_branch
      %97 = sbr.rel (0) target = $region41
    $region40: #{generator_forward.1} parent=1 // pred_region
      %98 = dma.done [#allocation7], 40768
    $region41: #{generator_forward.1} parent=1 // pred_fallthru
      _
    // Predicated region
    $region42: #{generator_forward.1} parent=1 // pred_check
      _
    $region43: #{generator_forward.1} parent=1 // pred_check_branch
      %100 = sbr.rel (0) target = $region45
    $region44: #{generator_forward.1} parent=1 // pred_region
      %101 = dma.done [#allocation7], 784
    $region45: #{generator_forward.1} parent=1 // pred_fallthru
      _
    // Predicated region
    $region46: #{generator_forward.1} parent=1 // pred_check
      _
    $region47: #{generator_forward.1} parent=1 // pred_check_branch
      %103 = sbr.rel (0) target = $region49
    $region48: #{generator_forward.1} parent=1 // pred_region
      %104 = dma.done [#allocation10], 784
    $region49: #{generator_forward.1} parent=1 // pred_fallthru
      _
    // Predicated region
    $region50: #{generator_forward.1} parent=1 // pred_check
      _
    $region51: #{generator_forward.1} parent=1 // pred_check_branch
      %106 = sbr.rel (0) target = $region53
    $region52: #{generator_forward.1} parent=1 // pred_region
      %107 = dma.done [#allocation10], 18432
    $region53: #{generator_forward.1} parent=1 // pred_fallthru
      _
    // Predicated region
    $region54: #{generator_forward.1} parent=1 // pred_check
      _
    $region55: #{generator_forward.1} parent=1 // pred_check_branch
      %109 = sbr.rel (0) target = $region57
    $region56: #{generator_forward.1} parent=1 // pred_region
      %110 = dma.done [#allocation13], 16
    $region57: #{generator_forward.1} parent=1 // pred_fallthru
      _
    // Predicated region
    $region58: #{generator_forward.1} parent=1 // pred_check
      _
    $region59: #{generator_forward.1} parent=1 // pred_check_branch
      %112 = sbr.rel (0) target = $region61
    $region60: #{generator_forward.1} parent=1 // pred_region
      %113 = dma.done [#allocation13], 16
    $region61: #{generator_forward.1} parent=1 // pred_fallthru
      _
    %v115 = vld [vmem:[#allocation4] sm:$0x3]
    %v116 = vpack.c.bf16 %v115, %v115
    %v117 = vld [vmem:[#allocation6] sm:$0xff]
    %v118 = vld [vmem:[#allocation6 + $0x8] sm:$0xff]
    %v119 = vld [vmem:[#allocation6 + $0x10] sm:$0xff]
    %v120 = vld [vmem:[#allocation6 + $0x18] sm:$0xff]
    %v121 = vld [vmem:[#allocation6 + $0x20] sm:$0xff]
    %v122 = vld [vmem:[#allocation6 + $0x28] sm:$0xff]
    %v123 = vld [vmem:[#allocation6 + $0x30] sm:$0xff]
    %v124 = vld [vmem:[#allocation6 + $0x38] sm:$0xff]
    %v125 = vld [vmem:[#allocation6 + $0x40] sm:$0xff]
    %v126 = vld [vmem:[#allocation6 + $0x48] sm:$0xff]
    %v127 = vld [vmem:[#allocation6 + $0x50] sm:$0xff]
    %v128 = vld [vmem:[#allocation6 + $0x58] sm:$0xff]
    %v129 = vld [vmem:[#allocation6 + $0x60] sm:$0xff]
    %v130 = vld [vmem:[#allocation6 + $0x68] sm:$0xff]
    %v131 = vld [vmem:[#allocation6 + $0x70] sm:$0xff]
    %v132 = vld [vmem:[#allocation6 + $0x78] sm:$0xff]
    %v133 = vld [vmem:[#allocation6 + $0x80] sm:$0xff]
    %v134 = vld [vmem:[#allocation6 + $0x88] sm:$0xff]
    %v135 = vld [vmem:[#allocation6 + $0x90] sm:$0xff]
    %v136 = vld [vmem:[#allocation6 + $0x98] sm:$0xff]
    %v137 = vld [vmem:[#allocation6 + $0xa0] sm:$0xff]
    %v138 = vld [vmem:[#allocation6 + $0xa8] sm:$0xff]
    %v139 = vld [vmem:[#allocation6 + $0xb0] sm:$0xff]
    %v140 = vld [vmem:[#allocation6 + $0xb8] sm:$0xff]
    %v141 = vld [vmem:[#allocation6 + $0xc0] sm:$0xf]
    %v142 = vld [vmem:[#allocation6 + $0xc4] sm:$0xff]
    %v143 = vld [vmem:[#allocation6 + $0xcc] sm:$0xff]
    %v144 = vld [vmem:[#allocation6 + $0xd4] sm:$0xff]
    %v145 = vld [vmem:[#allocation6 + $0xdc] sm:$0xff]
    %v146 = vld [vmem:[#allocation6 + $0xe4] sm:$0xff]
    %v147 = vld [vmem:[#allocation6 + $0xec] sm:$0xff]
    %v148 = vld [vmem:[#allocation6 + $0xf4] sm:$0xff]
    %v149 = vld [vmem:[#allocation6 + $0xfc] sm:$0xff]
    %v150 = vld [vmem:[#allocation6 + $0x104] sm:$0xff]
    %v151 = vld [vmem:[#allocation6 + $0x10c] sm:$0xff]
    %v152 = vld [vmem:[#allocation6 + $0x114] sm:$0xff]
    %v153 = vld [vmem:[#allocation6 + $0x11c] sm:$0xff]
    %v154 = vld [vmem:[#allocation6 + $0x124] sm:$0xff]
    %v155 = vld [vmem:[#allocation6 + $0x12c] sm:$0xff]
    %v156 = vld [vmem:[#allocation6 + $0x134] sm:$0xff]
    %v157 = vld [vmem:[#allocation6 + $0x13c] sm:$0xff]
    %v158 = vld [vmem:[#allocation6 + $0x144] sm:$0xff]
    %v159 = vld [vmem:[#allocation6 + $0x14c] sm:$0xff]
    %v160 = vld [vmem:[#allocation6 + $0x154] sm:$0xff]
    %v161 = vld [vmem:[#allocation6 + $0x15c] sm:$0xff]
    %v162 = vld [vmem:[#allocation6 + $0x164] sm:$0xff]
    %v163 = vld [vmem:[#allocation6 + $0x16c] sm:$0xff]
    %v164 = vld [vmem:[#allocation6 + $0x174] sm:$0xff]
    %v165 = vld [vmem:[#allocation6 + $0x17c] sm:$0xff]
    %v166 = vld [vmem:[#allocation6 + $0x184] sm:$0xf]
    %v167 = vld [vmem:[#allocation6 + $0x188] sm:$0xff]
    %v168 = vld [vmem:[#allocation6 + $0x190] sm:$0xff]
    %v169 = vld [vmem:[#allocation6 + $0x198] sm:$0xff]
    %v170 = vld [vmem:[#allocation6 + $0x1a0] sm:$0xff]
    %v171 = vld [vmem:[#allocation6 + $0x1a8] sm:$0xff]
    %v172 = vld [vmem:[#allocation6 + $0x1b0] sm:$0xff]
    %v173 = vld [vmem:[#allocation6 + $0x1b8] sm:$0xff]
    %v174 = vld [vmem:[#allocation6 + $0x1c0] sm:$0xff]
    %v175 = vld [vmem:[#allocation6 + $0x1c8] sm:$0xff]
    %v176 = vld [vmem:[#allocation6 + $0x1d0] sm:$0xff]
    %v177 = vld [vmem:[#allocation6 + $0x1d8] sm:$0xff]
    %v178 = vld [vmem:[#allocation6 + $0x1e0] sm:$0xff]
    %v179 = vld [vmem:[#allocation6 + $0x1e8] sm:$0xff]
    %v180 = vld [vmem:[#allocation6 + $0x1f0] sm:$0xff]
    %v181 = vld [vmem:[#allocation6 + $0x1f8] sm:$0xff]
    %v182 = vld [vmem:[#allocation6 + $0x200] sm:$0xff]
    %v183 = vld [vmem:[#allocation6 + $0x208] sm:$0xff]
    %v184 = vld [vmem:[#allocation6 + $0x210] sm:$0xff]
    %v185 = vld [vmem:[#allocation6 + $0x218] sm:$0xff]
    %v186 = vld [vmem:[#allocation6 + $0x220] sm:$0xff]
    %v187 = vld [vmem:[#allocation6 + $0x228] sm:$0xff]
    %v188 = vld [vmem:[#allocation6 + $0x230] sm:$0xff]
    %v189 = vld [vmem:[#allocation6 + $0x238] sm:$0xff]
    %v190 = vld [vmem:[#allocation6 + $0x240] sm:$0xff]
    %v191 = vld [vmem:[#allocation6 + $0x248] sm:$0xf]
    %v192 = vld [vmem:[#allocation6 + $0x24c] sm:$0xff]
    %v193 = vld [vmem:[#allocation6 + $0x254] sm:$0xff]
    %v194 = vld [vmem:[#allocation6 + $0x25c] sm:$0xff]
    %v195 = vld [vmem:[#allocation6 + $0x264] sm:$0xff]
    %v196 = vld [vmem:[#allocation6 + $0x26c] sm:$0xff]
    %v197 = vld [vmem:[#allocation6 + $0x274] sm:$0xff]
    %v198 = vld [vmem:[#allocation6 + $0x27c] sm:$0xff]
    %v199 = vld [vmem:[#allocation6 + $0x284] sm:$0xff]
    %v200 = vld [vmem:[#allocation6 + $0x28c] sm:$0xff]
    %v201 = vld [vmem:[#allocation6 + $0x294] sm:$0xff]
    %v202 = vld [vmem:[#allocation6 + $0x29c] sm:$0xff]
    %v203 = vld [vmem:[#allocation6 + $0x2a4] sm:$0xff]
    %v204 = vld [vmem:[#allocation6 + $0x2ac] sm:$0xff]
    %v205 = vld [vmem:[#allocation6 + $0x2b4] sm:$0xff]
    %v206 = vld [vmem:[#allocation6 + $0x2bc] sm:$0xff]
    %v207 = vld [vmem:[#allocation6 + $0x2c4] sm:$0xff]
    %v208 = vld [vmem:[#allocation6 + $0x2cc] sm:$0xff]
    %v209 = vld [vmem:[#allocation6 + $0x2d4] sm:$0xff]
    %v210 = vld [vmem:[#allocation6 + $0x2dc] sm:$0xff]
    %v211 = vld [vmem:[#allocation6 + $0x2e4] sm:$0xff]
    %v212 = vld [vmem:[#allocation6 + $0x2ec] sm:$0xff]
    %v213 = vld [vmem:[#allocation6 + $0x2f4] sm:$0xff]
    %v214 = vld [vmem:[#allocation6 + $0x2fc] sm:$0xff]
    %v215 = vld [vmem:[#allocation6 + $0x304] sm:$0xff]
    %v216 = vld [vmem:[#allocation6 + $0x30c] sm:$0xf]
    %v217 = vld [vmem:[#allocation6 + $0x310] sm:$0xff]
    %v218 = vld [vmem:[#allocation6 + $0x318] sm:$0xff]
    %v219 = vld [vmem:[#allocation6 + $0x320] sm:$0xff]
    %v220 = vld [vmem:[#allocation6 + $0x328] sm:$0xff]
    %v221 = vld [vmem:[#allocation6 + $0x330] sm:$0xff]
    %v222 = vld [vmem:[#allocation6 + $0x338] sm:$0xff]
    %v223 = vld [vmem:[#allocation6 + $0x340] sm:$0xff]
    %v224 = vld [vmem:[#allocation6 + $0x348] sm:$0xff]
    %v225 = vld [vmem:[#allocation6 + $0x350] sm:$0xff]
    %v226 = vld [vmem:[#allocation6 + $0x358] sm:$0xff]
    %v227 = vld [vmem:[#allocation6 + $0x360] sm:$0xff]
    %v228 = vld [vmem:[#allocation6 + $0x368] sm:$0xff]
    %v229 = vld [vmem:[#allocation6 + $0x370] sm:$0xff]
    %v230 = vld [vmem:[#allocation6 + $0x378] sm:$0xff]
    %v231 = vld [vmem:[#allocation6 + $0x380] sm:$0xff]
    %v232 = vld [vmem:[#allocation6 + $0x388] sm:$0xff]
    %v233 = vld [vmem:[#allocation6 + $0x390] sm:$0xff]
    %v234 = vld [vmem:[#allocation6 + $0x398] sm:$0xff]
    %v235 = vld [vmem:[#allocation6 + $0x3a0] sm:$0xff]
    %v236 = vld [vmem:[#allocation6 + $0x3a8] sm:$0xff]
    %v237 = vld [vmem:[#allocation6 + $0x3b0] sm:$0xff]
    %v238 = vld [vmem:[#allocation6 + $0x3b8] sm:$0xff]
    %v239 = vld [vmem:[#allocation6 + $0x3c0] sm:$0xff]
    %v240 = vld [vmem:[#allocation6 + $0x3c8] sm:$0xff]
    %v241 = vld [vmem:[#allocation6 + $0x3d0] sm:$0xf]
    %v242 = vld [vmem:[#allocation6 + $0x3d4] sm:$0xff]
    %v243 = vld [vmem:[#allocation6 + $0x3dc] sm:$0xff]
    %v244 = vld [vmem:[#allocation6 + $0x3e4] sm:$0xff]
    %v245 = vld [vmem:[#allocation6 + $0x3ec] sm:$0xff]
    %v246 = vld [vmem:[#allocation6 + $0x3f4] sm:$0xff]
    %v247 = vld [vmem:[#allocation6 + $0x3fc] sm:$0xff]
    %v248 = vld [vmem:[#allocation6 + $0x404] sm:$0xff]
    %v249 = vld [vmem:[#allocation6 + $0x40c] sm:$0xff]
    %v250 = vld [vmem:[#allocation6 + $0x414] sm:$0xff]
    %v251 = vld [vmem:[#allocation6 + $0x41c] sm:$0xff]
    %v252 = vld [vmem:[#allocation6 + $0x424] sm:$0xff]
    %v253 = vld [vmem:[#allocation6 + $0x42c] sm:$0xff]
    %v254 = vld [vmem:[#allocation6 + $0x434] sm:$0xff]
    %v255 = vld [vmem:[#allocation6 + $0x43c] sm:$0xff]
    %v256 = vld [vmem:[#allocation6 + $0x444] sm:$0xff]
    %v257 = vld [vmem:[#allocation6 + $0x44c] sm:$0xff]
    %v258 = vld [vmem:[#allocation6 + $0x454] sm:$0xff]
    %v259 = vld [vmem:[#allocation6 + $0x45c] sm:$0xff]
    %v260 = vld [vmem:[#allocation6 + $0x464] sm:$0xff]
    %v261 = vld [vmem:[#allocation6 + $0x46c] sm:$0xff]
    %v262 = vld [vmem:[#allocation6 + $0x474] sm:$0xff]
    %v263 = vld [vmem:[#allocation6 + $0x47c] sm:$0xff]
    %v264 = vld [vmem:[#allocation6 + $0x484] sm:$0xff]
    %v265 = vld [vmem:[#allocation6 + $0x48c] sm:$0xff]
    %v266 = vld [vmem:[#allocation6 + $0x494] sm:$0xf]
    %v267 = vld [vmem:[#allocation6 + $0x498] sm:$0xff]
    %v268 = vld [vmem:[#allocation6 + $0x4a0] sm:$0xff]
    %v269 = vld [vmem:[#allocation6 + $0x4a8] sm:$0xff]
    %v270 = vld [vmem:[#allocation6 + $0x4b0] sm:$0xff]
    %v271 = vld [vmem:[#allocation6 + $0x4b8] sm:$0xff]
    %v272 = vld [vmem:[#allocation6 + $0x4c0] sm:$0xff]
    %v273 = vld [vmem:[#allocation6 + $0x4c8] sm:$0xff]
    %v274 = vld [vmem:[#allocation6 + $0x4d0] sm:$0xff]
    %v275 = vld [vmem:[#allocation6 + $0x4d8] sm:$0xff]
    %v276 = vld [vmem:[#allocation6 + $0x4e0] sm:$0xff]
    %v277 = vld [vmem:[#allocation6 + $0x4e8] sm:$0xff]
    %v278 = vld [vmem:[#allocation6 + $0x4f0] sm:$0xff]
    %v279 = vld [vmem:[#allocation6 + $0x4f8] sm:$0xff]
    %v280 = vld [vmem:[#allocation6 + $0x500] sm:$0xff]
    %v281 = vld [vmem:[#allocation6 + $0x508] sm:$0xff]
    %v282 = vld [vmem:[#allocation6 + $0x510] sm:$0xff]
    %v283 = vld [vmem:[#allocation6 + $0x518] sm:$0xff]
    %v284 = vld [vmem:[#allocation6 + $0x520] sm:$0xff]
    %v285 = vld [vmem:[#allocation6 + $0x528] sm:$0xff]
    %v286 = vld [vmem:[#allocation6 + $0x530] sm:$0xff]
    %v287 = vld [vmem:[#allocation6 + $0x538] sm:$0xff]
    %v288 = vld [vmem:[#allocation6 + $0x540] sm:$0xff]
    %v289 = vld [vmem:[#allocation6 + $0x548] sm:$0xff]
    %v290 = vld [vmem:[#allocation6 + $0x550] sm:$0xff]
    %v291 = vld [vmem:[#allocation6 + $0x558] sm:$0xf]
    %v292 = vld [vmem:[#allocation6 + $0x55c] sm:$0xff]
    %v293 = vld [vmem:[#allocation6 + $0x564] sm:$0xff]
    %v294 = vld [vmem:[#allocation6 + $0x56c] sm:$0xff]
    %v295 = vld [vmem:[#allocation6 + $0x574] sm:$0xff]
    %v296 = vld [vmem:[#allocation6 + $0x57c] sm:$0xff]
    %v297 = vld [vmem:[#allocation6 + $0x584] sm:$0xff]
    %v298 = vld [vmem:[#allocation6 + $0x58c] sm:$0xff]
    %v299 = vld [vmem:[#allocation6 + $0x594] sm:$0xff]
    %v300 = vld [vmem:[#allocation6 + $0x59c] sm:$0xff]
    %v301 = vld [vmem:[#allocation6 + $0x5a4] sm:$0xff]
    %v302 = vld [vmem:[#allocation6 + $0x5ac] sm:$0xff]
    %v303 = vld [vmem:[#allocation6 + $0x5b4] sm:$0xff]
    %v304 = vld [vmem:[#allocation6 + $0x5bc] sm:$0xff]
    %v305 = vld [vmem:[#allocation6 + $0x5c4] sm:$0xff]
    %v306 = vld [vmem:[#allocation6 + $0x5cc] sm:$0xff]
    %v307 = vld [vmem:[#allocation6 + $0x5d4] sm:$0xff]
    %v308 = vld [vmem:[#allocation6 + $0x5dc] sm:$0xff]
    %v309 = vld [vmem:[#allocation6 + $0x5e4] sm:$0xff]
    %v310 = vld [vmem:[#allocation6 + $0x5ec] sm:$0xff]
    %v311 = vld [vmem:[#allocation6 + $0x5f4] sm:$0xff]
    %v312 = vld [vmem:[#allocation6 + $0x5fc] sm:$0xff]
    %v313 = vld [vmem:[#allocation6 + $0x604] sm:$0xff]
    %v314 = vld [vmem:[#allocation6 + $0x60c] sm:$0xff]
    %v315 = vld [vmem:[#allocation6 + $0x614] sm:$0xff]
    %v316 = vld [vmem:[#allocation6 + $0x61c] sm:$0xf]
    %v317 = vld [vmem:[#allocation6 + $0x620] sm:$0xff]
    %v318 = vld [vmem:[#allocation6 + $0x628] sm:$0xff]
    %v319 = vld [vmem:[#allocation6 + $0x630] sm:$0xff]
    %v320 = vld [vmem:[#allocation6 + $0x638] sm:$0xff]
    %v321 = vld [vmem:[#allocation6 + $0x640] sm:$0xff]
    %v322 = vld [vmem:[#allocation6 + $0x648] sm:$0xff]
    %v323 = vld [vmem:[#allocation6 + $0x650] sm:$0xff]
    %v324 = vld [vmem:[#allocation6 + $0x658] sm:$0xff]
    %v325 = vld [vmem:[#allocation6 + $0x660] sm:$0xff]
    %v326 = vld [vmem:[#allocation6 + $0x668] sm:$0xff]
    %v327 = vld [vmem:[#allocation6 + $0x670] sm:$0xff]
    %v328 = vld [vmem:[#allocation6 + $0x678] sm:$0xff]
    %v329 = vld [vmem:[#allocation6 + $0x680] sm:$0xff]
    %v330 = vld [vmem:[#allocation6 + $0x688] sm:$0xff]
    %v331 = vld [vmem:[#allocation6 + $0x690] sm:$0xff]
    %v332 = vld [vmem:[#allocation6 + $0x698] sm:$0xff]
    %v333 = vld [vmem:[#allocation6 + $0x6a0] sm:$0xff]
    %v334 = vld [vmem:[#allocation6 + $0x6a8] sm:$0xff]
    %v335 = vld [vmem:[#allocation6 + $0x6b0] sm:$0xff]
    %v336 = vld [vmem:[#allocation6 + $0x6b8] sm:$0xff]
    %v337 = vld [vmem:[#allocation6 + $0x6c0] sm:$0xff]
    %v338 = vld [vmem:[#allocation6 + $0x6c8] sm:$0xff]
    %v339 = vld [vmem:[#allocation6 + $0x6d0] sm:$0xff]
    %v340 = vld [vmem:[#allocation6 + $0x6d8] sm:$0xff]
    %v341 = vld [vmem:[#allocation6 + $0x6e0] sm:$0xf]
    %v342 = vld [vmem:[#allocation6 + $0x6e4] sm:$0xff]
    %v343 = vld [vmem:[#allocation6 + $0x6ec] sm:$0xff]
    %v344 = vld [vmem:[#allocation6 + $0x6f4] sm:$0xff]
    %v345 = vld [vmem:[#allocation6 + $0x6fc] sm:$0xff]
    %v346 = vld [vmem:[#allocation6 + $0x704] sm:$0xff]
    %v347 = vld [vmem:[#allocation6 + $0x70c] sm:$0xff]
    %v348 = vld [vmem:[#allocation6 + $0x714] sm:$0xff]
    %v349 = vld [vmem:[#allocation6 + $0x71c] sm:$0xff]
    %v350 = vld [vmem:[#allocation6 + $0x724] sm:$0xff]
    %v351 = vld [vmem:[#allocation6 + $0x72c] sm:$0xff]
    %v352 = vld [vmem:[#allocation6 + $0x734] sm:$0xff]
    %v353 = vld [vmem:[#allocation6 + $0x73c] sm:$0xff]
    %v354 = vld [vmem:[#allocation6 + $0x744] sm:$0xff]
    %v355 = vld [vmem:[#allocation6 + $0x74c] sm:$0xff]
    %v356 = vld [vmem:[#allocation6 + $0x754] sm:$0xff]
    %v357 = vld [vmem:[#allocation6 + $0x75c] sm:$0xff]
    %v358 = vld [vmem:[#allocation6 + $0x764] sm:$0xff]
    %v359 = vld [vmem:[#allocation6 + $0x76c] sm:$0xff]
    %v360 = vld [vmem:[#allocation6 + $0x774] sm:$0xff]
    %v361 = vld [vmem:[#allocation6 + $0x77c] sm:$0xff]
    %v362 = vld [vmem:[#allocation6 + $0x784] sm:$0xff]
    %v363 = vld [vmem:[#allocation6 + $0x78c] sm:$0xff]
    %v364 = vld [vmem:[#allocation6 + $0x794] sm:$0xff]
    %v365 = vld [vmem:[#allocation6 + $0x79c] sm:$0xff]
    %v366 = vld [vmem:[#allocation6 + $0x7a4] sm:$0xf]
    %v367 = vld [vmem:[#allocation6 + $0x7a8] sm:$0xff]
    %v368 = vld [vmem:[#allocation6 + $0x7b0] sm:$0xff]
    %v369 = vld [vmem:[#allocation6 + $0x7b8] sm:$0xff]
    %v370 = vld [vmem:[#allocation6 + $0x7c0] sm:$0xff]
    %v371 = vld [vmem:[#allocation6 + $0x7c8] sm:$0xff]
    %v372 = vld [vmem:[#allocation6 + $0x7d0] sm:$0xff]
    %v373 = vld [vmem:[#allocation6 + $0x7d8] sm:$0xff]
    %v374 = vld [vmem:[#allocation6 + $0x7e0] sm:$0xff]
    %v375 = vld [vmem:[#allocation6 + $0x7e8] sm:$0xff]
    %v376 = vld [vmem:[#allocation6 + $0x7f0] sm:$0xff]
    %v377 = vld [vmem:[#allocation6 + $0x7f8] sm:$0xff]
    %v378 = vld [vmem:[#allocation6 + $0x800] sm:$0xff]
    %v379 = vld [vmem:[#allocation6 + $0x808] sm:$0xff]
    %v380 = vld [vmem:[#allocation6 + $0x810] sm:$0xff]
    %v381 = vld [vmem:[#allocation6 + $0x818] sm:$0xff]
    %v382 = vld [vmem:[#allocation6 + $0x820] sm:$0xff]
    %v383 = vld [vmem:[#allocation6 + $0x828] sm:$0xff]
    %v384 = vld [vmem:[#allocation6 + $0x830] sm:$0xff]
    %v385 = vld [vmem:[#allocation6 + $0x838] sm:$0xff]
    %v386 = vld [vmem:[#allocation6 + $0x840] sm:$0xff]
    %v387 = vld [vmem:[#allocation6 + $0x848] sm:$0xff]
    %v388 = vld [vmem:[#allocation6 + $0x850] sm:$0xff]
    %v389 = vld [vmem:[#allocation6 + $0x858] sm:$0xff]
    %v390 = vld [vmem:[#allocation6 + $0x860] sm:$0xff]
    %v391 = vld [vmem:[#allocation6 + $0x868] sm:$0xf]
    %v392 = vld [vmem:[#allocation6 + $0x86c] sm:$0xff]
    %v393 = vld [vmem:[#allocation6 + $0x874] sm:$0xff]
    %v394 = vld [vmem:[#allocation6 + $0x87c] sm:$0xff]
    %v395 = vld [vmem:[#allocation6 + $0x884] sm:$0xff]
    %v396 = vld [vmem:[#allocation6 + $0x88c] sm:$0xff]
    %v397 = vld [vmem:[#allocation6 + $0x894] sm:$0xff]
    %v398 = vld [vmem:[#allocation6 + $0x89c] sm:$0xff]
    %v399 = vld [vmem:[#allocation6 + $0x8a4] sm:$0xff]
    %v400 = vld [vmem:[#allocation6 + $0x8ac] sm:$0xff]
    %v401 = vld [vmem:[#allocation6 + $0x8b4] sm:$0xff]
    %v402 = vld [vmem:[#allocation6 + $0x8bc] sm:$0xff]
    %v403 = vld [vmem:[#allocation6 + $0x8c4] sm:$0xff]
    %v404 = vld [vmem:[#allocation6 + $0x8cc] sm:$0xff]
    %v405 = vld [vmem:[#allocation6 + $0x8d4] sm:$0xff]
    %v406 = vld [vmem:[#allocation6 + $0x8dc] sm:$0xff]
    %v407 = vld [vmem:[#allocation6 + $0x8e4] sm:$0xff]
    %v408 = vld [vmem:[#allocation6 + $0x8ec] sm:$0xff]
    %v409 = vld [vmem:[#allocation6 + $0x8f4] sm:$0xff]
    %v410 = vld [vmem:[#allocation6 + $0x8fc] sm:$0xff]
    %v411 = vld [vmem:[#allocation6 + $0x904] sm:$0xff]
    %v412 = vld [vmem:[#allocation6 + $0x90c] sm:$0xff]
    %v413 = vld [vmem:[#allocation6 + $0x914] sm:$0xff]
    %v414 = vld [vmem:[#allocation6 + $0x91c] sm:$0xff]
    %v415 = vld [vmem:[#allocation6 + $0x924] sm:$0xff]
    %v416 = vld [vmem:[#allocation6 + $0x92c] sm:$0xf]
    %v417 = vld [vmem:[#allocation6 + $0x930] sm:$0x33]
    %v418 = vld [vmem:[#allocation6 + $0x938] sm:$0x33]
    %v419 = vld [vmem:[#allocation6 + $0x940] sm:$0x33]
    %v420 = vld [vmem:[#allocation6 + $0x948] sm:$0x33]
    %v421 = vld [vmem:[#allocation6 + $0x950] sm:$0x33]
    %v422 = vld [vmem:[#allocation6 + $0x958] sm:$0x33]
    %v423 = vld [vmem:[#allocation6 + $0x960] sm:$0x33]
    %v424 = vld [vmem:[#allocation6 + $0x968] sm:$0x33]
    %v425 = vld [vmem:[#allocation6 + $0x970] sm:$0x33]
    %v426 = vld [vmem:[#allocation6 + $0x978] sm:$0x33]
    %v427 = vld [vmem:[#allocation6 + $0x980] sm:$0x33]
    %v428 = vld [vmem:[#allocation6 + $0x988] sm:$0x33]
    %v429 = vld [vmem:[#allocation6 + $0x990] sm:$0x33]
    %v430 = vld [vmem:[#allocation6 + $0x998] sm:$0x33]
    %v431 = vld [vmem:[#allocation6 + $0x9a0] sm:$0x33]
    %v432 = vld [vmem:[#allocation6 + $0x9a8] sm:$0x33]
    %v433 = vld [vmem:[#allocation6 + $0x9b0] sm:$0x33]
    %v434 = vld [vmem:[#allocation6 + $0x9b8] sm:$0x33]
    %v435 = vld [vmem:[#allocation6 + $0x9c0] sm:$0x33]
    %v436 = vld [vmem:[#allocation6 + $0x9c8] sm:$0x33]
    %v437 = vld [vmem:[#allocation6 + $0x9d0] sm:$0x33]
    %v438 = vld [vmem:[#allocation6 + $0x9d8] sm:$0x33]
    %v439 = vld [vmem:[#allocation6 + $0x9e0] sm:$0x33]
    %v440 = vld [vmem:[#allocation6 + $0x9e8] sm:$0x33]
    %v441 = vld [vmem:[#allocation6 + $0x9f0] sm:$0x3]
    %v767 = vunpack.c.l.b16 %v117
    %v768 = vunpack.c.h.b16 %v117
    %v769 = vunpack.c.l.b16 %v118
    %v770 = vunpack.c.h.b16 %v118
    %v771 = vunpack.c.l.b16 %v119
    %v772 = vunpack.c.h.b16 %v119
    %v773 = vunpack.c.l.b16 %v120
    %v774 = vunpack.c.h.b16 %v120
    %v775 = vunpack.c.l.b16 %v121
    %v776 = vunpack.c.h.b16 %v121
    %v777 = vunpack.c.l.b16 %v122
    %v778 = vunpack.c.h.b16 %v122
    %v779 = vunpack.c.l.b16 %v123
    %v780 = vunpack.c.h.b16 %v123
    %v781 = vunpack.c.l.b16 %v124
    %v782 = vunpack.c.h.b16 %v124
    %v783 = vunpack.c.l.b16 %v125
    %v784 = vunpack.c.h.b16 %v125
    %v785 = vunpack.c.l.b16 %v126
    %v786 = vunpack.c.h.b16 %v126
    %v787 = vunpack.c.l.b16 %v127
    %v788 = vunpack.c.h.b16 %v127
    %v789 = vunpack.c.l.b16 %v128
    %v790 = vunpack.c.h.b16 %v128
    %v791 = vunpack.c.l.b16 %v129
    %v792 = vunpack.c.h.b16 %v129
    %v793 = vunpack.c.l.b16 %v130
    %v794 = vunpack.c.h.b16 %v130
    %v795 = vunpack.c.l.b16 %v131
    %v796 = vunpack.c.h.b16 %v131
    %v797 = vunpack.c.l.b16 %v132
    %v798 = vunpack.c.h.b16 %v132
    %v799 = vunpack.c.l.b16 %v133
    %v800 = vunpack.c.h.b16 %v133
    %v801 = vunpack.c.l.b16 %v134
    %v802 = vunpack.c.h.b16 %v134
    %v803 = vunpack.c.l.b16 %v135
    %v804 = vunpack.c.h.b16 %v135
    %v805 = vunpack.c.l.b16 %v136
    %v806 = vunpack.c.h.b16 %v136
    %v807 = vunpack.c.l.b16 %v137
    %v808 = vunpack.c.h.b16 %v137
    %v809 = vunpack.c.l.b16 %v138
    %v810 = vunpack.c.h.b16 %v138
    %v811 = vunpack.c.l.b16 %v139
    %v812 = vunpack.c.h.b16 %v139
    %v813 = vunpack.c.l.b16 %v140
    %v814 = vunpack.c.h.b16 %v140
    %v815 = vunpack.c.l.b16 %v141
    %v816 = vunpack.c.l.b16 %v142
    %v817 = vunpack.c.h.b16 %v142
    %v818 = vunpack.c.l.b16 %v143
    %v819 = vunpack.c.h.b16 %v143
    %v820 = vunpack.c.l.b16 %v144
    %v821 = vunpack.c.h.b16 %v144
    %v822 = vunpack.c.l.b16 %v145
    %v823 = vunpack.c.h.b16 %v145
    %v824 = vunpack.c.l.b16 %v146
    %v825 = vunpack.c.h.b16 %v146
    %v826 = vunpack.c.l.b16 %v147
    %v827 = vunpack.c.h.b16 %v147
    %v828 = vunpack.c.l.b16 %v148
    %v829 = vunpack.c.h.b16 %v148
    %v830 = vunpack.c.l.b16 %v149
    %v831 = vunpack.c.h.b16 %v149
    %v832 = vunpack.c.l.b16 %v150
    %v833 = vunpack.c.h.b16 %v150
    %v834 = vunpack.c.l.b16 %v151
    %v835 = vunpack.c.h.b16 %v151
    %v836 = vunpack.c.l.b16 %v152
    %v837 = vunpack.c.h.b16 %v152
    %v838 = vunpack.c.l.b16 %v153
    %v839 = vunpack.c.h.b16 %v153
    %v840 = vunpack.c.l.b16 %v154
    %v841 = vunpack.c.h.b16 %v154
    %v842 = vunpack.c.l.b16 %v155
    %v843 = vunpack.c.h.b16 %v155
    %v844 = vunpack.c.l.b16 %v156
    %v845 = vunpack.c.h.b16 %v156
    %v846 = vunpack.c.l.b16 %v157
    %v847 = vunpack.c.h.b16 %v157
    %v848 = vunpack.c.l.b16 %v158
    %v849 = vunpack.c.h.b16 %v158
    %v850 = vunpack.c.l.b16 %v159
    %v851 = vunpack.c.h.b16 %v159
    %v852 = vunpack.c.l.b16 %v160
    %v853 = vunpack.c.h.b16 %v160
    %v854 = vunpack.c.l.b16 %v161
    %v855 = vunpack.c.h.b16 %v161
    %v856 = vunpack.c.l.b16 %v162
    %v857 = vunpack.c.h.b16 %v162
    %v858 = vunpack.c.l.b16 %v163
    %v859 = vunpack.c.h.b16 %v163
    %v860 = vunpack.c.l.b16 %v164
    %v861 = vunpack.c.h.b16 %v164
    %v862 = vunpack.c.l.b16 %v165
    %v863 = vunpack.c.h.b16 %v165
    %v864 = vunpack.c.l.b16 %v166
    %v865 = vunpack.c.l.b16 %v167
    %v866 = vunpack.c.h.b16 %v167
    %v867 = vunpack.c.l.b16 %v168
    %v868 = vunpack.c.h.b16 %v168
    %v869 = vunpack.c.l.b16 %v169
    %v870 = vunpack.c.h.b16 %v169
    %v871 = vunpack.c.l.b16 %v170
    %v872 = vunpack.c.h.b16 %v170
    %v873 = vunpack.c.l.b16 %v171
    %v874 = vunpack.c.h.b16 %v171
    %v875 = vunpack.c.l.b16 %v172
    %v876 = vunpack.c.h.b16 %v172
    %v877 = vunpack.c.l.b16 %v173
    %v878 = vunpack.c.h.b16 %v173
    %v879 = vunpack.c.l.b16 %v174
    %v880 = vunpack.c.h.b16 %v174
    %v881 = vunpack.c.l.b16 %v175
    %v882 = vunpack.c.h.b16 %v175
    %v883 = vunpack.c.l.b16 %v176
    %v884 = vunpack.c.h.b16 %v176
    %v885 = vunpack.c.l.b16 %v177
    %v886 = vunpack.c.h.b16 %v177
    %v887 = vunpack.c.l.b16 %v178
    %v888 = vunpack.c.h.b16 %v178
    %v889 = vunpack.c.l.b16 %v179
    %v890 = vunpack.c.h.b16 %v179
    %v891 = vunpack.c.l.b16 %v180
    %v892 = vunpack.c.h.b16 %v180
    %v893 = vunpack.c.l.b16 %v181
    %v894 = vunpack.c.h.b16 %v181
    %v895 = vunpack.c.l.b16 %v182
    %v896 = vunpack.c.h.b16 %v182
    %v897 = vunpack.c.l.b16 %v183
    %v898 = vunpack.c.h.b16 %v183
    %v899 = vunpack.c.l.b16 %v184
    %v900 = vunpack.c.h.b16 %v184
    %v901 = vunpack.c.l.b16 %v185
    %v902 = vunpack.c.h.b16 %v185
    %v903 = vunpack.c.l.b16 %v186
    %v904 = vunpack.c.h.b16 %v186
    %v905 = vunpack.c.l.b16 %v187
    %v906 = vunpack.c.h.b16 %v187
    %v907 = vunpack.c.l.b16 %v188
    %v908 = vunpack.c.h.b16 %v188
    %v909 = vunpack.c.l.b16 %v189
    %v910 = vunpack.c.h.b16 %v189
    %v911 = vunpack.c.l.b16 %v190
    %v912 = vunpack.c.h.b16 %v190
    %v913 = vunpack.c.l.b16 %v191
    %v914 = vunpack.c.l.b16 %v192
    %v915 = vunpack.c.h.b16 %v192
    %v916 = vunpack.c.l.b16 %v193
    %v917 = vunpack.c.h.b16 %v193
    %v918 = vunpack.c.l.b16 %v194
    %v919 = vunpack.c.h.b16 %v194
    %v920 = vunpack.c.l.b16 %v195
    %v921 = vunpack.c.h.b16 %v195
    %v922 = vunpack.c.l.b16 %v196
    %v923 = vunpack.c.h.b16 %v196
    %v924 = vunpack.c.l.b16 %v197
    %v925 = vunpack.c.h.b16 %v197
    %v926 = vunpack.c.l.b16 %v198
    %v927 = vunpack.c.h.b16 %v198
    %v928 = vunpack.c.l.b16 %v199
    %v929 = vunpack.c.h.b16 %v199
    %v930 = vunpack.c.l.b16 %v200
    %v931 = vunpack.c.h.b16 %v200
    %v932 = vunpack.c.l.b16 %v201
    %v933 = vunpack.c.h.b16 %v201
    %v934 = vunpack.c.l.b16 %v202
    %v935 = vunpack.c.h.b16 %v202
    %v936 = vunpack.c.l.b16 %v203
    %v937 = vunpack.c.h.b16 %v203
    %v938 = vunpack.c.l.b16 %v204
    %v939 = vunpack.c.h.b16 %v204
    %v940 = vunpack.c.l.b16 %v205
    %v941 = vunpack.c.h.b16 %v205
    %v942 = vunpack.c.l.b16 %v206
    %v943 = vunpack.c.h.b16 %v206
    %v944 = vunpack.c.l.b16 %v207
    %v945 = vunpack.c.h.b16 %v207
    %v946 = vunpack.c.l.b16 %v208
    %v947 = vunpack.c.h.b16 %v208
    %v948 = vunpack.c.l.b16 %v209
    %v949 = vunpack.c.h.b16 %v209
    %v950 = vunpack.c.l.b16 %v210
    %v951 = vunpack.c.h.b16 %v210
    %v952 = vunpack.c.l.b16 %v211
    %v953 = vunpack.c.h.b16 %v211
    %v954 = vunpack.c.l.b16 %v212
    %v955 = vunpack.c.h.b16 %v212
    %v956 = vunpack.c.l.b16 %v213
    %v957 = vunpack.c.h.b16 %v213
    %v958 = vunpack.c.l.b16 %v214
    %v959 = vunpack.c.h.b16 %v214
    %v960 = vunpack.c.l.b16 %v215
    %v961 = vunpack.c.h.b16 %v215
    %v962 = vunpack.c.l.b16 %v216
    %v963 = vunpack.c.l.b16 %v217
    %v964 = vunpack.c.h.b16 %v217
    %v965 = vunpack.c.l.b16 %v218
    %v966 = vunpack.c.h.b16 %v218
    %v967 = vunpack.c.l.b16 %v219
    %v968 = vunpack.c.h.b16 %v219
    %v969 = vunpack.c.l.b16 %v220
    %v970 = vunpack.c.h.b16 %v220
    %v971 = vunpack.c.l.b16 %v221
    %v972 = vunpack.c.h.b16 %v221
    %v973 = vunpack.c.l.b16 %v222
    %v974 = vunpack.c.h.b16 %v222
    %v975 = vunpack.c.l.b16 %v223
    %v976 = vunpack.c.h.b16 %v223
    %v977 = vunpack.c.l.b16 %v224
    %v978 = vunpack.c.h.b16 %v224
    %v979 = vunpack.c.l.b16 %v225
    %v980 = vunpack.c.h.b16 %v225
    %v981 = vunpack.c.l.b16 %v226
    %v982 = vunpack.c.h.b16 %v226
    %v983 = vunpack.c.l.b16 %v227
    %v984 = vunpack.c.h.b16 %v227
    %v985 = vunpack.c.l.b16 %v228
    %v986 = vunpack.c.h.b16 %v228
    %v987 = vunpack.c.l.b16 %v229
    %v988 = vunpack.c.h.b16 %v229
    %v989 = vunpack.c.l.b16 %v230
    %v990 = vunpack.c.h.b16 %v230
    %v991 = vunpack.c.l.b16 %v231
    %v992 = vunpack.c.h.b16 %v231
    %v993 = vunpack.c.l.b16 %v232
    %v994 = vunpack.c.h.b16 %v232
    %v995 = vunpack.c.l.b16 %v233
    %v996 = vunpack.c.h.b16 %v233
    %v997 = vunpack.c.l.b16 %v234
    %v998 = vunpack.c.h.b16 %v234
    %v999 = vunpack.c.l.b16 %v235
    %v1000 = vunpack.c.h.b16 %v235
    %v1001 = vunpack.c.l.b16 %v236
    %v1002 = vunpack.c.h.b16 %v236
    %v1003 = vunpack.c.l.b16 %v237
    %v1004 = vunpack.c.h.b16 %v237
    %v1005 = vunpack.c.l.b16 %v238
    %v1006 = vunpack.c.h.b16 %v238
    %v1007 = vunpack.c.l.b16 %v239
    %v1008 = vunpack.c.h.b16 %v239
    %v1009 = vunpack.c.l.b16 %v240
    %v1010 = vunpack.c.h.b16 %v240
    %v1011 = vunpack.c.l.b16 %v241
    %v1012 = vunpack.c.l.b16 %v242
    %v1013 = vunpack.c.h.b16 %v242
    %v1014 = vunpack.c.l.b16 %v243
    %v1015 = vunpack.c.h.b16 %v243
    %v1016 = vunpack.c.l.b16 %v244
    %v1017 = vunpack.c.h.b16 %v244
    %v1018 = vunpack.c.l.b16 %v245
    %v1019 = vunpack.c.h.b16 %v245
    %v1020 = vunpack.c.l.b16 %v246
    %v1021 = vunpack.c.h.b16 %v246
    %v1022 = vunpack.c.l.b16 %v247
    %v1023 = vunpack.c.h.b16 %v247
    %v1024 = vunpack.c.l.b16 %v248
    %v1025 = vunpack.c.h.b16 %v248
    %v1026 = vunpack.c.l.b16 %v249
    %v1027 = vunpack.c.h.b16 %v249
    %v1028 = vunpack.c.l.b16 %v250
    %v1029 = vunpack.c.h.b16 %v250
    %v1030 = vunpack.c.l.b16 %v251
    %v1031 = vunpack.c.h.b16 %v251
    %v1032 = vunpack.c.l.b16 %v252
    %v1033 = vunpack.c.h.b16 %v252
    %v1034 = vunpack.c.l.b16 %v253
    %v1035 = vunpack.c.h.b16 %v253
    %v1036 = vunpack.c.l.b16 %v254
    %v1037 = vunpack.c.h.b16 %v254
    %v1038 = vunpack.c.l.b16 %v255
    %v1039 = vunpack.c.h.b16 %v255
    %v1040 = vunpack.c.l.b16 %v256
    %v1041 = vunpack.c.h.b16 %v256
    %v1042 = vunpack.c.l.b16 %v257
    %v1043 = vunpack.c.h.b16 %v257
    %v1044 = vunpack.c.l.b16 %v258
    %v1045 = vunpack.c.h.b16 %v258
    %v1046 = vunpack.c.l.b16 %v259
    %v1047 = vunpack.c.h.b16 %v259
    %v1048 = vunpack.c.l.b16 %v260
    %v1049 = vunpack.c.h.b16 %v260
    %v1050 = vunpack.c.l.b16 %v261
    %v1051 = vunpack.c.h.b16 %v261
    %v1052 = vunpack.c.l.b16 %v262
    %v1053 = vunpack.c.h.b16 %v262
    %v1054 = vunpack.c.l.b16 %v263
    %v1055 = vunpack.c.h.b16 %v263
    %v1056 = vunpack.c.l.b16 %v264
    %v1057 = vunpack.c.h.b16 %v264
    %v1058 = vunpack.c.l.b16 %v265
    %v1059 = vunpack.c.h.b16 %v265
    %v1060 = vunpack.c.l.b16 %v266
    %v1061 = vunpack.c.l.b16 %v267
    %v1062 = vunpack.c.h.b16 %v267
    %v1063 = vunpack.c.l.b16 %v268
    %v1064 = vunpack.c.h.b16 %v268
    %v1065 = vunpack.c.l.b16 %v269
    %v1066 = vunpack.c.h.b16 %v269
    %v1067 = vunpack.c.l.b16 %v270
    %v1068 = vunpack.c.h.b16 %v270
    %v1069 = vunpack.c.l.b16 %v271
    %v1070 = vunpack.c.h.b16 %v271
    %v1071 = vunpack.c.l.b16 %v272
    %v1072 = vunpack.c.h.b16 %v272
    %v1073 = vunpack.c.l.b16 %v273
    %v1074 = vunpack.c.h.b16 %v273
    %v1075 = vunpack.c.l.b16 %v274
    %v1076 = vunpack.c.h.b16 %v274
    %v1077 = vunpack.c.l.b16 %v275
    %v1078 = vunpack.c.h.b16 %v275
    %v1079 = vunpack.c.l.b16 %v276
    %v1080 = vunpack.c.h.b16 %v276
    %v1081 = vunpack.c.l.b16 %v277
    %v1082 = vunpack.c.h.b16 %v277
    %v1083 = vunpack.c.l.b16 %v278
    %v1084 = vunpack.c.h.b16 %v278
    %v1085 = vunpack.c.l.b16 %v279
    %v1086 = vunpack.c.h.b16 %v279
    %v1087 = vunpack.c.l.b16 %v280
    %v1088 = vunpack.c.h.b16 %v280
    %v1089 = vunpack.c.l.b16 %v281
    %v1090 = vunpack.c.h.b16 %v281
    %v1091 = vunpack.c.l.b16 %v282
    %v1092 = vunpack.c.h.b16 %v282
    %v1093 = vunpack.c.l.b16 %v283
    %v1094 = vunpack.c.h.b16 %v283
    %v1095 = vunpack.c.l.b16 %v284
    %v1096 = vunpack.c.h.b16 %v284
    %v1097 = vunpack.c.l.b16 %v285
    %v1098 = vunpack.c.h.b16 %v285
    %v1099 = vunpack.c.l.b16 %v286
    %v1100 = vunpack.c.h.b16 %v286
    %v1101 = vunpack.c.l.b16 %v287
    %v1102 = vunpack.c.h.b16 %v287
    %v1103 = vunpack.c.l.b16 %v288
    %v1104 = vunpack.c.h.b16 %v288
    %v1105 = vunpack.c.l.b16 %v289
    %v1106 = vunpack.c.h.b16 %v289
    %v1107 = vunpack.c.l.b16 %v290
    %v1108 = vunpack.c.h.b16 %v290
    %v1109 = vunpack.c.l.b16 %v291
    %v1110 = vunpack.c.l.b16 %v292
    %v1111 = vunpack.c.h.b16 %v292
    %v1112 = vunpack.c.l.b16 %v293
    %v1113 = vunpack.c.h.b16 %v293
    %v1114 = vunpack.c.l.b16 %v294
    %v1115 = vunpack.c.h.b16 %v294
    %v1116 = vunpack.c.l.b16 %v295
    %v1117 = vunpack.c.h.b16 %v295
    %v1118 = vunpack.c.l.b16 %v296
    %v1119 = vunpack.c.h.b16 %v296
    %v1120 = vunpack.c.l.b16 %v297
    %v1121 = vunpack.c.h.b16 %v297
    %v1122 = vunpack.c.l.b16 %v298
    %v1123 = vunpack.c.h.b16 %v298
    %v1124 = vunpack.c.l.b16 %v299
    %v1125 = vunpack.c.h.b16 %v299
    %v1126 = vunpack.c.l.b16 %v300
    %v1127 = vunpack.c.h.b16 %v300
    %v1128 = vunpack.c.l.b16 %v301
    %v1129 = vunpack.c.h.b16 %v301
    %v1130 = vunpack.c.l.b16 %v302
    %v1131 = vunpack.c.h.b16 %v302
    %v1132 = vunpack.c.l.b16 %v303
    %v1133 = vunpack.c.h.b16 %v303
    %v1134 = vunpack.c.l.b16 %v304
    %v1135 = vunpack.c.h.b16 %v304
    %v1136 = vunpack.c.l.b16 %v305
    %v1137 = vunpack.c.h.b16 %v305
    %v1138 = vunpack.c.l.b16 %v306
    %v1139 = vunpack.c.h.b16 %v306
    %v1140 = vunpack.c.l.b16 %v307
    %v1141 = vunpack.c.h.b16 %v307
    %v1142 = vunpack.c.l.b16 %v308
    %v1143 = vunpack.c.h.b16 %v308
    %v1144 = vunpack.c.l.b16 %v309
    %v1145 = vunpack.c.h.b16 %v309
    %v1146 = vunpack.c.l.b16 %v310
    %v1147 = vunpack.c.h.b16 %v310
    %v1148 = vunpack.c.l.b16 %v311
    %v1149 = vunpack.c.h.b16 %v311
    %v1150 = vunpack.c.l.b16 %v312
    %v1151 = vunpack.c.h.b16 %v312
    %v1152 = vunpack.c.l.b16 %v313
    %v1153 = vunpack.c.h.b16 %v313
    %v1154 = vunpack.c.l.b16 %v314
    %v1155 = vunpack.c.h.b16 %v314
    %v1156 = vunpack.c.l.b16 %v315
    %v1157 = vunpack.c.h.b16 %v315
    %v1158 = vunpack.c.l.b16 %v316
    %v1159 = vunpack.c.l.b16 %v317
    %v1160 = vunpack.c.h.b16 %v317
    %v1161 = vunpack.c.l.b16 %v318
    %v1162 = vunpack.c.h.b16 %v318
    %v1163 = vunpack.c.l.b16 %v319
    %v1164 = vunpack.c.h.b16 %v319
    %v1165 = vunpack.c.l.b16 %v320
    %v1166 = vunpack.c.h.b16 %v320
    %v1167 = vunpack.c.l.b16 %v321
    %v1168 = vunpack.c.h.b16 %v321
    %v1169 = vunpack.c.l.b16 %v322
    %v1170 = vunpack.c.h.b16 %v322
    %v1171 = vunpack.c.l.b16 %v323
    %v1172 = vunpack.c.h.b16 %v323
    %v1173 = vunpack.c.l.b16 %v324
    %v1174 = vunpack.c.h.b16 %v324
    %v1175 = vunpack.c.l.b16 %v325
    %v1176 = vunpack.c.h.b16 %v325
    %v1177 = vunpack.c.l.b16 %v326
    %v1178 = vunpack.c.h.b16 %v326
    %v1179 = vunpack.c.l.b16 %v327
    %v1180 = vunpack.c.h.b16 %v327
    %v1181 = vunpack.c.l.b16 %v328
    %v1182 = vunpack.c.h.b16 %v328
    %v1183 = vunpack.c.l.b16 %v329
    %v1184 = vunpack.c.h.b16 %v329
    %v1185 = vunpack.c.l.b16 %v330
    %v1186 = vunpack.c.h.b16 %v330
    %v1187 = vunpack.c.l.b16 %v331
    %v1188 = vunpack.c.h.b16 %v331
    %v1189 = vunpack.c.l.b16 %v332
    %v1190 = vunpack.c.h.b16 %v332
    %v1191 = vunpack.c.l.b16 %v333
    %v1192 = vunpack.c.h.b16 %v333
    %v1193 = vunpack.c.l.b16 %v334
    %v1194 = vunpack.c.h.b16 %v334
    %v1195 = vunpack.c.l.b16 %v335
    %v1196 = vunpack.c.h.b16 %v335
    %v1197 = vunpack.c.l.b16 %v336
    %v1198 = vunpack.c.h.b16 %v336
    %v1199 = vunpack.c.l.b16 %v337
    %v1200 = vunpack.c.h.b16 %v337
    %v1201 = vunpack.c.l.b16 %v338
    %v1202 = vunpack.c.h.b16 %v338
    %v1203 = vunpack.c.l.b16 %v339
    %v1204 = vunpack.c.h.b16 %v339
    %v1205 = vunpack.c.l.b16 %v340
    %v1206 = vunpack.c.h.b16 %v340
    %v1207 = vunpack.c.l.b16 %v341
    %v1208 = vunpack.c.l.b16 %v342
    %v1209 = vunpack.c.h.b16 %v342
    %v1210 = vunpack.c.l.b16 %v343
    %v1211 = vunpack.c.h.b16 %v343
    %v1212 = vunpack.c.l.b16 %v344
    %v1213 = vunpack.c.h.b16 %v344
    %v1214 = vunpack.c.l.b16 %v345
    %v1215 = vunpack.c.h.b16 %v345
    %v1216 = vunpack.c.l.b16 %v346
    %v1217 = vunpack.c.h.b16 %v346
    %v1218 = vunpack.c.l.b16 %v347
    %v1219 = vunpack.c.h.b16 %v347
    %v1220 = vunpack.c.l.b16 %v348
    %v1221 = vunpack.c.h.b16 %v348
    %v1222 = vunpack.c.l.b16 %v349
    %v1223 = vunpack.c.h.b16 %v349
    %v1224 = vunpack.c.l.b16 %v350
    %v1225 = vunpack.c.h.b16 %v350
    %v1226 = vunpack.c.l.b16 %v351
    %v1227 = vunpack.c.h.b16 %v351
    %v1228 = vunpack.c.l.b16 %v352
    %v1229 = vunpack.c.h.b16 %v352
    %v1230 = vunpack.c.l.b16 %v353
    %v1231 = vunpack.c.h.b16 %v353
    %v1232 = vunpack.c.l.b16 %v354
    %v1233 = vunpack.c.h.b16 %v354
    %v1234 = vunpack.c.l.b16 %v355
    %v1235 = vunpack.c.h.b16 %v355
    %v1236 = vunpack.c.l.b16 %v356
    %v1237 = vunpack.c.h.b16 %v356
    %v1238 = vunpack.c.l.b16 %v357
    %v1239 = vunpack.c.h.b16 %v357
    %v1240 = vunpack.c.l.b16 %v358
    %v1241 = vunpack.c.h.b16 %v358
    %v1242 = vunpack.c.l.b16 %v359
    %v1243 = vunpack.c.h.b16 %v359
    %v1244 = vunpack.c.l.b16 %v360
    %v1245 = vunpack.c.h.b16 %v360
    %v1246 = vunpack.c.l.b16 %v361
    %v1247 = vunpack.c.h.b16 %v361
    %v1248 = vunpack.c.l.b16 %v362
    %v1249 = vunpack.c.h.b16 %v362
    %v1250 = vunpack.c.l.b16 %v363
    %v1251 = vunpack.c.h.b16 %v363
    %v1252 = vunpack.c.l.b16 %v364
    %v1253 = vunpack.c.h.b16 %v364
    %v1254 = vunpack.c.l.b16 %v365
    %v1255 = vunpack.c.h.b16 %v365
    %v1256 = vunpack.c.l.b16 %v366
    %v1257 = vunpack.c.l.b16 %v367
    %v1258 = vunpack.c.h.b16 %v367
    %v1259 = vunpack.c.l.b16 %v368
    %v1260 = vunpack.c.h.b16 %v368
    %v1261 = vunpack.c.l.b16 %v369
    %v1262 = vunpack.c.h.b16 %v369
    %v1263 = vunpack.c.l.b16 %v370
    %v1264 = vunpack.c.h.b16 %v370
    %v1265 = vunpack.c.l.b16 %v371
    %v1266 = vunpack.c.h.b16 %v371
    %v1267 = vunpack.c.l.b16 %v372
    %v1268 = vunpack.c.h.b16 %v372
    %v1269 = vunpack.c.l.b16 %v373
    %v1270 = vunpack.c.h.b16 %v373
    %v1271 = vunpack.c.l.b16 %v374
    %v1272 = vunpack.c.h.b16 %v374
    %v1273 = vunpack.c.l.b16 %v375
    %v1274 = vunpack.c.h.b16 %v375
    %v1275 = vunpack.c.l.b16 %v376
    %v1276 = vunpack.c.h.b16 %v376
    %v1277 = vunpack.c.l.b16 %v377
    %v1278 = vunpack.c.h.b16 %v377
    %v1279 = vunpack.c.l.b16 %v378
    %v1280 = vunpack.c.h.b16 %v378
    %v1281 = vunpack.c.l.b16 %v379
    %v1282 = vunpack.c.h.b16 %v379
    %v1283 = vunpack.c.l.b16 %v380
    %v1284 = vunpack.c.h.b16 %v380
    %v1285 = vunpack.c.l.b16 %v381
    %v1286 = vunpack.c.h.b16 %v381
    %v1287 = vunpack.c.l.b16 %v382
    %v1288 = vunpack.c.h.b16 %v382
    %v1289 = vunpack.c.l.b16 %v383
    %v1290 = vunpack.c.h.b16 %v383
    %v1291 = vunpack.c.l.b16 %v384
    %v1292 = vunpack.c.h.b16 %v384
    %v1293 = vunpack.c.l.b16 %v385
    %v1294 = vunpack.c.h.b16 %v385
    %v1295 = vunpack.c.l.b16 %v386
    %v1296 = vunpack.c.h.b16 %v386
    %v1297 = vunpack.c.l.b16 %v387
    %v1298 = vunpack.c.h.b16 %v387
    %v1299 = vunpack.c.l.b16 %v388
    %v1300 = vunpack.c.h.b16 %v388
    %v1301 = vunpack.c.l.b16 %v389
    %v1302 = vunpack.c.h.b16 %v389
    %v1303 = vunpack.c.l.b16 %v390
    %v1304 = vunpack.c.h.b16 %v390
    %v1305 = vunpack.c.l.b16 %v391
    %v1306 = vunpack.c.l.b16 %v392
    %v1307 = vunpack.c.h.b16 %v392
    %v1308 = vunpack.c.l.b16 %v393
    %v1309 = vunpack.c.h.b16 %v393
    %v1310 = vunpack.c.l.b16 %v394
    %v1311 = vunpack.c.h.b16 %v394
    %v1312 = vunpack.c.l.b16 %v395
    %v1313 = vunpack.c.h.b16 %v395
    %v1314 = vunpack.c.l.b16 %v396
    %v1315 = vunpack.c.h.b16 %v396
    %v1316 = vunpack.c.l.b16 %v397
    %v1317 = vunpack.c.h.b16 %v397
    %v1318 = vunpack.c.l.b16 %v398
    %v1319 = vunpack.c.h.b16 %v398
    %v1320 = vunpack.c.l.b16 %v399
    %v1321 = vunpack.c.h.b16 %v399
    %v1322 = vunpack.c.l.b16 %v400
    %v1323 = vunpack.c.h.b16 %v400
    %v1324 = vunpack.c.l.b16 %v401
    %v1325 = vunpack.c.h.b16 %v401
    %v1326 = vunpack.c.l.b16 %v402
    %v1327 = vunpack.c.h.b16 %v402
    %v1328 = vunpack.c.l.b16 %v403
    %v1329 = vunpack.c.h.b16 %v403
    %v1330 = vunpack.c.l.b16 %v404
    %v1331 = vunpack.c.h.b16 %v404
    %v1332 = vunpack.c.l.b16 %v405
    %v1333 = vunpack.c.h.b16 %v405
    %v1334 = vunpack.c.l.b16 %v406
    %v1335 = vunpack.c.h.b16 %v406
    %v1336 = vunpack.c.l.b16 %v407
    %v1337 = vunpack.c.h.b16 %v407
    %v1338 = vunpack.c.l.b16 %v408
    %v1339 = vunpack.c.h.b16 %v408
    %v1340 = vunpack.c.l.b16 %v409
    %v1341 = vunpack.c.h.b16 %v409
    %v1342 = vunpack.c.l.b16 %v410
    %v1343 = vunpack.c.h.b16 %v410
    %v1344 = vunpack.c.l.b16 %v411
    %v1345 = vunpack.c.h.b16 %v411
    %v1346 = vunpack.c.l.b16 %v412
    %v1347 = vunpack.c.h.b16 %v412
    %v1348 = vunpack.c.l.b16 %v413
    %v1349 = vunpack.c.h.b16 %v413
    %v1350 = vunpack.c.l.b16 %v414
    %v1351 = vunpack.c.h.b16 %v414
    %v1352 = vunpack.c.l.b16 %v415
    %v1353 = vunpack.c.h.b16 %v415
    %v1354 = vunpack.c.l.b16 %v416
    %v1355 = vunpack.c.l.b16 %v417
    %v1356 = vunpack.c.h.b16 %v417
    %v1357 = vunpack.c.l.b16 %v418
    %v1358 = vunpack.c.h.b16 %v418
    %v1359 = vunpack.c.l.b16 %v419
    %v1360 = vunpack.c.h.b16 %v419
    %v1361 = vunpack.c.l.b16 %v420
    %v1362 = vunpack.c.h.b16 %v420
    %v1363 = vunpack.c.l.b16 %v421
    %v1364 = vunpack.c.h.b16 %v421
    %v1365 = vunpack.c.l.b16 %v422
    %v1366 = vunpack.c.h.b16 %v422
    %v1367 = vunpack.c.l.b16 %v423
    %v1368 = vunpack.c.h.b16 %v423
    %v1369 = vunpack.c.l.b16 %v424
    %v1370 = vunpack.c.h.b16 %v424
    %v1371 = vunpack.c.l.b16 %v425
    %v1372 = vunpack.c.h.b16 %v425
    %v1373 = vunpack.c.l.b16 %v426
    %v1374 = vunpack.c.h.b16 %v426
    %v1375 = vunpack.c.l.b16 %v427
    %v1376 = vunpack.c.h.b16 %v427
    %v1377 = vunpack.c.l.b16 %v428
    %v1378 = vunpack.c.h.b16 %v428
    %v1379 = vunpack.c.l.b16 %v429
    %v1380 = vunpack.c.h.b16 %v429
    %v1381 = vunpack.c.l.b16 %v430
    %v1382 = vunpack.c.h.b16 %v430
    %v1383 = vunpack.c.l.b16 %v431
    %v1384 = vunpack.c.h.b16 %v431
    %v1385 = vunpack.c.l.b16 %v432
    %v1386 = vunpack.c.h.b16 %v432
    %v1387 = vunpack.c.l.b16 %v433
    %v1388 = vunpack.c.h.b16 %v433
    %v1389 = vunpack.c.l.b16 %v434
    %v1390 = vunpack.c.h.b16 %v434
    %v1391 = vunpack.c.l.b16 %v435
    %v1392 = vunpack.c.h.b16 %v435
    %v1393 = vunpack.c.l.b16 %v436
    %v1394 = vunpack.c.h.b16 %v436
    %v1395 = vunpack.c.l.b16 %v437
    %v1396 = vunpack.c.h.b16 %v437
    %v1397 = vunpack.c.l.b16 %v438
    %v1398 = vunpack.c.h.b16 %v438
    %v1399 = vunpack.c.l.b16 %v439
    %v1400 = vunpack.c.h.b16 %v439
    %v1401 = vunpack.c.l.b16 %v440
    %v1402 = vunpack.c.h.b16 %v440
    %v1403 = vunpack.c.l.b16 %v441
    %v1404 = vpack.c.b16 %v816, %v767
    %v1405 = vpack.c.b16 %v817, %v768
    %v1406 = vpack.c.b16 %v818, %v769
    %v1407 = vpack.c.b16 %v819, %v770
    %v1408 = vpack.c.b16 %v820, %v771
    %v1409 = vpack.c.b16 %v821, %v772
    %v1410 = vpack.c.b16 %v822, %v773
    %v1411 = vpack.c.b16 %v823, %v774
    %v1412 = vpack.c.b16 %v824, %v775
    %v1413 = vpack.c.b16 %v825, %v776
    %v1414 = vpack.c.b16 %v826, %v777
    %v1415 = vpack.c.b16 %v827, %v778
    %v1416 = vpack.c.b16 %v828, %v779
    %v1417 = vpack.c.b16 %v829, %v780
    %v1418 = vpack.c.b16 %v830, %v781
    %v1419 = vpack.c.b16 %v831, %v782
    %v1420 = vpack.c.b16 %v832, %v783
    %v1421 = vpack.c.b16 %v833, %v784
    %v1422 = vpack.c.b16 %v834, %v785
    %v1423 = vpack.c.b16 %v835, %v786
    %v1424 = vpack.c.b16 %v836, %v787
    %v1425 = vpack.c.b16 %v837, %v788
    %v1426 = vpack.c.b16 %v838, %v789
    %v1427 = vpack.c.b16 %v839, %v790
    %v1428 = vpack.c.b16 %v840, %v791
    %v1429 = vpack.c.b16 %v841, %v792
    %v1430 = vpack.c.b16 %v842, %v793
    %v1431 = vpack.c.b16 %v843, %v794
    %v1432 = vpack.c.b16 %v844, %v795
    %v1433 = vpack.c.b16 %v845, %v796
    %v1434 = vpack.c.b16 %v846, %v797
    %v1435 = vpack.c.b16 %v847, %v798
    %v1436 = vpack.c.b16 %v848, %v799
    %v1437 = vpack.c.b16 %v849, %v800
    %v1438 = vpack.c.b16 %v850, %v801
    %v1439 = vpack.c.b16 %v851, %v802
    %v1440 = vpack.c.b16 %v852, %v803
    %v1441 = vpack.c.b16 %v853, %v804
    %v1442 = vpack.c.b16 %v854, %v805
    %v1443 = vpack.c.b16 %v855, %v806
    %v1444 = vpack.c.b16 %v856, %v807
    %v1445 = vpack.c.b16 %v857, %v808
    %v1446 = vpack.c.b16 %v858, %v809
    %v1447 = vpack.c.b16 %v859, %v810
    %v1448 = vpack.c.b16 %v860, %v811
    %v1449 = vpack.c.b16 %v861, %v812
    %v1450 = vpack.c.b16 %v862, %v813
    %v1451 = vpack.c.b16 %v863, %v814
    %v1452 = vpack.c.b16 %v864, %v815
    %v1453 = vpack.c.b16 %v914, %v865
    %v1454 = vpack.c.b16 %v915, %v866
    %v1455 = vpack.c.b16 %v916, %v867
    %v1456 = vpack.c.b16 %v917, %v868
    %v1457 = vpack.c.b16 %v918, %v869
    %v1458 = vpack.c.b16 %v919, %v870
    %v1459 = vpack.c.b16 %v920, %v871
    %v1460 = vpack.c.b16 %v921, %v872
    %v1461 = vpack.c.b16 %v922, %v873
    %v1462 = vpack.c.b16 %v923, %v874
    %v1463 = vpack.c.b16 %v924, %v875
    %v1464 = vpack.c.b16 %v925, %v876
    %v1465 = vpack.c.b16 %v926, %v877
    %v1466 = vpack.c.b16 %v927, %v878
    %v1467 = vpack.c.b16 %v928, %v879
    %v1468 = vpack.c.b16 %v929, %v880
    %v1469 = vpack.c.b16 %v930, %v881
    %v1470 = vpack.c.b16 %v931, %v882
    %v1471 = vpack.c.b16 %v932, %v883
    %v1472 = vpack.c.b16 %v933, %v884
    %v1473 = vpack.c.b16 %v934, %v885
    %v1474 = vpack.c.b16 %v935, %v886
    %v1475 = vpack.c.b16 %v936, %v887
    %v1476 = vpack.c.b16 %v937, %v888
    %v1477 = vpack.c.b16 %v938, %v889
    %v1478 = vpack.c.b16 %v939, %v890
    %v1479 = vpack.c.b16 %v940, %v891
    %v1480 = vpack.c.b16 %v941, %v892
    %v1481 = vpack.c.b16 %v942, %v893
    %v1482 = vpack.c.b16 %v943, %v894
    %v1483 = vpack.c.b16 %v944, %v895
    %v1484 = vpack.c.b16 %v945, %v896
    %v1485 = vpack.c.b16 %v946, %v897
    %v1486 = vpack.c.b16 %v947, %v898
    %v1487 = vpack.c.b16 %v948, %v899
    %v1488 = vpack.c.b16 %v949, %v900
    %v1489 = vpack.c.b16 %v950, %v901
    %v1490 = vpack.c.b16 %v951, %v902
    %v1491 = vpack.c.b16 %v952, %v903
    %v1492 = vpack.c.b16 %v953, %v904
    %v1493 = vpack.c.b16 %v954, %v905
    %v1494 = vpack.c.b16 %v955, %v906
    %v1495 = vpack.c.b16 %v956, %v907
    %v1496 = vpack.c.b16 %v957, %v908
    %v1497 = vpack.c.b16 %v958, %v909
    %v1498 = vpack.c.b16 %v959, %v910
    %v1499 = vpack.c.b16 %v960, %v911
    %v1500 = vpack.c.b16 %v961, %v912
    %v1501 = vpack.c.b16 %v962, %v913
    %v1502 = vpack.c.b16 %v1012, %v963
    %v1503 = vpack.c.b16 %v1013, %v964
    %v1504 = vpack.c.b16 %v1014, %v965
    %v1505 = vpack.c.b16 %v1015, %v966
    %v1506 = vpack.c.b16 %v1016, %v967
    %v1507 = vpack.c.b16 %v1017, %v968
    %v1508 = vpack.c.b16 %v1018, %v969
    %v1509 = vpack.c.b16 %v1019, %v970
    %v1510 = vpack.c.b16 %v1020, %v971
    %v1511 = vpack.c.b16 %v1021, %v972
    %v1512 = vpack.c.b16 %v1022, %v973
    %v1513 = vpack.c.b16 %v1023, %v974
    %v1514 = vpack.c.b16 %v1024, %v975
    %v1515 = vpack.c.b16 %v1025, %v976
    %v1516 = vpack.c.b16 %v1026, %v977
    %v1517 = vpack.c.b16 %v1027, %v978
    %v1518 = vpack.c.b16 %v1028, %v979
    %v1519 = vpack.c.b16 %v1029, %v980
    %v1520 = vpack.c.b16 %v1030, %v981
    %v1521 = vpack.c.b16 %v1031, %v982
    %v1522 = vpack.c.b16 %v1032, %v983
    %v1523 = vpack.c.b16 %v1033, %v984
    %v1524 = vpack.c.b16 %v1034, %v985
    %v1525 = vpack.c.b16 %v1035, %v986
    %v1526 = vpack.c.b16 %v1036, %v987
    %v1527 = vpack.c.b16 %v1037, %v988
    %v1528 = vpack.c.b16 %v1038, %v989
    %v1529 = vpack.c.b16 %v1039, %v990
    %v1530 = vpack.c.b16 %v1040, %v991
    %v1531 = vpack.c.b16 %v1041, %v992
    %v1532 = vpack.c.b16 %v1042, %v993
    %v1533 = vpack.c.b16 %v1043, %v994
    %v1534 = vpack.c.b16 %v1044, %v995
    %v1535 = vpack.c.b16 %v1045, %v996
    %v1536 = vpack.c.b16 %v1046, %v997
    %v1537 = vpack.c.b16 %v1047, %v998
    %v1538 = vpack.c.b16 %v1048, %v999
    %v1539 = vpack.c.b16 %v1049, %v1000
    %v1540 = vpack.c.b16 %v1050, %v1001
    %v1541 = vpack.c.b16 %v1051, %v1002
    %v1542 = vpack.c.b16 %v1052, %v1003
    %v1543 = vpack.c.b16 %v1053, %v1004
    %v1544 = vpack.c.b16 %v1054, %v1005
    %v1545 = vpack.c.b16 %v1055, %v1006
    %v1546 = vpack.c.b16 %v1056, %v1007
    %v1547 = vpack.c.b16 %v1057, %v1008
    %v1548 = vpack.c.b16 %v1058, %v1009
    %v1549 = vpack.c.b16 %v1059, %v1010
    %v1550 = vpack.c.b16 %v1060, %v1011
    %v1551 = vpack.c.b16 %v1110, %v1061
    %v1552 = vpack.c.b16 %v1111, %v1062
    %v1553 = vpack.c.b16 %v1112, %v1063
    %v1554 = vpack.c.b16 %v1113, %v1064
    %v1555 = vpack.c.b16 %v1114, %v1065
    %v1556 = vpack.c.b16 %v1115, %v1066
    %v1557 = vpack.c.b16 %v1116, %v1067
    %v1558 = vpack.c.b16 %v1117, %v1068
    %v1559 = vpack.c.b16 %v1118, %v1069
    %v1560 = vpack.c.b16 %v1119, %v1070
    %v1561 = vpack.c.b16 %v1120, %v1071
    %v1562 = vpack.c.b16 %v1121, %v1072
    %v1563 = vpack.c.b16 %v1122, %v1073
    %v1564 = vpack.c.b16 %v1123, %v1074
    %v1565 = vpack.c.b16 %v1124, %v1075
    %v1566 = vpack.c.b16 %v1125, %v1076
    %v1567 = vpack.c.b16 %v1126, %v1077
    %v1568 = vpack.c.b16 %v1127, %v1078
    %v1569 = vpack.c.b16 %v1128, %v1079
    %v1570 = vpack.c.b16 %v1129, %v1080
    %v1571 = vpack.c.b16 %v1130, %v1081
    %v1572 = vpack.c.b16 %v1131, %v1082
    %v1573 = vpack.c.b16 %v1132, %v1083
    %v1574 = vpack.c.b16 %v1133, %v1084
    %v1575 = vpack.c.b16 %v1134, %v1085
    %v1576 = vpack.c.b16 %v1135, %v1086
    %v1577 = vpack.c.b16 %v1136, %v1087
    %v1578 = vpack.c.b16 %v1137, %v1088
    %v1579 = vpack.c.b16 %v1138, %v1089
    %v1580 = vpack.c.b16 %v1139, %v1090
    %v1581 = vpack.c.b16 %v1140, %v1091
    %v1582 = vpack.c.b16 %v1141, %v1092
    %v1583 = vpack.c.b16 %v1142, %v1093
    %v1584 = vpack.c.b16 %v1143, %v1094
    %v1585 = vpack.c.b16 %v1144, %v1095
    %v1586 = vpack.c.b16 %v1145, %v1096
    %v1587 = vpack.c.b16 %v1146, %v1097
    %v1588 = vpack.c.b16 %v1147, %v1098
    %v1589 = vpack.c.b16 %v1148, %v1099
    %v1590 = vpack.c.b16 %v1149, %v1100
    %v1591 = vpack.c.b16 %v1150, %v1101
    %v1592 = vpack.c.b16 %v1151, %v1102
    %v1593 = vpack.c.b16 %v1152, %v1103
    %v1594 = vpack.c.b16 %v1153, %v1104
    %v1595 = vpack.c.b16 %v1154, %v1105
    %v1596 = vpack.c.b16 %v1155, %v1106
    %v1597 = vpack.c.b16 %v1156, %v1107
    %v1598 = vpack.c.b16 %v1157, %v1108
    %v1599 = vpack.c.b16 %v1158, %v1109
    %v1600 = vpack.c.b16 %v1208, %v1159
    %v1601 = vpack.c.b16 %v1209, %v1160
    %v1602 = vpack.c.b16 %v1210, %v1161
    %v1603 = vpack.c.b16 %v1211, %v1162
    %v1604 = vpack.c.b16 %v1212, %v1163
    %v1605 = vpack.c.b16 %v1213, %v1164
    %v1606 = vpack.c.b16 %v1214, %v1165
    %v1607 = vpack.c.b16 %v1215, %v1166
    %v1608 = vpack.c.b16 %v1216, %v1167
    %v1609 = vpack.c.b16 %v1217, %v1168
    %v1610 = vpack.c.b16 %v1218, %v1169
    %v1611 = vpack.c.b16 %v1219, %v1170
    %v1612 = vpack.c.b16 %v1220, %v1171
    %v1613 = vpack.c.b16 %v1221, %v1172
    %v1614 = vpack.c.b16 %v1222, %v1173
    %v1615 = vpack.c.b16 %v1223, %v1174
    %v1616 = vpack.c.b16 %v1224, %v1175
    %v1617 = vpack.c.b16 %v1225, %v1176
    %v1618 = vpack.c.b16 %v1226, %v1177
    %v1619 = vpack.c.b16 %v1227, %v1178
    %v1620 = vpack.c.b16 %v1228, %v1179
    %v1621 = vpack.c.b16 %v1229, %v1180
    %v1622 = vpack.c.b16 %v1230, %v1181
    %v1623 = vpack.c.b16 %v1231, %v1182
    %v1624 = vpack.c.b16 %v1232, %v1183
    %v1625 = vpack.c.b16 %v1233, %v1184
    %v1626 = vpack.c.b16 %v1234, %v1185
    %v1627 = vpack.c.b16 %v1235, %v1186
    %v1628 = vpack.c.b16 %v1236, %v1187
    %v1629 = vpack.c.b16 %v1237, %v1188
    %v1630 = vpack.c.b16 %v1238, %v1189
    %v1631 = vpack.c.b16 %v1239, %v1190
    %v1632 = vpack.c.b16 %v1240, %v1191
    %v1633 = vpack.c.b16 %v1241, %v1192
    %v1634 = vpack.c.b16 %v1242, %v1193
    %v1635 = vpack.c.b16 %v1243, %v1194
    %v1636 = vpack.c.b16 %v1244, %v1195
    %v1637 = vpack.c.b16 %v1245, %v1196
    %v1638 = vpack.c.b16 %v1246, %v1197
    %v1639 = vpack.c.b16 %v1247, %v1198
    %v1640 = vpack.c.b16 %v1248, %v1199
    %v1641 = vpack.c.b16 %v1249, %v1200
    %v1642 = vpack.c.b16 %v1250, %v1201
    %v1643 = vpack.c.b16 %v1251, %v1202
    %v1644 = vpack.c.b16 %v1252, %v1203
    %v1645 = vpack.c.b16 %v1253, %v1204
    %v1646 = vpack.c.b16 %v1254, %v1205
    %v1647 = vpack.c.b16 %v1255, %v1206
    %v1648 = vpack.c.b16 %v1256, %v1207
    %v1649 = vpack.c.b16 %v1306, %v1257
    %v1650 = vpack.c.b16 %v1307, %v1258
    %v1651 = vpack.c.b16 %v1308, %v1259
    %v1652 = vpack.c.b16 %v1309, %v1260
    %v1653 = vpack.c.b16 %v1310, %v1261
    %v1654 = vpack.c.b16 %v1311, %v1262
    %v1655 = vpack.c.b16 %v1312, %v1263
    %v1656 = vpack.c.b16 %v1313, %v1264
    %v1657 = vpack.c.b16 %v1314, %v1265
    %v1658 = vpack.c.b16 %v1315, %v1266
    %v1659 = vpack.c.b16 %v1316, %v1267
    %v1660 = vpack.c.b16 %v1317, %v1268
    %v1661 = vpack.c.b16 %v1318, %v1269
    %v1662 = vpack.c.b16 %v1319, %v1270
    %v1663 = vpack.c.b16 %v1320, %v1271
    %v1664 = vpack.c.b16 %v1321, %v1272
    %v1665 = vpack.c.b16 %v1322, %v1273
    %v1666 = vpack.c.b16 %v1323, %v1274
    %v1667 = vpack.c.b16 %v1324, %v1275
    %v1668 = vpack.c.b16 %v1325, %v1276
    %v1669 = vpack.c.b16 %v1326, %v1277
    %v1670 = vpack.c.b16 %v1327, %v1278
    %v1671 = vpack.c.b16 %v1328, %v1279
    %v1672 = vpack.c.b16 %v1329, %v1280
    %v1673 = vpack.c.b16 %v1330, %v1281
    %v1674 = vpack.c.b16 %v1331, %v1282
    %v1675 = vpack.c.b16 %v1332, %v1283
    %v1676 = vpack.c.b16 %v1333, %v1284
    %v1677 = vpack.c.b16 %v1334, %v1285
    %v1678 = vpack.c.b16 %v1335, %v1286
    %v1679 = vpack.c.b16 %v1336, %v1287
    %v1680 = vpack.c.b16 %v1337, %v1288
    %v1681 = vpack.c.b16 %v1338, %v1289
    %v1682 = vpack.c.b16 %v1339, %v1290
    %v1683 = vpack.c.b16 %v1340, %v1291
    %v1684 = vpack.c.b16 %v1341, %v1292
    %v1685 = vpack.c.b16 %v1342, %v1293
    %v1686 = vpack.c.b16 %v1343, %v1294
    %v1687 = vpack.c.b16 %v1344, %v1295
    %v1688 = vpack.c.b16 %v1345, %v1296
    %v1689 = vpack.c.b16 %v1346, %v1297
    %v1690 = vpack.c.b16 %v1347, %v1298
    %v1691 = vpack.c.b16 %v1348, %v1299
    %v1692 = vpack.c.b16 %v1349, %v1300
    %v1693 = vpack.c.b16 %v1350, %v1301
    %v1694 = vpack.c.b16 %v1351, %v1302
    %v1695 = vpack.c.b16 %v1352, %v1303
    %v1696 = vpack.c.b16 %v1353, %v1304
    %v1697 = vpack.c.b16 %v1354, %v1305
    %v1698 = vpack.c.b16 %v1355, %v1355
    %v1699 = vpack.c.b16 %v1356, %v1356
    %v1700 = vpack.c.b16 %v1357, %v1357
    %v1701 = vpack.c.b16 %v1358, %v1358
    %v1702 = vpack.c.b16 %v1359, %v1359
    %v1703 = vpack.c.b16 %v1360, %v1360
    %v1704 = vpack.c.b16 %v1361, %v1361
    %v1705 = vpack.c.b16 %v1362, %v1362
    %v1706 = vpack.c.b16 %v1363, %v1363
    %v1707 = vpack.c.b16 %v1364, %v1364
    %v1708 = vpack.c.b16 %v1365, %v1365
    %v1709 = vpack.c.b16 %v1366, %v1366
    %v1710 = vpack.c.b16 %v1367, %v1367
    %v1711 = vpack.c.b16 %v1368, %v1368
    %v1712 = vpack.c.b16 %v1369, %v1369
    %v1713 = vpack.c.b16 %v1370, %v1370
    %v1714 = vpack.c.b16 %v1371, %v1371
    %v1715 = vpack.c.b16 %v1372, %v1372
    %v1716 = vpack.c.b16 %v1373, %v1373
    %v1717 = vpack.c.b16 %v1374, %v1374
    %v1718 = vpack.c.b16 %v1375, %v1375
    %v1719 = vpack.c.b16 %v1376, %v1376
    %v1720 = vpack.c.b16 %v1377, %v1377
    %v1721 = vpack.c.b16 %v1378, %v1378
    %v1722 = vpack.c.b16 %v1379, %v1379
    %v1723 = vpack.c.b16 %v1380, %v1380
    %v1724 = vpack.c.b16 %v1381, %v1381
    %v1725 = vpack.c.b16 %v1382, %v1382
    %v1726 = vpack.c.b16 %v1383, %v1383
    %v1727 = vpack.c.b16 %v1384, %v1384
    %v1728 = vpack.c.b16 %v1385, %v1385
    %v1729 = vpack.c.b16 %v1386, %v1386
    %v1730 = vpack.c.b16 %v1387, %v1387
    %v1731 = vpack.c.b16 %v1388, %v1388
    %v1732 = vpack.c.b16 %v1389, %v1389
    %v1733 = vpack.c.b16 %v1390, %v1390
    %v1734 = vpack.c.b16 %v1391, %v1391
    %v1735 = vpack.c.b16 %v1392, %v1392
    %v1736 = vpack.c.b16 %v1393, %v1393
    %v1737 = vpack.c.b16 %v1394, %v1394
    %v1738 = vpack.c.b16 %v1395, %v1395
    %v1739 = vpack.c.b16 %v1396, %v1396
    %v1740 = vpack.c.b16 %v1397, %v1397
    %v1741 = vpack.c.b16 %v1398, %v1398
    %v1742 = vpack.c.b16 %v1399, %v1399
    %v1743 = vpack.c.b16 %v1400, %v1400
    %v1744 = vpack.c.b16 %v1401, %v1401
    %v1745 = vpack.c.b16 %v1402, %v1402
    %v1746 = vpack.c.b16 %v1403, %v1403
    %vm2041 = vcmask 818176
    %v2043 = vsel %vm2041, %v116, 0
    %vm2045 = vcmask 1041408
    %v2047 = vsel %vm2045, %v1698, 0
    %v2050 = vsel %vm2045, %v1699, 0
    %v2053 = vsel %vm2045, %v1700, 0
    %v2056 = vsel %vm2045, %v1701, 0
    %v2059 = vsel %vm2045, %v1702, 0
    %v2062 = vsel %vm2045, %v1703, 0
    %v2065 = vsel %vm2045, %v1704, 0
    %v2068 = vsel %vm2045, %v1705, 0
    %v2071 = vsel %vm2045, %v1706, 0
    %v2074 = vsel %vm2045, %v1707, 0
    %v2077 = vsel %vm2045, %v1708, 0
    %v2080 = vsel %vm2045, %v1709, 0
    %v2083 = vsel %vm2045, %v1710, 0
    %v2086 = vsel %vm2045, %v1711, 0
    %v2089 = vsel %vm2045, %v1712, 0
    %v2092 = vsel %vm2045, %v1713, 0
    %v2095 = vsel %vm2045, %v1714, 0
    %v2098 = vsel %vm2045, %v1715, 0
    %v2101 = vsel %vm2045, %v1716, 0
    %v2104 = vsel %vm2045, %v1717, 0
    %v2107 = vsel %vm2045, %v1718, 0
    %v2110 = vsel %vm2045, %v1719, 0
    %v2113 = vsel %vm2045, %v1720, 0
    %v2116 = vsel %vm2045, %v1721, 0
    %v2119 = vsel %vm2045, %v1722, 0
    %v2122 = vsel %vm2045, %v1723, 0
    %v2125 = vsel %vm2045, %v1724, 0
    %v2128 = vsel %vm2045, %v1725, 0
    %v2131 = vsel %vm2045, %v1726, 0
    %v2134 = vsel %vm2045, %v1727, 0
    %v2137 = vsel %vm2045, %v1728, 0
    %v2140 = vsel %vm2045, %v1729, 0
    %v2143 = vsel %vm2045, %v1730, 0
    %v2146 = vsel %vm2045, %v1731, 0
    %v2149 = vsel %vm2045, %v1732, 0
    %v2152 = vsel %vm2045, %v1733, 0
    %v2155 = vsel %vm2045, %v1734, 0
    %v2158 = vsel %vm2045, %v1735, 0
    %v2161 = vsel %vm2045, %v1736, 0
    %v2164 = vsel %vm2045, %v1737, 0
    %v2167 = vsel %vm2045, %v1738, 0
    %v2170 = vsel %vm2045, %v1739, 0
    %v2173 = vsel %vm2045, %v1740, 0
    %v2176 = vsel %vm2045, %v1741, 0
    %v2179 = vsel %vm2045, %v1742, 0
    %v2182 = vsel %vm2045, %v1743, 0
    %v2185 = vsel %vm2045, %v1744, 0
    %v2188 = vsel %vm2045, %v1745, 0
    %v2191 = vsel %vm2045, %v1746, 0
    %2193 = vmatprep.subr.bf16.mxu0 %v1405
    %2194 = vmatpush1.bf16.msra.mxu0 %v1404
    %2195 = vmatprep.subr.bf16.mxu0 %v1454
    %2196 = vmatpush1.bf16.msra.mxu0 %v1453
    %2197 = vmatprep.subr.bf16.mxu0 %v1503
    %2198 = vmatpush1.bf16.msra.mxu0 %v1502
    %2199 = vmatprep.subr.bf16.mxu0 %v1552
    %2200 = vmatpush1.bf16.msra.mxu0 %v1551
    %2201 = vmatprep.subr.bf16.mxu0 %v1601
    %2202 = vmatpush1.bf16.msra.mxu0 %v1600
    %2203 = vmatprep.subr.bf16.mxu0 %v1650
    %2204 = vmatpush1.bf16.msra.mxu0 %v1649
    %2205 = vmatprep.subr.bf16.mxu0 %v2050
    %2206 = vmatpush1.bf16.msra.mxu0 %v2047
    %2207 = vmatprep.subr.bf16.mxu0 0
    %2208 = vmatpush1.bf16.msra.mxu0 0
    %2209 = vmatprep.subr.bf16.mxu0 0
    %2210 = vmatpush1.bf16.msra.mxu0 0
    %2211 = vmatprep.subr.bf16.mxu0 0
    %2212 = vmatpush1.bf16.msra.mxu0 0
    %2213 = vmatprep.subr.bf16.mxu0 0
    %2214 = vmatpush1.bf16.msra.mxu0 0
    %2215 = vmatprep.subr.bf16.mxu0 0
    %2216 = vmatpush1.bf16.msra.mxu0 0
    %2217 = vmatprep.subr.bf16.mxu0 0
    %2218 = vmatpush1.bf16.msra.mxu0 0
    %2219 = vmatprep.subr.bf16.mxu0 0
    %2220 = vmatpush1.bf16.msra.mxu0 0
    %2221 = vmatprep.subr.bf16.mxu0 0
    %2222 = vmatpush1.bf16.msra.mxu0 0
    %2223 = vmatprep.subr.bf16.mxu0 0
    %2224 = vmatpush1.bf16.msra.mxu0 0
    %2225 = vmatprep.mubr.bf16.mxu0 0
    %2226 = vmatmul.mubr.bf16.gmra.mrb[0].mxu0 %v2043
    %v2227 = vpop.f32.mrb[0].mxu0
    %v2228 = vadd.f32 0.0, %v2227
    %v2229 = vpop.f32.mrb[0].mxu0
    %v2230 = vadd.f32 0.0, %v2229
    %v2231 = vpop.f32.mrb[0].mxu0
    %v2232 = vpop.f32.mrb[0].mxu0
    %2233 = vdwg.mxu0
    %2234 = vmatprep.subr.bf16.mxu0 %v1407
    %2235 = vmatpush1.bf16.msra.mxu0 %v1406
    %2236 = vmatprep.subr.bf16.mxu0 %v1456
    %2237 = vmatpush1.bf16.msra.mxu0 %v1455
    %2238 = vmatprep.subr.bf16.mxu0 %v1505
    %2239 = vmatpush1.bf16.msra.mxu0 %v1504
    %2240 = vmatprep.subr.bf16.mxu0 %v1554
    %2241 = vmatpush1.bf16.msra.mxu0 %v1553
    %2242 = vmatprep.subr.bf16.mxu0 %v1603
    %2243 = vmatpush1.bf16.msra.mxu0 %v1602
    %2244 = vmatprep.subr.bf16.mxu0 %v1652
    %2245 = vmatpush1.bf16.msra.mxu0 %v1651
    %2246 = vmatprep.subr.bf16.mxu0 %v2056
    %2247 = vmatpush1.bf16.msra.mxu0 %v2053
    %2248 = vmatprep.subr.bf16.mxu0 0
    %2249 = vmatpush1.bf16.msra.mxu0 0
    %2250 = vmatprep.subr.bf16.mxu0 0
    %2251 = vmatpush1.bf16.msra.mxu0 0
    %2252 = vmatprep.subr.bf16.mxu0 0
    %2253 = vmatpush1.bf16.msra.mxu0 0
    %2254 = vmatprep.subr.bf16.mxu0 0
    %2255 = vmatpush1.bf16.msra.mxu0 0
    %2256 = vmatprep.subr.bf16.mxu0 0
    %2257 = vmatpush1.bf16.msra.mxu0 0
    %2258 = vmatprep.subr.bf16.mxu0 0
    %2259 = vmatpush1.bf16.msra.mxu0 0
    %2260 = vmatprep.subr.bf16.mxu0 0
    %2261 = vmatpush1.bf16.msra.mxu0 0
    %2262 = vmatprep.subr.bf16.mxu0 0
    %2263 = vmatpush1.bf16.msra.mxu0 0
    %2264 = vmatprep.subr.bf16.mxu0 0
    %2265 = vmatpush1.bf16.msra.mxu0 0
    %2266 = vmatprep.mubr.bf16.mxu0 0
    %2267 = vmatmul.mubr.bf16.gmra.mrb[0].mxu0 %v2043
    %v2268 = vpop.f32.mrb[0].mxu0
    %v2269 = vadd.f32 0.0, %v2268
    %v2270 = vpop.f32.mrb[0].mxu0
    %v2271 = vadd.f32 0.0, %v2270
    %v2272 = vpop.f32.mrb[0].mxu0
    %v2273 = vpop.f32.mrb[0].mxu0
    %2274 = vdwg.mxu0
    %2275 = vmatprep.subr.bf16.mxu0 %v1409
    %2276 = vmatpush1.bf16.msra.mxu0 %v1408
    %2277 = vmatprep.subr.bf16.mxu0 %v1458
    %2278 = vmatpush1.bf16.msra.mxu0 %v1457
    %2279 = vmatprep.subr.bf16.mxu0 %v1507
    %2280 = vmatpush1.bf16.msra.mxu0 %v1506
    %2281 = vmatprep.subr.bf16.mxu0 %v1556
    %2282 = vmatpush1.bf16.msra.mxu0 %v1555
    %2283 = vmatprep.subr.bf16.mxu0 %v1605
    %2284 = vmatpush1.bf16.msra.mxu0 %v1604
    %2285 = vmatprep.subr.bf16.mxu0 %v1654
    %2286 = vmatpush1.bf16.msra.mxu0 %v1653
    %2287 = vmatprep.subr.bf16.mxu0 %v2062
    %2288 = vmatpush1.bf16.msra.mxu0 %v2059
    %2289 = vmatprep.subr.bf16.mxu0 0
    %2290 = vmatpush1.bf16.msra.mxu0 0
    %2291 = vmatprep.subr.bf16.mxu0 0
    %2292 = vmatpush1.bf16.msra.mxu0 0
    %2293 = vmatprep.subr.bf16.mxu0 0
    %2294 = vmatpush1.bf16.msra.mxu0 0
    %2295 = vmatprep.subr.bf16.mxu0 0
    %2296 = vmatpush1.bf16.msra.mxu0 0
    %2297 = vmatprep.subr.bf16.mxu0 0
    %2298 = vmatpush1.bf16.msra.mxu0 0
    %2299 = vmatprep.subr.bf16.mxu0 0
    %2300 = vmatpush1.bf16.msra.mxu0 0
    %2301 = vmatprep.subr.bf16.mxu0 0
    %2302 = vmatpush1.bf16.msra.mxu0 0
    %2303 = vmatprep.subr.bf16.mxu0 0
    %2304 = vmatpush1.bf16.msra.mxu0 0
    %2305 = vmatprep.subr.bf16.mxu0 0
    %2306 = vmatpush1.bf16.msra.mxu0 0
    %2307 = vmatprep.mubr.bf16.mxu0 0
    %2308 = vmatmul.mubr.bf16.gmra.mrb[0].mxu0 %v2043
    %v2309 = vpop.f32.mrb[0].mxu0
    %v2310 = vadd.f32 0.0, %v2309
    %v2311 = vpop.f32.mrb[0].mxu0
    %v2312 = vadd.f32 0.0, %v2311
    %v2313 = vpop.f32.mrb[0].mxu0
    %v2314 = vpop.f32.mrb[0].mxu0
    %2315 = vdwg.mxu0
    %2316 = vmatprep.subr.bf16.mxu0 %v1411
    %2317 = vmatpush1.bf16.msra.mxu0 %v1410
    %2318 = vmatprep.subr.bf16.mxu0 %v1460
    %2319 = vmatpush1.bf16.msra.mxu0 %v1459
    %2320 = vmatprep.subr.bf16.mxu0 %v1509
    %2321 = vmatpush1.bf16.msra.mxu0 %v1508
    %2322 = vmatprep.subr.bf16.mxu0 %v1558
    %2323 = vmatpush1.bf16.msra.mxu0 %v1557
    %2324 = vmatprep.subr.bf16.mxu0 %v1607
    %2325 = vmatpush1.bf16.msra.mxu0 %v1606
    %2326 = vmatprep.subr.bf16.mxu0 %v1656
    %2327 = vmatpush1.bf16.msra.mxu0 %v1655
    %2328 = vmatprep.subr.bf16.mxu0 %v2068
    %2329 = vmatpush1.bf16.msra.mxu0 %v2065
    %2330 = vmatprep.subr.bf16.mxu0 0
    %2331 = vmatpush1.bf16.msra.mxu0 0
    %2332 = vmatprep.subr.bf16.mxu0 0
    %2333 = vmatpush1.bf16.msra.mxu0 0
    %2334 = vmatprep.subr.bf16.mxu0 0
    %2335 = vmatpush1.bf16.msra.mxu0 0
    %2336 = vmatprep.subr.bf16.mxu0 0
    %2337 = vmatpush1.bf16.msra.mxu0 0
    %2338 = vmatprep.subr.bf16.mxu0 0
    %2339 = vmatpush1.bf16.msra.mxu0 0
    %2340 = vmatprep.subr.bf16.mxu0 0
    %2341 = vmatpush1.bf16.msra.mxu0 0
    %2342 = vmatprep.subr.bf16.mxu0 0
    %2343 = vmatpush1.bf16.msra.mxu0 0
    %2344 = vmatprep.subr.bf16.mxu0 0
    %2345 = vmatpush1.bf16.msra.mxu0 0
    %2346 = vmatprep.subr.bf16.mxu0 0
    %2347 = vmatpush1.bf16.msra.mxu0 0
    %2348 = vmatprep.mubr.bf16.mxu0 0
    %2349 = vmatmul.mubr.bf16.gmra.mrb[0].mxu0 %v2043
    %v2350 = vpop.f32.mrb[0].mxu0
    %v2351 = vadd.f32 0.0, %v2350
    %v2352 = vpop.f32.mrb[0].mxu0
    %v2353 = vadd.f32 0.0, %v2352
    %v2354 = vpop.f32.mrb[0].mxu0
    %v2355 = vpop.f32.mrb[0].mxu0
    %2356 = vdwg.mxu0
    %2357 = vmatprep.subr.bf16.mxu0 %v1413
    %2358 = vmatpush1.bf16.msra.mxu0 %v1412
    %2359 = vmatprep.subr.bf16.mxu0 %v1462
    %2360 = vmatpush1.bf16.msra.mxu0 %v1461
    %2361 = vmatprep.subr.bf16.mxu0 %v1511
    %2362 = vmatpush1.bf16.msra.mxu0 %v1510
    %2363 = vmatprep.subr.bf16.mxu0 %v1560
    %2364 = vmatpush1.bf16.msra.mxu0 %v1559
    %2365 = vmatprep.subr.bf16.mxu0 %v1609
    %2366 = vmatpush1.bf16.msra.mxu0 %v1608
    %2367 = vmatprep.subr.bf16.mxu0 %v1658
    %2368 = vmatpush1.bf16.msra.mxu0 %v1657
    %2369 = vmatprep.subr.bf16.mxu0 %v2074
    %2370 = vmatpush1.bf16.msra.mxu0 %v2071
    %2371 = vmatprep.subr.bf16.mxu0 0
    %2372 = vmatpush1.bf16.msra.mxu0 0
    %2373 = vmatprep.subr.bf16.mxu0 0
    %2374 = vmatpush1.bf16.msra.mxu0 0
    %2375 = vmatprep.subr.bf16.mxu0 0
    %2376 = vmatpush1.bf16.msra.mxu0 0
    %2377 = vmatprep.subr.bf16.mxu0 0
    %2378 = vmatpush1.bf16.msra.mxu0 0
    %2379 = vmatprep.subr.bf16.mxu0 0
    %2380 = vmatpush1.bf16.msra.mxu0 0
    %2381 = vmatprep.subr.bf16.mxu0 0
    %2382 = vmatpush1.bf16.msra.mxu0 0
    %2383 = vmatprep.subr.bf16.mxu0 0
    %2384 = vmatpush1.bf16.msra.mxu0 0
    %2385 = vmatprep.subr.bf16.mxu0 0
    %2386 = vmatpush1.bf16.msra.mxu0 0
    %2387 = vmatprep.subr.bf16.mxu0 0
    %2388 = vmatpush1.bf16.msra.mxu0 0
    %2389 = vmatprep.mubr.bf16.mxu0 0
    %2390 = vmatmul.mubr.bf16.gmra.mrb[0].mxu0 %v2043
    %v2391 = vpop.f32.mrb[0].mxu0
    %v2392 = vadd.f32 0.0, %v2391
    %v2393 = vpop.f32.mrb[0].mxu0
    %v2394 = vadd.f32 0.0, %v2393
    %v2395 = vpop.f32.mrb[0].mxu0
    %v2396 = vpop.f32.mrb[0].mxu0
    %2397 = vdwg.mxu0
    %2398 = vmatprep.subr.bf16.mxu0 %v1415
    %2399 = vmatpush1.bf16.msra.mxu0 %v1414
    %2400 = vmatprep.subr.bf16.mxu0 %v1464
    %2401 = vmatpush1.bf16.msra.mxu0 %v1463
    %2402 = vmatprep.subr.bf16.mxu0 %v1513
    %2403 = vmatpush1.bf16.msra.mxu0 %v1512
    %2404 = vmatprep.subr.bf16.mxu0 %v1562
    %2405 = vmatpush1.bf16.msra.mxu0 %v1561
    %2406 = vmatprep.subr.bf16.mxu0 %v1611
    %2407 = vmatpush1.bf16.msra.mxu0 %v1610
    %2408 = vmatprep.subr.bf16.mxu0 %v1660
    %2409 = vmatpush1.bf16.msra.mxu0 %v1659
    %2410 = vmatprep.subr.bf16.mxu0 %v2080
    %2411 = vmatpush1.bf16.msra.mxu0 %v2077
    %2412 = vmatprep.subr.bf16.mxu0 0
    %2413 = vmatpush1.bf16.msra.mxu0 0
    %2414 = vmatprep.subr.bf16.mxu0 0
    %2415 = vmatpush1.bf16.msra.mxu0 0
    %2416 = vmatprep.subr.bf16.mxu0 0
    %2417 = vmatpush1.bf16.msra.mxu0 0
    %2418 = vmatprep.subr.bf16.mxu0 0
    %2419 = vmatpush1.bf16.msra.mxu0 0
    %2420 = vmatprep.subr.bf16.mxu0 0
    %2421 = vmatpush1.bf16.msra.mxu0 0
    %2422 = vmatprep.subr.bf16.mxu0 0
    %2423 = vmatpush1.bf16.msra.mxu0 0
    %2424 = vmatprep.subr.bf16.mxu0 0
    %2425 = vmatpush1.bf16.msra.mxu0 0
    %2426 = vmatprep.subr.bf16.mxu0 0
    %2427 = vmatpush1.bf16.msra.mxu0 0
    %2428 = vmatprep.subr.bf16.mxu0 0
    %2429 = vmatpush1.bf16.msra.mxu0 0
    %2430 = vmatprep.mubr.bf16.mxu0 0
    %2431 = vmatmul.mubr.bf16.gmra.mrb[0].mxu0 %v2043
    %v2432 = vpop.f32.mrb[0].mxu0
    %v2433 = vadd.f32 0.0, %v2432
    %v2434 = vpop.f32.mrb[0].mxu0
    %v2435 = vadd.f32 0.0, %v2434
    %v2436 = vpop.f32.mrb[0].mxu0
    %v2437 = vpop.f32.mrb[0].mxu0
    %2438 = vdwg.mxu0
    %2439 = vmatprep.subr.bf16.mxu0 %v1417
    %2440 = vmatpush1.bf16.msra.mxu0 %v1416
    %2441 = vmatprep.subr.bf16.mxu0 %v1466
    %2442 = vmatpush1.bf16.msra.mxu0 %v1465
    %2443 = vmatprep.subr.bf16.mxu0 %v1515
    %2444 = vmatpush1.bf16.msra.mxu0 %v1514
    %2445 = vmatprep.subr.bf16.mxu0 %v1564
    %2446 = vmatpush1.bf16.msra.mxu0 %v1563
    %2447 = vmatprep.subr.bf16.mxu0 %v1613
    %2448 = vmatpush1.bf16.msra.mxu0 %v1612
    %2449 = vmatprep.subr.bf16.mxu0 %v1662
    %2450 = vmatpush1.bf16.msra.mxu0 %v1661
    %2451 = vmatprep.subr.bf16.mxu0 %v2086
    %2452 = vmatpush1.bf16.msra.mxu0 %v2083
    %2453 = vmatprep.subr.bf16.mxu0 0
    %2454 = vmatpush1.bf16.msra.mxu0 0
    %2455 = vmatprep.subr.bf16.mxu0 0
    %2456 = vmatpush1.bf16.msra.mxu0 0
    %2457 = vmatprep.subr.bf16.mxu0 0
    %2458 = vmatpush1.bf16.msra.mxu0 0
    %2459 = vmatprep.subr.bf16.mxu0 0
    %2460 = vmatpush1.bf16.msra.mxu0 0
    %2461 = vmatprep.subr.bf16.mxu0 0
    %2462 = vmatpush1.bf16.msra.mxu0 0
    %2463 = vmatprep.subr.bf16.mxu0 0
    %2464 = vmatpush1.bf16.msra.mxu0 0
    %2465 = vmatprep.subr.bf16.mxu0 0
    %2466 = vmatpush1.bf16.msra.mxu0 0
    %2467 = vmatprep.subr.bf16.mxu0 0
    %2468 = vmatpush1.bf16.msra.mxu0 0
    %2469 = vmatprep.subr.bf16.mxu0 0
    %2470 = vmatpush1.bf16.msra.mxu0 0
    %2471 = vmatprep.mubr.bf16.mxu0 0
    %2472 = vmatmul.mubr.bf16.gmra.mrb[0].mxu0 %v2043
    %v2473 = vpop.f32.mrb[0].mxu0
    %v2474 = vadd.f32 0.0, %v2473
    %v2475 = vpop.f32.mrb[0].mxu0
    %v2476 = vadd.f32 0.0, %v2475
    %v2477 = vpop.f32.mrb[0].mxu0
    %v2478 = vpop.f32.mrb[0].mxu0
    %2479 = vdwg.mxu0
    %2480 = vmatprep.subr.bf16.mxu0 %v1419
    %2481 = vmatpush1.bf16.msra.mxu0 %v1418
    %2482 = vmatprep.subr.bf16.mxu0 %v1468
    %2483 = vmatpush1.bf16.msra.mxu0 %v1467
    %2484 = vmatprep.subr.bf16.mxu0 %v1517
    %2485 = vmatpush1.bf16.msra.mxu0 %v1516
    %2486 = vmatprep.subr.bf16.mxu0 %v1566
    %2487 = vmatpush1.bf16.msra.mxu0 %v1565
    %2488 = vmatprep.subr.bf16.mxu0 %v1615
    %2489 = vmatpush1.bf16.msra.mxu0 %v1614
    %2490 = vmatprep.subr.bf16.mxu0 %v1664
    %2491 = vmatpush1.bf16.msra.mxu0 %v1663
    %2492 = vmatprep.subr.bf16.mxu0 %v2092
    %2493 = vmatpush1.bf16.msra.mxu0 %v2089
    %2494 = vmatprep.subr.bf16.mxu0 0
    %2495 = vmatpush1.bf16.msra.mxu0 0
    %2496 = vmatprep.subr.bf16.mxu0 0
    %2497 = vmatpush1.bf16.msra.mxu0 0
    %2498 = vmatprep.subr.bf16.mxu0 0
    %2499 = vmatpush1.bf16.msra.mxu0 0
    %2500 = vmatprep.subr.bf16.mxu0 0
    %2501 = vmatpush1.bf16.msra.mxu0 0
    %2502 = vmatprep.subr.bf16.mxu0 0
    %2503 = vmatpush1.bf16.msra.mxu0 0
    %2504 = vmatprep.subr.bf16.mxu0 0
    %2505 = vmatpush1.bf16.msra.mxu0 0
    %2506 = vmatprep.subr.bf16.mxu0 0
    %2507 = vmatpush1.bf16.msra.mxu0 0
    %2508 = vmatprep.subr.bf16.mxu0 0
    %2509 = vmatpush1.bf16.msra.mxu0 0
    %2510 = vmatprep.subr.bf16.mxu0 0
    %2511 = vmatpush1.bf16.msra.mxu0 0
    %2512 = vmatprep.mubr.bf16.mxu0 0
    %2513 = vmatmul.mubr.bf16.gmra.mrb[0].mxu0 %v2043
    %v2514 = vpop.f32.mrb[0].mxu0
    %v2515 = vadd.f32 0.0, %v2514
    %v2516 = vpop.f32.mrb[0].mxu0
    %v2517 = vadd.f32 0.0, %v2516
    %v2518 = vpop.f32.mrb[0].mxu0
    %v2519 = vpop.f32.mrb[0].mxu0
    %2520 = vdwg.mxu0
    %2521 = vmatprep.subr.bf16.mxu0 %v1421
    %2522 = vmatpush1.bf16.msra.mxu0 %v1420
    %2523 = vmatprep.subr.bf16.mxu0 %v1470
    %2524 = vmatpush1.bf16.msra.mxu0 %v1469
    %2525 = vmatprep.subr.bf16.mxu0 %v1519
    %2526 = vmatpush1.bf16.msra.mxu0 %v1518
    %2527 = vmatprep.subr.bf16.mxu0 %v1568
    %2528 = vmatpush1.bf16.msra.mxu0 %v1567
    %2529 = vmatprep.subr.bf16.mxu0 %v1617
    %2530 = vmatpush1.bf16.msra.mxu0 %v1616
    %2531 = vmatprep.subr.bf16.mxu0 %v1666
    %2532 = vmatpush1.bf16.msra.mxu0 %v1665
    %2533 = vmatprep.subr.bf16.mxu0 %v2098
    %2534 = vmatpush1.bf16.msra.mxu0 %v2095
    %2535 = vmatprep.subr.bf16.mxu0 0
    %2536 = vmatpush1.bf16.msra.mxu0 0
    %2537 = vmatprep.subr.bf16.mxu0 0
    %2538 = vmatpush1.bf16.msra.mxu0 0
    %2539 = vmatprep.subr.bf16.mxu0 0
    %2540 = vmatpush1.bf16.msra.mxu0 0
    %2541 = vmatprep.subr.bf16.mxu0 0
    %2542 = vmatpush1.bf16.msra.mxu0 0
    %2543 = vmatprep.subr.bf16.mxu0 0
    %2544 = vmatpush1.bf16.msra.mxu0 0
    %2545 = vmatprep.subr.bf16.mxu0 0
    %2546 = vmatpush1.bf16.msra.mxu0 0
    %2547 = vmatprep.subr.bf16.mxu0 0
    %2548 = vmatpush1.bf16.msra.mxu0 0
    %2549 = vmatprep.subr.bf16.mxu0 0
    %2550 = vmatpush1.bf16.msra.mxu0 0
    %2551 = vmatprep.subr.bf16.mxu0 0
    %2552 = vmatpush1.bf16.msra.mxu0 0
    %2553 = vmatprep.mubr.bf16.mxu0 0
    %2554 = vmatmul.mubr.bf16.gmra.mrb[0].mxu0 %v2043
    %v2555 = vpop.f32.mrb[0].mxu0
    %v2556 = vadd.f32 0.0, %v2555
    %v2557 = vpop.f32.mrb[0].mxu0
    %v2558 = vadd.f32 0.0, %v2557
    %v2559 = vpop.f32.mrb[0].mxu0
    %v2560 = vpop.f32.mrb[0].mxu0
    %2561 = vdwg.mxu0
    %2562 = vmatprep.subr.bf16.mxu0 %v1423
    %2563 = vmatpush1.bf16.msra.mxu0 %v1422
    %2564 = vmatprep.subr.bf16.mxu0 %v1472
    %2565 = vmatpush1.bf16.msra.mxu0 %v1471
    %2566 = vmatprep.subr.bf16.mxu0 %v1521
    %2567 = vmatpush1.bf16.msra.mxu0 %v1520
    %2568 = vmatprep.subr.bf16.mxu0 %v1570
    %2569 = vmatpush1.bf16.msra.mxu0 %v1569
    %2570 = vmatprep.subr.bf16.mxu0 %v1619
    %2571 = vmatpush1.bf16.msra.mxu0 %v1618
    %2572 = vmatprep.subr.bf16.mxu0 %v1668
    %2573 = vmatpush1.bf16.msra.mxu0 %v1667
    %2574 = vmatprep.subr.bf16.mxu0 %v2104
    %2575 = vmatpush1.bf16.msra.mxu0 %v2101
    %2576 = vmatprep.subr.bf16.mxu0 0
    %2577 = vmatpush1.bf16.msra.mxu0 0
    %2578 = vmatprep.subr.bf16.mxu0 0
    %2579 = vmatpush1.bf16.msra.mxu0 0
    %2580 = vmatprep.subr.bf16.mxu0 0
    %2581 = vmatpush1.bf16.msra.mxu0 0
    %2582 = vmatprep.subr.bf16.mxu0 0
    %2583 = vmatpush1.bf16.msra.mxu0 0
    %2584 = vmatprep.subr.bf16.mxu0 0
    %2585 = vmatpush1.bf16.msra.mxu0 0
    %2586 = vmatprep.subr.bf16.mxu0 0
    %2587 = vmatpush1.bf16.msra.mxu0 0
    %2588 = vmatprep.subr.bf16.mxu0 0
    %2589 = vmatpush1.bf16.msra.mxu0 0
    %2590 = vmatprep.subr.bf16.mxu0 0
    %2591 = vmatpush1.bf16.msra.mxu0 0
    %2592 = vmatprep.subr.bf16.mxu0 0
    %2593 = vmatpush1.bf16.msra.mxu0 0
    %2594 = vmatprep.mubr.bf16.mxu0 0
    %2595 = vmatmul.mubr.bf16.gmra.mrb[0].mxu0 %v2043
    %v2596 = vpop.f32.mrb[0].mxu0
    %v2597 = vadd.f32 0.0, %v2596
    %v2598 = vpop.f32.mrb[0].mxu0
    %v2599 = vadd.f32 0.0, %v2598
    %v2600 = vpop.f32.mrb[0].mxu0
    %v2601 = vpop.f32.mrb[0].mxu0
    %2602 = vdwg.mxu0
    %2603 = vmatprep.subr.bf16.mxu0 %v1425
    %2604 = vmatpush1.bf16.msra.mxu0 %v1424
    %2605 = vmatprep.subr.bf16.mxu0 %v1474
    %2606 = vmatpush1.bf16.msra.mxu0 %v1473
    %2607 = vmatprep.subr.bf16.mxu0 %v1523
    %2608 = vmatpush1.bf16.msra.mxu0 %v1522
    %2609 = vmatprep.subr.bf16.mxu0 %v1572
    %2610 = vmatpush1.bf16.msra.mxu0 %v1571
    %2611 = vmatprep.subr.bf16.mxu0 %v1621
    %2612 = vmatpush1.bf16.msra.mxu0 %v1620
    %2613 = vmatprep.subr.bf16.mxu0 %v1670
    %2614 = vmatpush1.bf16.msra.mxu0 %v1669
    %2615 = vmatprep.subr.bf16.mxu0 %v2110
    %2616 = vmatpush1.bf16.msra.mxu0 %v2107
    %2617 = vmatprep.subr.bf16.mxu0 0
    %2618 = vmatpush1.bf16.msra.mxu0 0
    %2619 = vmatprep.subr.bf16.mxu0 0
    %2620 = vmatpush1.bf16.msra.mxu0 0
    %2621 = vmatprep.subr.bf16.mxu0 0
    %2622 = vmatpush1.bf16.msra.mxu0 0
    %2623 = vmatprep.subr.bf16.mxu0 0
    %2624 = vmatpush1.bf16.msra.mxu0 0
    %2625 = vmatprep.subr.bf16.mxu0 0
    %2626 = vmatpush1.bf16.msra.mxu0 0
    %2627 = vmatprep.subr.bf16.mxu0 0
    %2628 = vmatpush1.bf16.msra.mxu0 0
    %2629 = vmatprep.subr.bf16.mxu0 0
    %2630 = vmatpush1.bf16.msra.mxu0 0
    %2631 = vmatprep.subr.bf16.mxu0 0
    %2632 = vmatpush1.bf16.msra.mxu0 0
    %2633 = vmatprep.subr.bf16.mxu0 0
    %2634 = vmatpush1.bf16.msra.mxu0 0
    %2635 = vmatprep.mubr.bf16.mxu0 0
    %2636 = vmatmul.mubr.bf16.gmra.mrb[0].mxu0 %v2043
    %v2637 = vpop.f32.mrb[0].mxu0
    %v2638 = vadd.f32 0.0, %v2637
    %v2639 = vpop.f32.mrb[0].mxu0
    %v2640 = vadd.f32 0.0, %v2639
    %v2641 = vpop.f32.mrb[0].mxu0
    %v2642 = vpop.f32.mrb[0].mxu0
    %2643 = vdwg.mxu0
    %2644 = vmatprep.subr.bf16.mxu0 %v1427
    %2645 = vmatpush1.bf16.msra.mxu0 %v1426
    %2646 = vmatprep.subr.bf16.mxu0 %v1476
    %2647 = vmatpush1.bf16.msra.mxu0 %v1475
    %2648 = vmatprep.subr.bf16.mxu0 %v1525
    %2649 = vmatpush1.bf16.msra.mxu0 %v1524
    %2650 = vmatprep.subr.bf16.mxu0 %v1574
    %2651 = vmatpush1.bf16.msra.mxu0 %v1573
    %2652 = vmatprep.subr.bf16.mxu0 %v1623
    %2653 = vmatpush1.bf16.msra.mxu0 %v1622
    %2654 = vmatprep.subr.bf16.mxu0 %v1672
    %2655 = vmatpush1.bf16.msra.mxu0 %v1671
    %2656 = vmatprep.subr.bf16.mxu0 %v2116
    %2657 = vmatpush1.bf16.msra.mxu0 %v2113
    %2658 = vmatprep.subr.bf16.mxu0 0
    %2659 = vmatpush1.bf16.msra.mxu0 0
    %2660 = vmatprep.subr.bf16.mxu0 0
    %2661 = vmatpush1.bf16.msra.mxu0 0
    %2662 = vmatprep.subr.bf16.mxu0 0
    %2663 = vmatpush1.bf16.msra.mxu0 0
    %2664 = vmatprep.subr.bf16.mxu0 0
    %2665 = vmatpush1.bf16.msra.mxu0 0
    %2666 = vmatprep.subr.bf16.mxu0 0
    %2667 = vmatpush1.bf16.msra.mxu0 0
    %2668 = vmatprep.subr.bf16.mxu0 0
    %2669 = vmatpush1.bf16.msra.mxu0 0
    %2670 = vmatprep.subr.bf16.mxu0 0
    %2671 = vmatpush1.bf16.msra.mxu0 0
    %2672 = vmatprep.subr.bf16.mxu0 0
    %2673 = vmatpush1.bf16.msra.mxu0 0
    %2674 = vmatprep.subr.bf16.mxu0 0
    %2675 = vmatpush1.bf16.msra.mxu0 0
    %2676 = vmatprep.mubr.bf16.mxu0 0
    %2677 = vmatmul.mubr.bf16.gmra.mrb[0].mxu0 %v2043
    %v2678 = vpop.f32.mrb[0].mxu0
    %v2679 = vadd.f32 0.0, %v2678
    %v2680 = vpop.f32.mrb[0].mxu0
    %v2681 = vadd.f32 0.0, %v2680
    %v2682 = vpop.f32.mrb[0].mxu0
    %v2683 = vpop.f32.mrb[0].mxu0
    %2684 = vdwg.mxu0
    %2685 = vmatprep.subr.bf16.mxu0 %v1429
    %2686 = vmatpush1.bf16.msra.mxu0 %v1428
    %2687 = vmatprep.subr.bf16.mxu0 %v1478
    %2688 = vmatpush1.bf16.msra.mxu0 %v1477
    %2689 = vmatprep.subr.bf16.mxu0 %v1527
    %2690 = vmatpush1.bf16.msra.mxu0 %v1526
    %2691 = vmatprep.subr.bf16.mxu0 %v1576
    %2692 = vmatpush1.bf16.msra.mxu0 %v1575
    %2693 = vmatprep.subr.bf16.mxu0 %v1625
    %2694 = vmatpush1.bf16.msra.mxu0 %v1624
    %2695 = vmatprep.subr.bf16.mxu0 %v1674
    %2696 = vmatpush1.bf16.msra.mxu0 %v1673
    %2697 = vmatprep.subr.bf16.mxu0 %v2122
    %2698 = vmatpush1.bf16.msra.mxu0 %v2119
    %2699 = vmatprep.subr.bf16.mxu0 0
    %2700 = vmatpush1.bf16.msra.mxu0 0
    %2701 = vmatprep.subr.bf16.mxu0 0
    %2702 = vmatpush1.bf16.msra.mxu0 0
    %2703 = vmatprep.subr.bf16.mxu0 0
    %2704 = vmatpush1.bf16.msra.mxu0 0
    %2705 = vmatprep.subr.bf16.mxu0 0
    %2706 = vmatpush1.bf16.msra.mxu0 0
    %2707 = vmatprep.subr.bf16.mxu0 0
    %2708 = vmatpush1.bf16.msra.mxu0 0
    %2709 = vmatprep.subr.bf16.mxu0 0
    %2710 = vmatpush1.bf16.msra.mxu0 0
    %2711 = vmatprep.subr.bf16.mxu0 0
    %2712 = vmatpush1.bf16.msra.mxu0 0
    %2713 = vmatprep.subr.bf16.mxu0 0
    %2714 = vmatpush1.bf16.msra.mxu0 0
    %2715 = vmatprep.subr.bf16.mxu0 0
    %2716 = vmatpush1.bf16.msra.mxu0 0
    %2717 = vmatprep.mubr.bf16.mxu0 0
    %2718 = vmatmul.mubr.bf16.gmra.mrb[0].mxu0 %v2043
    %v2719 = vpop.f32.mrb[0].mxu0
    %v2720 = vadd.f32 0.0, %v2719
    %v2721 = vpop.f32.mrb[0].mxu0
    %v2722 = vadd.f32 0.0, %v2721
    %v2723 = vpop.f32.mrb[0].mxu0
    %v2724 = vpop.f32.mrb[0].mxu0
    %2725 = vdwg.mxu0
    %2726 = vmatprep.subr.bf16.mxu0 %v1431
    %2727 = vmatpush1.bf16.msra.mxu0 %v1430
    %2728 = vmatprep.subr.bf16.mxu0 %v1480
    %2729 = vmatpush1.bf16.msra.mxu0 %v1479
    %2730 = vmatprep.subr.bf16.mxu0 %v1529
    %2731 = vmatpush1.bf16.msra.mxu0 %v1528
    %2732 = vmatprep.subr.bf16.mxu0 %v1578
    %2733 = vmatpush1.bf16.msra.mxu0 %v1577
    %2734 = vmatprep.subr.bf16.mxu0 %v1627
    %2735 = vmatpush1.bf16.msra.mxu0 %v1626
    %2736 = vmatprep.subr.bf16.mxu0 %v1676
    %2737 = vmatpush1.bf16.msra.mxu0 %v1675
    %2738 = vmatprep.subr.bf16.mxu0 %v2128
    %2739 = vmatpush1.bf16.msra.mxu0 %v2125
    %2740 = vmatprep.subr.bf16.mxu0 0
    %2741 = vmatpush1.bf16.msra.mxu0 0
    %2742 = vmatprep.subr.bf16.mxu0 0
    %2743 = vmatpush1.bf16.msra.mxu0 0
    %2744 = vmatprep.subr.bf16.mxu0 0
    %2745 = vmatpush1.bf16.msra.mxu0 0
    %2746 = vmatprep.subr.bf16.mxu0 0
    %2747 = vmatpush1.bf16.msra.mxu0 0
    %2748 = vmatprep.subr.bf16.mxu0 0
    %2749 = vmatpush1.bf16.msra.mxu0 0
    %2750 = vmatprep.subr.bf16.mxu0 0
    %2751 = vmatpush1.bf16.msra.mxu0 0
    %2752 = vmatprep.subr.bf16.mxu0 0
    %2753 = vmatpush1.bf16.msra.mxu0 0
    %2754 = vmatprep.subr.bf16.mxu0 0
    %2755 = vmatpush1.bf16.msra.mxu0 0
    %2756 = vmatprep.subr.bf16.mxu0 0
    %2757 = vmatpush1.bf16.msra.mxu0 0
    %2758 = vmatprep.mubr.bf16.mxu0 0
    %2759 = vmatmul.mubr.bf16.gmra.mrb[0].mxu0 %v2043
    %v2760 = vpop.f32.mrb[0].mxu0
    %v2761 = vadd.f32 0.0, %v2760
    %v2762 = vpop.f32.mrb[0].mxu0
    %v2763 = vadd.f32 0.0, %v2762
    %v2764 = vpop.f32.mrb[0].mxu0
    %v2765 = vpop.f32.mrb[0].mxu0
    %2766 = vdwg.mxu0
    %2767 = vmatprep.subr.bf16.mxu0 %v1433
    %2768 = vmatpush1.bf16.msra.mxu0 %v1432
    %2769 = vmatprep.subr.bf16.mxu0 %v1482
    %2770 = vmatpush1.bf16.msra.mxu0 %v1481
    %2771 = vmatprep.subr.bf16.mxu0 %v1531
    %2772 = vmatpush1.bf16.msra.mxu0 %v1530
    %2773 = vmatprep.subr.bf16.mxu0 %v1580
    %2774 = vmatpush1.bf16.msra.mxu0 %v1579
    %2775 = vmatprep.subr.bf16.mxu0 %v1629
    %2776 = vmatpush1.bf16.msra.mxu0 %v1628
    %2777 = vmatprep.subr.bf16.mxu0 %v1678
    %2778 = vmatpush1.bf16.msra.mxu0 %v1677
    %2779 = vmatprep.subr.bf16.mxu0 %v2134
    %2780 = vmatpush1.bf16.msra.mxu0 %v2131
    %2781 = vmatprep.subr.bf16.mxu0 0
    %2782 = vmatpush1.bf16.msra.mxu0 0
    %2783 = vmatprep.subr.bf16.mxu0 0
    %2784 = vmatpush1.bf16.msra.mxu0 0
    %2785 = vmatprep.subr.bf16.mxu0 0
    %2786 = vmatpush1.bf16.msra.mxu0 0
    %2787 = vmatprep.subr.bf16.mxu0 0
    %2788 = vmatpush1.bf16.msra.mxu0 0
    %2789 = vmatprep.subr.bf16.mxu0 0
    %2790 = vmatpush1.bf16.msra.mxu0 0
    %2791 = vmatprep.subr.bf16.mxu0 0
    %2792 = vmatpush1.bf16.msra.mxu0 0
    %2793 = vmatprep.subr.bf16.mxu0 0
    %2794 = vmatpush1.bf16.msra.mxu0 0
    %2795 = vmatprep.subr.bf16.mxu0 0
    %2796 = vmatpush1.bf16.msra.mxu0 0
    %2797 = vmatprep.subr.bf16.mxu0 0
    %2798 = vmatpush1.bf16.msra.mxu0 0
    %2799 = vmatprep.mubr.bf16.mxu0 0
    %2800 = vmatmul.mubr.bf16.gmra.mrb[0].mxu0 %v2043
    %v2801 = vpop.f32.mrb[0].mxu0
    %v2802 = vadd.f32 0.0, %v2801
    %v2803 = vpop.f32.mrb[0].mxu0
    %v2804 = vadd.f32 0.0, %v2803
    %v2805 = vpop.f32.mrb[0].mxu0
    %v2806 = vpop.f32.mrb[0].mxu0
    %2807 = vdwg.mxu0
    %2808 = vmatprep.subr.bf16.mxu0 %v1435
    %2809 = vmatpush1.bf16.msra.mxu0 %v1434
    %2810 = vmatprep.subr.bf16.mxu0 %v1484
    %2811 = vmatpush1.bf16.msra.mxu0 %v1483
    %2812 = vmatprep.subr.bf16.mxu0 %v1533
    %2813 = vmatpush1.bf16.msra.mxu0 %v1532
    %2814 = vmatprep.subr.bf16.mxu0 %v1582
    %2815 = vmatpush1.bf16.msra.mxu0 %v1581
    %2816 = vmatprep.subr.bf16.mxu0 %v1631
    %2817 = vmatpush1.bf16.msra.mxu0 %v1630
    %2818 = vmatprep.subr.bf16.mxu0 %v1680
    %2819 = vmatpush1.bf16.msra.mxu0 %v1679
    %2820 = vmatprep.subr.bf16.mxu0 %v2140
    %2821 = vmatpush1.bf16.msra.mxu0 %v2137
    %2822 = vmatprep.subr.bf16.mxu0 0
    %2823 = vmatpush1.bf16.msra.mxu0 0
    %2824 = vmatprep.subr.bf16.mxu0 0
    %2825 = vmatpush1.bf16.msra.mxu0 0
    %2826 = vmatprep.subr.bf16.mxu0 0
    %2827 = vmatpush1.bf16.msra.mxu0 0
    %2828 = vmatprep.subr.bf16.mxu0 0
    %2829 = vmatpush1.bf16.msra.mxu0 0
    %2830 = vmatprep.subr.bf16.mxu0 0
    %2831 = vmatpush1.bf16.msra.mxu0 0
    %2832 = vmatprep.subr.bf16.mxu0 0
    %2833 = vmatpush1.bf16.msra.mxu0 0
    %2834 = vmatprep.subr.bf16.mxu0 0
    %2835 = vmatpush1.bf16.msra.mxu0 0
    %2836 = vmatprep.subr.bf16.mxu0 0
    %2837 = vmatpush1.bf16.msra.mxu0 0
    %2838 = vmatprep.subr.bf16.mxu0 0
    %2839 = vmatpush1.bf16.msra.mxu0 0
    %2840 = vmatprep.mubr.bf16.mxu0 0
    %2841 = vmatmul.mubr.bf16.gmra.mrb[0].mxu0 %v2043
    %v2842 = vpop.f32.mrb[0].mxu0
    %v2843 = vadd.f32 0.0, %v2842
    %v2844 = vpop.f32.mrb[0].mxu0
    %v2845 = vadd.f32 0.0, %v2844
    %v2846 = vpop.f32.mrb[0].mxu0
    %v2847 = vpop.f32.mrb[0].mxu0
    %2848 = vdwg.mxu0
    %2849 = vmatprep.subr.bf16.mxu0 %v1437
    %2850 = vmatpush1.bf16.msra.mxu0 %v1436
    %2851 = vmatprep.subr.bf16.mxu0 %v1486
    %2852 = vmatpush1.bf16.msra.mxu0 %v1485
    %2853 = vmatprep.subr.bf16.mxu0 %v1535
    %2854 = vmatpush1.bf16.msra.mxu0 %v1534
    %2855 = vmatprep.subr.bf16.mxu0 %v1584
    %2856 = vmatpush1.bf16.msra.mxu0 %v1583
    %2857 = vmatprep.subr.bf16.mxu0 %v1633
    %2858 = vmatpush1.bf16.msra.mxu0 %v1632
    %2859 = vmatprep.subr.bf16.mxu0 %v1682
    %2860 = vmatpush1.bf16.msra.mxu0 %v1681
    %2861 = vmatprep.subr.bf16.mxu0 %v2146
    %2862 = vmatpush1.bf16.msra.mxu0 %v2143
    %2863 = vmatprep.subr.bf16.mxu0 0
    %2864 = vmatpush1.bf16.msra.mxu0 0
    %2865 = vmatprep.subr.bf16.mxu0 0
    %2866 = vmatpush1.bf16.msra.mxu0 0
    %2867 = vmatprep.subr.bf16.mxu0 0
    %2868 = vmatpush1.bf16.msra.mxu0 0
    %2869 = vmatprep.subr.bf16.mxu0 0
    %2870 = vmatpush1.bf16.msra.mxu0 0
    %2871 = vmatprep.subr.bf16.mxu0 0
    %2872 = vmatpush1.bf16.msra.mxu0 0
    %2873 = vmatprep.subr.bf16.mxu0 0
    %2874 = vmatpush1.bf16.msra.mxu0 0
    %2875 = vmatprep.subr.bf16.mxu0 0
    %2876 = vmatpush1.bf16.msra.mxu0 0
    %2877 = vmatprep.subr.bf16.mxu0 0
    %2878 = vmatpush1.bf16.msra.mxu0 0
    %2879 = vmatprep.subr.bf16.mxu0 0
    %2880 = vmatpush1.bf16.msra.mxu0 0
    %2881 = vmatprep.mubr.bf16.mxu0 0
    %2882 = vmatmul.mubr.bf16.gmra.mrb[0].mxu0 %v2043
    %v2883 = vpop.f32.mrb[0].mxu0
    %v2884 = vadd.f32 0.0, %v2883
    %v2885 = vpop.f32.mrb[0].mxu0
    %v2886 = vadd.f32 0.0, %v2885
    %v2887 = vpop.f32.mrb[0].mxu0
    %v2888 = vpop.f32.mrb[0].mxu0
    %2889 = vdwg.mxu0
    %2890 = vmatprep.subr.bf16.mxu0 %v1439
    %2891 = vmatpush1.bf16.msra.mxu0 %v1438
    %2892 = vmatprep.subr.bf16.mxu0 %v1488
    %2893 = vmatpush1.bf16.msra.mxu0 %v1487
    %2894 = vmatprep.subr.bf16.mxu0 %v1537
    %2895 = vmatpush1.bf16.msra.mxu0 %v1536
    %2896 = vmatprep.subr.bf16.mxu0 %v1586
    %2897 = vmatpush1.bf16.msra.mxu0 %v1585
    %2898 = vmatprep.subr.bf16.mxu0 %v1635
    %2899 = vmatpush1.bf16.msra.mxu0 %v1634
    %2900 = vmatprep.subr.bf16.mxu0 %v1684
    %2901 = vmatpush1.bf16.msra.mxu0 %v1683
    %2902 = vmatprep.subr.bf16.mxu0 %v2152
    %2903 = vmatpush1.bf16.msra.mxu0 %v2149
    %2904 = vmatprep.subr.bf16.mxu0 0
    %2905 = vmatpush1.bf16.msra.mxu0 0
    %2906 = vmatprep.subr.bf16.mxu0 0
    %2907 = vmatpush1.bf16.msra.mxu0 0
    %2908 = vmatprep.subr.bf16.mxu0 0
    %2909 = vmatpush1.bf16.msra.mxu0 0
    %2910 = vmatprep.subr.bf16.mxu0 0
    %2911 = vmatpush1.bf16.msra.mxu0 0
    %2912 = vmatprep.subr.bf16.mxu0 0
    %2913 = vmatpush1.bf16.msra.mxu0 0
    %2914 = vmatprep.subr.bf16.mxu0 0
    %2915 = vmatpush1.bf16.msra.mxu0 0
    %2916 = vmatprep.subr.bf16.mxu0 0
    %2917 = vmatpush1.bf16.msra.mxu0 0
    %2918 = vmatprep.subr.bf16.mxu0 0
    %2919 = vmatpush1.bf16.msra.mxu0 0
    %2920 = vmatprep.subr.bf16.mxu0 0
    %2921 = vmatpush1.bf16.msra.mxu0 0
    %2922 = vmatprep.mubr.bf16.mxu0 0
    %2923 = vmatmul.mubr.bf16.gmra.mrb[0].mxu0 %v2043
    %v2924 = vpop.f32.mrb[0].mxu0
    %v2925 = vadd.f32 0.0, %v2924
    %v2926 = vpop.f32.mrb[0].mxu0
    %v2927 = vadd.f32 0.0, %v2926
    %v2928 = vpop.f32.mrb[0].mxu0
    %v2929 = vpop.f32.mrb[0].mxu0
    %2930 = vdwg.mxu0
    %2931 = vmatprep.subr.bf16.mxu0 %v1441
    %2932 = vmatpush1.bf16.msra.mxu0 %v1440
    %2933 = vmatprep.subr.bf16.mxu0 %v1490
    %2934 = vmatpush1.bf16.msra.mxu0 %v1489
    %2935 = vmatprep.subr.bf16.mxu0 %v1539
    %2936 = vmatpush1.bf16.msra.mxu0 %v1538
    %2937 = vmatprep.subr.bf16.mxu0 %v1588
    %2938 = vmatpush1.bf16.msra.mxu0 %v1587
    %2939 = vmatprep.subr.bf16.mxu0 %v1637
    %2940 = vmatpush1.bf16.msra.mxu0 %v1636
    %2941 = vmatprep.subr.bf16.mxu0 %v1686
    %2942 = vmatpush1.bf16.msra.mxu0 %v1685
    %2943 = vmatprep.subr.bf16.mxu0 %v2158
    %2944 = vmatpush1.bf16.msra.mxu0 %v2155
    %2945 = vmatprep.subr.bf16.mxu0 0
    %2946 = vmatpush1.bf16.msra.mxu0 0
    %2947 = vmatprep.subr.bf16.mxu0 0
    %2948 = vmatpush1.bf16.msra.mxu0 0
    %2949 = vmatprep.subr.bf16.mxu0 0
    %2950 = vmatpush1.bf16.msra.mxu0 0
    %2951 = vmatprep.subr.bf16.mxu0 0
    %2952 = vmatpush1.bf16.msra.mxu0 0
    %2953 = vmatprep.subr.bf16.mxu0 0
    %2954 = vmatpush1.bf16.msra.mxu0 0
    %2955 = vmatprep.subr.bf16.mxu0 0
    %2956 = vmatpush1.bf16.msra.mxu0 0
    %2957 = vmatprep.subr.bf16.mxu0 0
    %2958 = vmatpush1.bf16.msra.mxu0 0
    %2959 = vmatprep.subr.bf16.mxu0 0
    %2960 = vmatpush1.bf16.msra.mxu0 0
    %2961 = vmatprep.subr.bf16.mxu0 0
    %2962 = vmatpush1.bf16.msra.mxu0 0
    %2963 = vmatprep.mubr.bf16.mxu0 0
    %2964 = vmatmul.mubr.bf16.gmra.mrb[0].mxu0 %v2043
    %v2965 = vpop.f32.mrb[0].mxu0
    %v2966 = vadd.f32 0.0, %v2965
    %v2967 = vpop.f32.mrb[0].mxu0
    %v2968 = vadd.f32 0.0, %v2967
    %v2969 = vpop.f32.mrb[0].mxu0
    %v2970 = vpop.f32.mrb[0].mxu0
    %2971 = vdwg.mxu0
    %2972 = vmatprep.subr.bf16.mxu0 %v1443
    %2973 = vmatpush1.bf16.msra.mxu0 %v1442
    %2974 = vmatprep.subr.bf16.mxu0 %v1492
    %2975 = vmatpush1.bf16.msra.mxu0 %v1491
    %2976 = vmatprep.subr.bf16.mxu0 %v1541
    %2977 = vmatpush1.bf16.msra.mxu0 %v1540
    %2978 = vmatprep.subr.bf16.mxu0 %v1590
    %2979 = vmatpush1.bf16.msra.mxu0 %v1589
    %2980 = vmatprep.subr.bf16.mxu0 %v1639
    %2981 = vmatpush1.bf16.msra.mxu0 %v1638
    %2982 = vmatprep.subr.bf16.mxu0 %v1688
    %2983 = vmatpush1.bf16.msra.mxu0 %v1687
    %2984 = vmatprep.subr.bf16.mxu0 %v2164
    %2985 = vmatpush1.bf16.msra.mxu0 %v2161
    %2986 = vmatprep.subr.bf16.mxu0 0
    %2987 = vmatpush1.bf16.msra.mxu0 0
    %2988 = vmatprep.subr.bf16.mxu0 0
    %2989 = vmatpush1.bf16.msra.mxu0 0
    %2990 = vmatprep.subr.bf16.mxu0 0
    %2991 = vmatpush1.bf16.msra.mxu0 0
    %2992 = vmatprep.subr.bf16.mxu0 0
    %2993 = vmatpush1.bf16.msra.mxu0 0
    %2994 = vmatprep.subr.bf16.mxu0 0
    %2995 = vmatpush1.bf16.msra.mxu0 0
    %2996 = vmatprep.subr.bf16.mxu0 0
    %2997 = vmatpush1.bf16.msra.mxu0 0
    %2998 = vmatprep.subr.bf16.mxu0 0
    %2999 = vmatpush1.bf16.msra.mxu0 0
    %3000 = vmatprep.subr.bf16.mxu0 0
    %3001 = vmatpush1.bf16.msra.mxu0 0
    %3002 = vmatprep.subr.bf16.mxu0 0
    %3003 = vmatpush1.bf16.msra.mxu0 0
    %3004 = vmatprep.mubr.bf16.mxu0 0
    %3005 = vmatmul.mubr.bf16.gmra.mrb[0].mxu0 %v2043
    %v3006 = vpop.f32.mrb[0].mxu0
    %v3007 = vadd.f32 0.0, %v3006
    %v3008 = vpop.f32.mrb[0].mxu0
    %v3009 = vadd.f32 0.0, %v3008
    %v3010 = vpop.f32.mrb[0].mxu0
    %v3011 = vpop.f32.mrb[0].mxu0
    %3012 = vdwg.mxu0
    %3013 = vmatprep.subr.bf16.mxu0 %v1445
    %3014 = vmatpush1.bf16.msra.mxu0 %v1444
    %3015 = vmatprep.subr.bf16.mxu0 %v1494
    %3016 = vmatpush1.bf16.msra.mxu0 %v1493
    %3017 = vmatprep.subr.bf16.mxu0 %v1543
    %3018 = vmatpush1.bf16.msra.mxu0 %v1542
    %3019 = vmatprep.subr.bf16.mxu0 %v1592
    %3020 = vmatpush1.bf16.msra.mxu0 %v1591
    %3021 = vmatprep.subr.bf16.mxu0 %v1641
    %3022 = vmatpush1.bf16.msra.mxu0 %v1640
    %3023 = vmatprep.subr.bf16.mxu0 %v1690
    %3024 = vmatpush1.bf16.msra.mxu0 %v1689
    %3025 = vmatprep.subr.bf16.mxu0 %v2170
    %3026 = vmatpush1.bf16.msra.mxu0 %v2167
    %3027 = vmatprep.subr.bf16.mxu0 0
    %3028 = vmatpush1.bf16.msra.mxu0 0
    %3029 = vmatprep.subr.bf16.mxu0 0
    %3030 = vmatpush1.bf16.msra.mxu0 0
    %3031 = vmatprep.subr.bf16.mxu0 0
    %3032 = vmatpush1.bf16.msra.mxu0 0
    %3033 = vmatprep.subr.bf16.mxu0 0
    %3034 = vmatpush1.bf16.msra.mxu0 0
    %3035 = vmatprep.subr.bf16.mxu0 0
    %3036 = vmatpush1.bf16.msra.mxu0 0
    %3037 = vmatprep.subr.bf16.mxu0 0
    %3038 = vmatpush1.bf16.msra.mxu0 0
    %3039 = vmatprep.subr.bf16.mxu0 0
    %3040 = vmatpush1.bf16.msra.mxu0 0
    %3041 = vmatprep.subr.bf16.mxu0 0
    %3042 = vmatpush1.bf16.msra.mxu0 0
    %3043 = vmatprep.subr.bf16.mxu0 0
    %3044 = vmatpush1.bf16.msra.mxu0 0
    %3045 = vmatprep.mubr.bf16.mxu0 0
    %3046 = vmatmul.mubr.bf16.gmra.mrb[0].mxu0 %v2043
    %v3047 = vpop.f32.mrb[0].mxu0
    %v3048 = vadd.f32 0.0, %v3047
    %v3049 = vpop.f32.mrb[0].mxu0
    %v3050 = vadd.f32 0.0, %v3049
    %v3051 = vpop.f32.mrb[0].mxu0
    %v3052 = vpop.f32.mrb[0].mxu0
    %3053 = vdwg.mxu0
    %3054 = vmatprep.subr.bf16.mxu0 %v1447
    %3055 = vmatpush1.bf16.msra.mxu0 %v1446
    %3056 = vmatprep.subr.bf16.mxu0 %v1496
    %3057 = vmatpush1.bf16.msra.mxu0 %v1495
    %3058 = vmatprep.subr.bf16.mxu0 %v1545
    %3059 = vmatpush1.bf16.msra.mxu0 %v1544
    %3060 = vmatprep.subr.bf16.mxu0 %v1594
    %3061 = vmatpush1.bf16.msra.mxu0 %v1593
    %3062 = vmatprep.subr.bf16.mxu0 %v1643
    %3063 = vmatpush1.bf16.msra.mxu0 %v1642
    %3064 = vmatprep.subr.bf16.mxu0 %v1692
    %3065 = vmatpush1.bf16.msra.mxu0 %v1691
    %3066 = vmatprep.subr.bf16.mxu0 %v2176
    %3067 = vmatpush1.bf16.msra.mxu0 %v2173
    %3068 = vmatprep.subr.bf16.mxu0 0
    %3069 = vmatpush1.bf16.msra.mxu0 0
    %3070 = vmatprep.subr.bf16.mxu0 0
    %3071 = vmatpush1.bf16.msra.mxu0 0
    %3072 = vmatprep.subr.bf16.mxu0 0
    %3073 = vmatpush1.bf16.msra.mxu0 0
    %3074 = vmatprep.subr.bf16.mxu0 0
    %3075 = vmatpush1.bf16.msra.mxu0 0
    %3076 = vmatprep.subr.bf16.mxu0 0
    %3077 = vmatpush1.bf16.msra.mxu0 0
    %3078 = vmatprep.subr.bf16.mxu0 0
    %3079 = vmatpush1.bf16.msra.mxu0 0
    %3080 = vmatprep.subr.bf16.mxu0 0
    %3081 = vmatpush1.bf16.msra.mxu0 0
    %3082 = vmatprep.subr.bf16.mxu0 0
    %3083 = vmatpush1.bf16.msra.mxu0 0
    %3084 = vmatprep.subr.bf16.mxu0 0
    %3085 = vmatpush1.bf16.msra.mxu0 0
    %3086 = vmatprep.mubr.bf16.mxu0 0
    %3087 = vmatmul.mubr.bf16.gmra.mrb[0].mxu0 %v2043
    %v3088 = vpop.f32.mrb[0].mxu0
    %v3089 = vadd.f32 0.0, %v3088
    %v3090 = vpop.f32.mrb[0].mxu0
    %v3091 = vadd.f32 0.0, %v3090
    %v3092 = vpop.f32.mrb[0].mxu0
    %v3093 = vpop.f32.mrb[0].mxu0
    %3094 = vdwg.mxu0
    %3095 = vmatprep.subr.bf16.mxu0 %v1449
    %3096 = vmatpush1.bf16.msra.mxu0 %v1448
    %3097 = vmatprep.subr.bf16.mxu0 %v1498
    %3098 = vmatpush1.bf16.msra.mxu0 %v1497
    %3099 = vmatprep.subr.bf16.mxu0 %v1547
    %3100 = vmatpush1.bf16.msra.mxu0 %v1546
    %3101 = vmatprep.subr.bf16.mxu0 %v1596
    %3102 = vmatpush1.bf16.msra.mxu0 %v1595
    %3103 = vmatprep.subr.bf16.mxu0 %v1645
    %3104 = vmatpush1.bf16.msra.mxu0 %v1644
    %3105 = vmatprep.subr.bf16.mxu0 %v1694
    %3106 = vmatpush1.bf16.msra.mxu0 %v1693
    %3107 = vmatprep.subr.bf16.mxu0 %v2182
    %3108 = vmatpush1.bf16.msra.mxu0 %v2179
    %3109 = vmatprep.subr.bf16.mxu0 0
    %3110 = vmatpush1.bf16.msra.mxu0 0
    %3111 = vmatprep.subr.bf16.mxu0 0
    %3112 = vmatpush1.bf16.msra.mxu0 0
    %3113 = vmatprep.subr.bf16.mxu0 0
    %3114 = vmatpush1.bf16.msra.mxu0 0
    %3115 = vmatprep.subr.bf16.mxu0 0
    %3116 = vmatpush1.bf16.msra.mxu0 0
    %3117 = vmatprep.subr.bf16.mxu0 0
    %3118 = vmatpush1.bf16.msra.mxu0 0
    %3119 = vmatprep.subr.bf16.mxu0 0
    %3120 = vmatpush1.bf16.msra.mxu0 0
    %3121 = vmatprep.subr.bf16.mxu0 0
    %3122 = vmatpush1.bf16.msra.mxu0 0
    %3123 = vmatprep.subr.bf16.mxu0 0
    %3124 = vmatpush1.bf16.msra.mxu0 0
    %3125 = vmatprep.subr.bf16.mxu0 0
    %3126 = vmatpush1.bf16.msra.mxu0 0
    %3127 = vmatprep.mubr.bf16.mxu0 0
    %3128 = vmatmul.mubr.bf16.gmra.mrb[0].mxu0 %v2043
    %v3129 = vpop.f32.mrb[0].mxu0
    %v3130 = vadd.f32 0.0, %v3129
    %v3131 = vpop.f32.mrb[0].mxu0
    %v3132 = vadd.f32 0.0, %v3131
    %v3133 = vpop.f32.mrb[0].mxu0
    %v3134 = vpop.f32.mrb[0].mxu0
    %3135 = vdwg.mxu0
    %3136 = vmatprep.subr.bf16.mxu0 %v1451
    %3137 = vmatpush1.bf16.msra.mxu0 %v1450
    %3138 = vmatprep.subr.bf16.mxu0 %v1500
    %3139 = vmatpush1.bf16.msra.mxu0 %v1499
    %3140 = vmatprep.subr.bf16.mxu0 %v1549
    %3141 = vmatpush1.bf16.msra.mxu0 %v1548
    %3142 = vmatprep.subr.bf16.mxu0 %v1598
    %3143 = vmatpush1.bf16.msra.mxu0 %v1597
    %3144 = vmatprep.subr.bf16.mxu0 %v1647
    %3145 = vmatpush1.bf16.msra.mxu0 %v1646
    %3146 = vmatprep.subr.bf16.mxu0 %v1696
    %3147 = vmatpush1.bf16.msra.mxu0 %v1695
    %3148 = vmatprep.subr.bf16.mxu0 %v2188
    %3149 = vmatpush1.bf16.msra.mxu0 %v2185
    %3150 = vmatprep.subr.bf16.mxu0 0
    %3151 = vmatpush1.bf16.msra.mxu0 0
    %3152 = vmatprep.subr.bf16.mxu0 0
    %3153 = vmatpush1.bf16.msra.mxu0 0
    %3154 = vmatprep.subr.bf16.mxu0 0
    %3155 = vmatpush1.bf16.msra.mxu0 0
    %3156 = vmatprep.subr.bf16.mxu0 0
    %3157 = vmatpush1.bf16.msra.mxu0 0
    %3158 = vmatprep.subr.bf16.mxu0 0
    %3159 = vmatpush1.bf16.msra.mxu0 0
    %3160 = vmatprep.subr.bf16.mxu0 0
    %3161 = vmatpush1.bf16.msra.mxu0 0
    %3162 = vmatprep.subr.bf16.mxu0 0
    %3163 = vmatpush1.bf16.msra.mxu0 0
    %3164 = vmatprep.subr.bf16.mxu0 0
    %3165 = vmatpush1.bf16.msra.mxu0 0
    %3166 = vmatprep.subr.bf16.mxu0 0
    %3167 = vmatpush1.bf16.msra.mxu0 0
    %3168 = vmatprep.mubr.bf16.mxu0 0
    %3169 = vmatmul.mubr.bf16.gmra.mrb[0].mxu0 %v2043
    %v3170 = vpop.f32.mrb[0].mxu0
    %v3171 = vadd.f32 0.0, %v3170
    %v3172 = vpop.f32.mrb[0].mxu0
    %v3173 = vadd.f32 0.0, %v3172
    %v3174 = vpop.f32.mrb[0].mxu0
    %v3175 = vpop.f32.mrb[0].mxu0
    %3176 = vdwg.mxu0
    %3177 = vmatprep.subr.bf16.mxu0 0
    %3178 = vmatpush1.bf16.msra.mxu0 %v1452
    %3179 = vmatprep.subr.bf16.mxu0 0
    %3180 = vmatpush1.bf16.msra.mxu0 %v1501
    %3181 = vmatprep.subr.bf16.mxu0 0
    %3182 = vmatpush1.bf16.msra.mxu0 %v1550
    %3183 = vmatprep.subr.bf16.mxu0 0
    %3184 = vmatpush1.bf16.msra.mxu0 %v1599
    %3185 = vmatprep.subr.bf16.mxu0 0
    %3186 = vmatpush1.bf16.msra.mxu0 %v1648
    %3187 = vmatprep.subr.bf16.mxu0 0
    %3188 = vmatpush1.bf16.msra.mxu0 %v1697
    %3189 = vmatprep.subr.bf16.mxu0 0
    %3190 = vmatpush1.bf16.msra.mxu0 %v2191
    %3191 = vmatprep.subr.bf16.mxu0 0
    %3192 = vmatpush1.bf16.msra.mxu0 0
    %3193 = vmatprep.subr.bf16.mxu0 0
    %3194 = vmatpush1.bf16.msra.mxu0 0
    %3195 = vmatprep.subr.bf16.mxu0 0
    %3196 = vmatpush1.bf16.msra.mxu0 0
    %3197 = vmatprep.subr.bf16.mxu0 0
    %3198 = vmatpush1.bf16.msra.mxu0 0
    %3199 = vmatprep.subr.bf16.mxu0 0
    %3200 = vmatpush1.bf16.msra.mxu0 0
    %3201 = vmatprep.subr.bf16.mxu0 0
    %3202 = vmatpush1.bf16.msra.mxu0 0
    %3203 = vmatprep.subr.bf16.mxu0 0
    %3204 = vmatpush1.bf16.msra.mxu0 0
    %3205 = vmatprep.subr.bf16.mxu0 0
    %3206 = vmatpush1.bf16.msra.mxu0 0
    %3207 = vmatprep.subr.bf16.mxu0 0
    %3208 = vmatpush1.bf16.msra.mxu0 0
    %3209 = vmatprep.mubr.bf16.mxu0 0
    %3210 = vmatmul.mubr.bf16.gmra.mrb[0].mxu0 %v2043
    %v3211 = vpop.f32.mrb[0].mxu0
    %v3212 = vadd.f32 0.0, %v3211
    %v3213 = vpop.f32.mrb[0].mxu0
    %v3214 = vpop.f32.mrb[0].mxu0
    %v3215 = vpop.f32.mrb[0].mxu0
    %3216 = vdwg.mxu0
    %v3217 = vsel %vm2045, %v2228, 0.0
    %v3218 = vrot.slane %v3217, 4
    %v3219 = vadd.f32 %v3217, %v3218
    %v3220 = vrot.slane %v3219, 2
    %v3221 = vadd.f32 %v3219, %v3220
    %v3222 = vrot.slane %v3221, 1
    %v3223 = vadd.f32 %v3221, %v3222
    %v3224 = vsel %vm2045, %v2230, 0.0
    %v3225 = vrot.slane %v3224, 4
    %v3226 = vadd.f32 %v3224, %v3225
    %v3227 = vrot.slane %v3226, 2
    %v3228 = vadd.f32 %v3226, %v3227
    %v3229 = vrot.slane %v3228, 1
    %v3230 = vadd.f32 %v3228, %v3229
    %v3231 = vsel %vm2045, %v2269, 0.0
    %v3232 = vrot.slane %v3231, 4
    %v3233 = vadd.f32 %v3231, %v3232
    %v3234 = vrot.slane %v3233, 2
    %v3235 = vadd.f32 %v3233, %v3234
    %v3236 = vrot.slane %v3235, 1
    %v3237 = vadd.f32 %v3235, %v3236
    %v3238 = vsel %vm2045, %v2271, 0.0
    %v3239 = vrot.slane %v3238, 4
    %v3240 = vadd.f32 %v3238, %v3239
    %v3241 = vrot.slane %v3240, 2
    %v3242 = vadd.f32 %v3240, %v3241
    %v3243 = vrot.slane %v3242, 1
    %v3244 = vadd.f32 %v3242, %v3243
    %v3245 = vsel %vm2045, %v2310, 0.0
    %v3246 = vrot.slane %v3245, 4
    %v3247 = vadd.f32 %v3245, %v3246
    %v3248 = vrot.slane %v3247, 2
    %v3249 = vadd.f32 %v3247, %v3248
    %v3250 = vrot.slane %v3249, 1
    %v3251 = vadd.f32 %v3249, %v3250
    %v3252 = vsel %vm2045, %v2312, 0.0
    %v3253 = vrot.slane %v3252, 4
    %v3254 = vadd.f32 %v3252, %v3253
    %v3255 = vrot.slane %v3254, 2
    %v3256 = vadd.f32 %v3254, %v3255
    %v3257 = vrot.slane %v3256, 1
    %v3258 = vadd.f32 %v3256, %v3257
    %v3259 = vsel %vm2045, %v2351, 0.0
    %v3260 = vrot.slane %v3259, 4
    %v3261 = vadd.f32 %v3259, %v3260
    %v3262 = vrot.slane %v3261, 2
    %v3263 = vadd.f32 %v3261, %v3262
    %v3264 = vrot.slane %v3263, 1
    %v3265 = vadd.f32 %v3263, %v3264
    %v3266 = vsel %vm2045, %v2353, 0.0
    %v3267 = vrot.slane %v3266, 4
    %v3268 = vadd.f32 %v3266, %v3267
    %v3269 = vrot.slane %v3268, 2
    %v3270 = vadd.f32 %v3268, %v3269
    %v3271 = vrot.slane %v3270, 1
    %v3272 = vadd.f32 %v3270, %v3271
    %v3273 = vsel %vm2045, %v2392, 0.0
    %v3274 = vrot.slane %v3273, 4
    %v3275 = vadd.f32 %v3273, %v3274
    %v3276 = vrot.slane %v3275, 2
    %v3277 = vadd.f32 %v3275, %v3276
    %v3278 = vrot.slane %v3277, 1
    %v3279 = vadd.f32 %v3277, %v3278
    %v3280 = vsel %vm2045, %v2394, 0.0
    %v3281 = vrot.slane %v3280, 4
    %v3282 = vadd.f32 %v3280, %v3281
    %v3283 = vrot.slane %v3282, 2
    %v3284 = vadd.f32 %v3282, %v3283
    %v3285 = vrot.slane %v3284, 1
    %v3286 = vadd.f32 %v3284, %v3285
    %v3287 = vsel %vm2045, %v2433, 0.0
    %v3288 = vrot.slane %v3287, 4
    %v3289 = vadd.f32 %v3287, %v3288
    %v3290 = vrot.slane %v3289, 2
    %v3291 = vadd.f32 %v3289, %v3290
    %v3292 = vrot.slane %v3291, 1
    %v3293 = vadd.f32 %v3291, %v3292
    %v3294 = vsel %vm2045, %v2435, 0.0
    %v3295 = vrot.slane %v3294, 4
    %v3296 = vadd.f32 %v3294, %v3295
    %v3297 = vrot.slane %v3296, 2
    %v3298 = vadd.f32 %v3296, %v3297
    %v3299 = vrot.slane %v3298, 1
    %v3300 = vadd.f32 %v3298, %v3299
    %v3301 = vsel %vm2045, %v2474, 0.0
    %v3302 = vrot.slane %v3301, 4
    %v3303 = vadd.f32 %v3301, %v3302
    %v3304 = vrot.slane %v3303, 2
    %v3305 = vadd.f32 %v3303, %v3304
    %v3306 = vrot.slane %v3305, 1
    %v3307 = vadd.f32 %v3305, %v3306
    %v3308 = vsel %vm2045, %v2476, 0.0
    %v3309 = vrot.slane %v3308, 4
    %v3310 = vadd.f32 %v3308, %v3309
    %v3311 = vrot.slane %v3310, 2
    %v3312 = vadd.f32 %v3310, %v3311
    %v3313 = vrot.slane %v3312, 1
    %v3314 = vadd.f32 %v3312, %v3313
    %v3315 = vsel %vm2045, %v2515, 0.0
    %v3316 = vrot.slane %v3315, 4
    %v3317 = vadd.f32 %v3315, %v3316
    %v3318 = vrot.slane %v3317, 2
    %v3319 = vadd.f32 %v3317, %v3318
    %v3320 = vrot.slane %v3319, 1
    %v3321 = vadd.f32 %v3319, %v3320
    %v3322 = vsel %vm2045, %v2517, 0.0
    %v3323 = vrot.slane %v3322, 4
    %v3324 = vadd.f32 %v3322, %v3323
    %v3325 = vrot.slane %v3324, 2
    %v3326 = vadd.f32 %v3324, %v3325
    %v3327 = vrot.slane %v3326, 1
    %v3328 = vadd.f32 %v3326, %v3327
    %v3329 = vsel %vm2045, %v2556, 0.0
    %v3330 = vrot.slane %v3329, 4
    %v3331 = vadd.f32 %v3329, %v3330
    %v3332 = vrot.slane %v3331, 2
    %v3333 = vadd.f32 %v3331, %v3332
    %v3334 = vrot.slane %v3333, 1
    %v3335 = vadd.f32 %v3333, %v3334
    %v3336 = vsel %vm2045, %v2558, 0.0
    %v3337 = vrot.slane %v3336, 4
    %v3338 = vadd.f32 %v3336, %v3337
    %v3339 = vrot.slane %v3338, 2
    %v3340 = vadd.f32 %v3338, %v3339
    %v3341 = vrot.slane %v3340, 1
    %v3342 = vadd.f32 %v3340, %v3341
    %v3343 = vsel %vm2045, %v2597, 0.0
    %v3344 = vrot.slane %v3343, 4
    %v3345 = vadd.f32 %v3343, %v3344
    %v3346 = vrot.slane %v3345, 2
    %v3347 = vadd.f32 %v3345, %v3346
    %v3348 = vrot.slane %v3347, 1
    %v3349 = vadd.f32 %v3347, %v3348
    %v3350 = vsel %vm2045, %v2599, 0.0
    %v3351 = vrot.slane %v3350, 4
    %v3352 = vadd.f32 %v3350, %v3351
    %v3353 = vrot.slane %v3352, 2
    %v3354 = vadd.f32 %v3352, %v3353
    %v3355 = vrot.slane %v3354, 1
    %v3356 = vadd.f32 %v3354, %v3355
    %v3357 = vsel %vm2045, %v2638, 0.0
    %v3358 = vrot.slane %v3357, 4
    %v3359 = vadd.f32 %v3357, %v3358
    %v3360 = vrot.slane %v3359, 2
    %v3361 = vadd.f32 %v3359, %v3360
    %v3362 = vrot.slane %v3361, 1
    %v3363 = vadd.f32 %v3361, %v3362
    %v3364 = vsel %vm2045, %v2640, 0.0
    %v3365 = vrot.slane %v3364, 4
    %v3366 = vadd.f32 %v3364, %v3365
    %v3367 = vrot.slane %v3366, 2
    %v3368 = vadd.f32 %v3366, %v3367
    %v3369 = vrot.slane %v3368, 1
    %v3370 = vadd.f32 %v3368, %v3369
    %v3371 = vsel %vm2045, %v2679, 0.0
    %v3372 = vrot.slane %v3371, 4
    %v3373 = vadd.f32 %v3371, %v3372
    %v3374 = vrot.slane %v3373, 2
    %v3375 = vadd.f32 %v3373, %v3374
    %v3376 = vrot.slane %v3375, 1
    %v3377 = vadd.f32 %v3375, %v3376
    %v3378 = vsel %vm2045, %v2681, 0.0
    %v3379 = vrot.slane %v3378, 4
    %v3380 = vadd.f32 %v3378, %v3379
    %v3381 = vrot.slane %v3380, 2
    %v3382 = vadd.f32 %v3380, %v3381
    %v3383 = vrot.slane %v3382, 1
    %v3384 = vadd.f32 %v3382, %v3383
    %v3385 = vsel %vm2045, %v2720, 0.0
    %v3386 = vrot.slane %v3385, 4
    %v3387 = vadd.f32 %v3385, %v3386
    %v3388 = vrot.slane %v3387, 2
    %v3389 = vadd.f32 %v3387, %v3388
    %v3390 = vrot.slane %v3389, 1
    %v3391 = vadd.f32 %v3389, %v3390
    %v3392 = vsel %vm2045, %v2722, 0.0
    %v3393 = vrot.slane %v3392, 4
    %v3394 = vadd.f32 %v3392, %v3393
    %v3395 = vrot.slane %v3394, 2
    %v3396 = vadd.f32 %v3394, %v3395
    %v3397 = vrot.slane %v3396, 1
    %v3398 = vadd.f32 %v3396, %v3397
    %v3399 = vsel %vm2045, %v2761, 0.0
    %v3400 = vrot.slane %v3399, 4
    %v3401 = vadd.f32 %v3399, %v3400
    %v3402 = vrot.slane %v3401, 2
    %v3403 = vadd.f32 %v3401, %v3402
    %v3404 = vrot.slane %v3403, 1
    %v3405 = vadd.f32 %v3403, %v3404
    %v3406 = vsel %vm2045, %v2763, 0.0
    %v3407 = vrot.slane %v3406, 4
    %v3408 = vadd.f32 %v3406, %v3407
    %v3409 = vrot.slane %v3408, 2
    %v3410 = vadd.f32 %v3408, %v3409
    %v3411 = vrot.slane %v3410, 1
    %v3412 = vadd.f32 %v3410, %v3411
    %v3413 = vsel %vm2045, %v2802, 0.0
    %v3414 = vrot.slane %v3413, 4
    %v3415 = vadd.f32 %v3413, %v3414
    %v3416 = vrot.slane %v3415, 2
    %v3417 = vadd.f32 %v3415, %v3416
    %v3418 = vrot.slane %v3417, 1
    %v3419 = vadd.f32 %v3417, %v3418
    %v3420 = vsel %vm2045, %v2804, 0.0
    %v3421 = vrot.slane %v3420, 4
    %v3422 = vadd.f32 %v3420, %v3421
    %v3423 = vrot.slane %v3422, 2
    %v3424 = vadd.f32 %v3422, %v3423
    %v3425 = vrot.slane %v3424, 1
    %v3426 = vadd.f32 %v3424, %v3425
    %v3427 = vsel %vm2045, %v2843, 0.0
    %v3428 = vrot.slane %v3427, 4
    %v3429 = vadd.f32 %v3427, %v3428
    %v3430 = vrot.slane %v3429, 2
    %v3431 = vadd.f32 %v3429, %v3430
    %v3432 = vrot.slane %v3431, 1
    %v3433 = vadd.f32 %v3431, %v3432
    %v3434 = vsel %vm2045, %v2845, 0.0
    %v3435 = vrot.slane %v3434, 4
    %v3436 = vadd.f32 %v3434, %v3435
    %v3437 = vrot.slane %v3436, 2
    %v3438 = vadd.f32 %v3436, %v3437
    %v3439 = vrot.slane %v3438, 1
    %v3440 = vadd.f32 %v3438, %v3439
    %v3441 = vsel %vm2045, %v2884, 0.0
    %v3442 = vrot.slane %v3441, 4
    %v3443 = vadd.f32 %v3441, %v3442
    %v3444 = vrot.slane %v3443, 2
    %v3445 = vadd.f32 %v3443, %v3444
    %v3446 = vrot.slane %v3445, 1
    %v3447 = vadd.f32 %v3445, %v3446
    %v3448 = vsel %vm2045, %v2886, 0.0
    %v3449 = vrot.slane %v3448, 4
    %v3450 = vadd.f32 %v3448, %v3449
    %v3451 = vrot.slane %v3450, 2
    %v3452 = vadd.f32 %v3450, %v3451
    %v3453 = vrot.slane %v3452, 1
    %v3454 = vadd.f32 %v3452, %v3453
    %v3455 = vsel %vm2045, %v2925, 0.0
    %v3456 = vrot.slane %v3455, 4
    %v3457 = vadd.f32 %v3455, %v3456
    %v3458 = vrot.slane %v3457, 2
    %v3459 = vadd.f32 %v3457, %v3458
    %v3460 = vrot.slane %v3459, 1
    %v3461 = vadd.f32 %v3459, %v3460
    %v3462 = vsel %vm2045, %v2927, 0.0
    %v3463 = vrot.slane %v3462, 4
    %v3464 = vadd.f32 %v3462, %v3463
    %v3465 = vrot.slane %v3464, 2
    %v3466 = vadd.f32 %v3464, %v3465
    %v3467 = vrot.slane %v3466, 1
    %v3468 = vadd.f32 %v3466, %v3467
    %v3469 = vsel %vm2045, %v2966, 0.0
    %v3470 = vrot.slane %v3469, 4
    %v3471 = vadd.f32 %v3469, %v3470
    %v3472 = vrot.slane %v3471, 2
    %v3473 = vadd.f32 %v3471, %v3472
    %v3474 = vrot.slane %v3473, 1
    %v3475 = vadd.f32 %v3473, %v3474
    %v3476 = vsel %vm2045, %v2968, 0.0
    %v3477 = vrot.slane %v3476, 4
    %v3478 = vadd.f32 %v3476, %v3477
    %v3479 = vrot.slane %v3478, 2
    %v3480 = vadd.f32 %v3478, %v3479
    %v3481 = vrot.slane %v3480, 1
    %v3482 = vadd.f32 %v3480, %v3481
    %v3483 = vsel %vm2045, %v3007, 0.0
    %v3484 = vrot.slane %v3483, 4
    %v3485 = vadd.f32 %v3483, %v3484
    %v3486 = vrot.slane %v3485, 2
    %v3487 = vadd.f32 %v3485, %v3486
    %v3488 = vrot.slane %v3487, 1
    %v3489 = vadd.f32 %v3487, %v3488
    %v3490 = vsel %vm2045, %v3009, 0.0
    %v3491 = vrot.slane %v3490, 4
    %v3492 = vadd.f32 %v3490, %v3491
    %v3493 = vrot.slane %v3492, 2
    %v3494 = vadd.f32 %v3492, %v3493
    %v3495 = vrot.slane %v3494, 1
    %v3496 = vadd.f32 %v3494, %v3495
    %v3497 = vsel %vm2045, %v3048, 0.0
    %v3498 = vrot.slane %v3497, 4
    %v3499 = vadd.f32 %v3497, %v3498
    %v3500 = vrot.slane %v3499, 2
    %v3501 = vadd.f32 %v3499, %v3500
    %v3502 = vrot.slane %v3501, 1
    %v3503 = vadd.f32 %v3501, %v3502
    %v3504 = vsel %vm2045, %v3050, 0.0
    %v3505 = vrot.slane %v3504, 4
    %v3506 = vadd.f32 %v3504, %v3505
    %v3507 = vrot.slane %v3506, 2
    %v3508 = vadd.f32 %v3506, %v3507
    %v3509 = vrot.slane %v3508, 1
    %v3510 = vadd.f32 %v3508, %v3509
    %v3511 = vsel %vm2045, %v3089, 0.0
    %v3512 = vrot.slane %v3511, 4
    %v3513 = vadd.f32 %v3511, %v3512
    %v3514 = vrot.slane %v3513, 2
    %v3515 = vadd.f32 %v3513, %v3514
    %v3516 = vrot.slane %v3515, 1
    %v3517 = vadd.f32 %v3515, %v3516
    %v3518 = vsel %vm2045, %v3091, 0.0
    %v3519 = vrot.slane %v3518, 4
    %v3520 = vadd.f32 %v3518, %v3519
    %v3521 = vrot.slane %v3520, 2
    %v3522 = vadd.f32 %v3520, %v3521
    %v3523 = vrot.slane %v3522, 1
    %v3524 = vadd.f32 %v3522, %v3523
    %v3525 = vsel %vm2045, %v3130, 0.0
    %v3526 = vrot.slane %v3525, 4
    %v3527 = vadd.f32 %v3525, %v3526
    %v3528 = vrot.slane %v3527, 2
    %v3529 = vadd.f32 %v3527, %v3528
    %v3530 = vrot.slane %v3529, 1
    %v3531 = vadd.f32 %v3529, %v3530
    %v3532 = vsel %vm2045, %v3132, 0.0
    %v3533 = vrot.slane %v3532, 4
    %v3534 = vadd.f32 %v3532, %v3533
    %v3535 = vrot.slane %v3534, 2
    %v3536 = vadd.f32 %v3534, %v3535
    %v3537 = vrot.slane %v3536, 1
    %v3538 = vadd.f32 %v3536, %v3537
    %v3539 = vsel %vm2045, %v3171, 0.0
    %v3540 = vrot.slane %v3539, 4
    %v3541 = vadd.f32 %v3539, %v3540
    %v3542 = vrot.slane %v3541, 2
    %v3543 = vadd.f32 %v3541, %v3542
    %v3544 = vrot.slane %v3543, 1
    %v3545 = vadd.f32 %v3543, %v3544
    %v3546 = vsel %vm2045, %v3173, 0.0
    %v3547 = vrot.slane %v3546, 4
    %v3548 = vadd.f32 %v3546, %v3547
    %v3549 = vrot.slane %v3548, 2
    %v3550 = vadd.f32 %v3548, %v3549
    %v3551 = vrot.slane %v3550, 1
    %v3552 = vadd.f32 %v3550, %v3551
    %v3553 = vsel %vm2045, %v3212, 0.0
    %v3554 = vrot.slane %v3553, 4
    %v3555 = vadd.f32 %v3553, %v3554
    %v3556 = vrot.slane %v3555, 2
    %v3557 = vadd.f32 %v3555, %v3556
    %v3558 = vrot.slane %v3557, 1
    %v3559 = vadd.f32 %v3557, %v3558
    %v3560 = vmul.f32 %v2228, %v2228
    %v3561 = vmul.f32 %v2230, %v2230
    %v3562 = vmul.f32 %v2269, %v2269
    %v3563 = vmul.f32 %v2271, %v2271
    %v3564 = vmul.f32 %v2310, %v2310
    %v3565 = vmul.f32 %v2312, %v2312
    %v3566 = vmul.f32 %v2351, %v2351
    %v3567 = vmul.f32 %v2353, %v2353
    %v3568 = vmul.f32 %v2392, %v2392
    %v3569 = vmul.f32 %v2394, %v2394
    %v3570 = vmul.f32 %v2433, %v2433
    %v3571 = vmul.f32 %v2435, %v2435
    %v3572 = vmul.f32 %v2474, %v2474
    %v3573 = vmul.f32 %v2476, %v2476
    %v3574 = vmul.f32 %v2515, %v2515
    %v3575 = vmul.f32 %v2517, %v2517
    %v3576 = vmul.f32 %v2556, %v2556
    %v3577 = vmul.f32 %v2558, %v2558
    %v3578 = vmul.f32 %v2597, %v2597
    %v3579 = vmul.f32 %v2599, %v2599
    %v3580 = vmul.f32 %v2638, %v2638
    %v3581 = vmul.f32 %v2640, %v2640
    %v3582 = vmul.f32 %v2679, %v2679
    %v3583 = vmul.f32 %v2681, %v2681
    %v3584 = vmul.f32 %v2720, %v2720
    %v3585 = vmul.f32 %v2722, %v2722
    %v3586 = vmul.f32 %v2761, %v2761
    %v3587 = vmul.f32 %v2763, %v2763
    %v3588 = vmul.f32 %v2802, %v2802
    %v3589 = vmul.f32 %v2804, %v2804
    %v3590 = vmul.f32 %v2843, %v2843
    %v3591 = vmul.f32 %v2845, %v2845
    %v3592 = vmul.f32 %v2884, %v2884
    %v3593 = vmul.f32 %v2886, %v2886
    %v3594 = vmul.f32 %v2925, %v2925
    %v3595 = vmul.f32 %v2927, %v2927
    %v3596 = vmul.f32 %v2966, %v2966
    %v3597 = vmul.f32 %v2968, %v2968
    %v3598 = vmul.f32 %v3007, %v3007
    %v3599 = vmul.f32 %v3009, %v3009
    %v3600 = vmul.f32 %v3048, %v3048
    %v3601 = vmul.f32 %v3050, %v3050
    %v3602 = vmul.f32 %v3089, %v3089
    %v3603 = vmul.f32 %v3091, %v3091
    %v3604 = vmul.f32 %v3130, %v3130
    %v3605 = vmul.f32 %v3132, %v3132
    %v3606 = vmul.f32 %v3171, %v3171
    %v3607 = vmul.f32 %v3173, %v3173
    %v3608 = vmul.f32 %v3212, %v3212
    %v3609 = vsel %vm2045, %v3560, 0.0
    %v3610 = vrot.slane %v3609, 4
    %v3611 = vadd.f32 %v3609, %v3610
    %v3612 = vrot.slane %v3611, 2
    %v3613 = vadd.f32 %v3611, %v3612
    %v3614 = vrot.slane %v3613, 1
    %v3615 = vadd.f32 %v3613, %v3614
    %v3616 = vsel %vm2045, %v3561, 0.0
    %v3617 = vrot.slane %v3616, 4
    %v3618 = vadd.f32 %v3616, %v3617
    %v3619 = vrot.slane %v3618, 2
    %v3620 = vadd.f32 %v3618, %v3619
    %v3621 = vrot.slane %v3620, 1
    %v3622 = vadd.f32 %v3620, %v3621
    %v3623 = vsel %vm2045, %v3562, 0.0
    %v3624 = vrot.slane %v3623, 4
    %v3625 = vadd.f32 %v3623, %v3624
    %v3626 = vrot.slane %v3625, 2
    %v3627 = vadd.f32 %v3625, %v3626
    %v3628 = vrot.slane %v3627, 1
    %v3629 = vadd.f32 %v3627, %v3628
    %v3630 = vsel %vm2045, %v3563, 0.0
    %v3631 = vrot.slane %v3630, 4
    %v3632 = vadd.f32 %v3630, %v3631
    %v3633 = vrot.slane %v3632, 2
    %v3634 = vadd.f32 %v3632, %v3633
    %v3635 = vrot.slane %v3634, 1
    %v3636 = vadd.f32 %v3634, %v3635
    %v3637 = vsel %vm2045, %v3564, 0.0
    %v3638 = vrot.slane %v3637, 4
    %v3639 = vadd.f32 %v3637, %v3638
    %v3640 = vrot.slane %v3639, 2
    %v3641 = vadd.f32 %v3639, %v3640
    %v3642 = vrot.slane %v3641, 1
    %v3643 = vadd.f32 %v3641, %v3642
    %v3644 = vsel %vm2045, %v3565, 0.0
    %v3645 = vrot.slane %v3644, 4
    %v3646 = vadd.f32 %v3644, %v3645
    %v3647 = vrot.slane %v3646, 2
    %v3648 = vadd.f32 %v3646, %v3647
    %v3649 = vrot.slane %v3648, 1
    %v3650 = vadd.f32 %v3648, %v3649
    %v3651 = vsel %vm2045, %v3566, 0.0
    %v3652 = vrot.slane %v3651, 4
    %v3653 = vadd.f32 %v3651, %v3652
    %v3654 = vrot.slane %v3653, 2
    %v3655 = vadd.f32 %v3653, %v3654
    %v3656 = vrot.slane %v3655, 1
    %v3657 = vadd.f32 %v3655, %v3656
    %v3658 = vsel %vm2045, %v3567, 0.0
    %v3659 = vrot.slane %v3658, 4
    %v3660 = vadd.f32 %v3658, %v3659
    %v3661 = vrot.slane %v3660, 2
    %v3662 = vadd.f32 %v3660, %v3661
    %v3663 = vrot.slane %v3662, 1
    %v3664 = vadd.f32 %v3662, %v3663
    %v3665 = vsel %vm2045, %v3568, 0.0
    %v3666 = vrot.slane %v3665, 4
    %v3667 = vadd.f32 %v3665, %v3666
    %v3668 = vrot.slane %v3667, 2
    %v3669 = vadd.f32 %v3667, %v3668
    %v3670 = vrot.slane %v3669, 1
    %v3671 = vadd.f32 %v3669, %v3670
    %v3672 = vsel %vm2045, %v3569, 0.0
    %v3673 = vrot.slane %v3672, 4
    %v3674 = vadd.f32 %v3672, %v3673
    %v3675 = vrot.slane %v3674, 2
    %v3676 = vadd.f32 %v3674, %v3675
    %v3677 = vrot.slane %v3676, 1
    %v3678 = vadd.f32 %v3676, %v3677
    %v3679 = vsel %vm2045, %v3570, 0.0
    %v3680 = vrot.slane %v3679, 4
    %v3681 = vadd.f32 %v3679, %v3680
    %v3682 = vrot.slane %v3681, 2
    %v3683 = vadd.f32 %v3681, %v3682
    %v3684 = vrot.slane %v3683, 1
    %v3685 = vadd.f32 %v3683, %v3684
    %v3686 = vsel %vm2045, %v3571, 0.0
    %v3687 = vrot.slane %v3686, 4
    %v3688 = vadd.f32 %v3686, %v3687
    %v3689 = vrot.slane %v3688, 2
    %v3690 = vadd.f32 %v3688, %v3689
    %v3691 = vrot.slane %v3690, 1
    %v3692 = vadd.f32 %v3690, %v3691
    %v3693 = vsel %vm2045, %v3572, 0.0
    %v3694 = vrot.slane %v3693, 4
    %v3695 = vadd.f32 %v3693, %v3694
    %v3696 = vrot.slane %v3695, 2
    %v3697 = vadd.f32 %v3695, %v3696
    %v3698 = vrot.slane %v3697, 1
    %v3699 = vadd.f32 %v3697, %v3698
    %v3700 = vsel %vm2045, %v3573, 0.0
    %v3701 = vrot.slane %v3700, 4
    %v3702 = vadd.f32 %v3700, %v3701
    %v3703 = vrot.slane %v3702, 2
    %v3704 = vadd.f32 %v3702, %v3703
    %v3705 = vrot.slane %v3704, 1
    %v3706 = vadd.f32 %v3704, %v3705
    %v3707 = vsel %vm2045, %v3574, 0.0
    %v3708 = vrot.slane %v3707, 4
    %v3709 = vadd.f32 %v3707, %v3708
    %v3710 = vrot.slane %v3709, 2
    %v3711 = vadd.f32 %v3709, %v3710
    %v3712 = vrot.slane %v3711, 1
    %v3713 = vadd.f32 %v3711, %v3712
    %v3714 = vsel %vm2045, %v3575, 0.0
    %v3715 = vrot.slane %v3714, 4
    %v3716 = vadd.f32 %v3714, %v3715
    %v3717 = vrot.slane %v3716, 2
    %v3718 = vadd.f32 %v3716, %v3717
    %v3719 = vrot.slane %v3718, 1
    %v3720 = vadd.f32 %v3718, %v3719
    %v3721 = vsel %vm2045, %v3576, 0.0
    %v3722 = vrot.slane %v3721, 4
    %v3723 = vadd.f32 %v3721, %v3722
    %v3724 = vrot.slane %v3723, 2
    %v3725 = vadd.f32 %v3723, %v3724
    %v3726 = vrot.slane %v3725, 1
    %v3727 = vadd.f32 %v3725, %v3726
    %v3728 = vsel %vm2045, %v3577, 0.0
    %v3729 = vrot.slane %v3728, 4
    %v3730 = vadd.f32 %v3728, %v3729
    %v3731 = vrot.slane %v3730, 2
    %v3732 = vadd.f32 %v3730, %v3731
    %v3733 = vrot.slane %v3732, 1
    %v3734 = vadd.f32 %v3732, %v3733
    %v3735 = vsel %vm2045, %v3578, 0.0
    %v3736 = vrot.slane %v3735, 4
    %v3737 = vadd.f32 %v3735, %v3736
    %v3738 = vrot.slane %v3737, 2
    %v3739 = vadd.f32 %v3737, %v3738
    %v3740 = vrot.slane %v3739, 1
    %v3741 = vadd.f32 %v3739, %v3740
    %v3742 = vsel %vm2045, %v3579, 0.0
    %v3743 = vrot.slane %v3742, 4
    %v3744 = vadd.f32 %v3742, %v3743
    %v3745 = vrot.slane %v3744, 2
    %v3746 = vadd.f32 %v3744, %v3745
    %v3747 = vrot.slane %v3746, 1
    %v3748 = vadd.f32 %v3746, %v3747
    %v3749 = vsel %vm2045, %v3580, 0.0
    %v3750 = vrot.slane %v3749, 4
    %v3751 = vadd.f32 %v3749, %v3750
    %v3752 = vrot.slane %v3751, 2
    %v3753 = vadd.f32 %v3751, %v3752
    %v3754 = vrot.slane %v3753, 1
    %v3755 = vadd.f32 %v3753, %v3754
    %v3756 = vsel %vm2045, %v3581, 0.0
    %v3757 = vrot.slane %v3756, 4
    %v3758 = vadd.f32 %v3756, %v3757
    %v3759 = vrot.slane %v3758, 2
    %v3760 = vadd.f32 %v3758, %v3759
    %v3761 = vrot.slane %v3760, 1
    %v3762 = vadd.f32 %v3760, %v3761
    %v3763 = vsel %vm2045, %v3582, 0.0
    %v3764 = vrot.slane %v3763, 4
    %v3765 = vadd.f32 %v3763, %v3764
    %v3766 = vrot.slane %v3765, 2
    %v3767 = vadd.f32 %v3765, %v3766
    %v3768 = vrot.slane %v3767, 1
    %v3769 = vadd.f32 %v3767, %v3768
    %v3770 = vsel %vm2045, %v3583, 0.0
    %v3771 = vrot.slane %v3770, 4
    %v3772 = vadd.f32 %v3770, %v3771
    %v3773 = vrot.slane %v3772, 2
    %v3774 = vadd.f32 %v3772, %v3773
    %v3775 = vrot.slane %v3774, 1
    %v3776 = vadd.f32 %v3774, %v3775
    %v3777 = vsel %vm2045, %v3584, 0.0
    %v3778 = vrot.slane %v3777, 4
    %v3779 = vadd.f32 %v3777, %v3778
    %v3780 = vrot.slane %v3779, 2
    %v3781 = vadd.f32 %v3779, %v3780
    %v3782 = vrot.slane %v3781, 1
    %v3783 = vadd.f32 %v3781, %v3782
    %v3784 = vsel %vm2045, %v3585, 0.0
    %v3785 = vrot.slane %v3784, 4
    %v3786 = vadd.f32 %v3784, %v3785
    %v3787 = vrot.slane %v3786, 2
    %v3788 = vadd.f32 %v3786, %v3787
    %v3789 = vrot.slane %v3788, 1
    %v3790 = vadd.f32 %v3788, %v3789
    %v3791 = vsel %vm2045, %v3586, 0.0
    %v3792 = vrot.slane %v3791, 4
    %v3793 = vadd.f32 %v3791, %v3792
    %v3794 = vrot.slane %v3793, 2
    %v3795 = vadd.f32 %v3793, %v3794
    %v3796 = vrot.slane %v3795, 1
    %v3797 = vadd.f32 %v3795, %v3796
    %v3798 = vsel %vm2045, %v3587, 0.0
    %v3799 = vrot.slane %v3798, 4
    %v3800 = vadd.f32 %v3798, %v3799
    %v3801 = vrot.slane %v3800, 2
    %v3802 = vadd.f32 %v3800, %v3801
    %v3803 = vrot.slane %v3802, 1
    %v3804 = vadd.f32 %v3802, %v3803
    %v3805 = vsel %vm2045, %v3588, 0.0
    %v3806 = vrot.slane %v3805, 4
    %v3807 = vadd.f32 %v3805, %v3806
    %v3808 = vrot.slane %v3807, 2
    %v3809 = vadd.f32 %v3807, %v3808
    %v3810 = vrot.slane %v3809, 1
    %v3811 = vadd.f32 %v3809, %v3810
    %v3812 = vsel %vm2045, %v3589, 0.0
    %v3813 = vrot.slane %v3812, 4
    %v3814 = vadd.f32 %v3812, %v3813
    %v3815 = vrot.slane %v3814, 2
    %v3816 = vadd.f32 %v3814, %v3815
    %v3817 = vrot.slane %v3816, 1
    %v3818 = vadd.f32 %v3816, %v3817
    %v3819 = vsel %vm2045, %v3590, 0.0
    %v3820 = vrot.slane %v3819, 4
    %v3821 = vadd.f32 %v3819, %v3820
    %v3822 = vrot.slane %v3821, 2
    %v3823 = vadd.f32 %v3821, %v3822
    %v3824 = vrot.slane %v3823, 1
    %v3825 = vadd.f32 %v3823, %v3824
    %v3826 = vsel %vm2045, %v3591, 0.0
    %v3827 = vrot.slane %v3826, 4
    %v3828 = vadd.f32 %v3826, %v3827
    %v3829 = vrot.slane %v3828, 2
    %v3830 = vadd.f32 %v3828, %v3829
    %v3831 = vrot.slane %v3830, 1
    %v3832 = vadd.f32 %v3830, %v3831
    %v3833 = vsel %vm2045, %v3592, 0.0
    %v3834 = vrot.slane %v3833, 4
    %v3835 = vadd.f32 %v3833, %v3834
    %v3836 = vrot.slane %v3835, 2
    %v3837 = vadd.f32 %v3835, %v3836
    %v3838 = vrot.slane %v3837, 1
    %v3839 = vadd.f32 %v3837, %v3838
    %v3840 = vsel %vm2045, %v3593, 0.0
    %v3841 = vrot.slane %v3840, 4
    %v3842 = vadd.f32 %v3840, %v3841
    %v3843 = vrot.slane %v3842, 2
    %v3844 = vadd.f32 %v3842, %v3843
    %v3845 = vrot.slane %v3844, 1
    %v3846 = vadd.f32 %v3844, %v3845
    %v3847 = vsel %vm2045, %v3594, 0.0
    %v3848 = vrot.slane %v3847, 4
    %v3849 = vadd.f32 %v3847, %v3848
    %v3850 = vrot.slane %v3849, 2
    %v3851 = vadd.f32 %v3849, %v3850
    %v3852 = vrot.slane %v3851, 1
    %v3853 = vadd.f32 %v3851, %v3852
    %v3854 = vsel %vm2045, %v3595, 0.0
    %v3855 = vrot.slane %v3854, 4
    %v3856 = vadd.f32 %v3854, %v3855
    %v3857 = vrot.slane %v3856, 2
    %v3858 = vadd.f32 %v3856, %v3857
    %v3859 = vrot.slane %v3858, 1
    %v3860 = vadd.f32 %v3858, %v3859
    %v3861 = vsel %vm2045, %v3596, 0.0
    %v3862 = vrot.slane %v3861, 4
    %v3863 = vadd.f32 %v3861, %v3862
    %v3864 = vrot.slane %v3863, 2
    %v3865 = vadd.f32 %v3863, %v3864
    %v3866 = vrot.slane %v3865, 1
    %v3867 = vadd.f32 %v3865, %v3866
    %v3868 = vsel %vm2045, %v3597, 0.0
    %v3869 = vrot.slane %v3868, 4
    %v3870 = vadd.f32 %v3868, %v3869
    %v3871 = vrot.slane %v3870, 2
    %v3872 = vadd.f32 %v3870, %v3871
    %v3873 = vrot.slane %v3872, 1
    %v3874 = vadd.f32 %v3872, %v3873
    %v3875 = vsel %vm2045, %v3598, 0.0
    %v3876 = vrot.slane %v3875, 4
    %v3877 = vadd.f32 %v3875, %v3876
    %v3878 = vrot.slane %v3877, 2
    %v3879 = vadd.f32 %v3877, %v3878
    %v3880 = vrot.slane %v3879, 1
    %v3881 = vadd.f32 %v3879, %v3880
    %v3882 = vsel %vm2045, %v3599, 0.0
    %v3883 = vrot.slane %v3882, 4
    %v3884 = vadd.f32 %v3882, %v3883
    %v3885 = vrot.slane %v3884, 2
    %v3886 = vadd.f32 %v3884, %v3885
    %v3887 = vrot.slane %v3886, 1
    %v3888 = vadd.f32 %v3886, %v3887
    %v3889 = vsel %vm2045, %v3600, 0.0
    %v3890 = vrot.slane %v3889, 4
    %v3891 = vadd.f32 %v3889, %v3890
    %v3892 = vrot.slane %v3891, 2
    %v3893 = vadd.f32 %v3891, %v3892
    %v3894 = vrot.slane %v3893, 1
    %v3895 = vadd.f32 %v3893, %v3894
    %v3896 = vsel %vm2045, %v3601, 0.0
    %v3897 = vrot.slane %v3896, 4
    %v3898 = vadd.f32 %v3896, %v3897
    %v3899 = vrot.slane %v3898, 2
    %v3900 = vadd.f32 %v3898, %v3899
    %v3901 = vrot.slane %v3900, 1
    %v3902 = vadd.f32 %v3900, %v3901
    %v3903 = vsel %vm2045, %v3602, 0.0
    %v3904 = vrot.slane %v3903, 4
    %v3905 = vadd.f32 %v3903, %v3904
    %v3906 = vrot.slane %v3905, 2
    %v3907 = vadd.f32 %v3905, %v3906
    %v3908 = vrot.slane %v3907, 1
    %v3909 = vadd.f32 %v3907, %v3908
    %v3910 = vsel %vm2045, %v3603, 0.0
    %v3911 = vrot.slane %v3910, 4
    %v3912 = vadd.f32 %v3910, %v3911
    %v3913 = vrot.slane %v3912, 2
    %v3914 = vadd.f32 %v3912, %v3913
    %v3915 = vrot.slane %v3914, 1
    %v3916 = vadd.f32 %v3914, %v3915
    %v3917 = vsel %vm2045, %v3604, 0.0
    %v3918 = vrot.slane %v3917, 4
    %v3919 = vadd.f32 %v3917, %v3918
    %v3920 = vrot.slane %v3919, 2
    %v3921 = vadd.f32 %v3919, %v3920
    %v3922 = vrot.slane %v3921, 1
    %v3923 = vadd.f32 %v3921, %v3922
    %v3924 = vsel %vm2045, %v3605, 0.0
    %v3925 = vrot.slane %v3924, 4
    %v3926 = vadd.f32 %v3924, %v3925
    %v3927 = vrot.slane %v3926, 2
    %v3928 = vadd.f32 %v3926, %v3927
    %v3929 = vrot.slane %v3928, 1
    %v3930 = vadd.f32 %v3928, %v3929
    %v3931 = vsel %vm2045, %v3606, 0.0
    %v3932 = vrot.slane %v3931, 4
    %v3933 = vadd.f32 %v3931, %v3932
    %v3934 = vrot.slane %v3933, 2
    %v3935 = vadd.f32 %v3933, %v3934
    %v3936 = vrot.slane %v3935, 1
    %v3937 = vadd.f32 %v3935, %v3936
    %v3938 = vsel %vm2045, %v3607, 0.0
    %v3939 = vrot.slane %v3938, 4
    %v3940 = vadd.f32 %v3938, %v3939
    %v3941 = vrot.slane %v3940, 2
    %v3942 = vadd.f32 %v3940, %v3941
    %v3943 = vrot.slane %v3942, 1
    %v3944 = vadd.f32 %v3942, %v3943
    %v3945 = vsel %vm2045, %v3608, 0.0
    %v3946 = vrot.slane %v3945, 4
    %v3947 = vadd.f32 %v3945, %v3946
    %v3948 = vrot.slane %v3947, 2
    %v3949 = vadd.f32 %v3947, %v3948
    %v3950 = vrot.slane %v3949, 1
    %v3951 = vadd.f32 %v3949, %v3950
    %v3952 = vrcp.pop 2.0
    %v3953 = vmul.f32 %v3223, %v3952
    %v3954 = vmul.f32 %v3230, %v3952
    %v3955 = vmul.f32 %v3237, %v3952
    %v3956 = vmul.f32 %v3244, %v3952
    %v3957 = vmul.f32 %v3251, %v3952
    %v3958 = vmul.f32 %v3258, %v3952
    %v3959 = vmul.f32 %v3265, %v3952
    %v3960 = vmul.f32 %v3272, %v3952
    %v3961 = vmul.f32 %v3279, %v3952
    %v3962 = vmul.f32 %v3286, %v3952
    %v3963 = vmul.f32 %v3293, %v3952
    %v3964 = vmul.f32 %v3300, %v3952
    %v3965 = vmul.f32 %v3307, %v3952
    %v3966 = vmul.f32 %v3314, %v3952
    %v3967 = vmul.f32 %v3321, %v3952
    %v3968 = vmul.f32 %v3328, %v3952
    %v3969 = vmul.f32 %v3335, %v3952
    %v3970 = vmul.f32 %v3342, %v3952
    %v3971 = vmul.f32 %v3349, %v3952
    %v3972 = vmul.f32 %v3356, %v3952
    %v3973 = vmul.f32 %v3363, %v3952
    %v3974 = vmul.f32 %v3370, %v3952
    %v3975 = vmul.f32 %v3377, %v3952
    %v3976 = vmul.f32 %v3384, %v3952
    %v3977 = vmul.f32 %v3391, %v3952
    %v3978 = vmul.f32 %v3398, %v3952
    %v3979 = vmul.f32 %v3405, %v3952
    %v3980 = vmul.f32 %v3412, %v3952
    %v3981 = vmul.f32 %v3419, %v3952
    %v3982 = vmul.f32 %v3426, %v3952
    %v3983 = vmul.f32 %v3433, %v3952
    %v3984 = vmul.f32 %v3440, %v3952
    %v3985 = vmul.f32 %v3447, %v3952
    %v3986 = vmul.f32 %v3454, %v3952
    %v3987 = vmul.f32 %v3461, %v3952
    %v3988 = vmul.f32 %v3468, %v3952
    %v3989 = vmul.f32 %v3475, %v3952
    %v3990 = vmul.f32 %v3482, %v3952
    %v3991 = vmul.f32 %v3489, %v3952
    %v3992 = vmul.f32 %v3496, %v3952
    %v3993 = vmul.f32 %v3503, %v3952
    %v3994 = vmul.f32 %v3510, %v3952
    %v3995 = vmul.f32 %v3517, %v3952
    %v3996 = vmul.f32 %v3524, %v3952
    %v3997 = vmul.f32 %v3531, %v3952
    %v3998 = vmul.f32 %v3538, %v3952
    %v3999 = vmul.f32 %v3545, %v3952
    %v4000 = vmul.f32 %v3552, %v3952
    %v4001 = vmul.f32 %v3559, %v3952
    %v4002 = vmul.f32 %v3615, %v3952
    %v4003 = vmul.f32 %v3622, %v3952
    %v4004 = vmul.f32 %v3629, %v3952
    %v4005 = vmul.f32 %v3636, %v3952
    %v4006 = vmul.f32 %v3643, %v3952
    %v4007 = vmul.f32 %v3650, %v3952
    %v4008 = vmul.f32 %v3657, %v3952
    %v4009 = vmul.f32 %v3664, %v3952
    %v4010 = vmul.f32 %v3671, %v3952
    %v4011 = vmul.f32 %v3678, %v3952
    %v4012 = vmul.f32 %v3685, %v3952
    %v4013 = vmul.f32 %v3692, %v3952
    %v4014 = vmul.f32 %v3699, %v3952
    %v4015 = vmul.f32 %v3706, %v3952
    %v4016 = vmul.f32 %v3713, %v3952
    %v4017 = vmul.f32 %v3720, %v3952
    %v4018 = vmul.f32 %v3727, %v3952
    %v4019 = vmul.f32 %v3734, %v3952
    %v4020 = vmul.f32 %v3741, %v3952
    %v4021 = vmul.f32 %v3748, %v3952
    %v4022 = vmul.f32 %v3755, %v3952
    %v4023 = vmul.f32 %v3762, %v3952
    %v4024 = vmul.f32 %v3769, %v3952
    %v4025 = vmul.f32 %v3776, %v3952
    %v4026 = vmul.f32 %v3783, %v3952
    %v4027 = vmul.f32 %v3790, %v3952
    %v4028 = vmul.f32 %v3797, %v3952
    %v4029 = vmul.f32 %v3804, %v3952
    %v4030 = vmul.f32 %v3811, %v3952
    %v4031 = vmul.f32 %v3818, %v3952
    %v4032 = vmul.f32 %v3825, %v3952
    %v4033 = vmul.f32 %v3832, %v3952
    %v4034 = vmul.f32 %v3839, %v3952
    %v4035 = vmul.f32 %v3846, %v3952
    %v4036 = vmul.f32 %v3853, %v3952
    %v4037 = vmul.f32 %v3860, %v3952
    %v4038 = vmul.f32 %v3867, %v3952
    %v4039 = vmul.f32 %v3874, %v3952
    %v4040 = vmul.f32 %v3881, %v3952
    %v4041 = vmul.f32 %v3888, %v3952
    %v4042 = vmul.f32 %v3895, %v3952
    %v4043 = vmul.f32 %v3902, %v3952
    %v4044 = vmul.f32 %v3909, %v3952
    %v4045 = vmul.f32 %v3916, %v3952
    %v4046 = vmul.f32 %v3923, %v3952
    %v4047 = vmul.f32 %v3930, %v3952
    %v4048 = vmul.f32 %v3937, %v3952
    %v4049 = vmul.f32 %v3944, %v3952
    %v4050 = vmul.f32 %v3951, %v3952
    %v4051 = vmul.f32 %v3953, %v3953
    %v4052 = vmul.f32 %v3954, %v3954
    %v4053 = vmul.f32 %v3955, %v3955
    %v4054 = vmul.f32 %v3956, %v3956
    %v4055 = vmul.f32 %v3957, %v3957
    %v4056 = vmul.f32 %v3958, %v3958
    %v4057 = vmul.f32 %v3959, %v3959
    %v4058 = vmul.f32 %v3960, %v3960
    %v4059 = vmul.f32 %v3961, %v3961
    %v4060 = vmul.f32 %v3962, %v3962
    %v4061 = vmul.f32 %v3963, %v3963
    %v4062 = vmul.f32 %v3964, %v3964
    %v4063 = vmul.f32 %v3965, %v3965
    %v4064 = vmul.f32 %v3966, %v3966
    %v4065 = vmul.f32 %v3967, %v3967
    %v4066 = vmul.f32 %v3968, %v3968
    %v4067 = vmul.f32 %v3969, %v3969
    %v4068 = vmul.f32 %v3970, %v3970
    %v4069 = vmul.f32 %v3971, %v3971
    %v4070 = vmul.f32 %v3972, %v3972
    %v4071 = vmul.f32 %v3973, %v3973
    %v4072 = vmul.f32 %v3974, %v3974
    %v4073 = vmul.f32 %v3975, %v3975
    %v4074 = vmul.f32 %v3976, %v3976
    %v4075 = vmul.f32 %v3977, %v3977
    %v4076 = vmul.f32 %v3978, %v3978
    %v4077 = vmul.f32 %v3979, %v3979
    %v4078 = vmul.f32 %v3980, %v3980
    %v4079 = vmul.f32 %v3981, %v3981
    %v4080 = vmul.f32 %v3982, %v3982
    %v4081 = vmul.f32 %v3983, %v3983
    %v4082 = vmul.f32 %v3984, %v3984
    %v4083 = vmul.f32 %v3985, %v3985
    %v4084 = vmul.f32 %v3986, %v3986
    %v4085 = vmul.f32 %v3987, %v3987
    %v4086 = vmul.f32 %v3988, %v3988
    %v4087 = vmul.f32 %v3989, %v3989
    %v4088 = vmul.f32 %v3990, %v3990
    %v4089 = vmul.f32 %v3991, %v3991
    %v4090 = vmul.f32 %v3992, %v3992
    %v4091 = vmul.f32 %v3993, %v3993
    %v4092 = vmul.f32 %v3994, %v3994
    %v4093 = vmul.f32 %v3995, %v3995
    %v4094 = vmul.f32 %v3996, %v3996
    %v4095 = vmul.f32 %v3997, %v3997
    %v4096 = vmul.f32 %v3998, %v3998
    %v4097 = vmul.f32 %v3999, %v3999
    %v4098 = vmul.f32 %v4000, %v4000
    %v4099 = vmul.f32 %v4001, %v4001
    %v4100 = vsub.f32 %v4002, %v4051
    %v4101 = vsub.f32 %v4003, %v4052
    %v4102 = vsub.f32 %v4004, %v4053
    %v4103 = vsub.f32 %v4005, %v4054
    %v4104 = vsub.f32 %v4006, %v4055
    %v4105 = vsub.f32 %v4007, %v4056
    %v4106 = vsub.f32 %v4008, %v4057
    %v4107 = vsub.f32 %v4009, %v4058
    %v4108 = vsub.f32 %v4010, %v4059
    %v4109 = vsub.f32 %v4011, %v4060
    %v4110 = vsub.f32 %v4012, %v4061
    %v4111 = vsub.f32 %v4013, %v4062
    %v4112 = vsub.f32 %v4014, %v4063
    %v4113 = vsub.f32 %v4015, %v4064
    %v4114 = vsub.f32 %v4016, %v4065
    %v4115 = vsub.f32 %v4017, %v4066
    %v4116 = vsub.f32 %v4018, %v4067
    %v4117 = vsub.f32 %v4019, %v4068
    %v4118 = vsub.f32 %v4020, %v4069
    %v4119 = vsub.f32 %v4021, %v4070
    %v4120 = vsub.f32 %v4022, %v4071
    %v4121 = vsub.f32 %v4023, %v4072
    %v4122 = vsub.f32 %v4024, %v4073
    %v4123 = vsub.f32 %v4025, %v4074
    %v4124 = vsub.f32 %v4026, %v4075
    %v4125 = vsub.f32 %v4027, %v4076
    %v4126 = vsub.f32 %v4028, %v4077
    %v4127 = vsub.f32 %v4029, %v4078
    %v4128 = vsub.f32 %v4030, %v4079
    %v4129 = vsub.f32 %v4031, %v4080
    %v4130 = vsub.f32 %v4032, %v4081
    %v4131 = vsub.f32 %v4033, %v4082
    %v4132 = vsub.f32 %v4034, %v4083
    %v4133 = vsub.f32 %v4035, %v4084
    %v4134 = vsub.f32 %v4036, %v4085
    %v4135 = vsub.f32 %v4037, %v4086
    %v4136 = vsub.f32 %v4038, %v4087
    %v4137 = vsub.f32 %v4039, %v4088
    %v4138 = vsub.f32 %v4040, %v4089
    %v4139 = vsub.f32 %v4041, %v4090
    %v4140 = vsub.f32 %v4042, %v4091
    %v4141 = vsub.f32 %v4043, %v4092
    %v4142 = vsub.f32 %v4044, %v4093
    %v4143 = vsub.f32 %v4045, %v4094
    %v4144 = vsub.f32 %v4046, %v4095
    %v4145 = vsub.f32 %v4047, %v4096
    %v4146 = vsub.f32 %v4048, %v4097
    %v4147 = vsub.f32 %v4049, %v4098
    %v4148 = vsub.f32 %v4050, %v4099
    %v4149 = vsub.f32 %v2228, %v3953
    %v4150 = vsub.f32 %v2230, %v3954
    %v4151 = vsub.f32 %v2269, %v3955
    %v4152 = vsub.f32 %v2271, %v3956
    %v4153 = vsub.f32 %v2310, %v3957
    %v4154 = vsub.f32 %v2312, %v3958
    %v4155 = vsub.f32 %v2351, %v3959
    %v4156 = vsub.f32 %v2353, %v3960
    %v4157 = vsub.f32 %v2392, %v3961
    %v4158 = vsub.f32 %v2394, %v3962
    %v4159 = vsub.f32 %v2433, %v3963
    %v4160 = vsub.f32 %v2435, %v3964
    %v4161 = vsub.f32 %v2474, %v3965
    %v4162 = vsub.f32 %v2476, %v3966
    %v4163 = vsub.f32 %v2515, %v3967
    %v4164 = vsub.f32 %v2517, %v3968
    %v4165 = vsub.f32 %v2556, %v3969
    %v4166 = vsub.f32 %v2558, %v3970
    %v4167 = vsub.f32 %v2597, %v3971
    %v4168 = vsub.f32 %v2599, %v3972
    %v4169 = vsub.f32 %v2638, %v3973
    %v4170 = vsub.f32 %v2640, %v3974
    %v4171 = vsub.f32 %v2679, %v3975
    %v4172 = vsub.f32 %v2681, %v3976
    %v4173 = vsub.f32 %v2720, %v3977
    %v4174 = vsub.f32 %v2722, %v3978
    %v4175 = vsub.f32 %v2761, %v3979
    %v4176 = vsub.f32 %v2763, %v3980
    %v4177 = vsub.f32 %v2802, %v3981
    %v4178 = vsub.f32 %v2804, %v3982
    %v4179 = vsub.f32 %v2843, %v3983
    %v4180 = vsub.f32 %v2845, %v3984
    %v4181 = vsub.f32 %v2884, %v3985
    %v4182 = vsub.f32 %v2886, %v3986
    %v4183 = vsub.f32 %v2925, %v3987
    %v4184 = vsub.f32 %v2927, %v3988
    %v4185 = vsub.f32 %v2966, %v3989
    %v4186 = vsub.f32 %v2968, %v3990
    %v4187 = vsub.f32 %v3007, %v3991
    %v4188 = vsub.f32 %v3009, %v3992
    %v4189 = vsub.f32 %v3048, %v3993
    %v4190 = vsub.f32 %v3050, %v3994
    %v4191 = vsub.f32 %v3089, %v3995
    %v4192 = vsub.f32 %v3091, %v3996
    %v4193 = vsub.f32 %v3130, %v3997
    %v4194 = vsub.f32 %v3132, %v3998
    %v4195 = vsub.f32 %v3171, %v3999
    %v4196 = vsub.f32 %v3173, %v4000
    %v4197 = vsub.f32 %v3212, %v4001
    %v4198 = vadd.f32 %v4100, 1e-05
    %v4199 = vadd.f32 %v4101, 1e-05
    %v4200 = vadd.f32 %v4102, 1e-05
    %v4201 = vadd.f32 %v4103, 1e-05
    %v4202 = vadd.f32 %v4104, 1e-05
    %v4203 = vadd.f32 %v4105, 1e-05
    %v4204 = vadd.f32 %v4106, 1e-05
    %v4205 = vadd.f32 %v4107, 1e-05
    %v4206 = vadd.f32 %v4108, 1e-05
    %v4207 = vadd.f32 %v4109, 1e-05
    %v4208 = vadd.f32 %v4110, 1e-05
    %v4209 = vadd.f32 %v4111, 1e-05
    %v4210 = vadd.f32 %v4112, 1e-05
    %v4211 = vadd.f32 %v4113, 1e-05
    %v4212 = vadd.f32 %v4114, 1e-05
    %v4213 = vadd.f32 %v4115, 1e-05
    %v4214 = vadd.f32 %v4116, 1e-05
    %v4215 = vadd.f32 %v4117, 1e-05
    %v4216 = vadd.f32 %v4118, 1e-05
    %v4217 = vadd.f32 %v4119, 1e-05
    %v4218 = vadd.f32 %v4120, 1e-05
    %v4219 = vadd.f32 %v4121, 1e-05
    %v4220 = vadd.f32 %v4122, 1e-05
    %v4221 = vadd.f32 %v4123, 1e-05
    %v4222 = vadd.f32 %v4124, 1e-05
    %v4223 = vadd.f32 %v4125, 1e-05
    %v4224 = vadd.f32 %v4126, 1e-05
    %v4225 = vadd.f32 %v4127, 1e-05
    %v4226 = vadd.f32 %v4128, 1e-05
    %v4227 = vadd.f32 %v4129, 1e-05
    %v4228 = vadd.f32 %v4130, 1e-05
    %v4229 = vadd.f32 %v4131, 1e-05
    %v4230 = vadd.f32 %v4132, 1e-05
    %v4231 = vadd.f32 %v4133, 1e-05
    %v4232 = vadd.f32 %v4134, 1e-05
    %v4233 = vadd.f32 %v4135, 1e-05
    %v4234 = vadd.f32 %v4136, 1e-05
    %v4235 = vadd.f32 %v4137, 1e-05
    %v4236 = vadd.f32 %v4138, 1e-05
    %v4237 = vadd.f32 %v4139, 1e-05
    %v4238 = vadd.f32 %v4140, 1e-05
    %v4239 = vadd.f32 %v4141, 1e-05
    %v4240 = vadd.f32 %v4142, 1e-05
    %v4241 = vadd.f32 %v4143, 1e-05
    %v4242 = vadd.f32 %v4144, 1e-05
    %v4243 = vadd.f32 %v4145, 1e-05
    %v4244 = vadd.f32 %v4146, 1e-05
    %v4245 = vadd.f32 %v4147, 1e-05
    %v4246 = vadd.f32 %v4148, 1e-05
    %v4247 = vrsqrt.pop %v4198
    %v4248 = vrsqrt.pop %v4199
    %v4249 = vrsqrt.pop %v4200
    %v4250 = vrsqrt.pop %v4201
    %v4251 = vrsqrt.pop %v4202
    %v4252 = vrsqrt.pop %v4203
    %v4253 = vrsqrt.pop %v4204
    %v4254 = vrsqrt.pop %v4205
    %v4255 = vrsqrt.pop %v4206
    %v4256 = vrsqrt.pop %v4207
    %v4257 = vrsqrt.pop %v4208
    %v4258 = vrsqrt.pop %v4209
    %v4259 = vrsqrt.pop %v4210
    %v4260 = vrsqrt.pop %v4211
    %v4261 = vrsqrt.pop %v4212
    %v4262 = vrsqrt.pop %v4213
    %v4263 = vrsqrt.pop %v4214
    %v4264 = vrsqrt.pop %v4215
    %v4265 = vrsqrt.pop %v4216
    %v4266 = vrsqrt.pop %v4217
    %v4267 = vrsqrt.pop %v4218
    %v4268 = vrsqrt.pop %v4219
    %v4269 = vrsqrt.pop %v4220
    %v4270 = vrsqrt.pop %v4221
    %v4271 = vrsqrt.pop %v4222
    %v4272 = vrsqrt.pop %v4223
    %v4273 = vrsqrt.pop %v4224
    %v4274 = vrsqrt.pop %v4225
    %v4275 = vrsqrt.pop %v4226
    %v4276 = vrsqrt.pop %v4227
    %v4277 = vrsqrt.pop %v4228
    %v4278 = vrsqrt.pop %v4229
    %v4279 = vrsqrt.pop %v4230
    %v4280 = vrsqrt.pop %v4231
    %v4281 = vrsqrt.pop %v4232
    %v4282 = vrsqrt.pop %v4233
    %v4283 = vrsqrt.pop %v4234
    %v4284 = vrsqrt.pop %v4235
    %v4285 = vrsqrt.pop %v4236
    %v4286 = vrsqrt.pop %v4237
    %v4287 = vrsqrt.pop %v4238
    %v4288 = vrsqrt.pop %v4239
    %v4289 = vrsqrt.pop %v4240
    %v4290 = vrsqrt.pop %v4241
    %v4291 = vrsqrt.pop %v4242
    %v4292 = vrsqrt.pop %v4243
    %v4293 = vrsqrt.pop %v4244
    %v4294 = vrsqrt.pop %v4245
    %v4295 = vrsqrt.pop %v4246
    %v4296 = vmul.f32 %v4149, %v4247
    %v4297 = vmul.f32 %v4150, %v4248
    %v4298 = vmul.f32 %v4151, %v4249
    %v4299 = vmul.f32 %v4152, %v4250
    %v4300 = vmul.f32 %v4153, %v4251
    %v4301 = vmul.f32 %v4154, %v4252
    %v4302 = vmul.f32 %v4155, %v4253
    %v4303 = vmul.f32 %v4156, %v4254
    %v4304 = vmul.f32 %v4157, %v4255
    %v4305 = vmul.f32 %v4158, %v4256
    %v4306 = vmul.f32 %v4159, %v4257
    %v4307 = vmul.f32 %v4160, %v4258
    %v4308 = vmul.f32 %v4161, %v4259
    %v4309 = vmul.f32 %v4162, %v4260
    %v4310 = vmul.f32 %v4163, %v4261
    %v4311 = vmul.f32 %v4164, %v4262
    %v4312 = vmul.f32 %v4165, %v4263
    %v4313 = vmul.f32 %v4166, %v4264
    %v4314 = vmul.f32 %v4167, %v4265
    %v4315 = vmul.f32 %v4168, %v4266
    %v4316 = vmul.f32 %v4169, %v4267
    %v4317 = vmul.f32 %v4170, %v4268
    %v4318 = vmul.f32 %v4171, %v4269
    %v4319 = vmul.f32 %v4172, %v4270
    %v4320 = vmul.f32 %v4173, %v4271
    %v4321 = vmul.f32 %v4174, %v4272
    %v4322 = vmul.f32 %v4175, %v4273
    %v4323 = vmul.f32 %v4176, %v4274
    %v4324 = vmul.f32 %v4177, %v4275
    %v4325 = vmul.f32 %v4178, %v4276
    %v4326 = vmul.f32 %v4179, %v4277
    %v4327 = vmul.f32 %v4180, %v4278
    %v4328 = vmul.f32 %v4181, %v4279
    %v4329 = vmul.f32 %v4182, %v4280
    %v4330 = vmul.f32 %v4183, %v4281
    %v4331 = vmul.f32 %v4184, %v4282
    %v4332 = vmul.f32 %v4185, %v4283
    %v4333 = vmul.f32 %v4186, %v4284
    %v4334 = vmul.f32 %v4187, %v4285
    %v4335 = vmul.f32 %v4188, %v4286
    %v4336 = vmul.f32 %v4189, %v4287
    %v4337 = vmul.f32 %v4190, %v4288
    %v4338 = vmul.f32 %v4191, %v4289
    %v4339 = vmul.f32 %v4192, %v4290
    %v4340 = vmul.f32 %v4193, %v4291
    %v4341 = vmul.f32 %v4194, %v4292
    %v4342 = vmul.f32 %v4195, %v4293
    %v4343 = vmul.f32 %v4196, %v4294
    %v4344 = vmul.f32 %v4197, %v4295
    %v4345 = vld [vmem:[#allocation8] sm:$0xff]
    %v4346 = vld [vmem:[#allocation8 + $0x8] sm:$0xff]
    %v4347 = vld [vmem:[#allocation8 + $0x10] sm:$0xff]
    %v4348 = vld [vmem:[#allocation8 + $0x18] sm:$0xff]
    %v4349 = vld [vmem:[#allocation8 + $0x20] sm:$0xff]
    %v4350 = vld [vmem:[#allocation8 + $0x28] sm:$0xff]
    %v4351 = vld [vmem:[#allocation8 + $0x30] sm:$0x1]
    %v4359 = vlaneseq
    %v4360 = vshrl.u32 %v4359, 7
    %v4361 = vsub.s32 0, %v4360
    %v4362 = vrot.slane %v4345, %v4361
    %v4363 = vlaneseq
    %v4364 = vshrl.u32 %v4363, 7
    %v4365 = vsub.s32 1, %v4364
    %v4366 = vrot.slane %v4345, %v4365
    %v4367 = vlaneseq
    %v4368 = vshrl.u32 %v4367, 7
    %v4369 = vsub.s32 2, %v4368
    %v4370 = vrot.slane %v4345, %v4369
    %v4371 = vlaneseq
    %v4372 = vshrl.u32 %v4371, 7
    %v4373 = vsub.s32 3, %v4372
    %v4374 = vrot.slane %v4345, %v4373
    %v4375 = vlaneseq
    %v4376 = vshrl.u32 %v4375, 7
    %v4377 = vsub.s32 4, %v4376
    %v4378 = vrot.slane %v4345, %v4377
    %v4379 = vlaneseq
    %v4380 = vshrl.u32 %v4379, 7
    %v4381 = vsub.s32 5, %v4380
    %v4382 = vrot.slane %v4345, %v4381
    %v4383 = vlaneseq
    %v4384 = vshrl.u32 %v4383, 7
    %v4385 = vsub.s32 6, %v4384
    %v4386 = vrot.slane %v4345, %v4385
    %v4387 = vlaneseq
    %v4388 = vshrl.u32 %v4387, 7
    %v4389 = vsub.s32 7, %v4388
    %v4390 = vrot.slane %v4345, %v4389
    %v4391 = vlaneseq
    %v4392 = vshrl.u32 %v4391, 7
    %v4393 = vsub.s32 0, %v4392
    %v4394 = vrot.slane %v4346, %v4393
    %v4395 = vlaneseq
    %v4396 = vshrl.u32 %v4395, 7
    %v4397 = vsub.s32 1, %v4396
    %v4398 = vrot.slane %v4346, %v4397
    %v4399 = vlaneseq
    %v4400 = vshrl.u32 %v4399, 7
    %v4401 = vsub.s32 2, %v4400
    %v4402 = vrot.slane %v4346, %v4401
    %v4403 = vlaneseq
    %v4404 = vshrl.u32 %v4403, 7
    %v4405 = vsub.s32 3, %v4404
    %v4406 = vrot.slane %v4346, %v4405
    %v4407 = vlaneseq
    %v4408 = vshrl.u32 %v4407, 7
    %v4409 = vsub.s32 4, %v4408
    %v4410 = vrot.slane %v4346, %v4409
    %v4411 = vlaneseq
    %v4412 = vshrl.u32 %v4411, 7
    %v4413 = vsub.s32 5, %v4412
    %v4414 = vrot.slane %v4346, %v4413
    %v4415 = vlaneseq
    %v4416 = vshrl.u32 %v4415, 7
    %v4417 = vsub.s32 6, %v4416
    %v4418 = vrot.slane %v4346, %v4417
    %v4419 = vlaneseq
    %v4420 = vshrl.u32 %v4419, 7
    %v4421 = vsub.s32 7, %v4420
    %v4422 = vrot.slane %v4346, %v4421
    %v4423 = vlaneseq
    %v4424 = vshrl.u32 %v4423, 7
    %v4425 = vsub.s32 0, %v4424
    %v4426 = vrot.slane %v4347, %v4425
    %v4427 = vlaneseq
    %v4428 = vshrl.u32 %v4427, 7
    %v4429 = vsub.s32 1, %v4428
    %v4430 = vrot.slane %v4347, %v4429
    %v4431 = vlaneseq
    %v4432 = vshrl.u32 %v4431, 7
    %v4433 = vsub.s32 2, %v4432
    %v4434 = vrot.slane %v4347, %v4433
    %v4435 = vlaneseq
    %v4436 = vshrl.u32 %v4435, 7
    %v4437 = vsub.s32 3, %v4436
    %v4438 = vrot.slane %v4347, %v4437
    %v4439 = vlaneseq
    %v4440 = vshrl.u32 %v4439, 7
    %v4441 = vsub.s32 4, %v4440
    %v4442 = vrot.slane %v4347, %v4441
    %v4443 = vlaneseq
    %v4444 = vshrl.u32 %v4443, 7
    %v4445 = vsub.s32 5, %v4444
    %v4446 = vrot.slane %v4347, %v4445
    %v4447 = vlaneseq
    %v4448 = vshrl.u32 %v4447, 7
    %v4449 = vsub.s32 6, %v4448
    %v4450 = vrot.slane %v4347, %v4449
    %v4451 = vlaneseq
    %v4452 = vshrl.u32 %v4451, 7
    %v4453 = vsub.s32 7, %v4452
    %v4454 = vrot.slane %v4347, %v4453
    %v4455 = vlaneseq
    %v4456 = vshrl.u32 %v4455, 7
    %v4457 = vsub.s32 0, %v4456
    %v4458 = vrot.slane %v4348, %v4457
    %v4459 = vlaneseq
    %v4460 = vshrl.u32 %v4459, 7
    %v4461 = vsub.s32 1, %v4460
    %v4462 = vrot.slane %v4348, %v4461
    %v4463 = vlaneseq
    %v4464 = vshrl.u32 %v4463, 7
    %v4465 = vsub.s32 2, %v4464
    %v4466 = vrot.slane %v4348, %v4465
    %v4467 = vlaneseq
    %v4468 = vshrl.u32 %v4467, 7
    %v4469 = vsub.s32 3, %v4468
    %v4470 = vrot.slane %v4348, %v4469
    %v4471 = vlaneseq
    %v4472 = vshrl.u32 %v4471, 7
    %v4473 = vsub.s32 4, %v4472
    %v4474 = vrot.slane %v4348, %v4473
    %v4475 = vlaneseq
    %v4476 = vshrl.u32 %v4475, 7
    %v4477 = vsub.s32 5, %v4476
    %v4478 = vrot.slane %v4348, %v4477
    %v4479 = vlaneseq
    %v4480 = vshrl.u32 %v4479, 7
    %v4481 = vsub.s32 6, %v4480
    %v4482 = vrot.slane %v4348, %v4481
    %v4483 = vlaneseq
    %v4484 = vshrl.u32 %v4483, 7
    %v4485 = vsub.s32 7, %v4484
    %v4486 = vrot.slane %v4348, %v4485
    %v4487 = vlaneseq
    %v4488 = vshrl.u32 %v4487, 7
    %v4489 = vsub.s32 0, %v4488
    %v4490 = vrot.slane %v4349, %v4489
    %v4491 = vlaneseq
    %v4492 = vshrl.u32 %v4491, 7
    %v4493 = vsub.s32 1, %v4492
    %v4494 = vrot.slane %v4349, %v4493
    %v4495 = vlaneseq
    %v4496 = vshrl.u32 %v4495, 7
    %v4497 = vsub.s32 2, %v4496
    %v4498 = vrot.slane %v4349, %v4497
    %v4499 = vlaneseq
    %v4500 = vshrl.u32 %v4499, 7
    %v4501 = vsub.s32 3, %v4500
    %v4502 = vrot.slane %v4349, %v4501
    %v4503 = vlaneseq
    %v4504 = vshrl.u32 %v4503, 7
    %v4505 = vsub.s32 4, %v4504
    %v4506 = vrot.slane %v4349, %v4505
    %v4507 = vlaneseq
    %v4508 = vshrl.u32 %v4507, 7
    %v4509 = vsub.s32 5, %v4508
    %v4510 = vrot.slane %v4349, %v4509
    %v4511 = vlaneseq
    %v4512 = vshrl.u32 %v4511, 7
    %v4513 = vsub.s32 6, %v4512
    %v4514 = vrot.slane %v4349, %v4513
    %v4515 = vlaneseq
    %v4516 = vshrl.u32 %v4515, 7
    %v4517 = vsub.s32 7, %v4516
    %v4518 = vrot.slane %v4349, %v4517
    %v4519 = vlaneseq
    %v4520 = vshrl.u32 %v4519, 7
    %v4521 = vsub.s32 0, %v4520
    %v4522 = vrot.slane %v4350, %v4521
    %v4523 = vlaneseq
    %v4524 = vshrl.u32 %v4523, 7
    %v4525 = vsub.s32 1, %v4524
    %v4526 = vrot.slane %v4350, %v4525
    %v4527 = vlaneseq
    %v4528 = vshrl.u32 %v4527, 7
    %v4529 = vsub.s32 2, %v4528
    %v4530 = vrot.slane %v4350, %v4529
    %v4531 = vlaneseq
    %v4532 = vshrl.u32 %v4531, 7
    %v4533 = vsub.s32 3, %v4532
    %v4534 = vrot.slane %v4350, %v4533
    %v4535 = vlaneseq
    %v4536 = vshrl.u32 %v4535, 7
    %v4537 = vsub.s32 4, %v4536
    %v4538 = vrot.slane %v4350, %v4537
    %v4539 = vlaneseq
    %v4540 = vshrl.u32 %v4539, 7
    %v4541 = vsub.s32 5, %v4540
    %v4542 = vrot.slane %v4350, %v4541
    %v4543 = vlaneseq
    %v4544 = vshrl.u32 %v4543, 7
    %v4545 = vsub.s32 6, %v4544
    %v4546 = vrot.slane %v4350, %v4545
    %v4547 = vlaneseq
    %v4548 = vshrl.u32 %v4547, 7
    %v4549 = vsub.s32 7, %v4548
    %v4550 = vrot.slane %v4350, %v4549
    %v4551 = vlaneseq
    %v4552 = vshrl.u32 %v4551, 7
    %v4553 = vsub.s32 0, %v4552
    %v4554 = vrot.slane %v4351, %v4553
    %v4604 = vmul.f32 %v4296, %v4362
    %v4605 = vmul.f32 %v4297, %v4366
    %v4606 = vmul.f32 %v4298, %v4370
    %v4607 = vmul.f32 %v4299, %v4374
    %v4608 = vmul.f32 %v4300, %v4378
    %v4609 = vmul.f32 %v4301, %v4382
    %v4610 = vmul.f32 %v4302, %v4386
    %v4611 = vmul.f32 %v4303, %v4390
    %v4612 = vmul.f32 %v4304, %v4394
    %v4613 = vmul.f32 %v4305, %v4398
    %v4614 = vmul.f32 %v4306, %v4402
    %v4615 = vmul.f32 %v4307, %v4406
    %v4616 = vmul.f32 %v4308, %v4410
    %v4617 = vmul.f32 %v4309, %v4414
    %v4618 = vmul.f32 %v4310, %v4418
    %v4619 = vmul.f32 %v4311, %v4422
    %v4620 = vmul.f32 %v4312, %v4426
    %v4621 = vmul.f32 %v4313, %v4430
    %v4622 = vmul.f32 %v4314, %v4434
    %v4623 = vmul.f32 %v4315, %v4438
    %v4624 = vmul.f32 %v4316, %v4442
    %v4625 = vmul.f32 %v4317, %v4446
    %v4626 = vmul.f32 %v4318, %v4450
    %v4627 = vmul.f32 %v4319, %v4454
    %v4628 = vmul.f32 %v4320, %v4458
    %v4629 = vmul.f32 %v4321, %v4462
    %v4630 = vmul.f32 %v4322, %v4466
    %v4631 = vmul.f32 %v4323, %v4470
    %v4632 = vmul.f32 %v4324, %v4474
    %v4633 = vmul.f32 %v4325, %v4478
    %v4634 = vmul.f32 %v4326, %v4482
    %v4635 = vmul.f32 %v4327, %v4486
    %v4636 = vmul.f32 %v4328, %v4490
    %v4637 = vmul.f32 %v4329, %v4494
    %v4638 = vmul.f32 %v4330, %v4498
    %v4639 = vmul.f32 %v4331, %v4502
    %v4640 = vmul.f32 %v4332, %v4506
    %v4641 = vmul.f32 %v4333, %v4510
    %v4642 = vmul.f32 %v4334, %v4514
    %v4643 = vmul.f32 %v4335, %v4518
    %v4644 = vmul.f32 %v4336, %v4522
    %v4645 = vmul.f32 %v4337, %v4526
    %v4646 = vmul.f32 %v4338, %v4530
    %v4647 = vmul.f32 %v4339, %v4534
    %v4648 = vmul.f32 %v4340, %v4538
    %v4649 = vmul.f32 %v4341, %v4542
    %v4650 = vmul.f32 %v4342, %v4546
    %v4651 = vmul.f32 %v4343, %v4550
    %v4652 = vmul.f32 %v4344, %v4554
    %v4653 = vld [vmem:[#allocation9] sm:$0xff]
    %v4654 = vld [vmem:[#allocation9 + $0x8] sm:$0xff]
    %v4655 = vld [vmem:[#allocation9 + $0x10] sm:$0xff]
    %v4656 = vld [vmem:[#allocation9 + $0x18] sm:$0xff]
    %v4657 = vld [vmem:[#allocation9 + $0x20] sm:$0xff]
    %v4658 = vld [vmem:[#allocation9 + $0x28] sm:$0xff]
    %v4659 = vld [vmem:[#allocation9 + $0x30] sm:$0x1]
    %v4667 = vlaneseq
    %v4668 = vshrl.u32 %v4667, 7
    %v4669 = vsub.s32 0, %v4668
    %v4670 = vrot.slane %v4653, %v4669
    %v4671 = vlaneseq
    %v4672 = vshrl.u32 %v4671, 7
    %v4673 = vsub.s32 1, %v4672
    %v4674 = vrot.slane %v4653, %v4673
    %v4675 = vlaneseq
    %v4676 = vshrl.u32 %v4675, 7
    %v4677 = vsub.s32 2, %v4676
    %v4678 = vrot.slane %v4653, %v4677
    %v4679 = vlaneseq
    %v4680 = vshrl.u32 %v4679, 7
    %v4681 = vsub.s32 3, %v4680
    %v4682 = vrot.slane %v4653, %v4681
    %v4683 = vlaneseq
    %v4684 = vshrl.u32 %v4683, 7
    %v4685 = vsub.s32 4, %v4684
    %v4686 = vrot.slane %v4653, %v4685
    %v4687 = vlaneseq
    %v4688 = vshrl.u32 %v4687, 7
    %v4689 = vsub.s32 5, %v4688
    %v4690 = vrot.slane %v4653, %v4689
    %v4691 = vlaneseq
    %v4692 = vshrl.u32 %v4691, 7
    %v4693 = vsub.s32 6, %v4692
    %v4694 = vrot.slane %v4653, %v4693
    %v4695 = vlaneseq
    %v4696 = vshrl.u32 %v4695, 7
    %v4697 = vsub.s32 7, %v4696
    %v4698 = vrot.slane %v4653, %v4697
    %v4699 = vlaneseq
    %v4700 = vshrl.u32 %v4699, 7
    %v4701 = vsub.s32 0, %v4700
    %v4702 = vrot.slane %v4654, %v4701
    %v4703 = vlaneseq
    %v4704 = vshrl.u32 %v4703, 7
    %v4705 = vsub.s32 1, %v4704
    %v4706 = vrot.slane %v4654, %v4705
    %v4707 = vlaneseq
    %v4708 = vshrl.u32 %v4707, 7
    %v4709 = vsub.s32 2, %v4708
    %v4710 = vrot.slane %v4654, %v4709
    %v4711 = vlaneseq
    %v4712 = vshrl.u32 %v4711, 7
    %v4713 = vsub.s32 3, %v4712
    %v4714 = vrot.slane %v4654, %v4713
    %v4715 = vlaneseq
    %v4716 = vshrl.u32 %v4715, 7
    %v4717 = vsub.s32 4, %v4716
    %v4718 = vrot.slane %v4654, %v4717
    %v4719 = vlaneseq
    %v4720 = vshrl.u32 %v4719, 7
    %v4721 = vsub.s32 5, %v4720
    %v4722 = vrot.slane %v4654, %v4721
    %v4723 = vlaneseq
    %v4724 = vshrl.u32 %v4723, 7
    %v4725 = vsub.s32 6, %v4724
    %v4726 = vrot.slane %v4654, %v4725
    %v4727 = vlaneseq
    %v4728 = vshrl.u32 %v4727, 7
    %v4729 = vsub.s32 7, %v4728
    %v4730 = vrot.slane %v4654, %v4729
    %v4731 = vlaneseq
    %v4732 = vshrl.u32 %v4731, 7
    %v4733 = vsub.s32 0, %v4732
    %v4734 = vrot.slane %v4655, %v4733
    %v4735 = vlaneseq
    %v4736 = vshrl.u32 %v4735, 7
    %v4737 = vsub.s32 1, %v4736
    %v4738 = vrot.slane %v4655, %v4737
    %v4739 = vlaneseq
    %v4740 = vshrl.u32 %v4739, 7
    %v4741 = vsub.s32 2, %v4740
    %v4742 = vrot.slane %v4655, %v4741
    %v4743 = vlaneseq
    %v4744 = vshrl.u32 %v4743, 7
    %v4745 = vsub.s32 3, %v4744
    %v4746 = vrot.slane %v4655, %v4745
    %v4747 = vlaneseq
    %v4748 = vshrl.u32 %v4747, 7
    %v4749 = vsub.s32 4, %v4748
    %v4750 = vrot.slane %v4655, %v4749
    %v4751 = vlaneseq
    %v4752 = vshrl.u32 %v4751, 7
    %v4753 = vsub.s32 5, %v4752
    %v4754 = vrot.slane %v4655, %v4753
    %v4755 = vlaneseq
    %v4756 = vshrl.u32 %v4755, 7
    %v4757 = vsub.s32 6, %v4756
    %v4758 = vrot.slane %v4655, %v4757
    %v4759 = vlaneseq
    %v4760 = vshrl.u32 %v4759, 7
    %v4761 = vsub.s32 7, %v4760
    %v4762 = vrot.slane %v4655, %v4761
    %v4763 = vlaneseq
    %v4764 = vshrl.u32 %v4763, 7
    %v4765 = vsub.s32 0, %v4764
    %v4766 = vrot.slane %v4656, %v4765
    %v4767 = vlaneseq
    %v4768 = vshrl.u32 %v4767, 7
    %v4769 = vsub.s32 1, %v4768
    %v4770 = vrot.slane %v4656, %v4769
    %v4771 = vlaneseq
    %v4772 = vshrl.u32 %v4771, 7
    %v4773 = vsub.s32 2, %v4772
    %v4774 = vrot.slane %v4656, %v4773
    %v4775 = vlaneseq
    %v4776 = vshrl.u32 %v4775, 7
    %v4777 = vsub.s32 3, %v4776
    %v4778 = vrot.slane %v4656, %v4777
    %v4779 = vlaneseq
    %v4780 = vshrl.u32 %v4779, 7
    %v4781 = vsub.s32 4, %v4780
    %v4782 = vrot.slane %v4656, %v4781
    %v4783 = vlaneseq
    %v4784 = vshrl.u32 %v4783, 7
    %v4785 = vsub.s32 5, %v4784
    %v4786 = vrot.slane %v4656, %v4785
    %v4787 = vlaneseq
    %v4788 = vshrl.u32 %v4787, 7
    %v4789 = vsub.s32 6, %v4788
    %v4790 = vrot.slane %v4656, %v4789
    %v4791 = vlaneseq
    %v4792 = vshrl.u32 %v4791, 7
    %v4793 = vsub.s32 7, %v4792
    %v4794 = vrot.slane %v4656, %v4793
    %v4795 = vlaneseq
    %v4796 = vshrl.u32 %v4795, 7
    %v4797 = vsub.s32 0, %v4796
    %v4798 = vrot.slane %v4657, %v4797
    %v4799 = vlaneseq
    %v4800 = vshrl.u32 %v4799, 7
    %v4801 = vsub.s32 1, %v4800
    %v4802 = vrot.slane %v4657, %v4801
    %v4803 = vlaneseq
    %v4804 = vshrl.u32 %v4803, 7
    %v4805 = vsub.s32 2, %v4804
    %v4806 = vrot.slane %v4657, %v4805
    %v4807 = vlaneseq
    %v4808 = vshrl.u32 %v4807, 7
    %v4809 = vsub.s32 3, %v4808
    %v4810 = vrot.slane %v4657, %v4809
    %v4811 = vlaneseq
    %v4812 = vshrl.u32 %v4811, 7
    %v4813 = vsub.s32 4, %v4812
    %v4814 = vrot.slane %v4657, %v4813
    %v4815 = vlaneseq
    %v4816 = vshrl.u32 %v4815, 7
    %v4817 = vsub.s32 5, %v4816
    %v4818 = vrot.slane %v4657, %v4817
    %v4819 = vlaneseq
    %v4820 = vshrl.u32 %v4819, 7
    %v4821 = vsub.s32 6, %v4820
    %v4822 = vrot.slane %v4657, %v4821
    %v4823 = vlaneseq
    %v4824 = vshrl.u32 %v4823, 7
    %v4825 = vsub.s32 7, %v4824
    %v4826 = vrot.slane %v4657, %v4825
    %v4827 = vlaneseq
    %v4828 = vshrl.u32 %v4827, 7
    %v4829 = vsub.s32 0, %v4828
    %v4830 = vrot.slane %v4658, %v4829
    %v4831 = vlaneseq
    %v4832 = vshrl.u32 %v4831, 7
    %v4833 = vsub.s32 1, %v4832
    %v4834 = vrot.slane %v4658, %v4833
    %v4835 = vlaneseq
    %v4836 = vshrl.u32 %v4835, 7
    %v4837 = vsub.s32 2, %v4836
    %v4838 = vrot.slane %v4658, %v4837
    %v4839 = vlaneseq
    %v4840 = vshrl.u32 %v4839, 7
    %v4841 = vsub.s32 3, %v4840
    %v4842 = vrot.slane %v4658, %v4841
    %v4843 = vlaneseq
    %v4844 = vshrl.u32 %v4843, 7
    %v4845 = vsub.s32 4, %v4844
    %v4846 = vrot.slane %v4658, %v4845
    %v4847 = vlaneseq
    %v4848 = vshrl.u32 %v4847, 7
    %v4849 = vsub.s32 5, %v4848
    %v4850 = vrot.slane %v4658, %v4849
    %v4851 = vlaneseq
    %v4852 = vshrl.u32 %v4851, 7
    %v4853 = vsub.s32 6, %v4852
    %v4854 = vrot.slane %v4658, %v4853
    %v4855 = vlaneseq
    %v4856 = vshrl.u32 %v4855, 7
    %v4857 = vsub.s32 7, %v4856
    %v4858 = vrot.slane %v4658, %v4857
    %v4859 = vlaneseq
    %v4860 = vshrl.u32 %v4859, 7
    %v4861 = vsub.s32 0, %v4860
    %v4862 = vrot.slane %v4659, %v4861
    %v4912 = vadd.f32 %v4604, %v4670
    %v4913 = vadd.f32 %v4605, %v4674
    %v4914 = vadd.f32 %v4606, %v4678
    %v4915 = vadd.f32 %v4607, %v4682
    %v4916 = vadd.f32 %v4608, %v4686
    %v4917 = vadd.f32 %v4609, %v4690
    %v4918 = vadd.f32 %v4610, %v4694
    %v4919 = vadd.f32 %v4611, %v4698
    %v4920 = vadd.f32 %v4612, %v4702
    %v4921 = vadd.f32 %v4613, %v4706
    %v4922 = vadd.f32 %v4614, %v4710
    %v4923 = vadd.f32 %v4615, %v4714
    %v4924 = vadd.f32 %v4616, %v4718
    %v4925 = vadd.f32 %v4617, %v4722
    %v4926 = vadd.f32 %v4618, %v4726
    %v4927 = vadd.f32 %v4619, %v4730
    %v4928 = vadd.f32 %v4620, %v4734
    %v4929 = vadd.f32 %v4621, %v4738
    %v4930 = vadd.f32 %v4622, %v4742
    %v4931 = vadd.f32 %v4623, %v4746
    %v4932 = vadd.f32 %v4624, %v4750
    %v4933 = vadd.f32 %v4625, %v4754
    %v4934 = vadd.f32 %v4626, %v4758
    %v4935 = vadd.f32 %v4627, %v4762
    %v4936 = vadd.f32 %v4628, %v4766
    %v4937 = vadd.f32 %v4629, %v4770
    %v4938 = vadd.f32 %v4630, %v4774
    %v4939 = vadd.f32 %v4631, %v4778
    %v4940 = vadd.f32 %v4632, %v4782
    %v4941 = vadd.f32 %v4633, %v4786
    %v4942 = vadd.f32 %v4634, %v4790
    %v4943 = vadd.f32 %v4635, %v4794
    %v4944 = vadd.f32 %v4636, %v4798
    %v4945 = vadd.f32 %v4637, %v4802
    %v4946 = vadd.f32 %v4638, %v4806
    %v4947 = vadd.f32 %v4639, %v4810
    %v4948 = vadd.f32 %v4640, %v4814
    %v4949 = vadd.f32 %v4641, %v4818
    %v4950 = vadd.f32 %v4642, %v4822
    %v4951 = vadd.f32 %v4643, %v4826
    %v4952 = vadd.f32 %v4644, %v4830
    %v4953 = vadd.f32 %v4645, %v4834
    %v4954 = vadd.f32 %v4646, %v4838
    %v4955 = vadd.f32 %v4647, %v4842
    %v4956 = vadd.f32 %v4648, %v4846
    %v4957 = vadd.f32 %v4649, %v4850
    %v4958 = vadd.f32 %v4650, %v4854
    %v4959 = vadd.f32 %v4651, %v4858
    %v4960 = vadd.f32 %v4652, %v4862
    %v4961 = vmax.f32 %v4912, 0.0
    %v4962 = vmax.f32 %v4913, 0.0
    %v4963 = vmax.f32 %v4914, 0.0
    %v4964 = vmax.f32 %v4915, 0.0
    %v4965 = vmax.f32 %v4916, 0.0
    %v4966 = vmax.f32 %v4917, 0.0
    %v4967 = vmax.f32 %v4918, 0.0
    %v4968 = vmax.f32 %v4919, 0.0
    %v4969 = vmax.f32 %v4920, 0.0
    %v4970 = vmax.f32 %v4921, 0.0
    %v4971 = vmax.f32 %v4922, 0.0
    %v4972 = vmax.f32 %v4923, 0.0
    %v4973 = vmax.f32 %v4924, 0.0
    %v4974 = vmax.f32 %v4925, 0.0
    %v4975 = vmax.f32 %v4926, 0.0
    %v4976 = vmax.f32 %v4927, 0.0
    %v4977 = vmax.f32 %v4928, 0.0
    %v4978 = vmax.f32 %v4929, 0.0
    %v4979 = vmax.f32 %v4930, 0.0
    %v4980 = vmax.f32 %v4931, 0.0
    %v4981 = vmax.f32 %v4932, 0.0
    %v4982 = vmax.f32 %v4933, 0.0
    %v4983 = vmax.f32 %v4934, 0.0
    %v4984 = vmax.f32 %v4935, 0.0
    %v4985 = vmax.f32 %v4936, 0.0
    %v4986 = vmax.f32 %v4937, 0.0
    %v4987 = vmax.f32 %v4938, 0.0
    %v4988 = vmax.f32 %v4939, 0.0
    %v4989 = vmax.f32 %v4940, 0.0
    %v4990 = vmax.f32 %v4941, 0.0
    %v4991 = vmax.f32 %v4942, 0.0
    %v4992 = vmax.f32 %v4943, 0.0
    %v4993 = vmax.f32 %v4944, 0.0
    %v4994 = vmax.f32 %v4945, 0.0
    %v4995 = vmax.f32 %v4946, 0.0
    %v4996 = vmax.f32 %v4947, 0.0
    %v4997 = vmax.f32 %v4948, 0.0
    %v4998 = vmax.f32 %v4949, 0.0
    %v4999 = vmax.f32 %v4950, 0.0
    %v5000 = vmax.f32 %v4951, 0.0
    %v5001 = vmax.f32 %v4952, 0.0
    %v5002 = vmax.f32 %v4953, 0.0
    %v5003 = vmax.f32 %v4954, 0.0
    %v5004 = vmax.f32 %v4955, 0.0
    %v5005 = vmax.f32 %v4956, 0.0
    %v5006 = vmax.f32 %v4957, 0.0
    %v5007 = vmax.f32 %v4958, 0.0
    %v5008 = vmax.f32 %v4959, 0.0
    %v5009 = vmax.f32 %v4960, 0.0
    %5010 = vst [vmem:[#allocation2] sm:$0x3] 0.0
    %5011 = vst [vmem:[#allocation2 + $0x2] sm:$0x3] 0.0
    %5012 = vst [vmem:[#allocation2 + $0x4] sm:$0x3] 0.0
    %5013 = vst [vmem:[#allocation2 + $0x6] sm:$0x3] 0.0
    %5014 = vst [vmem:[#allocation2 + $0x8] sm:$0x3] 0.0
    %5015 = vst [vmem:[#allocation2 + $0xa] sm:$0x3] 0.0
    %5016 = vst [vmem:[#allocation2 + $0xc] sm:$0x3] 0.0
    %5017 = vst [vmem:[#allocation2 + $0xe] sm:$0x3] 0.0
    %5018 = vst [vmem:[#allocation2 + $0x10] sm:$0x3] 0.0
    %5019 = vst [vmem:[#allocation2 + $0x12] sm:$0x3] 0.0
    %5020 = vst [vmem:[#allocation2 + $0x14] sm:$0x3] 0.0
    %5021 = vst [vmem:[#allocation2 + $0x16] sm:$0x3] 0.0
    %5022 = vst [vmem:[#allocation2 + $0x18] sm:$0x3] 0.0
    %5023 = vst [vmem:[#allocation2 + $0x1a] sm:$0x3] 0.0
    %5024 = vst [vmem:[#allocation2 + $0x1c] sm:$0x3] 0.0
    %5025 = vst [vmem:[#allocation2 + $0x1e] sm:$0x3] 0.0
    %5026 = vst [vmem:[#allocation2 + $0x20] sm:$0x3] 0.0
    %5027 = vst [vmem:[#allocation2 + $0x22] sm:$0x3] 0.0
    %5028 = vst [vmem:[#allocation2 + $0x24] sm:$0x3] 0.0
    %5029 = vst [vmem:[#allocation2 + $0x26] sm:$0x3] 0.0
    %5030 = vst [vmem:[#allocation2 + $0x28] sm:$0x3] 0.0
    %5031 = vst [vmem:[#allocation2 + $0x2a] sm:$0x3] 0.0
    %5032 = vst [vmem:[#allocation2 + $0x2c] sm:$0x3] 0.0
    %5033 = vst [vmem:[#allocation2 + $0x2e] sm:$0x3] 0.0
    %5034 = vst [vmem:[#allocation2 + $0x30] sm:$0x3] 0.0
    %5035 = vst [vmem:[#allocation2 + $0x32] sm:$0x3] 0.0
    %5036 = vst [vmem:[#allocation2 + $0x34] sm:$0x3] 0.0
    %5037 = vst [vmem:[#allocation2 + $0x36] sm:$0x3] 0.0
    %5038 = vst [vmem:[#allocation2 + $0x38] sm:$0x3] 0.0
    %5039 = vst [vmem:[#allocation2 + $0x3a] sm:$0x3] 0.0
    %5040 = vst [vmem:[#allocation2 + $0x3c] sm:$0x3] 0.0
    %5041 = vst [vmem:[#allocation2 + $0x3e] sm:$0x3] 0.0
    %5042 = vst [vmem:[#allocation2 + $0x40] sm:$0x3] 0.0
    %5043 = vst [vmem:[#allocation2 + $0x42] sm:$0x3] 0.0
    %5044 = vst [vmem:[#allocation2 + $0x44] sm:$0x3] 0.0
    %5045 = vst [vmem:[#allocation2 + $0x46] sm:$0x3] 0.0
    %5046 = vst [vmem:[#allocation2 + $0x48] sm:$0x3] 0.0
    %5047 = vst [vmem:[#allocation2 + $0x4a] sm:$0x3] 0.0
    %5048 = vst [vmem:[#allocation2 + $0x4c] sm:$0x3] 0.0
    %5049 = vst [vmem:[#allocation2 + $0x4e] sm:$0x3] 0.0
    %5050 = vst [vmem:[#allocation2 + $0x50] sm:$0x3] 0.0
    %5051 = vst [vmem:[#allocation2 + $0x52] sm:$0x3] 0.0
    %5052 = vst [vmem:[#allocation2 + $0x54] sm:$0x3] 0.0
    %5053 = vst [vmem:[#allocation2 + $0x56] sm:$0x3] 0.0
    %5054 = vst [vmem:[#allocation2 + $0x58] sm:$0x3] 0.0
    %5055 = vst [vmem:[#allocation2 + $0x5a] sm:$0x3] 0.0
    %5056 = vst [vmem:[#allocation2 + $0x5c] sm:$0x3] 0.0
    %5057 = vst [vmem:[#allocation2 + $0x5e] sm:$0x3] 0.0
    %5058 = vst [vmem:[#allocation2 + $0x60] sm:$0x3] 0.0
    %5059 = vst [vmem:[#allocation2 + $0x62] sm:$0x3] 0.0
    %5060 = vst [vmem:[#allocation2 + $0x64] sm:$0x3] 0.0
    %5061 = vst [vmem:[#allocation2 + $0x66] sm:$0x3] 0.0
    %5062 = vst [vmem:[#allocation2 + $0x68] sm:$0x3] 0.0
    %5063 = vst [vmem:[#allocation2 + $0x6a] sm:$0x3] 0.0
    %5064 = vst [vmem:[#allocation2 + $0x6c] sm:$0x3] 0.0
    %5065 = vst [vmem:[#allocation2 + $0x6e] sm:$0x3] 0.0
    %5066 = vst [vmem:[#allocation2 + $0x70] sm:$0x3] 0.0
    %5067 = vst [vmem:[#allocation2 + $0x72] sm:$0x3] 0.0
    %5068 = vst [vmem:[#allocation2 + $0x74] sm:$0x3] 0.0
    %5069 = vst [vmem:[#allocation2 + $0x76] sm:$0x3] 0.0
    %5070 = vst [vmem:[#allocation2 + $0x78] sm:$0x3] 0.0
    %5071 = vst [vmem:[#allocation2 + $0x7a] sm:$0x3] 0.0
    %5072 = vst [vmem:[#allocation2 + $0x7c] sm:$0x3] 0.0
    %5073 = vst [vmem:[#allocation2 + $0x7e] sm:$0x3] 0.0
    %5074 = vst [vmem:[#allocation2 + $0x80] sm:$0x3] 0.0
    %5075 = vst [vmem:[#allocation2 + $0x82] sm:$0x3] 0.0
    %5076 = vst [vmem:[#allocation2 + $0x84] sm:$0x3] 0.0
    %5077 = vst [vmem:[#allocation2 + $0x86] sm:$0x3] 0.0
    %5078 = vst [vmem:[#allocation2 + $0x88] sm:$0x3] 0.0
    %5079 = vst [vmem:[#allocation2 + $0x8a] sm:$0x3] 0.0
    %5080 = vst [vmem:[#allocation2 + $0x8c] sm:$0x3] 0.0
    %5081 = vst [vmem:[#allocation2 + $0x8e] sm:$0x3] 0.0
    %5082 = vst [vmem:[#allocation2 + $0x90] sm:$0x3] 0.0
    %5083 = vst [vmem:[#allocation2 + $0x92] sm:$0x3] 0.0
    %5084 = vst [vmem:[#allocation2 + $0x94] sm:$0x3] 0.0
    %5085 = vst [vmem:[#allocation2 + $0x96] sm:$0x3] 0.0
    %5086 = vst [vmem:[#allocation2 + $0x98] sm:$0x3] 0.0
    %5087 = vst [vmem:[#allocation2 + $0x9a] sm:$0x3] 0.0
    %5088 = vst [vmem:[#allocation2 + $0x9c] sm:$0x3] 0.0
    %5089 = vst [vmem:[#allocation2 + $0x9e] sm:$0x3] 0.0
    %5090 = vst [vmem:[#allocation2 + $0xa0] sm:$0x3] 0.0
    %s5091 = scalar_lea.vmem [#allocation2], 20
    %5092 = vst [vmem:[%s5091] sm:$0x3] %v4961
    %s5093 = scalar_lea.vmem [#allocation2], 22
    %5094 = vst [vmem:[%s5093] sm:$0x3] %v4962
    %s5095 = scalar_lea.vmem [#allocation2], 24
    %5096 = vst [vmem:[%s5095] sm:$0x3] %v4963
    %s5097 = scalar_lea.vmem [#allocation2], 26
    %5098 = vst [vmem:[%s5097] sm:$0x3] %v4964
    %s5099 = scalar_lea.vmem [#allocation2], 28
    %5100 = vst [vmem:[%s5099] sm:$0x3] %v4965
    %s5101 = scalar_lea.vmem [#allocation2], 30
    %5102 = vst [vmem:[%s5101] sm:$0x3] %v4966
    %s5103 = scalar_lea.vmem [#allocation2], 32
    %5104 = vst [vmem:[%s5103] sm:$0x3] %v4967
    %s5105 = scalar_lea.vmem [#allocation2], 38
    %5106 = vst [vmem:[%s5105] sm:$0x3] %v4968
    %s5107 = scalar_lea.vmem [#allocation2], 40
    %5108 = vst [vmem:[%s5107] sm:$0x3] %v4969
    %s5109 = scalar_lea.vmem [#allocation2], 42
    %5110 = vst [vmem:[%s5109] sm:$0x3] %v4970
    %s5111 = scalar_lea.vmem [#allocation2], 44
    %5112 = vst [vmem:[%s5111] sm:$0x3] %v4971
    %s5113 = scalar_lea.vmem [#allocation2], 46
    %5114 = vst [vmem:[%s5113] sm:$0x3] %v4972
    %s5115 = scalar_lea.vmem [#allocation2], 48
    %5116 = vst [vmem:[%s5115] sm:$0x3] %v4973
    %s5117 = scalar_lea.vmem [#allocation2], 50
    %5118 = vst [vmem:[%s5117] sm:$0x3] %v4974
    %s5119 = scalar_lea.vmem [#allocation2], 56
    %5120 = vst [vmem:[%s5119] sm:$0x3] %v4975
    %s5121 = scalar_lea.vmem [#allocation2], 58
    %5122 = vst [vmem:[%s5121] sm:$0x3] %v4976
    %s5123 = scalar_lea.vmem [#allocation2], 60
    %5124 = vst [vmem:[%s5123] sm:$0x3] %v4977
    %s5125 = scalar_lea.vmem [#allocation2], 62
    %5126 = vst [vmem:[%s5125] sm:$0x3] %v4978
    %s5127 = scalar_lea.vmem [#allocation2], 64
    %5128 = vst [vmem:[%s5127] sm:$0x3] %v4979
    %s5129 = scalar_lea.vmem [#allocation2], 66
    %5130 = vst [vmem:[%s5129] sm:$0x3] %v4980
    %s5131 = scalar_lea.vmem [#allocation2], 68
    %5132 = vst [vmem:[%s5131] sm:$0x3] %v4981
    %s5133 = scalar_lea.vmem [#allocation2], 74
    %5134 = vst [vmem:[%s5133] sm:$0x3] %v4982
    %s5135 = scalar_lea.vmem [#allocation2], 76
    %5136 = vst [vmem:[%s5135] sm:$0x3] %v4983
    %s5137 = scalar_lea.vmem [#allocation2], 78
    %5138 = vst [vmem:[%s5137] sm:$0x3] %v4984
    %s5139 = scalar_lea.vmem [#allocation2], 80
    %5140 = vst [vmem:[%s5139] sm:$0x3] %v4985
    %s5141 = scalar_lea.vmem [#allocation2], 82
    %5142 = vst [vmem:[%s5141] sm:$0x3] %v4986
    %s5143 = scalar_lea.vmem [#allocation2], 84
    %5144 = vst [vmem:[%s5143] sm:$0x3] %v4987
    %s5145 = scalar_lea.vmem [#allocation2], 86
    %5146 = vst [vmem:[%s5145] sm:$0x3] %v4988
    %s5147 = scalar_lea.vmem [#allocation2], 92
    %5148 = vst [vmem:[%s5147] sm:$0x3] %v4989
    %s5149 = scalar_lea.vmem [#allocation2], 94
    %5150 = vst [vmem:[%s5149] sm:$0x3] %v4990
    %s5151 = scalar_lea.vmem [#allocation2], 96
    %5152 = vst [vmem:[%s5151] sm:$0x3] %v4991
    %s5153 = scalar_lea.vmem [#allocation2], 98
    %5154 = vst [vmem:[%s5153] sm:$0x3] %v4992
    %s5155 = scalar_lea.vmem [#allocation2], 100
    %5156 = vst [vmem:[%s5155] sm:$0x3] %v4993
    %s5157 = scalar_lea.vmem [#allocation2], 102
    %5158 = vst [vmem:[%s5157] sm:$0x3] %v4994
    %s5159 = scalar_lea.vmem [#allocation2], 104
    %5160 = vst [vmem:[%s5159] sm:$0x3] %v4995
    %s5161 = scalar_lea.vmem [#allocation2], 110
    %5162 = vst [vmem:[%s5161] sm:$0x3] %v4996
    %s5163 = scalar_lea.vmem [#allocation2], 112
    %5164 = vst [vmem:[%s5163] sm:$0x3] %v4997
    %s5165 = scalar_lea.vmem [#allocation2], 114
    %5166 = vst [vmem:[%s5165] sm:$0x3] %v4998
    %s5167 = scalar_lea.vmem [#allocation2], 116
    %5168 = vst [vmem:[%s5167] sm:$0x3] %v4999
    %s5169 = scalar_lea.vmem [#allocation2], 118
    %5170 = vst [vmem:[%s5169] sm:$0x3] %v5000
    %s5171 = scalar_lea.vmem [#allocation2], 120
    %5172 = vst [vmem:[%s5171] sm:$0x3] %v5001
    %s5173 = scalar_lea.vmem [#allocation2], 122
    %5174 = vst [vmem:[%s5173] sm:$0x3] %v5002
    %s5175 = scalar_lea.vmem [#allocation2], 128
    %5176 = vst [vmem:[%s5175] sm:$0x3] %v5003
    %s5177 = scalar_lea.vmem [#allocation2], 130
    %5178 = vst [vmem:[%s5177] sm:$0x3] %v5004
    %s5179 = scalar_lea.vmem [#allocation2], 132
    %5180 = vst [vmem:[%s5179] sm:$0x3] %v5005
    %s5181 = scalar_lea.vmem [#allocation2], 134
    %5182 = vst [vmem:[%s5181] sm:$0x3] %v5006
    %s5183 = scalar_lea.vmem [#allocation2], 136
    %5184 = vst [vmem:[%s5183] sm:$0x3] %v5007
    %s5185 = scalar_lea.vmem [#allocation2], 138
    %5186 = vst [vmem:[%s5185] sm:$0x3] %v5008
    %s5187 = scalar_lea.vmem [#allocation2], 140
    %5188 = vst [vmem:[%s5187] sm:$0x3] %v5009
    %v5189 = vld [vmem:[#allocation2] sm:$0x3]
    %v5190 = vld [vmem:[#allocation2 + $0x2] sm:$0x3]
    %v5191 = vld [vmem:[#allocation2 + $0x4] sm:$0x3]
    %v5192 = vld [vmem:[#allocation2 + $0x6] sm:$0x3]
    %v5193 = vld [vmem:[#allocation2 + $0x8] sm:$0x3]
    %v5194 = vld [vmem:[#allocation2 + $0xa] sm:$0x3]
    %v5195 = vld [vmem:[#allocation2 + $0xc] sm:$0x3]
    %v5196 = vld [vmem:[#allocation2 + $0xe] sm:$0x3]
    %v5197 = vld [vmem:[#allocation2 + $0x10] sm:$0x3]
    %v5198 = vld [vmem:[#allocation2 + $0x12] sm:$0x3]
    %v5199 = vld [vmem:[#allocation2 + $0x14] sm:$0x3]
    %v5200 = vld [vmem:[#allocation2 + $0x16] sm:$0x3]
    %v5201 = vld [vmem:[#allocation2 + $0x18] sm:$0x3]
    %v5202 = vld [vmem:[#allocation2 + $0x1a] sm:$0x3]
    %v5203 = vld [vmem:[#allocation2 + $0x1c] sm:$0x3]
    %v5204 = vld [vmem:[#allocation2 + $0x1e] sm:$0x3]
    %v5205 = vld [vmem:[#allocation2 + $0x20] sm:$0x3]
    %v5206 = vld [vmem:[#allocation2 + $0x22] sm:$0x3]
    %v5207 = vld [vmem:[#allocation2 + $0x24] sm:$0x3]
    %v5208 = vld [vmem:[#allocation2 + $0x26] sm:$0x3]
    %v5209 = vld [vmem:[#allocation2 + $0x28] sm:$0x3]
    %v5210 = vld [vmem:[#allocation2 + $0x2a] sm:$0x3]
    %v5211 = vld [vmem:[#allocation2 + $0x2c] sm:$0x3]
    %v5212 = vld [vmem:[#allocation2 + $0x2e] sm:$0x3]
    %v5213 = vld [vmem:[#allocation2 + $0x30] sm:$0x3]
    %v5214 = vld [vmem:[#allocation2 + $0x32] sm:$0x3]
    %v5215 = vld [vmem:[#allocation2 + $0x34] sm:$0x3]
    %v5216 = vld [vmem:[#allocation2 + $0x36] sm:$0x3]
    %v5217 = vld [vmem:[#allocation2 + $0x38] sm:$0x3]
    %v5218 = vld [vmem:[#allocation2 + $0x3a] sm:$0x3]
    %v5219 = vld [vmem:[#allocation2 + $0x3c] sm:$0x3]
    %v5220 = vld [vmem:[#allocation2 + $0x3e] sm:$0x3]
    %v5221 = vld [vmem:[#allocation2 + $0x40] sm:$0x3]
    %v5222 = vld [vmem:[#allocation2 + $0x42] sm:$0x3]
    %v5223 = vld [vmem:[#allocation2 + $0x44] sm:$0x3]
    %v5224 = vld [vmem:[#allocation2 + $0x46] sm:$0x3]
    %v5225 = vld [vmem:[#allocation2 + $0x48] sm:$0x3]
    %v5226 = vld [vmem:[#allocation2 + $0x4a] sm:$0x3]
    %v5227 = vld [vmem:[#allocation2 + $0x4c] sm:$0x3]
    %v5228 = vld [vmem:[#allocation2 + $0x4e] sm:$0x3]
    %v5229 = vld [vmem:[#allocation2 + $0x50] sm:$0x3]
    %v5230 = vld [vmem:[#allocation2 + $0x52] sm:$0x3]
    %v5231 = vld [vmem:[#allocation2 + $0x54] sm:$0x3]
    %v5232 = vld [vmem:[#allocation2 + $0x56] sm:$0x3]
    %v5233 = vld [vmem:[#allocation2 + $0x58] sm:$0x3]
    %v5234 = vld [vmem:[#allocation2 + $0x5a] sm:$0x3]
    %v5235 = vld [vmem:[#allocation2 + $0x5c] sm:$0x3]
    %v5236 = vld [vmem:[#allocation2 + $0x5e] sm:$0x3]
    %v5237 = vld [vmem:[#allocation2 + $0x60] sm:$0x3]
    %v5238 = vld [vmem:[#allocation2 + $0x62] sm:$0x3]
    %v5239 = vld [vmem:[#allocation2 + $0x64] sm:$0x3]
    %v5240 = vld [vmem:[#allocation2 + $0x66] sm:$0x3]
    %v5241 = vld [vmem:[#allocation2 + $0x68] sm:$0x3]
    %v5242 = vld [vmem:[#allocation2 + $0x6a] sm:$0x3]
    %v5243 = vld [vmem:[#allocation2 + $0x6c] sm:$0x3]
    %v5244 = vld [vmem:[#allocation2 + $0x6e] sm:$0x3]
    %v5245 = vld [vmem:[#allocation2 + $0x70] sm:$0x3]
    %v5246 = vld [vmem:[#allocation2 + $0x72] sm:$0x3]
    %v5247 = vld [vmem:[#allocation2 + $0x74] sm:$0x3]
    %v5248 = vld [vmem:[#allocation2 + $0x76] sm:$0x3]
    %v5249 = vld [vmem:[#allocation2 + $0x78] sm:$0x3]
    %v5250 = vld [vmem:[#allocation2 + $0x7a] sm:$0x3]
    %v5251 = vld [vmem:[#allocation2 + $0x7c] sm:$0x3]
    %v5252 = vld [vmem:[#allocation2 + $0x7e] sm:$0x3]
    %v5253 = vld [vmem:[#allocation2 + $0x80] sm:$0x3]
    %v5254 = vld [vmem:[#allocation2 + $0x82] sm:$0x3]
    %v5255 = vld [vmem:[#allocation2 + $0x84] sm:$0x3]
    %v5256 = vld [vmem:[#allocation2 + $0x86] sm:$0x3]
    %v5257 = vld [vmem:[#allocation2 + $0x88] sm:$0x3]
    %v5258 = vld [vmem:[#allocation2 + $0x8a] sm:$0x3]
    %v5259 = vld [vmem:[#allocation2 + $0x8c] sm:$0x3]
    %v5260 = vld [vmem:[#allocation2 + $0x8e] sm:$0x3]
    %v5261 = vld [vmem:[#allocation2 + $0x90] sm:$0x3]
    %v5262 = vld [vmem:[#allocation2 + $0x92] sm:$0x3]
    %v5263 = vld [vmem:[#allocation2 + $0x94] sm:$0x3]
    %v5264 = vld [vmem:[#allocation2 + $0x96] sm:$0x3]
    %v5265 = vld [vmem:[#allocation2 + $0x98] sm:$0x3]
    %v5266 = vld [vmem:[#allocation2 + $0x9a] sm:$0x3]
    %v5267 = vld [vmem:[#allocation2 + $0x9c] sm:$0x3]
    %v5268 = vld [vmem:[#allocation2 + $0x9e] sm:$0x3]
    %v5269 = vld [vmem:[#allocation2 + $0xa0] sm:$0x3]
    %v5319 = vcombine.low %v5189, %v5190
    %v5320 = vcombine.low %v5191, %v5192
    %v5322 = vunpack.c.l.s4 1983009808
    %v5323 = vunpack.c.0.s8 %v5322
    %v5324 = vlaneseq
    %v5325 = vshrl.u32 %v5324, 7
    %v5326 = vsub.s32 %v5323, %v5325
    %v5327 = vrot.slane %v5319, %v5326
    %v5329 = vunpack.c.l.s4 1983009808
    %v5330 = vunpack.c.0.s8 %v5329
    %v5331 = vlaneseq
    %v5332 = vshrl.u32 %v5331, 7
    %v5333 = vsub.s32 %v5330, %v5332
    %v5334 = vrot.slane %v5320, %v5333
    %v5335 = vcombine.low %v5327, %v5334
    %v5336 = vcombine.low %v5193, %v5194
    %v5337 = vcombine.low %v5195, %v5198
    %v5339 = vunpack.c.l.s4 1983009808
    %v5340 = vunpack.c.0.s8 %v5339
    %v5341 = vlaneseq
    %v5342 = vshrl.u32 %v5341, 7
    %v5343 = vsub.s32 %v5340, %v5342
    %v5344 = vrot.slane %v5336, %v5343
    %v5346 = vunpack.c.l.s4 1983009808
    %v5347 = vunpack.c.0.s8 %v5346
    %v5348 = vlaneseq
    %v5349 = vshrl.u32 %v5348, 7
    %v5350 = vsub.s32 %v5347, %v5349
    %v5351 = vrot.slane %v5337, %v5350
    %v5352 = vcombine.low %v5344, %v5351
    %v5353 = vcombine.low %v5199, %v5200
    %v5354 = vcombine.low %v5201, %v5202
    %v5356 = vunpack.c.l.s4 1983009808
    %v5357 = vunpack.c.0.s8 %v5356
    %v5358 = vlaneseq
    %v5359 = vshrl.u32 %v5358, 7
    %v5360 = vsub.s32 %v5357, %v5359
    %v5361 = vrot.slane %v5353, %v5360
    %v5363 = vunpack.c.l.s4 1983009808
    %v5364 = vunpack.c.0.s8 %v5363
    %v5365 = vlaneseq
    %v5366 = vshrl.u32 %v5365, 7
    %v5367 = vsub.s32 %v5364, %v5366
    %v5368 = vrot.slane %v5354, %v5367
    %v5369 = vcombine.low %v5361, %v5368
    %v5370 = vcombine.low %v5203, %v5204
    %v5371 = vcombine.low %v5207, %v5208
    %v5373 = vunpack.c.l.s4 1983009808
    %v5374 = vunpack.c.0.s8 %v5373
    %v5375 = vlaneseq
    %v5376 = vshrl.u32 %v5375, 7
    %v5377 = vsub.s32 %v5374, %v5376
    %v5378 = vrot.slane %v5370, %v5377
    %v5380 = vunpack.c.l.s4 1983009808
    %v5381 = vunpack.c.0.s8 %v5380
    %v5382 = vlaneseq
    %v5383 = vshrl.u32 %v5382, 7
    %v5384 = vsub.s32 %v5381, %v5383
    %v5385 = vrot.slane %v5371, %v5384
    %v5386 = vcombine.low %v5378, %v5385
    %v5387 = vcombine.low %v5209, %v5210
    %v5388 = vcombine.low %v5211, %v5212
    %v5390 = vunpack.c.l.s4 1983009808
    %v5391 = vunpack.c.0.s8 %v5390
    %v5392 = vlaneseq
    %v5393 = vshrl.u32 %v5392, 7
    %v5394 = vsub.s32 %v5391, %v5393
    %v5395 = vrot.slane %v5387, %v5394
    %v5397 = vunpack.c.l.s4 1983009808
    %v5398 = vunpack.c.0.s8 %v5397
    %v5399 = vlaneseq
    %v5400 = vshrl.u32 %v5399, 7
    %v5401 = vsub.s32 %v5398, %v5400
    %v5402 = vrot.slane %v5388, %v5401
    %v5403 = vcombine.low %v5395, %v5402
    %v5404 = vcombine.low %v5213, %v5216
    %v5405 = vcombine.low %v5217, %v5218
    %v5407 = vunpack.c.l.s4 1983009808
    %v5408 = vunpack.c.0.s8 %v5407
    %v5409 = vlaneseq
    %v5410 = vshrl.u32 %v5409, 7
    %v5411 = vsub.s32 %v5408, %v5410
    %v5412 = vrot.slane %v5404, %v5411
    %v5414 = vunpack.c.l.s4 1983009808
    %v5415 = vunpack.c.0.s8 %v5414
    %v5416 = vlaneseq
    %v5417 = vshrl.u32 %v5416, 7
    %v5418 = vsub.s32 %v5415, %v5417
    %v5419 = vrot.slane %v5405, %v5418
    %v5420 = vcombine.low %v5412, %v5419
    %v5421 = vcombine.low %v5219, %v5220
    %v5422 = vcombine.low %v5221, %v5222
    %v5424 = vunpack.c.l.s4 1983009808
    %v5425 = vunpack.c.0.s8 %v5424
    %v5426 = vlaneseq
    %v5427 = vshrl.u32 %v5426, 7
    %v5428 = vsub.s32 %v5425, %v5427
    %v5429 = vrot.slane %v5421, %v5428
    %v5431 = vunpack.c.l.s4 1983009808
    %v5432 = vunpack.c.0.s8 %v5431
    %v5433 = vlaneseq
    %v5434 = vshrl.u32 %v5433, 7
    %v5435 = vsub.s32 %v5432, %v5434
    %v5436 = vrot.slane %v5422, %v5435
    %v5437 = vcombine.low %v5429, %v5436
    %v5438 = vcombine.low %v5225, %v5226
    %v5439 = vcombine.low %v5227, %v5228
    %v5441 = vunpack.c.l.s4 1983009808
    %v5442 = vunpack.c.0.s8 %v5441
    %v5443 = vlaneseq
    %v5444 = vshrl.u32 %v5443, 7
    %v5445 = vsub.s32 %v5442, %v5444
    %v5446 = vrot.slane %v5438, %v5445
    %v5448 = vunpack.c.l.s4 1983009808
    %v5449 = vunpack.c.0.s8 %v5448
    %v5450 = vlaneseq
    %v5451 = vshrl.u32 %v5450, 7
    %v5452 = vsub.s32 %v5449, %v5451
    %v5453 = vrot.slane %v5439, %v5452
    %v5454 = vcombine.low %v5446, %v5453
    %v5455 = vcombine.low %v5229, %v5230
    %v5456 = vcombine.low %v5231, %v5234
    %v5458 = vunpack.c.l.s4 1983009808
    %v5459 = vunpack.c.0.s8 %v5458
    %v5460 = vlaneseq
    %v5461 = vshrl.u32 %v5460, 7
    %v5462 = vsub.s32 %v5459, %v5461
    %v5463 = vrot.slane %v5455, %v5462
    %v5465 = vunpack.c.l.s4 1983009808
    %v5466 = vunpack.c.0.s8 %v5465
    %v5467 = vlaneseq
    %v5468 = vshrl.u32 %v5467, 7
    %v5469 = vsub.s32 %v5466, %v5468
    %v5470 = vrot.slane %v5456, %v5469
    %v5471 = vcombine.low %v5463, %v5470
    %v5472 = vcombine.low %v5235, %v5236
    %v5473 = vcombine.low %v5237, %v5238
    %v5475 = vunpack.c.l.s4 1983009808
    %v5476 = vunpack.c.0.s8 %v5475
    %v5477 = vlaneseq
    %v5478 = vshrl.u32 %v5477, 7
    %v5479 = vsub.s32 %v5476, %v5478
    %v5480 = vrot.slane %v5472, %v5479
    %v5482 = vunpack.c.l.s4 1983009808
    %v5483 = vunpack.c.0.s8 %v5482
    %v5484 = vlaneseq
    %v5485 = vshrl.u32 %v5484, 7
    %v5486 = vsub.s32 %v5483, %v5485
    %v5487 = vrot.slane %v5473, %v5486
    %v5488 = vcombine.low %v5480, %v5487
    %v5489 = vcombine.low %v5239, %v5240
    %v5490 = vcombine.low %v5243, %v5244
    %v5492 = vunpack.c.l.s4 1983009808
    %v5493 = vunpack.c.0.s8 %v5492
    %v5494 = vlaneseq
    %v5495 = vshrl.u32 %v5494, 7
    %v5496 = vsub.s32 %v5493, %v5495
    %v5497 = vrot.slane %v5489, %v5496
    %v5499 = vunpack.c.l.s4 1983009808
    %v5500 = vunpack.c.0.s8 %v5499
    %v5501 = vlaneseq
    %v5502 = vshrl.u32 %v5501, 7
    %v5503 = vsub.s32 %v5500, %v5502
    %v5504 = vrot.slane %v5490, %v5503
    %v5505 = vcombine.low %v5497, %v5504
    %v5506 = vcombine.low %v5245, %v5246
    %v5507 = vcombine.low %v5247, %v5248
    %v5509 = vunpack.c.l.s4 1983009808
    %v5510 = vunpack.c.0.s8 %v5509
    %v5511 = vlaneseq
    %v5512 = vshrl.u32 %v5511, 7
    %v5513 = vsub.s32 %v5510, %v5512
    %v5514 = vrot.slane %v5506, %v5513
    %v5516 = vunpack.c.l.s4 1983009808
    %v5517 = vunpack.c.0.s8 %v5516
    %v5518 = vlaneseq
    %v5519 = vshrl.u32 %v5518, 7
    %v5520 = vsub.s32 %v5517, %v5519
    %v5521 = vrot.slane %v5507, %v5520
    %v5522 = vcombine.low %v5514, %v5521
    %v5524 = vunpack.c.l.s4 1983009808
    %v5525 = vunpack.c.0.s8 %v5524
    %v5526 = vlaneseq
    %v5527 = vshrl.u32 %v5526, 7
    %v5528 = vsub.s32 %v5525, %v5527
    %v5529 = vrot.slane %v5249, %v5528
    %v5543 = vpack.c.bf16 %v5352, %v5335
    %v5544 = vpack.c.bf16 %v5386, %v5369
    %v5545 = vpack.c.bf16 %v5420, %v5403
    %v5546 = vpack.c.bf16 %v5454, %v5437
    %v5547 = vpack.c.bf16 %v5488, %v5471
    %v5548 = vpack.c.bf16 %v5522, %v5505
    %v5549 = vpack.c.bf16 %v5529, %v5529
    %v5557 = vcombine.low %v5190, %v5191
    %v5558 = vcombine.low %v5192, %v5193
    %v5560 = vunpack.c.l.s4 1983009808
    %v5561 = vunpack.c.0.s8 %v5560
    %v5562 = vlaneseq
    %v5563 = vshrl.u32 %v5562, 7
    %v5564 = vsub.s32 %v5561, %v5563
    %v5565 = vrot.slane %v5557, %v5564
    %v5567 = vunpack.c.l.s4 1983009808
    %v5568 = vunpack.c.0.s8 %v5567
    %v5569 = vlaneseq
    %v5570 = vshrl.u32 %v5569, 7
    %v5571 = vsub.s32 %v5568, %v5570
    %v5572 = vrot.slane %v5558, %v5571
    %v5573 = vcombine.low %v5565, %v5572
    %v5574 = vcombine.low %v5194, %v5195
    %v5575 = vcombine.low %v5196, %v5199
    %v5577 = vunpack.c.l.s4 1983009808
    %v5578 = vunpack.c.0.s8 %v5577
    %v5579 = vlaneseq
    %v5580 = vshrl.u32 %v5579, 7
    %v5581 = vsub.s32 %v5578, %v5580
    %v5582 = vrot.slane %v5574, %v5581
    %v5584 = vunpack.c.l.s4 1983009808
    %v5585 = vunpack.c.0.s8 %v5584
    %v5586 = vlaneseq
    %v5587 = vshrl.u32 %v5586, 7
    %v5588 = vsub.s32 %v5585, %v5587
    %v5589 = vrot.slane %v5575, %v5588
    %v5590 = vcombine.low %v5582, %v5589
    %v5591 = vcombine.low %v5200, %v5201
    %v5592 = vcombine.low %v5202, %v5203
    %v5594 = vunpack.c.l.s4 1983009808
    %v5595 = vunpack.c.0.s8 %v5594
    %v5596 = vlaneseq
    %v5597 = vshrl.u32 %v5596, 7
    %v5598 = vsub.s32 %v5595, %v5597
    %v5599 = vrot.slane %v5591, %v5598
    %v5601 = vunpack.c.l.s4 1983009808
    %v5602 = vunpack.c.0.s8 %v5601
    %v5603 = vlaneseq
    %v5604 = vshrl.u32 %v5603, 7
    %v5605 = vsub.s32 %v5602, %v5604
    %v5606 = vrot.slane %v5592, %v5605
    %v5607 = vcombine.low %v5599, %v5606
    %v5608 = vcombine.low %v5204, %v5205
    %v5609 = vcombine.low %v5208, %v5209
    %v5611 = vunpack.c.l.s4 1983009808
    %v5612 = vunpack.c.0.s8 %v5611
    %v5613 = vlaneseq
    %v5614 = vshrl.u32 %v5613, 7
    %v5615 = vsub.s32 %v5612, %v5614
    %v5616 = vrot.slane %v5608, %v5615
    %v5618 = vunpack.c.l.s4 1983009808
    %v5619 = vunpack.c.0.s8 %v5618
    %v5620 = vlaneseq
    %v5621 = vshrl.u32 %v5620, 7
    %v5622 = vsub.s32 %v5619, %v5621
    %v5623 = vrot.slane %v5609, %v5622
    %v5624 = vcombine.low %v5616, %v5623
    %v5625 = vcombine.low %v5210, %v5211
    %v5626 = vcombine.low %v5212, %v5213
    %v5628 = vunpack.c.l.s4 1983009808
    %v5629 = vunpack.c.0.s8 %v5628
    %v5630 = vlaneseq
    %v5631 = vshrl.u32 %v5630, 7
    %v5632 = vsub.s32 %v5629, %v5631
    %v5633 = vrot.slane %v5625, %v5632
    %v5635 = vunpack.c.l.s4 1983009808
    %v5636 = vunpack.c.0.s8 %v5635
    %v5637 = vlaneseq
    %v5638 = vshrl.u32 %v5637, 7
    %v5639 = vsub.s32 %v5636, %v5638
    %v5640 = vrot.slane %v5626, %v5639
    %v5641 = vcombine.low %v5633, %v5640
    %v5642 = vcombine.low %v5214, %v5217
    %v5643 = vcombine.low %v5218, %v5219
    %v5645 = vunpack.c.l.s4 1983009808
    %v5646 = vunpack.c.0.s8 %v5645
    %v5647 = vlaneseq
    %v5648 = vshrl.u32 %v5647, 7
    %v5649 = vsub.s32 %v5646, %v5648
    %v5650 = vrot.slane %v5642, %v5649
    %v5652 = vunpack.c.l.s4 1983009808
    %v5653 = vunpack.c.0.s8 %v5652
    %v5654 = vlaneseq
    %v5655 = vshrl.u32 %v5654, 7
    %v5656 = vsub.s32 %v5653, %v5655
    %v5657 = vrot.slane %v5643, %v5656
    %v5658 = vcombine.low %v5650, %v5657
    %v5659 = vcombine.low %v5220, %v5221
    %v5660 = vcombine.low %v5222, %v5223
    %v5662 = vunpack.c.l.s4 1983009808
    %v5663 = vunpack.c.0.s8 %v5662
    %v5664 = vlaneseq
    %v5665 = vshrl.u32 %v5664, 7
    %v5666 = vsub.s32 %v5663, %v5665
    %v5667 = vrot.slane %v5659, %v5666
    %v5669 = vunpack.c.l.s4 1983009808
    %v5670 = vunpack.c.0.s8 %v5669
    %v5671 = vlaneseq
    %v5672 = vshrl.u32 %v5671, 7
    %v5673 = vsub.s32 %v5670, %v5672
    %v5674 = vrot.slane %v5660, %v5673
    %v5675 = vcombine.low %v5667, %v5674
    %v5676 = vcombine.low %v5226, %v5227
    %v5677 = vcombine.low %v5228, %v5229
    %v5679 = vunpack.c.l.s4 1983009808
    %v5680 = vunpack.c.0.s8 %v5679
    %v5681 = vlaneseq
    %v5682 = vshrl.u32 %v5681, 7
    %v5683 = vsub.s32 %v5680, %v5682
    %v5684 = vrot.slane %v5676, %v5683
    %v5686 = vunpack.c.l.s4 1983009808
    %v5687 = vunpack.c.0.s8 %v5686
    %v5688 = vlaneseq
    %v5689 = vshrl.u32 %v5688, 7
    %v5690 = vsub.s32 %v5687, %v5689
    %v5691 = vrot.slane %v5677, %v5690
    %v5692 = vcombine.low %v5684, %v5691
    %v5693 = vcombine.low %v5230, %v5231
    %v5694 = vcombine.low %v5232, %v5235
    %v5696 = vunpack.c.l.s4 1983009808
    %v5697 = vunpack.c.0.s8 %v5696
    %v5698 = vlaneseq
    %v5699 = vshrl.u32 %v5698, 7
    %v5700 = vsub.s32 %v5697, %v5699
    %v5701 = vrot.slane %v5693, %v5700
    %v5703 = vunpack.c.l.s4 1983009808
    %v5704 = vunpack.c.0.s8 %v5703
    %v5705 = vlaneseq
    %v5706 = vshrl.u32 %v5705, 7
    %v5707 = vsub.s32 %v5704, %v5706
    %v5708 = vrot.slane %v5694, %v5707
    %v5709 = vcombine.low %v5701, %v5708
    %v5710 = vcombine.low %v5236, %v5237
    %v5711 = vcombine.low %v5238, %v5239
    %v5713 = vunpack.c.l.s4 1983009808
    %v5714 = vunpack.c.0.s8 %v5713
    %v5715 = vlaneseq
    %v5716 = vshrl.u32 %v5715, 7
    %v5717 = vsub.s32 %v5714, %v5716
    %v5718 = vrot.slane %v5710, %v5717
    %v5720 = vunpack.c.l.s4 1983009808
    %v5721 = vunpack.c.0.s8 %v5720
    %v5722 = vlaneseq
    %v5723 = vshrl.u32 %v5722, 7
    %v5724 = vsub.s32 %v5721, %v5723
    %v5725 = vrot.slane %v5711, %v5724
    %v5726 = vcombine.low %v5718, %v5725
    %v5727 = vcombine.low %v5240, %v5241
    %v5728 = vcombine.low %v5244, %v5245
    %v5730 = vunpack.c.l.s4 1983009808
    %v5731 = vunpack.c.0.s8 %v5730
    %v5732 = vlaneseq
    %v5733 = vshrl.u32 %v5732, 7
    %v5734 = vsub.s32 %v5731, %v5733
    %v5735 = vrot.slane %v5727, %v5734
    %v5737 = vunpack.c.l.s4 1983009808
    %v5738 = vunpack.c.0.s8 %v5737
    %v5739 = vlaneseq
    %v5740 = vshrl.u32 %v5739, 7
    %v5741 = vsub.s32 %v5738, %v5740
    %v5742 = vrot.slane %v5728, %v5741
    %v5743 = vcombine.low %v5735, %v5742
    %v5744 = vcombine.low %v5246, %v5247
    %v5745 = vcombine.low %v5248, %v5249
    %v5747 = vunpack.c.l.s4 1983009808
    %v5748 = vunpack.c.0.s8 %v5747
    %v5749 = vlaneseq
    %v5750 = vshrl.u32 %v5749, 7
    %v5751 = vsub.s32 %v5748, %v5750
    %v5752 = vrot.slane %v5744, %v5751
    %v5754 = vunpack.c.l.s4 1983009808
    %v5755 = vunpack.c.0.s8 %v5754
    %v5756 = vlaneseq
    %v5757 = vshrl.u32 %v5756, 7
    %v5758 = vsub.s32 %v5755, %v5757
    %v5759 = vrot.slane %v5745, %v5758
    %v5760 = vcombine.low %v5752, %v5759
    %v5762 = vunpack.c.l.s4 1983009808
    %v5763 = vunpack.c.0.s8 %v5762
    %v5764 = vlaneseq
    %v5765 = vshrl.u32 %v5764, 7
    %v5766 = vsub.s32 %v5763, %v5765
    %v5767 = vrot.slane %v5250, %v5766
    %v5781 = vpack.c.bf16 %v5590, %v5573
    %v5782 = vpack.c.bf16 %v5624, %v5607
    %v5783 = vpack.c.bf16 %v5658, %v5641
    %v5784 = vpack.c.bf16 %v5692, %v5675
    %v5785 = vpack.c.bf16 %v5726, %v5709
    %v5786 = vpack.c.bf16 %v5760, %v5743
    %v5787 = vpack.c.bf16 %v5767, %v5767
    %v5795 = vcombine.low %v5334, %v5344
    %v5796 = vcombine.low %v5195, %v5196
    %v5797 = vcombine.low %v5197, %v5200
    %v5799 = vunpack.c.l.s4 1983009808
    %v5800 = vunpack.c.0.s8 %v5799
    %v5801 = vlaneseq
    %v5802 = vshrl.u32 %v5801, 7
    %v5803 = vsub.s32 %v5800, %v5802
    %v5804 = vrot.slane %v5796, %v5803
    %v5806 = vunpack.c.l.s4 1983009808
    %v5807 = vunpack.c.0.s8 %v5806
    %v5808 = vlaneseq
    %v5809 = vshrl.u32 %v5808, 7
    %v5810 = vsub.s32 %v5807, %v5809
    %v5811 = vrot.slane %v5797, %v5810
    %v5812 = vcombine.low %v5804, %v5811
    %v5813 = vcombine.low %v5368, %v5378
    %v5814 = vcombine.low %v5205, %v5206
    %v5816 = vunpack.c.l.s4 1983009808
    %v5817 = vunpack.c.0.s8 %v5816
    %v5818 = vlaneseq
    %v5819 = vshrl.u32 %v5818, 7
    %v5820 = vsub.s32 %v5817, %v5819
    %v5821 = vrot.slane %v5814, %v5820
    %v5822 = vcombine.low %v5821, %v5395
    %v5823 = vcombine.low %v5213, %v5214
    %v5825 = vunpack.c.l.s4 1983009808
    %v5826 = vunpack.c.0.s8 %v5825
    %v5827 = vlaneseq
    %v5828 = vshrl.u32 %v5827, 7
    %v5829 = vsub.s32 %v5826, %v5828
    %v5830 = vrot.slane %v5823, %v5829
    %v5831 = vcombine.low %v5402, %v5830
    %v5832 = vcombine.low %v5215, %v5218
    %v5834 = vunpack.c.l.s4 1983009808
    %v5835 = vunpack.c.0.s8 %v5834
    %v5836 = vlaneseq
    %v5837 = vshrl.u32 %v5836, 7
    %v5838 = vsub.s32 %v5835, %v5837
    %v5839 = vrot.slane %v5832, %v5838
    %v5840 = vcombine.low %v5839, %v5429
    %v5841 = vcombine.low %v5223, %v5224
    %v5843 = vunpack.c.l.s4 1983009808
    %v5844 = vunpack.c.0.s8 %v5843
    %v5845 = vlaneseq
    %v5846 = vshrl.u32 %v5845, 7
    %v5847 = vsub.s32 %v5844, %v5846
    %v5848 = vrot.slane %v5841, %v5847
    %v5849 = vcombine.low %v5436, %v5848
    %v5850 = vcombine.low %v5453, %v5463
    %v5851 = vcombine.low %v5231, %v5232
    %v5852 = vcombine.low %v5233, %v5236
    %v5854 = vunpack.c.l.s4 1983009808
    %v5855 = vunpack.c.0.s8 %v5854
    %v5856 = vlaneseq
    %v5857 = vshrl.u32 %v5856, 7
    %v5858 = vsub.s32 %v5855, %v5857
    %v5859 = vrot.slane %v5851, %v5858
    %v5861 = vunpack.c.l.s4 1983009808
    %v5862 = vunpack.c.0.s8 %v5861
    %v5863 = vlaneseq
    %v5864 = vshrl.u32 %v5863, 7
    %v5865 = vsub.s32 %v5862, %v5864
    %v5866 = vrot.slane %v5852, %v5865
    %v5867 = vcombine.low %v5859, %v5866
    %v5868 = vcombine.low %v5487, %v5497
    %v5869 = vcombine.low %v5241, %v5242
    %v5871 = vunpack.c.l.s4 1983009808
    %v5872 = vunpack.c.0.s8 %v5871
    %v5873 = vlaneseq
    %v5874 = vshrl.u32 %v5873, 7
    %v5875 = vsub.s32 %v5872, %v5874
    %v5876 = vrot.slane %v5869, %v5875
    %v5877 = vcombine.low %v5876, %v5514
    %v5878 = vcombine.low %v5249, %v5250
    %v5880 = vunpack.c.l.s4 1983009808
    %v5881 = vunpack.c.0.s8 %v5880
    %v5882 = vlaneseq
    %v5883 = vshrl.u32 %v5882, 7
    %v5884 = vsub.s32 %v5881, %v5883
    %v5885 = vrot.slane %v5878, %v5884
    %v5886 = vcombine.low %v5521, %v5885
    %v5888 = vunpack.c.l.s4 1983009808
    %v5889 = vunpack.c.0.s8 %v5888
    %v5890 = vlaneseq
    %v5891 = vshrl.u32 %v5890, 7
    %v5892 = vsub.s32 %v5889, %v5891
    %v5893 = vrot.slane %v5251, %v5892
    %v5907 = vpack.c.bf16 %v5812, %v5795
    %v5908 = vpack.c.bf16 %v5822, %v5813
    %v5909 = vpack.c.bf16 %v5840, %v5831
    %v5910 = vpack.c.bf16 %v5850, %v5849
    %v5911 = vpack.c.bf16 %v5868, %v5867
    %v5912 = vpack.c.bf16 %v5886, %v5877
    %v5913 = vpack.c.bf16 %v5893, %v5893
    %v5921 = vcombine.low %v5198, %v5199
    %v5923 = vunpack.c.l.s4 1983009808
    %v5924 = vunpack.c.0.s8 %v5923
    %v5925 = vlaneseq
    %v5926 = vshrl.u32 %v5925, 7
    %v5927 = vsub.s32 %v5924, %v5926
    %v5928 = vrot.slane %v5921, %v5927
    %v5929 = vcombine.low %v5928, %v5599
    %v5930 = vcombine.low %v5204, %v5207
    %v5932 = vunpack.c.l.s4 1983009808
    %v5933 = vunpack.c.0.s8 %v5932
    %v5934 = vlaneseq
    %v5935 = vshrl.u32 %v5934, 7
    %v5936 = vsub.s32 %v5933, %v5935
    %v5937 = vrot.slane %v5930, %v5936
    %v5938 = vcombine.low %v5606, %v5937
    %v5939 = vcombine.low %v5623, %v5633
    %v5940 = vcombine.low %v5216, %v5217
    %v5942 = vunpack.c.l.s4 1983009808
    %v5943 = vunpack.c.0.s8 %v5942
    %v5944 = vlaneseq
    %v5945 = vshrl.u32 %v5944, 7
    %v5946 = vsub.s32 %v5943, %v5945
    %v5947 = vrot.slane %v5940, %v5946
    %v5948 = vcombine.low %v5640, %v5947
    %v5949 = vcombine.low %v5657, %v5667
    %v5950 = vcombine.low %v5222, %v5225
    %v5952 = vunpack.c.l.s4 1983009808
    %v5953 = vunpack.c.0.s8 %v5952
    %v5954 = vlaneseq
    %v5955 = vshrl.u32 %v5954, 7
    %v5956 = vsub.s32 %v5953, %v5955
    %v5957 = vrot.slane %v5950, %v5956
    %v5958 = vcombine.low %v5957, %v5684
    %v5959 = vcombine.low %v5691, %v5701
    %v5960 = vcombine.low %v5234, %v5235
    %v5962 = vunpack.c.l.s4 1983009808
    %v5963 = vunpack.c.0.s8 %v5962
    %v5964 = vlaneseq
    %v5965 = vshrl.u32 %v5964, 7
    %v5966 = vsub.s32 %v5963, %v5965
    %v5967 = vrot.slane %v5960, %v5966
    %v5968 = vcombine.low %v5967, %v5718
    %v5969 = vcombine.low %v5240, %v5243
    %v5971 = vunpack.c.l.s4 1983009808
    %v5972 = vunpack.c.0.s8 %v5971
    %v5973 = vlaneseq
    %v5974 = vshrl.u32 %v5973, 7
    %v5975 = vsub.s32 %v5972, %v5974
    %v5976 = vrot.slane %v5969, %v5975
    %v5977 = vcombine.low %v5725, %v5976
    %v5978 = vcombine.low %v5742, %v5752
    %v5979 = vcombine.low %v5252, %v5253
    %v5981 = vunpack.c.l.s4 1983009808
    %v5982 = vunpack.c.0.s8 %v5981
    %v5983 = vlaneseq
    %v5984 = vshrl.u32 %v5983, 7
    %v5985 = vsub.s32 %v5982, %v5984
    %v5986 = vrot.slane %v5979, %v5985
    %v5987 = vcombine.low %v5759, %v5986
    %v5988 = vcombine.low %v5254, %v5255
    %v5989 = vcombine.low %v5256, %v5257
    %v5991 = vunpack.c.l.s4 1983009808
    %v5992 = vunpack.c.0.s8 %v5991
    %v5993 = vlaneseq
    %v5994 = vshrl.u32 %v5993, 7
    %v5995 = vsub.s32 %v5992, %v5994
    %v5996 = vrot.slane %v5988, %v5995
    %v5998 = vunpack.c.l.s4 1983009808
    %v5999 = vunpack.c.0.s8 %v5998
    %v6000 = vlaneseq
    %v6001 = vshrl.u32 %v6000, 7
    %v6002 = vsub.s32 %v5999, %v6001
    %v6003 = vrot.slane %v5989, %v6002
    %v6004 = vcombine.low %v5996, %v6003
    %v6006 = vunpack.c.l.s4 1983009808
    %v6007 = vunpack.c.0.s8 %v6006
    %v6008 = vlaneseq
    %v6009 = vshrl.u32 %v6008, 7
    %v6010 = vsub.s32 %v6007, %v6009
    %v6011 = vrot.slane %v5258, %v6010
    %v6025 = vpack.c.bf16 %v5938, %v5929
    %v6026 = vpack.c.bf16 %v5948, %v5939
    %v6027 = vpack.c.bf16 %v5958, %v5949
    %v6028 = vpack.c.bf16 %v5968, %v5959
    %v6029 = vpack.c.bf16 %v5978, %v5977
    %v6030 = vpack.c.bf16 %v6004, %v5987
    %v6031 = vpack.c.bf16 %v6011, %v6011
    %v6033 = vcombine.low %v5205, %v5208
    %v6035 = vunpack.c.l.s4 1983009808
    %v6036 = vunpack.c.0.s8 %v6035
    %v6037 = vlaneseq
    %v6038 = vshrl.u32 %v6037, 7
    %v6039 = vsub.s32 %v6036, %v6038
    %v6040 = vrot.slane %v6033, %v6039
    %v6041 = vcombine.low %v5378, %v6040
    %v6042 = vcombine.low %v5830, %v5419
    %v6043 = vcombine.low %v5223, %v5226
    %v6045 = vunpack.c.l.s4 1983009808
    %v6046 = vunpack.c.0.s8 %v6045
    %v6047 = vlaneseq
    %v6048 = vshrl.u32 %v6047, 7
    %v6049 = vsub.s32 %v6046, %v6048
    %v6050 = vrot.slane %v6043, %v6049
    %v6051 = vcombine.low %v6050, %v5453
    %v6052 = vcombine.low %v5463, %v5859
    %v6053 = vcombine.low %v5241, %v5244
    %v6055 = vunpack.c.l.s4 1983009808
    %v6056 = vunpack.c.0.s8 %v6055
    %v6057 = vlaneseq
    %v6058 = vshrl.u32 %v6057, 7
    %v6059 = vsub.s32 %v6056, %v6058
    %v6060 = vrot.slane %v6053, %v6059
    %v6061 = vcombine.low %v5497, %v6060
    %v6062 = vcombine.low %v5253, %v5254
    %v6064 = vunpack.c.l.s4 1983009808
    %v6065 = vunpack.c.0.s8 %v6064
    %v6066 = vlaneseq
    %v6067 = vshrl.u32 %v6066, 7
    %v6068 = vsub.s32 %v6065, %v6067
    %v6069 = vrot.slane %v6062, %v6068
    %v6070 = vcombine.low %v5885, %v6069
    %v6071 = vcombine.low %v5255, %v5256
    %v6072 = vcombine.low %v5257, %v5258
    %v6074 = vunpack.c.l.s4 1983009808
    %v6075 = vunpack.c.0.s8 %v6074
    %v6076 = vlaneseq
    %v6077 = vshrl.u32 %v6076, 7
    %v6078 = vsub.s32 %v6075, %v6077
    %v6079 = vrot.slane %v6071, %v6078
    %v6081 = vunpack.c.l.s4 1983009808
    %v6082 = vunpack.c.0.s8 %v6081
    %v6083 = vlaneseq
    %v6084 = vshrl.u32 %v6083, 7
    %v6085 = vsub.s32 %v6082, %v6084
    %v6086 = vrot.slane %v6072, %v6085
    %v6087 = vcombine.low %v6079, %v6086
    %v6089 = vunpack.c.l.s4 1983009808
    %v6090 = vunpack.c.0.s8 %v6089
    %v6091 = vlaneseq
    %v6092 = vshrl.u32 %v6091, 7
    %v6093 = vsub.s32 %v6090, %v6092
    %v6094 = vrot.slane %v5259, %v6093
    %v6103 = vpack.c.bf16 %v6041, %v5369
    %v6104 = vpack.c.bf16 %v6042, %v5403
    %v6105 = vpack.c.bf16 %v6051, %v5437
    %v6106 = vpack.c.bf16 %v5488, %v6052
    %v6107 = vpack.c.bf16 %v5522, %v6061
    %v6108 = vpack.c.bf16 %v6087, %v6070
    %v6109 = vpack.c.bf16 %v6094, %v6094
    %v6111 = vcombine.low %v5206, %v5209
    %v6113 = vunpack.c.l.s4 1983009808
    %v6114 = vunpack.c.0.s8 %v6113
    %v6115 = vlaneseq
    %v6116 = vshrl.u32 %v6115, 7
    %v6117 = vsub.s32 %v6114, %v6116
    %v6118 = vrot.slane %v6111, %v6117
    %v6119 = vcombine.low %v5616, %v6118
    %v6120 = vcombine.low %v5214, %v5215
    %v6122 = vunpack.c.l.s4 1983009808
    %v6123 = vunpack.c.0.s8 %v6122
    %v6124 = vlaneseq
    %v6125 = vshrl.u32 %v6124, 7
    %v6126 = vsub.s32 %v6123, %v6125
    %v6127 = vrot.slane %v6120, %v6126
    %v6128 = vcombine.low %v6127, %v5657
    %v6129 = vcombine.low %v5224, %v5227
    %v6131 = vunpack.c.l.s4 1983009808
    %v6132 = vunpack.c.0.s8 %v6131
    %v6133 = vlaneseq
    %v6134 = vshrl.u32 %v6133, 7
    %v6135 = vsub.s32 %v6132, %v6134
    %v6136 = vrot.slane %v6129, %v6135
    %v6137 = vcombine.low %v6136, %v5691
    %v6138 = vcombine.low %v5232, %v5233
    %v6140 = vunpack.c.l.s4 1983009808
    %v6141 = vunpack.c.0.s8 %v6140
    %v6142 = vlaneseq
    %v6143 = vshrl.u32 %v6142, 7
    %v6144 = vsub.s32 %v6141, %v6143
    %v6145 = vrot.slane %v6138, %v6144
    %v6146 = vcombine.low %v5701, %v6145
    %v6147 = vcombine.low %v5242, %v5245
    %v6149 = vunpack.c.l.s4 1983009808
    %v6150 = vunpack.c.0.s8 %v6149
    %v6151 = vlaneseq
    %v6152 = vshrl.u32 %v6151, 7
    %v6153 = vsub.s32 %v6150, %v6152
    %v6154 = vrot.slane %v6147, %v6153
    %v6155 = vcombine.low %v5735, %v6154
    %v6156 = vcombine.low %v5250, %v5251
    %v6158 = vunpack.c.l.s4 1983009808
    %v6159 = vunpack.c.0.s8 %v6158
    %v6160 = vlaneseq
    %v6161 = vshrl.u32 %v6160, 7
    %v6162 = vsub.s32 %v6159, %v6161
    %v6163 = vrot.slane %v6156, %v6162
    %v6164 = vcombine.low %v6163, %v5996
    %v6165 = vcombine.low %v5258, %v5259
    %v6167 = vunpack.c.l.s4 1983009808
    %v6168 = vunpack.c.0.s8 %v6167
    %v6169 = vlaneseq
    %v6170 = vshrl.u32 %v6169, 7
    %v6171 = vsub.s32 %v6168, %v6170
    %v6172 = vrot.slane %v6165, %v6171
    %v6173 = vcombine.low %v6003, %v6172
    %v6175 = vunpack.c.l.s4 1983009808
    %v6176 = vunpack.c.0.s8 %v6175
    %v6177 = vlaneseq
    %v6178 = vshrl.u32 %v6177, 7
    %v6179 = vsub.s32 %v6176, %v6178
    %v6180 = vrot.slane %v5260, %v6179
    %v6189 = vpack.c.bf16 %v6119, %v5607
    %v6190 = vpack.c.bf16 %v6128, %v5641
    %v6191 = vpack.c.bf16 %v6137, %v5675
    %v6192 = vpack.c.bf16 %v5726, %v6146
    %v6193 = vpack.c.bf16 %v5760, %v6155
    %v6194 = vpack.c.bf16 %v6173, %v6164
    %v6195 = vpack.c.bf16 %v6180, %v6180
    %v6203 = vcombine.low %v5385, %v5395
    %v6204 = vcombine.low %v5402, %v5412
    %v6205 = vcombine.low %v5419, %v5429
    %v6206 = vcombine.low %v5436, %v5446
    %v6207 = vcombine.low %v5470, %v5480
    %v6208 = vcombine.low %v5504, %v5514
    %v6209 = vcombine.low %v5249, %v5252
    %v6211 = vunpack.c.l.s4 1983009808
    %v6212 = vunpack.c.0.s8 %v6211
    %v6213 = vlaneseq
    %v6214 = vshrl.u32 %v6213, 7
    %v6215 = vsub.s32 %v6212, %v6214
    %v6216 = vrot.slane %v6209, %v6215
    %v6217 = vcombine.low %v5521, %v6216
    %v6218 = vcombine.low %v6069, %v6079
    %v6219 = vcombine.low %v5261, %v5262
    %v6221 = vunpack.c.l.s4 1983009808
    %v6222 = vunpack.c.0.s8 %v6221
    %v6223 = vlaneseq
    %v6224 = vshrl.u32 %v6223, 7
    %v6225 = vsub.s32 %v6222, %v6224
    %v6226 = vrot.slane %v6219, %v6225
    %v6227 = vcombine.low %v6086, %v6226
    %v6228 = vcombine.low %v5263, %v5264
    %v6229 = vcombine.low %v5265, %v5266
    %v6231 = vunpack.c.l.s4 1983009808
    %v6232 = vunpack.c.0.s8 %v6231
    %v6233 = vlaneseq
    %v6234 = vshrl.u32 %v6233, 7
    %v6235 = vsub.s32 %v6232, %v6234
    %v6236 = vrot.slane %v6228, %v6235
    %v6238 = vunpack.c.l.s4 1983009808
    %v6239 = vunpack.c.0.s8 %v6238
    %v6240 = vlaneseq
    %v6241 = vshrl.u32 %v6240, 7
    %v6242 = vsub.s32 %v6239, %v6241
    %v6243 = vrot.slane %v6229, %v6242
    %v6244 = vcombine.low %v6236, %v6243
    %v6246 = vunpack.c.l.s4 1983009808
    %v6247 = vunpack.c.0.s8 %v6246
    %v6248 = vlaneseq
    %v6249 = vshrl.u32 %v6248, 7
    %v6250 = vsub.s32 %v6247, %v6249
    %v6251 = vrot.slane %v5267, %v6250
    %v6263 = vpack.c.bf16 %v6204, %v6203
    %v6264 = vpack.c.bf16 %v6206, %v6205
    %v6265 = vpack.c.bf16 %v6207, %v5850
    %v6266 = vpack.c.bf16 %v6208, %v5868
    %v6267 = vpack.c.bf16 %v6218, %v6217
    %v6268 = vpack.c.bf16 %v6244, %v6227
    %v6269 = vpack.c.bf16 %v6251, %v6251
    %v6271 = vcombine.low %v5640, %v5650
    %v6272 = vcombine.low %v5674, %v5684
    %v6273 = vcombine.low %v5708, %v5718
    %v6274 = vcombine.low %v5725, %v5735
    %v6275 = vcombine.low %v5250, %v5253
    %v6277 = vunpack.c.l.s4 1983009808
    %v6278 = vunpack.c.0.s8 %v6277
    %v6279 = vlaneseq
    %v6280 = vshrl.u32 %v6279, 7
    %v6281 = vsub.s32 %v6278, %v6280
    %v6282 = vrot.slane %v6275, %v6281
    %v6283 = vcombine.low %v5759, %v6282
    %v6284 = vcombine.low %v5262, %v5263
    %v6286 = vunpack.c.l.s4 1983009808
    %v6287 = vunpack.c.0.s8 %v6286
    %v6288 = vlaneseq
    %v6289 = vshrl.u32 %v6288, 7
    %v6290 = vsub.s32 %v6287, %v6289
    %v6291 = vrot.slane %v6284, %v6290
    %v6292 = vcombine.low %v6172, %v6291
    %v6293 = vcombine.low %v5264, %v5265
    %v6294 = vcombine.low %v5266, %v5267
    %v6296 = vunpack.c.l.s4 1983009808
    %v6297 = vunpack.c.0.s8 %v6296
    %v6298 = vlaneseq
    %v6299 = vshrl.u32 %v6298, 7
    %v6300 = vsub.s32 %v6297, %v6299
    %v6301 = vrot.slane %v6293, %v6300
    %v6303 = vunpack.c.l.s4 1983009808
    %v6304 = vunpack.c.0.s8 %v6303
    %v6305 = vlaneseq
    %v6306 = vshrl.u32 %v6305, 7
    %v6307 = vsub.s32 %v6304, %v6306
    %v6308 = vrot.slane %v6294, %v6307
    %v6309 = vcombine.low %v6301, %v6308
    %v6311 = vunpack.c.l.s4 1983009808
    %v6312 = vunpack.c.0.s8 %v6311
    %v6313 = vlaneseq
    %v6314 = vshrl.u32 %v6313, 7
    %v6315 = vsub.s32 %v6312, %v6314
    %v6316 = vrot.slane %v5268, %v6315
    %v6325 = vpack.c.bf16 %v6271, %v5939
    %v6326 = vpack.c.bf16 %v6272, %v5949
    %v6327 = vpack.c.bf16 %v6273, %v5959
    %v6328 = vpack.c.bf16 %v5978, %v6274
    %v6329 = vpack.c.bf16 %v6004, %v6283
    %v6330 = vpack.c.bf16 %v6309, %v6292
    %v6331 = vpack.c.bf16 %v6316, %v6316
    %v6333 = vcombine.low %v5830, %v5839
    %v6334 = vcombine.low %v5848, %v5453
    %v6335 = vcombine.low %v5866, %v5487
    %v6336 = vcombine.low %v5497, %v5876
    %v6337 = vcombine.low %v5251, %v5254
    %v6339 = vunpack.c.l.s4 1983009808
    %v6340 = vunpack.c.0.s8 %v6339
    %v6341 = vlaneseq
    %v6342 = vshrl.u32 %v6341, 7
    %v6343 = vsub.s32 %v6340, %v6342
    %v6344 = vrot.slane %v6337, %v6343
    %v6345 = vcombine.low %v5885, %v6344
    %v6346 = vcombine.low %v5259, %v5260
    %v6348 = vunpack.c.l.s4 1983009808
    %v6349 = vunpack.c.0.s8 %v6348
    %v6350 = vlaneseq
    %v6351 = vshrl.u32 %v6350, 7
    %v6352 = vsub.s32 %v6349, %v6351
    %v6353 = vrot.slane %v6346, %v6352
    %v6354 = vcombine.low %v6353, %v6236
    %v6355 = vcombine.low %v5267, %v5268
    %v6357 = vunpack.c.l.s4 1983009808
    %v6358 = vunpack.c.0.s8 %v6357
    %v6359 = vlaneseq
    %v6360 = vshrl.u32 %v6359, 7
    %v6361 = vsub.s32 %v6358, %v6360
    %v6362 = vrot.slane %v6355, %v6361
    %v6363 = vcombine.low %v6243, %v6362
    %v6365 = vunpack.c.l.s4 1983009808
    %v6366 = vunpack.c.0.s8 %v6365
    %v6367 = vlaneseq
    %v6368 = vshrl.u32 %v6367, 7
    %v6369 = vsub.s32 %v6366, %v6368
    %v6370 = vrot.slane %v5269, %v6369
    %v6379 = vpack.c.bf16 %v6333, %v5403
    %v6380 = vpack.c.bf16 %v6334, %v5437
    %v6381 = vpack.c.bf16 %v6335, %v6052
    %v6382 = vpack.c.bf16 %v5522, %v6336
    %v6383 = vpack.c.bf16 %v6087, %v6345
    %v6384 = vpack.c.bf16 %v6363, %v6354
    %v6385 = vpack.c.bf16 %v6370, %v6370
    %v6386 = vld [vmem:[#allocation11] sm:$0xff]
    %v6387 = vld [vmem:[#allocation11 + $0x8] sm:$0xff]
    %v6388 = vld [vmem:[#allocation11 + $0x10] sm:$0xff]
    %v6389 = vld [vmem:[#allocation11 + $0x18] sm:$0xff]
    %v6390 = vld [vmem:[#allocation11 + $0x20] sm:$0xff]
    %v6391 = vld [vmem:[#allocation11 + $0x28] sm:$0xff]
    %v6392 = vld [vmem:[#allocation11 + $0x30] sm:$0xff]
    %v6393 = vld [vmem:[#allocation11 + $0x38] sm:$0xff]
    %v6394 = vld [vmem:[#allocation11 + $0x40] sm:$0xff]
    %v6395 = vld [vmem:[#allocation11 + $0x48] sm:$0xff]
    %v6396 = vld [vmem:[#allocation11 + $0x50] sm:$0xff]
    %v6397 = vld [vmem:[#allocation11 + $0x58] sm:$0xff]
    %v6398 = vld [vmem:[#allocation11 + $0x60] sm:$0xff]
    %v6399 = vld [vmem:[#allocation11 + $0x68] sm:$0xff]
    %v6400 = vld [vmem:[#allocation11 + $0x70] sm:$0xff]
    %v6401 = vld [vmem:[#allocation11 + $0x78] sm:$0xff]
    %v6402 = vld [vmem:[#allocation11 + $0x80] sm:$0xff]
    %v6403 = vld [vmem:[#allocation11 + $0x88] sm:$0xff]
    %v6404 = vld [vmem:[#allocation11 + $0x90] sm:$0xff]
    %v6405 = vld [vmem:[#allocation11 + $0x98] sm:$0xff]
    %v6406 = vld [vmem:[#allocation11 + $0xa0] sm:$0xff]
    %v6407 = vld [vmem:[#allocation11 + $0xa8] sm:$0xff]
    %v6408 = vld [vmem:[#allocation11 + $0xb0] sm:$0xff]
    %v6409 = vld [vmem:[#allocation11 + $0xb8] sm:$0xff]
    %v6410 = vld [vmem:[#allocation11 + $0xc0] sm:$0xff]
    %v6411 = vld [vmem:[#allocation11 + $0xc8] sm:$0xff]
    %v6412 = vld [vmem:[#allocation11 + $0xd0] sm:$0xff]
    %v6413 = vld [vmem:[#allocation11 + $0xd8] sm:$0xff]
    %v6414 = vld [vmem:[#allocation11 + $0xe0] sm:$0xff]
    %v6415 = vld [vmem:[#allocation11 + $0xe8] sm:$0xff]
    %v6416 = vld [vmem:[#allocation11 + $0xf0] sm:$0xff]
    %v6417 = vld [vmem:[#allocation11 + $0xf8] sm:$0xff]
    %v6418 = vld [vmem:[#allocation11 + $0x100] sm:$0xff]
    %v6419 = vld [vmem:[#allocation11 + $0x108] sm:$0xff]
    %v6420 = vld [vmem:[#allocation11 + $0x110] sm:$0xff]
    %v6421 = vld [vmem:[#allocation11 + $0x118] sm:$0xff]
    %v6422 = vld [vmem:[#allocation11 + $0x120] sm:$0xff]
    %v6423 = vld [vmem:[#allocation11 + $0x128] sm:$0xff]
    %v6424 = vld [vmem:[#allocation11 + $0x130] sm:$0xff]
    %v6425 = vld [vmem:[#allocation11 + $0x138] sm:$0xff]
    %v6426 = vld [vmem:[#allocation11 + $0x140] sm:$0xff]
    %v6427 = vld [vmem:[#allocation11 + $0x148] sm:$0xff]
    %v6428 = vld [vmem:[#allocation11 + $0x150] sm:$0xff]
    %v6429 = vld [vmem:[#allocation11 + $0x158] sm:$0xff]
    %v6430 = vld [vmem:[#allocation11 + $0x160] sm:$0xff]
    %v6431 = vld [vmem:[#allocation11 + $0x168] sm:$0xff]
    %v6432 = vld [vmem:[#allocation11 + $0x170] sm:$0xff]
    %v6433 = vld [vmem:[#allocation11 + $0x178] sm:$0xff]
    %v6434 = vld [vmem:[#allocation11 + $0x180] sm:$0xff]
    %v6435 = vld [vmem:[#allocation11 + $0x188] sm:$0xff]
    %v6436 = vld [vmem:[#allocation11 + $0x190] sm:$0xff]
    %v6437 = vld [vmem:[#allocation11 + $0x198] sm:$0xff]
    %v6438 = vld [vmem:[#allocation11 + $0x1a0] sm:$0xff]
    %v6439 = vld [vmem:[#allocation11 + $0x1a8] sm:$0xff]
    %v6440 = vld [vmem:[#allocation11 + $0x1b0] sm:$0xff]
    %v6441 = vld [vmem:[#allocation11 + $0x1b8] sm:$0xff]
    %v6442 = vld [vmem:[#allocation11 + $0x1c0] sm:$0xff]
    %v6443 = vld [vmem:[#allocation11 + $0x1c8] sm:$0xff]
    %v6444 = vld [vmem:[#allocation11 + $0x1d0] sm:$0xff]
    %v6445 = vld [vmem:[#allocation11 + $0x1d8] sm:$0xff]
    %v6446 = vld [vmem:[#allocation11 + $0x1e0] sm:$0xff]
    %v6447 = vld [vmem:[#allocation11 + $0x1e8] sm:$0xff]
    %v6448 = vld [vmem:[#allocation11 + $0x1f0] sm:$0xff]
    %v6449 = vld [vmem:[#allocation11 + $0x1f8] sm:$0xff]
    %v6450 = vld [vmem:[#allocation11 + $0x200] sm:$0xff]
    %v6451 = vld [vmem:[#allocation11 + $0x208] sm:$0xff]
    %v6452 = vld [vmem:[#allocation11 + $0x210] sm:$0xff]
    %v6453 = vld [vmem:[#allocation11 + $0x218] sm:$0xff]
    %v6454 = vld [vmem:[#allocation11 + $0x220] sm:$0xff]
    %v6455 = vld [vmem:[#allocation11 + $0x228] sm:$0xff]
    %v6456 = vld [vmem:[#allocation11 + $0x230] sm:$0xff]
    %v6457 = vld [vmem:[#allocation11 + $0x238] sm:$0xff]
    %v6458 = vld [vmem:[#allocation11 + $0x240] sm:$0xff]
    %v6459 = vld [vmem:[#allocation11 + $0x248] sm:$0xff]
    %v6460 = vld [vmem:[#allocation11 + $0x250] sm:$0xff]
    %v6461 = vld [vmem:[#allocation11 + $0x258] sm:$0xff]
    %v6462 = vld [vmem:[#allocation11 + $0x260] sm:$0xff]
    %v6463 = vld [vmem:[#allocation11 + $0x268] sm:$0xff]
    %v6464 = vld [vmem:[#allocation11 + $0x270] sm:$0xff]
    %v6465 = vld [vmem:[#allocation11 + $0x278] sm:$0xff]
    %v6466 = vld [vmem:[#allocation11 + $0x280] sm:$0xff]
    %v6467 = vld [vmem:[#allocation11 + $0x288] sm:$0xff]
    %v6468 = vld [vmem:[#allocation11 + $0x290] sm:$0xff]
    %v6469 = vld [vmem:[#allocation11 + $0x298] sm:$0xff]
    %v6470 = vld [vmem:[#allocation11 + $0x2a0] sm:$0xff]
    %v6471 = vld [vmem:[#allocation11 + $0x2a8] sm:$0xff]
    %v6472 = vld [vmem:[#allocation11 + $0x2b0] sm:$0xff]
    %v6473 = vld [vmem:[#allocation11 + $0x2b8] sm:$0xff]
    %v6474 = vld [vmem:[#allocation11 + $0x2c0] sm:$0xff]
    %v6475 = vld [vmem:[#allocation11 + $0x2c8] sm:$0xff]
    %v6476 = vld [vmem:[#allocation11 + $0x2d0] sm:$0xff]
    %v6477 = vld [vmem:[#allocation11 + $0x2d8] sm:$0xff]
    %v6478 = vld [vmem:[#allocation11 + $0x2e0] sm:$0xff]
    %v6479 = vld [vmem:[#allocation11 + $0x2e8] sm:$0xff]
    %v6480 = vld [vmem:[#allocation11 + $0x2f0] sm:$0xff]
    %v6481 = vld [vmem:[#allocation11 + $0x2f8] sm:$0xff]
    %v6482 = vld [vmem:[#allocation11 + $0x300] sm:$0xff]
    %v6483 = vld [vmem:[#allocation11 + $0x308] sm:$0xff]
    %v6484 = vld [vmem:[#allocation11 + $0x310] sm:$0xff]
    %v6485 = vld [vmem:[#allocation11 + $0x318] sm:$0xff]
    %v6486 = vld [vmem:[#allocation11 + $0x320] sm:$0xff]
    %v6487 = vld [vmem:[#allocation11 + $0x328] sm:$0xff]
    %v6488 = vld [vmem:[#allocation11 + $0x330] sm:$0xff]
    %v6489 = vld [vmem:[#allocation11 + $0x338] sm:$0xff]
    %v6490 = vld [vmem:[#allocation11 + $0x340] sm:$0xff]
    %v6491 = vld [vmem:[#allocation11 + $0x348] sm:$0xff]
    %v6492 = vld [vmem:[#allocation11 + $0x350] sm:$0xff]
    %v6493 = vld [vmem:[#allocation11 + $0x358] sm:$0xff]
    %v6494 = vld [vmem:[#allocation11 + $0x360] sm:$0xff]
    %v6495 = vld [vmem:[#allocation11 + $0x368] sm:$0xff]
    %v6496 = vld [vmem:[#allocation11 + $0x370] sm:$0xff]
    %v6497 = vld [vmem:[#allocation11 + $0x378] sm:$0xff]
    %v6498 = vld [vmem:[#allocation11 + $0x380] sm:$0xff]
    %v6499 = vld [vmem:[#allocation11 + $0x388] sm:$0xff]
    %v6500 = vld [vmem:[#allocation11 + $0x390] sm:$0xff]
    %v6501 = vld [vmem:[#allocation11 + $0x398] sm:$0xff]
    %v6502 = vld [vmem:[#allocation11 + $0x3a0] sm:$0xff]
    %v6503 = vld [vmem:[#allocation11 + $0x3a8] sm:$0xff]
    %v6504 = vld [vmem:[#allocation11 + $0x3b0] sm:$0xff]
    %v6505 = vld [vmem:[#allocation11 + $0x3b8] sm:$0xff]
    %v6506 = vld [vmem:[#allocation11 + $0x3c0] sm:$0xff]
    %v6507 = vld [vmem:[#allocation11 + $0x3c8] sm:$0xff]
    %v6508 = vld [vmem:[#allocation11 + $0x3d0] sm:$0xff]
    %v6509 = vld [vmem:[#allocation11 + $0x3d8] sm:$0xff]
    %v6510 = vld [vmem:[#allocation11 + $0x3e0] sm:$0xff]
    %v6511 = vld [vmem:[#allocation11 + $0x3e8] sm:$0xff]
    %v6512 = vld [vmem:[#allocation11 + $0x3f0] sm:$0xff]
    %v6513 = vld [vmem:[#allocation11 + $0x3f8] sm:$0xff]
    %v6514 = vld [vmem:[#allocation11 + $0x400] sm:$0xff]
    %v6515 = vld [vmem:[#allocation11 + $0x408] sm:$0xff]
    %v6516 = vld [vmem:[#allocation11 + $0x410] sm:$0xff]
    %v6517 = vld [vmem:[#allocation11 + $0x418] sm:$0xff]
    %v6518 = vld [vmem:[#allocation11 + $0x420] sm:$0xff]
    %v6519 = vld [vmem:[#allocation11 + $0x428] sm:$0xff]
    %v6520 = vld [vmem:[#allocation11 + $0x430] sm:$0xff]
    %v6521 = vld [vmem:[#allocation11 + $0x438] sm:$0xff]
    %v6522 = vld [vmem:[#allocation11 + $0x440] sm:$0xff]
    %v6523 = vld [vmem:[#allocation11 + $0x448] sm:$0xff]
    %v6524 = vld [vmem:[#allocation11 + $0x450] sm:$0xff]
    %v6525 = vld [vmem:[#allocation11 + $0x458] sm:$0xff]
    %v6526 = vld [vmem:[#allocation11 + $0x460] sm:$0xff]
    %v6527 = vld [vmem:[#allocation11 + $0x468] sm:$0xff]
    %v6528 = vld [vmem:[#allocation11 + $0x470] sm:$0xff]
    %v6529 = vld [vmem:[#allocation11 + $0x478] sm:$0xff]
    %v6674 = vunpack.c.l.b16 %v6386
    %v6675 = vunpack.c.h.b16 %v6386
    %v6676 = vunpack.c.l.b16 %v6387
    %v6677 = vunpack.c.h.b16 %v6387
    %v6678 = vunpack.c.l.b16 %v6388
    %v6679 = vunpack.c.h.b16 %v6388
    %v6680 = vunpack.c.l.b16 %v6389
    %v6681 = vunpack.c.h.b16 %v6389
    %v6682 = vunpack.c.l.b16 %v6390
    %v6683 = vunpack.c.h.b16 %v6390
    %v6684 = vunpack.c.l.b16 %v6391
    %v6685 = vunpack.c.h.b16 %v6391
    %v6686 = vunpack.c.l.b16 %v6392
    %v6687 = vunpack.c.h.b16 %v6392
    %v6688 = vunpack.c.l.b16 %v6393
    %v6689 = vunpack.c.h.b16 %v6393
    %v6690 = vunpack.c.l.b16 %v6394
    %v6691 = vunpack.c.h.b16 %v6394
    %v6692 = vunpack.c.l.b16 %v6395
    %v6693 = vunpack.c.h.b16 %v6395
    %v6694 = vunpack.c.l.b16 %v6396
    %v6695 = vunpack.c.h.b16 %v6396
    %v6696 = vunpack.c.l.b16 %v6397
    %v6697 = vunpack.c.h.b16 %v6397
    %v6698 = vunpack.c.l.b16 %v6398
    %v6699 = vunpack.c.h.b16 %v6398
    %v6700 = vunpack.c.l.b16 %v6399
    %v6701 = vunpack.c.h.b16 %v6399
    %v6702 = vunpack.c.l.b16 %v6400
    %v6703 = vunpack.c.h.b16 %v6400
    %v6704 = vunpack.c.l.b16 %v6401
    %v6705 = vunpack.c.h.b16 %v6401
    %v6706 = vunpack.c.l.b16 %v6402
    %v6707 = vunpack.c.h.b16 %v6402
    %v6708 = vunpack.c.l.b16 %v6403
    %v6709 = vunpack.c.h.b16 %v6403
    %v6710 = vunpack.c.l.b16 %v6404
    %v6711 = vunpack.c.h.b16 %v6404
    %v6712 = vunpack.c.l.b16 %v6405
    %v6713 = vunpack.c.h.b16 %v6405
    %v6714 = vunpack.c.l.b16 %v6406
    %v6715 = vunpack.c.h.b16 %v6406
    %v6716 = vunpack.c.l.b16 %v6407
    %v6717 = vunpack.c.h.b16 %v6407
    %v6718 = vunpack.c.l.b16 %v6408
    %v6719 = vunpack.c.h.b16 %v6408
    %v6720 = vunpack.c.l.b16 %v6409
    %v6721 = vunpack.c.h.b16 %v6409
    %v6722 = vunpack.c.l.b16 %v6410
    %v6723 = vunpack.c.h.b16 %v6410
    %v6724 = vunpack.c.l.b16 %v6411
    %v6725 = vunpack.c.h.b16 %v6411
    %v6726 = vunpack.c.l.b16 %v6412
    %v6727 = vunpack.c.h.b16 %v6412
    %v6728 = vunpack.c.l.b16 %v6413
    %v6729 = vunpack.c.h.b16 %v6413
    %v6730 = vunpack.c.l.b16 %v6414
    %v6731 = vunpack.c.h.b16 %v6414
    %v6732 = vunpack.c.l.b16 %v6415
    %v6733 = vunpack.c.h.b16 %v6415
    %v6734 = vunpack.c.l.b16 %v6416
    %v6735 = vunpack.c.h.b16 %v6416
    %v6736 = vunpack.c.l.b16 %v6417
    %v6737 = vunpack.c.h.b16 %v6417
    %v6738 = vunpack.c.l.b16 %v6418
    %v6739 = vunpack.c.h.b16 %v6418
    %v6740 = vunpack.c.l.b16 %v6419
    %v6741 = vunpack.c.h.b16 %v6419
    %v6742 = vunpack.c.l.b16 %v6420
    %v6743 = vunpack.c.h.b16 %v6420
    %v6744 = vunpack.c.l.b16 %v6421
    %v6745 = vunpack.c.h.b16 %v6421
    %v6746 = vunpack.c.l.b16 %v6422
    %v6747 = vunpack.c.h.b16 %v6422
    %v6748 = vunpack.c.l.b16 %v6423
    %v6749 = vunpack.c.h.b16 %v6423
    %v6750 = vunpack.c.l.b16 %v6424
    %v6751 = vunpack.c.h.b16 %v6424
    %v6752 = vunpack.c.l.b16 %v6425
    %v6753 = vunpack.c.h.b16 %v6425
    %v6754 = vunpack.c.l.b16 %v6426
    %v6755 = vunpack.c.h.b16 %v6426
    %v6756 = vunpack.c.l.b16 %v6427
    %v6757 = vunpack.c.h.b16 %v6427
    %v6758 = vunpack.c.l.b16 %v6428
    %v6759 = vunpack.c.h.b16 %v6428
    %v6760 = vunpack.c.l.b16 %v6429
    %v6761 = vunpack.c.h.b16 %v6429
    %v6762 = vunpack.c.l.b16 %v6430
    %v6763 = vunpack.c.h.b16 %v6430
    %v6764 = vunpack.c.l.b16 %v6431
    %v6765 = vunpack.c.h.b16 %v6431
    %v6766 = vunpack.c.l.b16 %v6432
    %v6767 = vunpack.c.h.b16 %v6432
    %v6768 = vunpack.c.l.b16 %v6433
    %v6769 = vunpack.c.h.b16 %v6433
    %v6770 = vunpack.c.l.b16 %v6434
    %v6771 = vunpack.c.h.b16 %v6434
    %v6772 = vunpack.c.l.b16 %v6435
    %v6773 = vunpack.c.h.b16 %v6435
    %v6774 = vunpack.c.l.b16 %v6436
    %v6775 = vunpack.c.h.b16 %v6436
    %v6776 = vunpack.c.l.b16 %v6437
    %v6777 = vunpack.c.h.b16 %v6437
    %v6778 = vunpack.c.l.b16 %v6438
    %v6779 = vunpack.c.h.b16 %v6438
    %v6780 = vunpack.c.l.b16 %v6439
    %v6781 = vunpack.c.h.b16 %v6439
    %v6782 = vunpack.c.l.b16 %v6440
    %v6783 = vunpack.c.h.b16 %v6440
    %v6784 = vunpack.c.l.b16 %v6441
    %v6785 = vunpack.c.h.b16 %v6441
    %v6786 = vunpack.c.l.b16 %v6442
    %v6787 = vunpack.c.h.b16 %v6442
    %v6788 = vunpack.c.l.b16 %v6443
    %v6789 = vunpack.c.h.b16 %v6443
    %v6790 = vunpack.c.l.b16 %v6444
    %v6791 = vunpack.c.h.b16 %v6444
    %v6792 = vunpack.c.l.b16 %v6445
    %v6793 = vunpack.c.h.b16 %v6445
    %v6794 = vunpack.c.l.b16 %v6446
    %v6795 = vunpack.c.h.b16 %v6446
    %v6796 = vunpack.c.l.b16 %v6447
    %v6797 = vunpack.c.h.b16 %v6447
    %v6798 = vunpack.c.l.b16 %v6448
    %v6799 = vunpack.c.h.b16 %v6448
    %v6800 = vunpack.c.l.b16 %v6449
    %v6801 = vunpack.c.h.b16 %v6449
    %v6802 = vunpack.c.l.b16 %v6450
    %v6803 = vunpack.c.h.b16 %v6450
    %v6804 = vunpack.c.l.b16 %v6451
    %v6805 = vunpack.c.h.b16 %v6451
    %v6806 = vunpack.c.l.b16 %v6452
    %v6807 = vunpack.c.h.b16 %v6452
    %v6808 = vunpack.c.l.b16 %v6453
    %v6809 = vunpack.c.h.b16 %v6453
    %v6810 = vunpack.c.l.b16 %v6454
    %v6811 = vunpack.c.h.b16 %v6454
    %v6812 = vunpack.c.l.b16 %v6455
    %v6813 = vunpack.c.h.b16 %v6455
    %v6814 = vunpack.c.l.b16 %v6456
    %v6815 = vunpack.c.h.b16 %v6456
    %v6816 = vunpack.c.l.b16 %v6457
    %v6817 = vunpack.c.h.b16 %v6457
    %v6818 = vunpack.c.l.b16 %v6458
    %v6819 = vunpack.c.h.b16 %v6458
    %v6820 = vunpack.c.l.b16 %v6459
    %v6821 = vunpack.c.h.b16 %v6459
    %v6822 = vunpack.c.l.b16 %v6460
    %v6823 = vunpack.c.h.b16 %v6460
    %v6824 = vunpack.c.l.b16 %v6461
    %v6825 = vunpack.c.h.b16 %v6461
    %v6826 = vunpack.c.l.b16 %v6462
    %v6827 = vunpack.c.h.b16 %v6462
    %v6828 = vunpack.c.l.b16 %v6463
    %v6829 = vunpack.c.h.b16 %v6463
    %v6830 = vunpack.c.l.b16 %v6464
    %v6831 = vunpack.c.h.b16 %v6464
    %v6832 = vunpack.c.l.b16 %v6465
    %v6833 = vunpack.c.h.b16 %v6465
    %v6834 = vunpack.c.l.b16 %v6466
    %v6835 = vunpack.c.h.b16 %v6466
    %v6836 = vunpack.c.l.b16 %v6467
    %v6837 = vunpack.c.h.b16 %v6467
    %v6838 = vunpack.c.l.b16 %v6468
    %v6839 = vunpack.c.h.b16 %v6468
    %v6840 = vunpack.c.l.b16 %v6469
    %v6841 = vunpack.c.h.b16 %v6469
    %v6842 = vunpack.c.l.b16 %v6470
    %v6843 = vunpack.c.h.b16 %v6470
    %v6844 = vunpack.c.l.b16 %v6471
    %v6845 = vunpack.c.h.b16 %v6471
    %v6846 = vunpack.c.l.b16 %v6472
    %v6847 = vunpack.c.h.b16 %v6472
    %v6848 = vunpack.c.l.b16 %v6473
    %v6849 = vunpack.c.h.b16 %v6473
    %v6850 = vunpack.c.l.b16 %v6474
    %v6851 = vunpack.c.h.b16 %v6474
    %v6852 = vunpack.c.l.b16 %v6475
    %v6853 = vunpack.c.h.b16 %v6475
    %v6854 = vunpack.c.l.b16 %v6476
    %v6855 = vunpack.c.h.b16 %v6476
    %v6856 = vunpack.c.l.b16 %v6477
    %v6857 = vunpack.c.h.b16 %v6477
    %v6858 = vunpack.c.l.b16 %v6478
    %v6859 = vunpack.c.h.b16 %v6478
    %v6860 = vunpack.c.l.b16 %v6479
    %v6861 = vunpack.c.h.b16 %v6479
    %v6862 = vunpack.c.l.b16 %v6480
    %v6863 = vunpack.c.h.b16 %v6480
    %v6864 = vunpack.c.l.b16 %v6481
    %v6865 = vunpack.c.h.b16 %v6481
    %v6866 = vunpack.c.l.b16 %v6482
    %v6867 = vunpack.c.h.b16 %v6482
    %v6868 = vunpack.c.l.b16 %v6483
    %v6869 = vunpack.c.h.b16 %v6483
    %v6870 = vunpack.c.l.b16 %v6484
    %v6871 = vunpack.c.h.b16 %v6484
    %v6872 = vunpack.c.l.b16 %v6485
    %v6873 = vunpack.c.h.b16 %v6485
    %v6874 = vunpack.c.l.b16 %v6486
    %v6875 = vunpack.c.h.b16 %v6486
    %v6876 = vunpack.c.l.b16 %v6487
    %v6877 = vunpack.c.h.b16 %v6487
    %v6878 = vunpack.c.l.b16 %v6488
    %v6879 = vunpack.c.h.b16 %v6488
    %v6880 = vunpack.c.l.b16 %v6489
    %v6881 = vunpack.c.h.b16 %v6489
    %v6882 = vunpack.c.l.b16 %v6490
    %v6883 = vunpack.c.h.b16 %v6490
    %v6884 = vunpack.c.l.b16 %v6491
    %v6885 = vunpack.c.h.b16 %v6491
    %v6886 = vunpack.c.l.b16 %v6492
    %v6887 = vunpack.c.h.b16 %v6492
    %v6888 = vunpack.c.l.b16 %v6493
    %v6889 = vunpack.c.h.b16 %v6493
    %v6890 = vunpack.c.l.b16 %v6494
    %v6891 = vunpack.c.h.b16 %v6494
    %v6892 = vunpack.c.l.b16 %v6495
    %v6893 = vunpack.c.h.b16 %v6495
    %v6894 = vunpack.c.l.b16 %v6496
    %v6895 = vunpack.c.h.b16 %v6496
    %v6896 = vunpack.c.l.b16 %v6497
    %v6897 = vunpack.c.h.b16 %v6497
    %v6898 = vunpack.c.l.b16 %v6498
    %v6899 = vunpack.c.h.b16 %v6498
    %v6900 = vunpack.c.l.b16 %v6499
    %v6901 = vunpack.c.h.b16 %v6499
    %v6902 = vunpack.c.l.b16 %v6500
    %v6903 = vunpack.c.h.b16 %v6500
    %v6904 = vunpack.c.l.b16 %v6501
    %v6905 = vunpack.c.h.b16 %v6501
    %v6906 = vunpack.c.l.b16 %v6502
    %v6907 = vunpack.c.h.b16 %v6502
    %v6908 = vunpack.c.l.b16 %v6503
    %v6909 = vunpack.c.h.b16 %v6503
    %v6910 = vunpack.c.l.b16 %v6504
    %v6911 = vunpack.c.h.b16 %v6504
    %v6912 = vunpack.c.l.b16 %v6505
    %v6913 = vunpack.c.h.b16 %v6505
    %v6914 = vunpack.c.l.b16 %v6506
    %v6915 = vunpack.c.h.b16 %v6506
    %v6916 = vunpack.c.l.b16 %v6507
    %v6917 = vunpack.c.h.b16 %v6507
    %v6918 = vunpack.c.l.b16 %v6508
    %v6919 = vunpack.c.h.b16 %v6508
    %v6920 = vunpack.c.l.b16 %v6509
    %v6921 = vunpack.c.h.b16 %v6509
    %v6922 = vunpack.c.l.b16 %v6510
    %v6923 = vunpack.c.h.b16 %v6510
    %v6924 = vunpack.c.l.b16 %v6511
    %v6925 = vunpack.c.h.b16 %v6511
    %v6926 = vunpack.c.l.b16 %v6512
    %v6927 = vunpack.c.h.b16 %v6512
    %v6928 = vunpack.c.l.b16 %v6513
    %v6929 = vunpack.c.h.b16 %v6513
    %v6930 = vunpack.c.l.b16 %v6514
    %v6931 = vunpack.c.h.b16 %v6514
    %v6932 = vunpack.c.l.b16 %v6515
    %v6933 = vunpack.c.h.b16 %v6515
    %v6934 = vunpack.c.l.b16 %v6516
    %v6935 = vunpack.c.h.b16 %v6516
    %v6936 = vunpack.c.l.b16 %v6517
    %v6937 = vunpack.c.h.b16 %v6517
    %v6938 = vunpack.c.l.b16 %v6518
    %v6939 = vunpack.c.h.b16 %v6518
    %v6940 = vunpack.c.l.b16 %v6519
    %v6941 = vunpack.c.h.b16 %v6519
    %v6942 = vunpack.c.l.b16 %v6520
    %v6943 = vunpack.c.h.b16 %v6520
    %v6944 = vunpack.c.l.b16 %v6521
    %v6945 = vunpack.c.h.b16 %v6521
    %v6946 = vunpack.c.l.b16 %v6522
    %v6947 = vunpack.c.h.b16 %v6522
    %v6948 = vunpack.c.l.b16 %v6523
    %v6949 = vunpack.c.h.b16 %v6523
    %v6950 = vunpack.c.l.b16 %v6524
    %v6951 = vunpack.c.h.b16 %v6524
    %v6952 = vunpack.c.l.b16 %v6525
    %v6953 = vunpack.c.h.b16 %v6525
    %v6954 = vunpack.c.l.b16 %v6526
    %v6955 = vunpack.c.h.b16 %v6526
    %v6956 = vunpack.c.l.b16 %v6527
    %v6957 = vunpack.c.h.b16 %v6527
    %v6958 = vunpack.c.l.b16 %v6528
    %v6959 = vunpack.c.h.b16 %v6528
    %v6960 = vunpack.c.l.b16 %v6529
    %v6961 = vunpack.c.h.b16 %v6529
    %v6962 = vpack.c.b16 %v6676, %v6674
    %v6963 = vpack.c.b16 %v6677, %v6675
    %v6964 = vpack.c.b16 %v6680, %v6678
    %v6965 = vpack.c.b16 %v6681, %v6679
    %v6966 = vpack.c.b16 %v6684, %v6682
    %v6967 = vpack.c.b16 %v6685, %v6683
    %v6968 = vpack.c.b16 %v6688, %v6686
    %v6969 = vpack.c.b16 %v6689, %v6687
    %v6970 = vpack.c.b16 %v6692, %v6690
    %v6971 = vpack.c.b16 %v6693, %v6691
    %v6972 = vpack.c.b16 %v6696, %v6694
    %v6973 = vpack.c.b16 %v6697, %v6695
    %v6974 = vpack.c.b16 %v6700, %v6698
    %v6975 = vpack.c.b16 %v6701, %v6699
    %v6976 = vpack.c.b16 %v6704, %v6702
    %v6977 = vpack.c.b16 %v6705, %v6703
    %v6978 = vpack.c.b16 %v6708, %v6706
    %v6979 = vpack.c.b16 %v6709, %v6707
    %v6980 = vpack.c.b16 %v6712, %v6710
    %v6981 = vpack.c.b16 %v6713, %v6711
    %v6982 = vpack.c.b16 %v6716, %v6714
    %v6983 = vpack.c.b16 %v6717, %v6715
    %v6984 = vpack.c.b16 %v6720, %v6718
    %v6985 = vpack.c.b16 %v6721, %v6719
    %v6986 = vpack.c.b16 %v6724, %v6722
    %v6987 = vpack.c.b16 %v6725, %v6723
    %v6988 = vpack.c.b16 %v6728, %v6726
    %v6989 = vpack.c.b16 %v6729, %v6727
    %v6990 = vpack.c.b16 %v6732, %v6730
    %v6991 = vpack.c.b16 %v6733, %v6731
    %v6992 = vpack.c.b16 %v6736, %v6734
    %v6993 = vpack.c.b16 %v6737, %v6735
    %v6994 = vpack.c.b16 %v6740, %v6738
    %v6995 = vpack.c.b16 %v6741, %v6739
    %v6996 = vpack.c.b16 %v6744, %v6742
    %v6997 = vpack.c.b16 %v6745, %v6743
    %v6998 = vpack.c.b16 %v6748, %v6746
    %v6999 = vpack.c.b16 %v6749, %v6747
    %v7000 = vpack.c.b16 %v6752, %v6750
    %v7001 = vpack.c.b16 %v6753, %v6751
    %v7002 = vpack.c.b16 %v6756, %v6754
    %v7003 = vpack.c.b16 %v6757, %v6755
    %v7004 = vpack.c.b16 %v6760, %v6758
    %v7005 = vpack.c.b16 %v6761, %v6759
    %v7006 = vpack.c.b16 %v6764, %v6762
    %v7007 = vpack.c.b16 %v6765, %v6763
    %v7008 = vpack.c.b16 %v6768, %v6766
    %v7009 = vpack.c.b16 %v6769, %v6767
    %v7010 = vpack.c.b16 %v6772, %v6770
    %v7011 = vpack.c.b16 %v6773, %v6771
    %v7012 = vpack.c.b16 %v6776, %v6774
    %v7013 = vpack.c.b16 %v6777, %v6775
    %v7014 = vpack.c.b16 %v6780, %v6778
    %v7015 = vpack.c.b16 %v6781, %v6779
    %v7016 = vpack.c.b16 %v6784, %v6782
    %v7017 = vpack.c.b16 %v6785, %v6783
    %v7018 = vpack.c.b16 %v6788, %v6786
    %v7019 = vpack.c.b16 %v6789, %v6787
    %v7020 = vpack.c.b16 %v6792, %v6790
    %v7021 = vpack.c.b16 %v6793, %v6791
    %v7022 = vpack.c.b16 %v6796, %v6794
    %v7023 = vpack.c.b16 %v6797, %v6795
    %v7024 = vpack.c.b16 %v6800, %v6798
    %v7025 = vpack.c.b16 %v6801, %v6799
    %v7026 = vpack.c.b16 %v6804, %v6802
    %v7027 = vpack.c.b16 %v6805, %v6803
    %v7028 = vpack.c.b16 %v6808, %v6806
    %v7029 = vpack.c.b16 %v6809, %v6807
    %v7030 = vpack.c.b16 %v6812, %v6810
    %v7031 = vpack.c.b16 %v6813, %v6811
    %v7032 = vpack.c.b16 %v6816, %v6814
    %v7033 = vpack.c.b16 %v6817, %v6815
    %v7034 = vpack.c.b16 %v6820, %v6818
    %v7035 = vpack.c.b16 %v6821, %v6819
    %v7036 = vpack.c.b16 %v6824, %v6822
    %v7037 = vpack.c.b16 %v6825, %v6823
    %v7038 = vpack.c.b16 %v6828, %v6826
    %v7039 = vpack.c.b16 %v6829, %v6827
    %v7040 = vpack.c.b16 %v6832, %v6830
    %v7041 = vpack.c.b16 %v6833, %v6831
    %v7042 = vpack.c.b16 %v6836, %v6834
    %v7043 = vpack.c.b16 %v6837, %v6835
    %v7044 = vpack.c.b16 %v6840, %v6838
    %v7045 = vpack.c.b16 %v6841, %v6839
    %v7046 = vpack.c.b16 %v6844, %v6842
    %v7047 = vpack.c.b16 %v6845, %v6843
    %v7048 = vpack.c.b16 %v6848, %v6846
    %v7049 = vpack.c.b16 %v6849, %v6847
    %v7050 = vpack.c.b16 %v6852, %v6850
    %v7051 = vpack.c.b16 %v6853, %v6851
    %v7052 = vpack.c.b16 %v6856, %v6854
    %v7053 = vpack.c.b16 %v6857, %v6855
    %v7054 = vpack.c.b16 %v6860, %v6858
    %v7055 = vpack.c.b16 %v6861, %v6859
    %v7056 = vpack.c.b16 %v6864, %v6862
    %v7057 = vpack.c.b16 %v6865, %v6863
    %v7058 = vpack.c.b16 %v6868, %v6866
    %v7059 = vpack.c.b16 %v6869, %v6867
    %v7060 = vpack.c.b16 %v6872, %v6870
    %v7061 = vpack.c.b16 %v6873, %v6871
    %v7062 = vpack.c.b16 %v6876, %v6874
    %v7063 = vpack.c.b16 %v6877, %v6875
    %v7064 = vpack.c.b16 %v6880, %v6878
    %v7065 = vpack.c.b16 %v6881, %v6879
    %v7066 = vpack.c.b16 %v6884, %v6882
    %v7067 = vpack.c.b16 %v6885, %v6883
    %v7068 = vpack.c.b16 %v6888, %v6886
    %v7069 = vpack.c.b16 %v6889, %v6887
    %v7070 = vpack.c.b16 %v6892, %v6890
    %v7071 = vpack.c.b16 %v6893, %v6891
    %v7072 = vpack.c.b16 %v6896, %v6894
    %v7073 = vpack.c.b16 %v6897, %v6895
    %v7074 = vpack.c.b16 %v6900, %v6898
    %v7075 = vpack.c.b16 %v6901, %v6899
    %v7076 = vpack.c.b16 %v6904, %v6902
    %v7077 = vpack.c.b16 %v6905, %v6903
    %v7078 = vpack.c.b16 %v6908, %v6906
    %v7079 = vpack.c.b16 %v6909, %v6907
    %v7080 = vpack.c.b16 %v6912, %v6910
    %v7081 = vpack.c.b16 %v6913, %v6911
    %v7082 = vpack.c.b16 %v6916, %v6914
    %v7083 = vpack.c.b16 %v6917, %v6915
    %v7084 = vpack.c.b16 %v6920, %v6918
    %v7085 = vpack.c.b16 %v6921, %v6919
    %v7086 = vpack.c.b16 %v6924, %v6922
    %v7087 = vpack.c.b16 %v6925, %v6923
    %v7088 = vpack.c.b16 %v6928, %v6926
    %v7089 = vpack.c.b16 %v6929, %v6927
    %v7090 = vpack.c.b16 %v6932, %v6930
    %v7091 = vpack.c.b16 %v6933, %v6931
    %v7092 = vpack.c.b16 %v6936, %v6934
    %v7093 = vpack.c.b16 %v6937, %v6935
    %v7094 = vpack.c.b16 %v6940, %v6938
    %v7095 = vpack.c.b16 %v6941, %v6939
    %v7096 = vpack.c.b16 %v6944, %v6942
    %v7097 = vpack.c.b16 %v6945, %v6943
    %v7098 = vpack.c.b16 %v6948, %v6946
    %v7099 = vpack.c.b16 %v6949, %v6947
    %v7100 = vpack.c.b16 %v6952, %v6950
    %v7101 = vpack.c.b16 %v6953, %v6951
    %v7102 = vpack.c.b16 %v6956, %v6954
    %v7103 = vpack.c.b16 %v6957, %v6955
    %v7104 = vpack.c.b16 %v6960, %v6958
    %v7105 = vpack.c.b16 %v6961, %v6959
    %7250 = vmatprep.subr.bf16.mxu0 %v6963
    %7251 = vmatpush1.bf16.msra.mxu0 %v6962
    %7252 = vmatprep.subr.bf16.mxu0 %v6965
    %7253 = vmatpush1.bf16.msra.mxu0 %v6964
    %7254 = vmatprep.subr.bf16.mxu0 %v6967
    %7255 = vmatpush1.bf16.msra.mxu0 %v6966
    %7256 = vmatprep.subr.bf16.mxu0 %v6969
    %7257 = vmatpush1.bf16.msra.mxu0 %v6968
    %7258 = vmatprep.subr.bf16.mxu0 %v6971
    %7259 = vmatpush1.bf16.msra.mxu0 %v6970
    %7260 = vmatprep.subr.bf16.mxu0 %v6973
    %7261 = vmatpush1.bf16.msra.mxu0 %v6972
    %7262 = vmatprep.subr.bf16.mxu0 %v6975
    %7263 = vmatpush1.bf16.msra.mxu0 %v6974
    %7264 = vmatprep.subr.bf16.mxu0 %v6977
    %7265 = vmatpush1.bf16.msra.mxu0 %v6976
    %7266 = vmatprep.subr.bf16.mxu0 %v6979
    %7267 = vmatpush1.bf16.msra.mxu0 %v6978
    %7268 = vmatprep.subr.bf16.mxu0 %v6981
    %7269 = vmatpush1.bf16.msra.mxu0 %v6980
    %7270 = vmatprep.subr.bf16.mxu0 %v6983
    %7271 = vmatpush1.bf16.msra.mxu0 %v6982
    %7272 = vmatprep.subr.bf16.mxu0 %v6985
    %7273 = vmatpush1.bf16.msra.mxu0 %v6984
    %7274 = vmatprep.subr.bf16.mxu0 %v6987
    %7275 = vmatpush1.bf16.msra.mxu0 %v6986
    %7276 = vmatprep.subr.bf16.mxu0 %v6989
    %7277 = vmatpush1.bf16.msra.mxu0 %v6988
    %7278 = vmatprep.subr.bf16.mxu0 %v6991
    %7279 = vmatpush1.bf16.msra.mxu0 %v6990
    %7280 = vmatprep.subr.bf16.mxu0 %v6993
    %7281 = vmatpush1.bf16.msra.mxu0 %v6992
    %7282 = vmatprep.mubr.bf16.mxu0 %v5781
    %7283 = vmatmul.mubr.bf16.gmra.mrb[0].mxu0 %v5543
    %v7284 = vpop.f32.mrb[0].mxu0
    %v7285 = vadd.f32 0.0, %v7284
    %v7286 = vpop.f32.mrb[0].mxu0
    %v7287 = vadd.f32 0.0, %v7286
    %v7288 = vpop.f32.mrb[0].mxu0
    %v7289 = vadd.f32 0.0, %v7288
    %v7290 = vpop.f32.mrb[0].mxu0
    %v7291 = vadd.f32 0.0, %v7290
    %7292 = vmatprep.mubr.bf16.mxu0 %v5782
    %7293 = vmatmul.mubr.bf16.gmra.mrb[0].mxu0 %v5544
    %v7294 = vpop.f32.mrb[0].mxu0
    %v7295 = vadd.f32 0.0, %v7294
    %v7296 = vpop.f32.mrb[0].mxu0
    %v7297 = vadd.f32 0.0, %v7296
    %v7298 = vpop.f32.mrb[0].mxu0
    %v7299 = vadd.f32 0.0, %v7298
    %v7300 = vpop.f32.mrb[0].mxu0
    %v7301 = vadd.f32 0.0, %v7300
    %7302 = vmatprep.mubr.bf16.mxu0 %v5783
    %7303 = vmatmul.mubr.bf16.gmra.mrb[0].mxu0 %v5545
    %v7304 = vpop.f32.mrb[0].mxu0
    %v7305 = vadd.f32 0.0, %v7304
    %v7306 = vpop.f32.mrb[0].mxu0
    %v7307 = vadd.f32 0.0, %v7306
    %v7308 = vpop.f32.mrb[0].mxu0
    %v7309 = vadd.f32 0.0, %v7308
    %v7310 = vpop.f32.mrb[0].mxu0
    %v7311 = vadd.f32 0.0, %v7310
    %7312 = vmatprep.mubr.bf16.mxu0 %v5784
    %7313 = vmatmul.mubr.bf16.gmra.mrb[0].mxu0 %v5546
    %v7314 = vpop.f32.mrb[0].mxu0
    %v7315 = vadd.f32 0.0, %v7314
    %v7316 = vpop.f32.mrb[0].mxu0
    %v7317 = vadd.f32 0.0, %v7316
    %v7318 = vpop.f32.mrb[0].mxu0
    %v7319 = vadd.f32 0.0, %v7318
    %v7320 = vpop.f32.mrb[0].mxu0
    %v7321 = vadd.f32 0.0, %v7320
    %7322 = vmatprep.mubr.bf16.mxu0 %v5785
    %7323 = vmatmul.mubr.bf16.gmra.mrb[0].mxu0 %v5547
    %v7324 = vpop.f32.mrb[0].mxu0
    %v7325 = vadd.f32 0.0, %v7324
    %v7326 = vpop.f32.mrb[0].mxu0
    %v7327 = vadd.f32 0.0, %v7326
    %v7328 = vpop.f32.mrb[0].mxu0
    %v7329 = vadd.f32 0.0, %v7328
    %v7330 = vpop.f32.mrb[0].mxu0
    %v7331 = vadd.f32 0.0, %v7330
    %7332 = vmatprep.mubr.bf16.mxu0 %v5786
    %7333 = vmatmul.mubr.bf16.gmra.mrb[0].mxu0 %v5548
    %v7334 = vpop.f32.mrb[0].mxu0
    %v7335 = vadd.f32 0.0, %v7334
    %v7336 = vpop.f32.mrb[0].mxu0
    %v7337 = vadd.f32 0.0, %v7336
    %v7338 = vpop.f32.mrb[0].mxu0
    %v7339 = vadd.f32 0.0, %v7338
    %v7340 = vpop.f32.mrb[0].mxu0
    %v7341 = vadd.f32 0.0, %v7340
    %7342 = vmatprep.mubr.bf16.mxu0 %v5787
    %7343 = vmatmul.mubr.bf16.gmra.mrb[0].mxu0 %v5549
    %v7344 = vpop.f32.mrb[0].mxu0
    %v7345 = vadd.f32 0.0, %v7344
    %v7346 = vpop.f32.mrb[0].mxu0
    %v7347 = vadd.f32 0.0, %v7346
    %v7348 = vpop.f32.mrb[0].mxu0
    %v7349 = vpop.f32.mrb[0].mxu0
    %7350 = vdwg.mxu0
    %7351 = vmatprep.subr.bf16.mxu0 %v6995
    %7352 = vmatpush1.bf16.msra.mxu0 %v6994
    %7353 = vmatprep.subr.bf16.mxu0 %v6997
    %7354 = vmatpush1.bf16.msra.mxu0 %v6996
    %7355 = vmatprep.subr.bf16.mxu0 %v6999
    %7356 = vmatpush1.bf16.msra.mxu0 %v6998
    %7357 = vmatprep.subr.bf16.mxu0 %v7001
    %7358 = vmatpush1.bf16.msra.mxu0 %v7000
    %7359 = vmatprep.subr.bf16.mxu0 %v7003
    %7360 = vmatpush1.bf16.msra.mxu0 %v7002
    %7361 = vmatprep.subr.bf16.mxu0 %v7005
    %7362 = vmatpush1.bf16.msra.mxu0 %v7004
    %7363 = vmatprep.subr.bf16.mxu0 %v7007
    %7364 = vmatpush1.bf16.msra.mxu0 %v7006
    %7365 = vmatprep.subr.bf16.mxu0 %v7009
    %7366 = vmatpush1.bf16.msra.mxu0 %v7008
    %7367 = vmatprep.subr.bf16.mxu0 %v7011
    %7368 = vmatpush1.bf16.msra.mxu0 %v7010
    %7369 = vmatprep.subr.bf16.mxu0 %v7013
    %7370 = vmatpush1.bf16.msra.mxu0 %v7012
    %7371 = vmatprep.subr.bf16.mxu0 %v7015
    %7372 = vmatpush1.bf16.msra.mxu0 %v7014
    %7373 = vmatprep.subr.bf16.mxu0 %v7017
    %7374 = vmatpush1.bf16.msra.mxu0 %v7016
    %7375 = vmatprep.subr.bf16.mxu0 %v7019
    %7376 = vmatpush1.bf16.msra.mxu0 %v7018
    %7377 = vmatprep.subr.bf16.mxu0 %v7021
    %7378 = vmatpush1.bf16.msra.mxu0 %v7020
    %7379 = vmatprep.subr.bf16.mxu0 %v7023
    %7380 = vmatpush1.bf16.msra.mxu0 %v7022
    %7381 = vmatprep.subr.bf16.mxu0 %v7025
    %7382 = vmatpush1.bf16.msra.mxu0 %v7024
    %7383 = vmatprep.mubr.bf16.mxu0 %v6025
    %7384 = vmatmul.mubr.bf16.gmra.mrb[0].mxu0 %v5907
    %v7385 = vpop.f32.mrb[0].mxu0
    %v7386 = vadd.f32 %v7285, %v7385
    %v7387 = vpop.f32.mrb[0].mxu0
    %v7388 = vadd.f32 %v7287, %v7387
    %v7389 = vpop.f32.mrb[0].mxu0
    %v7390 = vadd.f32 %v7289, %v7389
    %v7391 = vpop.f32.mrb[0].mxu0
    %v7392 = vadd.f32 %v7291, %v7391
    %7393 = vmatprep.mubr.bf16.mxu0 %v6026
    %7394 = vmatmul.mubr.bf16.gmra.mrb[0].mxu0 %v5908
    %v7395 = vpop.f32.mrb[0].mxu0
    %v7396 = vadd.f32 %v7295, %v7395
    %v7397 = vpop.f32.mrb[0].mxu0
    %v7398 = vadd.f32 %v7297, %v7397
    %v7399 = vpop.f32.mrb[0].mxu0
    %v7400 = vadd.f32 %v7299, %v7399
    %v7401 = vpop.f32.mrb[0].mxu0
    %v7402 = vadd.f32 %v7301, %v7401
    %7403 = vmatprep.mubr.bf16.mxu0 %v6027
    %7404 = vmatmul.mubr.bf16.gmra.mrb[0].mxu0 %v5909
    %v7405 = vpop.f32.mrb[0].mxu0
    %v7406 = vadd.f32 %v7305, %v7405
    %v7407 = vpop.f32.mrb[0].mxu0
    %v7408 = vadd.f32 %v7307, %v7407
    %v7409 = vpop.f32.mrb[0].mxu0
    %v7410 = vadd.f32 %v7309, %v7409
    %v7411 = vpop.f32.mrb[0].mxu0
    %v7412 = vadd.f32 %v7311, %v7411
    %7413 = vmatprep.mubr.bf16.mxu0 %v6028
    %7414 = vmatmul.mubr.bf16.gmra.mrb[0].mxu0 %v5910
    %v7415 = vpop.f32.mrb[0].mxu0
    %v7416 = vadd.f32 %v7315, %v7415
    %v7417 = vpop.f32.mrb[0].mxu0
    %v7418 = vadd.f32 %v7317, %v7417
    %v7419 = vpop.f32.mrb[0].mxu0
    %v7420 = vadd.f32 %v7319, %v7419
    %v7421 = vpop.f32.mrb[0].mxu0
    %v7422 = vadd.f32 %v7321, %v7421
    %7423 = vmatprep.mubr.bf16.mxu0 %v6029
    %7424 = vmatmul.mubr.bf16.gmra.mrb[0].mxu0 %v5911
    %v7425 = vpop.f32.mrb[0].mxu0
    %v7426 = vadd.f32 %v7325, %v7425
    %v7427 = vpop.f32.mrb[0].mxu0
    %v7428 = vadd.f32 %v7327, %v7427
    %v7429 = vpop.f32.mrb[0].mxu0
    %v7430 = vadd.f32 %v7329, %v7429
    %v7431 = vpop.f32.mrb[0].mxu0
    %v7432 = vadd.f32 %v7331, %v7431
    %7433 = vmatprep.mubr.bf16.mxu0 %v6030
    %7434 = vmatmul.mubr.bf16.gmra.mrb[0].mxu0 %v5912
    %v7435 = vpop.f32.mrb[0].mxu0
    %v7436 = vadd.f32 %v7335, %v7435
    %v7437 = vpop.f32.mrb[0].mxu0
    %v7438 = vadd.f32 %v7337, %v7437
    %v7439 = vpop.f32.mrb[0].mxu0
    %v7440 = vadd.f32 %v7339, %v7439
    %v7441 = vpop.f32.mrb[0].mxu0
    %v7442 = vadd.f32 %v7341, %v7441
    %7443 = vmatprep.mubr.bf16.mxu0 %v6031
    %7444 = vmatmul.mubr.bf16.gmra.mrb[0].mxu0 %v5913
    %v7445 = vpop.f32.mrb[0].mxu0
    %v7446 = vadd.f32 %v7345, %v7445
    %v7447 = vpop.f32.mrb[0].mxu0
    %v7448 = vadd.f32 %v7347, %v7447
    %v7449 = vpop.f32.mrb[0].mxu0
    %v7450 = vpop.f32.mrb[0].mxu0
    %7451 = vdwg.mxu0
    %7452 = vmatprep.subr.bf16.mxu0 %v7027
    %7453 = vmatpush1.bf16.msra.mxu0 %v7026
    %7454 = vmatprep.subr.bf16.mxu0 %v7029
    %7455 = vmatpush1.bf16.msra.mxu0 %v7028
    %7456 = vmatprep.subr.bf16.mxu0 %v7031
    %7457 = vmatpush1.bf16.msra.mxu0 %v7030
    %7458 = vmatprep.subr.bf16.mxu0 %v7033
    %7459 = vmatpush1.bf16.msra.mxu0 %v7032
    %7460 = vmatprep.subr.bf16.mxu0 %v7035
    %7461 = vmatpush1.bf16.msra.mxu0 %v7034
    %7462 = vmatprep.subr.bf16.mxu0 %v7037
    %7463 = vmatpush1.bf16.msra.mxu0 %v7036
    %7464 = vmatprep.subr.bf16.mxu0 %v7039
    %7465 = vmatpush1.bf16.msra.mxu0 %v7038
    %7466 = vmatprep.subr.bf16.mxu0 %v7041
    %7467 = vmatpush1.bf16.msra.mxu0 %v7040
    %7468 = vmatprep.subr.bf16.mxu0 %v7043
    %7469 = vmatpush1.bf16.msra.mxu0 %v7042
    %7470 = vmatprep.subr.bf16.mxu0 %v7045
    %7471 = vmatpush1.bf16.msra.mxu0 %v7044
    %7472 = vmatprep.subr.bf16.mxu0 %v7047
    %7473 = vmatpush1.bf16.msra.mxu0 %v7046
    %7474 = vmatprep.subr.bf16.mxu0 %v7049
    %7475 = vmatpush1.bf16.msra.mxu0 %v7048
    %7476 = vmatprep.subr.bf16.mxu0 %v7051
    %7477 = vmatpush1.bf16.msra.mxu0 %v7050
    %7478 = vmatprep.subr.bf16.mxu0 %v7053
    %7479 = vmatpush1.bf16.msra.mxu0 %v7052
    %7480 = vmatprep.subr.bf16.mxu0 %v7055
    %7481 = vmatpush1.bf16.msra.mxu0 %v7054
    %7482 = vmatprep.subr.bf16.mxu0 %v7057
    %7483 = vmatpush1.bf16.msra.mxu0 %v7056
    %7484 = vmatprep.mubr.bf16.mxu0 %v6189
    %7485 = vmatmul.mubr.bf16.gmra.mrb[0].mxu0 %v6103
    %v7486 = vpop.f32.mrb[0].mxu0
    %v7487 = vadd.f32 %v7386, %v7486
    %v7488 = vpop.f32.mrb[0].mxu0
    %v7489 = vadd.f32 %v7388, %v7488
    %v7490 = vpop.f32.mrb[0].mxu0
    %v7491 = vadd.f32 %v7390, %v7490
    %v7492 = vpop.f32.mrb[0].mxu0
    %v7493 = vadd.f32 %v7392, %v7492
    %7494 = vmatprep.mubr.bf16.mxu0 %v6190
    %7495 = vmatmul.mubr.bf16.gmra.mrb[0].mxu0 %v6104
    %v7496 = vpop.f32.mrb[0].mxu0
    %v7497 = vadd.f32 %v7396, %v7496
    %v7498 = vpop.f32.mrb[0].mxu0
    %v7499 = vadd.f32 %v7398, %v7498
    %v7500 = vpop.f32.mrb[0].mxu0
    %v7501 = vadd.f32 %v7400, %v7500
    %v7502 = vpop.f32.mrb[0].mxu0
    %v7503 = vadd.f32 %v7402, %v7502
    %7504 = vmatprep.mubr.bf16.mxu0 %v6191
    %7505 = vmatmul.mubr.bf16.gmra.mrb[0].mxu0 %v6105
    %v7506 = vpop.f32.mrb[0].mxu0
    %v7507 = vadd.f32 %v7406, %v7506
    %v7508 = vpop.f32.mrb[0].mxu0
    %v7509 = vadd.f32 %v7408, %v7508
    %v7510 = vpop.f32.mrb[0].mxu0
    %v7511 = vadd.f32 %v7410, %v7510
    %v7512 = vpop.f32.mrb[0].mxu0
    %v7513 = vadd.f32 %v7412, %v7512
    %7514 = vmatprep.mubr.bf16.mxu0 %v6192
    %7515 = vmatmul.mubr.bf16.gmra.mrb[0].mxu0 %v6106
    %v7516 = vpop.f32.mrb[0].mxu0
    %v7517 = vadd.f32 %v7416, %v7516
    %v7518 = vpop.f32.mrb[0].mxu0
    %v7519 = vadd.f32 %v7418, %v7518
    %v7520 = vpop.f32.mrb[0].mxu0
    %v7521 = vadd.f32 %v7420, %v7520
    %v7522 = vpop.f32.mrb[0].mxu0
    %v7523 = vadd.f32 %v7422, %v7522
    %7524 = vmatprep.mubr.bf16.mxu0 %v6193
    %7525 = vmatmul.mubr.bf16.gmra.mrb[0].mxu0 %v6107
    %v7526 = vpop.f32.mrb[0].mxu0
    %v7527 = vadd.f32 %v7426, %v7526
    %v7528 = vpop.f32.mrb[0].mxu0
    %v7529 = vadd.f32 %v7428, %v7528
    %v7530 = vpop.f32.mrb[0].mxu0
    %v7531 = vadd.f32 %v7430, %v7530
    %v7532 = vpop.f32.mrb[0].mxu0
    %v7533 = vadd.f32 %v7432, %v7532
    %7534 = vmatprep.mubr.bf16.mxu0 %v6194
    %7535 = vmatmul.mubr.bf16.gmra.mrb[0].mxu0 %v6108
    %v7536 = vpop.f32.mrb[0].mxu0
    %v7537 = vadd.f32 %v7436, %v7536
    %v7538 = vpop.f32.mrb[0].mxu0
    %v7539 = vadd.f32 %v7438, %v7538
    %v7540 = vpop.f32.mrb[0].mxu0
    %v7541 = vadd.f32 %v7440, %v7540
    %v7542 = vpop.f32.mrb[0].mxu0
    %v7543 = vadd.f32 %v7442, %v7542
    %7544 = vmatprep.mubr.bf16.mxu0 %v6195
    %7545 = vmatmul.mubr.bf16.gmra.mrb[0].mxu0 %v6109
    %v7546 = vpop.f32.mrb[0].mxu0
    %v7547 = vadd.f32 %v7446, %v7546
    %v7548 = vpop.f32.mrb[0].mxu0
    %v7549 = vadd.f32 %v7448, %v7548
    %v7550 = vpop.f32.mrb[0].mxu0
    %v7551 = vpop.f32.mrb[0].mxu0
    %7552 = vdwg.mxu0
    %7553 = vmatprep.subr.bf16.mxu0 %v7059
    %7554 = vmatpush1.bf16.msra.mxu0 %v7058
    %7555 = vmatprep.subr.bf16.mxu0 %v7061
    %7556 = vmatpush1.bf16.msra.mxu0 %v7060
    %7557 = vmatprep.subr.bf16.mxu0 %v7063
    %7558 = vmatpush1.bf16.msra.mxu0 %v7062
    %7559 = vmatprep.subr.bf16.mxu0 %v7065
    %7560 = vmatpush1.bf16.msra.mxu0 %v7064
    %7561 = vmatprep.subr.bf16.mxu0 %v7067
    %7562 = vmatpush1.bf16.msra.mxu0 %v7066
    %7563 = vmatprep.subr.bf16.mxu0 %v7069
    %7564 = vmatpush1.bf16.msra.mxu0 %v7068
    %7565 = vmatprep.subr.bf16.mxu0 %v7071
    %7566 = vmatpush1.bf16.msra.mxu0 %v7070
    %7567 = vmatprep.subr.bf16.mxu0 %v7073
    %7568 = vmatpush1.bf16.msra.mxu0 %v7072
    %7569 = vmatprep.subr.bf16.mxu0 %v7075
    %7570 = vmatpush1.bf16.msra.mxu0 %v7074
    %7571 = vmatprep.subr.bf16.mxu0 %v7077
    %7572 = vmatpush1.bf16.msra.mxu0 %v7076
    %7573 = vmatprep.subr.bf16.mxu0 %v7079
    %7574 = vmatpush1.bf16.msra.mxu0 %v7078
    %7575 = vmatprep.subr.bf16.mxu0 %v7081
    %7576 = vmatpush1.bf16.msra.mxu0 %v7080
    %7577 = vmatprep.subr.bf16.mxu0 %v7083
    %7578 = vmatpush1.bf16.msra.mxu0 %v7082
    %7579 = vmatprep.subr.bf16.mxu0 %v7085
    %7580 = vmatpush1.bf16.msra.mxu0 %v7084
    %7581 = vmatprep.subr.bf16.mxu0 %v7087
    %7582 = vmatpush1.bf16.msra.mxu0 %v7086
    %7583 = vmatprep.subr.bf16.mxu0 %v7089
    %7584 = vmatpush1.bf16.msra.mxu0 %v7088
    %7585 = vmatprep.mubr.bf16.mxu0 %v6325
    %7586 = vmatmul.mubr.bf16.gmra.mrb[0].mxu0 %v6263
    %v7587 = vpop.f32.mrb[0].mxu0
    %v7588 = vadd.f32 %v7487, %v7587
    %v7589 = vpop.f32.mrb[0].mxu0
    %v7590 = vadd.f32 %v7489, %v7589
    %v7591 = vpop.f32.mrb[0].mxu0
    %v7592 = vadd.f32 %v7491, %v7591
    %v7593 = vpop.f32.mrb[0].mxu0
    %v7594 = vadd.f32 %v7493, %v7593
    %7595 = vmatprep.mubr.bf16.mxu0 %v6326
    %7596 = vmatmul.mubr.bf16.gmra.mrb[0].mxu0 %v6264
    %v7597 = vpop.f32.mrb[0].mxu0
    %v7598 = vadd.f32 %v7497, %v7597
    %v7599 = vpop.f32.mrb[0].mxu0
    %v7600 = vadd.f32 %v7499, %v7599
    %v7601 = vpop.f32.mrb[0].mxu0
    %v7602 = vadd.f32 %v7501, %v7601
    %v7603 = vpop.f32.mrb[0].mxu0
    %v7604 = vadd.f32 %v7503, %v7603
    %7605 = vmatprep.mubr.bf16.mxu0 %v6327
    %7606 = vmatmul.mubr.bf16.gmra.mrb[0].mxu0 %v6265
    %v7607 = vpop.f32.mrb[0].mxu0
    %v7608 = vadd.f32 %v7507, %v7607
    %v7609 = vpop.f32.mrb[0].mxu0
    %v7610 = vadd.f32 %v7509, %v7609
    %v7611 = vpop.f32.mrb[0].mxu0
    %v7612 = vadd.f32 %v7511, %v7611
    %v7613 = vpop.f32.mrb[0].mxu0
    %v7614 = vadd.f32 %v7513, %v7613
    %7615 = vmatprep.mubr.bf16.mxu0 %v6328
    %7616 = vmatmul.mubr.bf16.gmra.mrb[0].mxu0 %v6266
    %v7617 = vpop.f32.mrb[0].mxu0
    %v7618 = vadd.f32 %v7517, %v7617
    %v7619 = vpop.f32.mrb[0].mxu0
    %v7620 = vadd.f32 %v7519, %v7619
    %v7621 = vpop.f32.mrb[0].mxu0
    %v7622 = vadd.f32 %v7521, %v7621
    %v7623 = vpop.f32.mrb[0].mxu0
    %v7624 = vadd.f32 %v7523, %v7623
    %7625 = vmatprep.mubr.bf16.mxu0 %v6329
    %7626 = vmatmul.mubr.bf16.gmra.mrb[0].mxu0 %v6267
    %v7627 = vpop.f32.mrb[0].mxu0
    %v7628 = vadd.f32 %v7527, %v7627
    %v7629 = vpop.f32.mrb[0].mxu0
    %v7630 = vadd.f32 %v7529, %v7629
    %v7631 = vpop.f32.mrb[0].mxu0
    %v7632 = vadd.f32 %v7531, %v7631
    %v7633 = vpop.f32.mrb[0].mxu0
    %v7634 = vadd.f32 %v7533, %v7633
    %7635 = vmatprep.mubr.bf16.mxu0 %v6330
    %7636 = vmatmul.mubr.bf16.gmra.mrb[0].mxu0 %v6268
    %v7637 = vpop.f32.mrb[0].mxu0
    %v7638 = vadd.f32 %v7537, %v7637
    %v7639 = vpop.f32.mrb[0].mxu0
    %v7640 = vadd.f32 %v7539, %v7639
    %v7641 = vpop.f32.mrb[0].mxu0
    %v7642 = vadd.f32 %v7541, %v7641
    %v7643 = vpop.f32.mrb[0].mxu0
    %v7644 = vadd.f32 %v7543, %v7643
    %7645 = vmatprep.mubr.bf16.mxu0 %v6331
    %7646 = vmatmul.mubr.bf16.gmra.mrb[0].mxu0 %v6269
    %v7647 = vpop.f32.mrb[0].mxu0
    %v7648 = vadd.f32 %v7547, %v7647
    %v7649 = vpop.f32.mrb[0].mxu0
    %v7650 = vadd.f32 %v7549, %v7649
    %v7651 = vpop.f32.mrb[0].mxu0
    %v7652 = vpop.f32.mrb[0].mxu0
    %7653 = vdwg.mxu0
    %7654 = vmatprep.subr.bf16.mxu0 %v7091
    %7655 = vmatpush1.bf16.msra.mxu0 %v7090
    %7656 = vmatprep.subr.bf16.mxu0 %v7093
    %7657 = vmatpush1.bf16.msra.mxu0 %v7092
    %7658 = vmatprep.subr.bf16.mxu0 %v7095
    %7659 = vmatpush1.bf16.msra.mxu0 %v7094
    %7660 = vmatprep.subr.bf16.mxu0 %v7097
    %7661 = vmatpush1.bf16.msra.mxu0 %v7096
    %7662 = vmatprep.subr.bf16.mxu0 %v7099
    %7663 = vmatpush1.bf16.msra.mxu0 %v7098
    %7664 = vmatprep.subr.bf16.mxu0 %v7101
    %7665 = vmatpush1.bf16.msra.mxu0 %v7100
    %7666 = vmatprep.subr.bf16.mxu0 %v7103
    %7667 = vmatpush1.bf16.msra.mxu0 %v7102
    %7668 = vmatprep.subr.bf16.mxu0 %v7105
    %7669 = vmatpush1.bf16.msra.mxu0 %v7104
    %7670 = vmatprep.subr.bf16.mxu0 0
    %7671 = vmatpush1.bf16.msra.mxu0 0
    %7672 = vmatprep.subr.bf16.mxu0 0
    %7673 = vmatpush1.bf16.msra.mxu0 0
    %7674 = vmatprep.subr.bf16.mxu0 0
    %7675 = vmatpush1.bf16.msra.mxu0 0
    %7676 = vmatprep.subr.bf16.mxu0 0
    %7677 = vmatpush1.bf16.msra.mxu0 0
    %7678 = vmatprep.subr.bf16.mxu0 0
    %7679 = vmatpush1.bf16.msra.mxu0 0
    %7680 = vmatprep.subr.bf16.mxu0 0
    %7681 = vmatpush1.bf16.msra.mxu0 0
    %7682 = vmatprep.subr.bf16.mxu0 0
    %7683 = vmatpush1.bf16.msra.mxu0 0
    %7684 = vmatprep.subr.bf16.mxu0 0
    %7685 = vmatpush1.bf16.msra.mxu0 0
    %7686 = vmatprep.mubr.bf16.mxu0 0
    %7687 = vmatmul.mubr.bf16.gmra.mrb[0].mxu0 %v6379
    %v7688 = vpop.f32.mrb[0].mxu0
    %v7689 = vadd.f32 %v7588, %v7688
    %v7690 = vpop.f32.mrb[0].mxu0
    %v7691 = vadd.f32 %v7590, %v7690
    %v7692 = vpop.f32.mrb[0].mxu0
    %v7693 = vadd.f32 %v7592, %v7692
    %v7694 = vpop.f32.mrb[0].mxu0
    %v7695 = vadd.f32 %v7594, %v7694
    %7696 = vmatprep.mubr.bf16.mxu0 0
    %7697 = vmatmul.mubr.bf16.gmra.mrb[0].mxu0 %v6380
    %v7698 = vpop.f32.mrb[0].mxu0
    %v7699 = vadd.f32 %v7598, %v7698
    %v7700 = vpop.f32.mrb[0].mxu0
    %v7701 = vadd.f32 %v7600, %v7700
    %v7702 = vpop.f32.mrb[0].mxu0
    %v7703 = vadd.f32 %v7602, %v7702
    %v7704 = vpop.f32.mrb[0].mxu0
    %v7705 = vadd.f32 %v7604, %v7704
    %7706 = vmatprep.mubr.bf16.mxu0 0
    %7707 = vmatmul.mubr.bf16.gmra.mrb[0].mxu0 %v6381
    %v7708 = vpop.f32.mrb[0].mxu0
    %v7709 = vadd.f32 %v7608, %v7708
    %v7710 = vpop.f32.mrb[0].mxu0
    %v7711 = vadd.f32 %v7610, %v7710
    %v7712 = vpop.f32.mrb[0].mxu0
    %v7713 = vadd.f32 %v7612, %v7712
    %v7714 = vpop.f32.mrb[0].mxu0
    %v7715 = vadd.f32 %v7614, %v7714
    %7716 = vmatprep.mubr.bf16.mxu0 0
    %7717 = vmatmul.mubr.bf16.gmra.mrb[0].mxu0 %v6382
    %v7718 = vpop.f32.mrb[0].mxu0
    %v7719 = vadd.f32 %v7618, %v7718
    %v7720 = vpop.f32.mrb[0].mxu0
    %v7721 = vadd.f32 %v7620, %v7720
    %v7722 = vpop.f32.mrb[0].mxu0
    %v7723 = vadd.f32 %v7622, %v7722
    %v7724 = vpop.f32.mrb[0].mxu0
    %v7725 = vadd.f32 %v7624, %v7724
    %7726 = vmatprep.mubr.bf16.mxu0 0
    %7727 = vmatmul.mubr.bf16.gmra.mrb[0].mxu0 %v6383
    %v7728 = vpop.f32.mrb[0].mxu0
    %v7729 = vadd.f32 %v7628, %v7728
    %v7730 = vpop.f32.mrb[0].mxu0
    %v7731 = vadd.f32 %v7630, %v7730
    %v7732 = vpop.f32.mrb[0].mxu0
    %v7733 = vadd.f32 %v7632, %v7732
    %v7734 = vpop.f32.mrb[0].mxu0
    %v7735 = vadd.f32 %v7634, %v7734
    %7736 = vmatprep.mubr.bf16.mxu0 0
    %7737 = vmatmul.mubr.bf16.gmra.mrb[0].mxu0 %v6384
    %v7738 = vpop.f32.mrb[0].mxu0
    %v7739 = vadd.f32 %v7638, %v7738
    %v7740 = vpop.f32.mrb[0].mxu0
    %v7741 = vadd.f32 %v7640, %v7740
    %v7742 = vpop.f32.mrb[0].mxu0
    %v7743 = vadd.f32 %v7642, %v7742
    %v7744 = vpop.f32.mrb[0].mxu0
    %v7745 = vadd.f32 %v7644, %v7744
    %7746 = vmatprep.mubr.bf16.mxu0 0
    %7747 = vmatmul.mubr.bf16.gmra.mrb[0].mxu0 %v6385
    %v7748 = vpop.f32.mrb[0].mxu0
    %v7749 = vadd.f32 %v7648, %v7748
    %v7750 = vpop.f32.mrb[0].mxu0
    %v7751 = vadd.f32 %v7650, %v7750
    %v7752 = vpop.f32.mrb[0].mxu0
    %v7753 = vpop.f32.mrb[0].mxu0
    %7754 = vdwg.mxu0
    %v7755 = vadd.f32 %v7689, %v7693
    %v7756 = vadd.f32 %v7755, %v7699
    %v7757 = vadd.f32 %v7756, %v7703
    %v7758 = vadd.f32 %v7757, %v7709
    %v7759 = vadd.f32 %v7758, %v7713
    %v7760 = vadd.f32 %v7759, %v7719
    %v7761 = vadd.f32 %v7760, %v7723
    %v7762 = vadd.f32 %v7761, %v7729
    %v7763 = vadd.f32 %v7762, %v7733
    %v7764 = vadd.f32 %v7763, %v7739
    %v7765 = vadd.f32 %v7764, %v7743
    %v7766 = vsel %vm2045, %v7749, 0.0
    %v7767 = vadd.f32 %v7765, %v7766
    %v7768 = vrot.slane %v7767, 4
    %v7769 = vadd.f32 %v7767, %v7768
    %v7770 = vrot.slane %v7769, 2
    %v7771 = vadd.f32 %v7769, %v7770
    %v7772 = vrot.slane %v7771, 1
    %v7773 = vadd.f32 %v7771, %v7772
    %v7774 = vadd.f32 %v7691, %v7695
    %v7775 = vadd.f32 %v7774, %v7701
    %v7776 = vadd.f32 %v7775, %v7705
    %v7777 = vadd.f32 %v7776, %v7711
    %v7778 = vadd.f32 %v7777, %v7715
    %v7779 = vadd.f32 %v7778, %v7721
    %v7780 = vadd.f32 %v7779, %v7725
    %v7781 = vadd.f32 %v7780, %v7731
    %v7782 = vadd.f32 %v7781, %v7735
    %v7783 = vadd.f32 %v7782, %v7741
    %v7784 = vadd.f32 %v7783, %v7745
    %v7785 = vsel %vm2045, %v7751, 0.0
    %v7786 = vadd.f32 %v7784, %v7785
    %v7787 = vrot.slane %v7786, 4
    %v7788 = vadd.f32 %v7786, %v7787
    %v7789 = vrot.slane %v7788, 2
    %v7790 = vadd.f32 %v7788, %v7789
    %v7791 = vrot.slane %v7790, 1
    %v7792 = vadd.f32 %v7790, %v7791
    %v7793 = vmul.f32 %v7689, %v7689
    %v7794 = vmul.f32 %v7691, %v7691
    %v7795 = vmul.f32 %v7693, %v7693
    %v7796 = vmul.f32 %v7695, %v7695
    %v7797 = vmul.f32 %v7699, %v7699
    %v7798 = vmul.f32 %v7701, %v7701
    %v7799 = vmul.f32 %v7703, %v7703
    %v7800 = vmul.f32 %v7705, %v7705
    %v7801 = vmul.f32 %v7709, %v7709
    %v7802 = vmul.f32 %v7711, %v7711
    %v7803 = vmul.f32 %v7713, %v7713
    %v7804 = vmul.f32 %v7715, %v7715
    %v7805 = vmul.f32 %v7719, %v7719
    %v7806 = vmul.f32 %v7721, %v7721
    %v7807 = vmul.f32 %v7723, %v7723
    %v7808 = vmul.f32 %v7725, %v7725
    %v7809 = vmul.f32 %v7729, %v7729
    %v7810 = vmul.f32 %v7731, %v7731
    %v7811 = vmul.f32 %v7733, %v7733
    %v7812 = vmul.f32 %v7735, %v7735
    %v7813 = vmul.f32 %v7739, %v7739
    %v7814 = vmul.f32 %v7741, %v7741
    %v7815 = vmul.f32 %v7743, %v7743
    %v7816 = vmul.f32 %v7745, %v7745
    %v7817 = vmul.f32 %v7749, %v7749
    %v7818 = vmul.f32 %v7751, %v7751
    %v7819 = vadd.f32 %v7793, %v7795
    %v7820 = vadd.f32 %v7819, %v7797
    %v7821 = vadd.f32 %v7820, %v7799
    %v7822 = vadd.f32 %v7821, %v7801
    %v7823 = vadd.f32 %v7822, %v7803
    %v7824 = vadd.f32 %v7823, %v7805
    %v7825 = vadd.f32 %v7824, %v7807
    %v7826 = vadd.f32 %v7825, %v7809
    %v7827 = vadd.f32 %v7826, %v7811
    %v7828 = vadd.f32 %v7827, %v7813
    %v7829 = vadd.f32 %v7828, %v7815
    %v7830 = vsel %vm2045, %v7817, 0.0
    %v7831 = vadd.f32 %v7829, %v7830
    %v7832 = vrot.slane %v7831, 4
    %v7833 = vadd.f32 %v7831, %v7832
    %v7834 = vrot.slane %v7833, 2
    %v7835 = vadd.f32 %v7833, %v7834
    %v7836 = vrot.slane %v7835, 1
    %v7837 = vadd.f32 %v7835, %v7836
    %v7838 = vadd.f32 %v7794, %v7796
    %v7839 = vadd.f32 %v7838, %v7798
    %v7840 = vadd.f32 %v7839, %v7800
    %v7841 = vadd.f32 %v7840, %v7802
    %v7842 = vadd.f32 %v7841, %v7804
    %v7843 = vadd.f32 %v7842, %v7806
    %v7844 = vadd.f32 %v7843, %v7808
    %v7845 = vadd.f32 %v7844, %v7810
    %v7846 = vadd.f32 %v7845, %v7812
    %v7847 = vadd.f32 %v7846, %v7814
    %v7848 = vadd.f32 %v7847, %v7816
    %v7849 = vsel %vm2045, %v7818, 0.0
    %v7850 = vadd.f32 %v7848, %v7849
    %v7851 = vrot.slane %v7850, 4
    %v7852 = vadd.f32 %v7850, %v7851
    %v7853 = vrot.slane %v7852, 2
    %v7854 = vadd.f32 %v7852, %v7853
    %v7855 = vrot.slane %v7854, 1
    %v7856 = vadd.f32 %v7854, %v7855
    %7858 = vrot.lane.b32.xlu0 %v7773, 64
    %v7859 = vpop.permute.xlu0 %7858
    %v7861 = vadd.f32 %v7773, %v7859
    %v7862 = vadd.f32 %v7861, %v7792
    %7864 = vrot.lane.b32.xlu0 %v7792, 64
    %v7865 = vpop.permute.xlu0 %7864
    %v7867 = vadd.f32 %v7862, %v7865
    %7869 = vrot.lane.b32.xlu0 %v7837, 64
    %v7870 = vpop.permute.xlu0 %7869
    %v7872 = vadd.f32 %v7837, %v7870
    %v7873 = vadd.f32 %v7872, %v7856
    %7875 = vrot.lane.b32.xlu0 %v7856, 64
    %v7876 = vpop.permute.xlu0 %7875
    %v7878 = vadd.f32 %v7873, %v7876
    %v7879 = vrcp.pop 392.0
    %v7880 = vmul.f32 %v7867, %v7879
    %v7881 = vmul.f32 %v7878, %v7879
    %v7882 = vmul.f32 %v7880, %v7880
    %v7883 = vsub.f32 %v7881, %v7882
    %v7884 = vadd.f32 %v7883, 1e-05
    %v7885 = vrsqrt.pop %v7884
    %v7886 = vld [vmem:[#allocation12] sm:$0x1]
    %v7887 = vmul.f32 %v7885, %v7886
    %v7888 = vld [vmem:[#allocation14] sm:$0x1]
    %v7889 = vmul.f32 %v7880, %v7887
    %v7890 = vsub.f32 %v7888, %v7889
    %7892 = vrot.lane.b32.xlu0 %v7887, 64
    %v7893 = vpop.permute.xlu0 %7892
    %vm7895 = vcmask 523264
    %v7896 = vsel %vm7895, %v7887, %v7893
    %v7898 = vlaneseq
    %v7899 = vshrl.u32 %v7898, 7
    %v7900 = vsub.s32 0, %v7899
    %v7901 = vrot.slane %v7890, %v7900
    %7902 = vrot.lane.b32.xlu0 %v7901, 64
    %v7903 = vpop.permute.xlu0 %7902
    %v7905 = vsel %vm7895, %v7890, %v7903
    %v7906 = vlaneseq
    %v7907 = vshrl.u32 %v7906, 7
    %v7908 = vsub.s32 0, %v7907
    %v7909 = vrot.slane %v7896, %v7908
    %v7910 = vmul.f32 %v7689, %v7909
    %v7911 = vmul.f32 %v7691, %v7909
    %v7912 = vmul.f32 %v7693, %v7909
    %v7913 = vmul.f32 %v7695, %v7909
    %v7914 = vmul.f32 %v7699, %v7909
    %v7915 = vmul.f32 %v7701, %v7909
    %v7916 = vmul.f32 %v7703, %v7909
    %v7917 = vmul.f32 %v7705, %v7909
    %v7918 = vmul.f32 %v7709, %v7909
    %v7919 = vmul.f32 %v7711, %v7909
    %v7920 = vmul.f32 %v7713, %v7909
    %v7921 = vmul.f32 %v7715, %v7909
    %v7922 = vmul.f32 %v7719, %v7909
    %v7923 = vmul.f32 %v7721, %v7909
    %v7924 = vmul.f32 %v7723, %v7909
    %v7925 = vmul.f32 %v7725, %v7909
    %v7926 = vmul.f32 %v7729, %v7909
    %v7927 = vmul.f32 %v7731, %v7909
    %v7928 = vmul.f32 %v7733, %v7909
    %v7929 = vmul.f32 %v7735, %v7909
    %v7930 = vmul.f32 %v7739, %v7909
    %v7931 = vmul.f32 %v7741, %v7909
    %v7932 = vmul.f32 %v7743, %v7909
    %v7933 = vmul.f32 %v7745, %v7909
    %v7934 = vmul.f32 %v7749, %v7909
    %v7935 = vmul.f32 %v7751, %v7909
    %v7936 = vlaneseq
    %v7937 = vshrl.u32 %v7936, 7
    %v7938 = vsub.s32 0, %v7937
    %v7939 = vrot.slane %v7905, %v7938
    %v7940 = vadd.f32 %v7910, %v7939
    %v7941 = vadd.f32 %v7911, %v7939
    %v7942 = vadd.f32 %v7912, %v7939
    %v7943 = vadd.f32 %v7913, %v7939
    %v7944 = vadd.f32 %v7914, %v7939
    %v7945 = vadd.f32 %v7915, %v7939
    %v7946 = vadd.f32 %v7916, %v7939
    %v7947 = vadd.f32 %v7917, %v7939
    %v7948 = vadd.f32 %v7918, %v7939
    %v7949 = vadd.f32 %v7919, %v7939
    %v7950 = vadd.f32 %v7920, %v7939
    %v7951 = vadd.f32 %v7921, %v7939
    %v7952 = vadd.f32 %v7922, %v7939
    %v7953 = vadd.f32 %v7923, %v7939
    %v7954 = vadd.f32 %v7924, %v7939
    %v7955 = vadd.f32 %v7925, %v7939
    %v7956 = vadd.f32 %v7926, %v7939
    %v7957 = vadd.f32 %v7927, %v7939
    %v7958 = vadd.f32 %v7928, %v7939
    %v7959 = vadd.f32 %v7929, %v7939
    %v7960 = vadd.f32 %v7930, %v7939
    %v7961 = vadd.f32 %v7931, %v7939
    %v7962 = vadd.f32 %v7932, %v7939
    %v7963 = vadd.f32 %v7933, %v7939
    %v7964 = vadd.f32 %v7934, %v7939
    %v7965 = vadd.f32 %v7935, %v7939
    %v7966 = vmax.f32 %v7940, 0.0
    %v7967 = vmax.f32 %v7941, 0.0
    %v7968 = vmax.f32 %v7942, 0.0
    %v7969 = vmax.f32 %v7943, 0.0
    %v7970 = vmax.f32 %v7944, 0.0
    %v7971 = vmax.f32 %v7945, 0.0
    %v7972 = vmax.f32 %v7946, 0.0
    %v7973 = vmax.f32 %v7947, 0.0
    %v7974 = vmax.f32 %v7948, 0.0
    %v7975 = vmax.f32 %v7949, 0.0
    %v7976 = vmax.f32 %v7950, 0.0
    %v7977 = vmax.f32 %v7951, 0.0
    %v7978 = vmax.f32 %v7952, 0.0
    %v7979 = vmax.f32 %v7953, 0.0
    %v7980 = vmax.f32 %v7954, 0.0
    %v7981 = vmax.f32 %v7955, 0.0
    %v7982 = vmax.f32 %v7956, 0.0
    %v7983 = vmax.f32 %v7957, 0.0
    %v7984 = vmax.f32 %v7958, 0.0
    %v7985 = vmax.f32 %v7959, 0.0
    %v7986 = vmax.f32 %v7960, 0.0
    %v7987 = vmax.f32 %v7961, 0.0
    %v7988 = vmax.f32 %v7962, 0.0
    %v7989 = vmax.f32 %v7963, 0.0
    %v7990 = vmax.f32 %v7964, 0.0
    %v7991 = vmax.f32 %v7965, 0.0
    %7992 = vst [vmem:[#allocation3] sm:$0xf] 0.0
    %7993 = vst [vmem:[#allocation3 + $0x4] sm:$0xf] 0.0
    %7994 = vst [vmem:[#allocation3 + $0x8] sm:$0xf] 0.0
    %7995 = vst [vmem:[#allocation3 + $0xc] sm:$0xf] 0.0
    %7996 = vst [vmem:[#allocation3 + $0x10] sm:$0xf] 0.0
    %7997 = vst [vmem:[#allocation3 + $0x14] sm:$0xf] 0.0
    %7998 = vst [vmem:[#allocation3 + $0x18] sm:$0xf] 0.0
    %7999 = vst [vmem:[#allocation3 + $0x1c] sm:$0xf] 0.0
    %8000 = vst [vmem:[#allocation3 + $0x20] sm:$0xf] 0.0
    %8001 = vst [vmem:[#allocation3 + $0x24] sm:$0xf] 0.0
    %8002 = vst [vmem:[#allocation3 + $0x28] sm:$0xf] 0.0
    %8003 = vst [vmem:[#allocation3 + $0x2c] sm:$0xf] 0.0
    %8004 = vst [vmem:[#allocation3 + $0x30] sm:$0xf] 0.0
    %8005 = vst [vmem:[#allocation3 + $0x34] sm:$0xf] 0.0
    %8006 = vst [vmem:[#allocation3 + $0x38] sm:$0xf] 0.0
    %8007 = vst [vmem:[#allocation3 + $0x3c] sm:$0xf] 0.0
    %8008 = vst [vmem:[#allocation3 + $0x40] sm:$0xf] 0.0
    %8009 = vst [vmem:[#allocation3 + $0x44] sm:$0xf] 0.0
    %8010 = vst [vmem:[#allocation3 + $0x48] sm:$0xf] 0.0
    %8011 = vst [vmem:[#allocation3 + $0x4c] sm:$0xf] 0.0
    %8012 = vst [vmem:[#allocation3 + $0x50] sm:$0xf] 0.0
    %8013 = vst [vmem:[#allocation3 + $0x54] sm:$0xf] 0.0
    %8014 = vst [vmem:[#allocation3 + $0x58] sm:$0xf] 0.0
    %8015 = vst [vmem:[#allocation3 + $0x5c] sm:$0xf] 0.0
    %8016 = vst [vmem:[#allocation3 + $0x60] sm:$0xf] 0.0
    %8017 = vst [vmem:[#allocation3 + $0x64] sm:$0xf] 0.0
    %8018 = vst [vmem:[#allocation3 + $0x68] sm:$0xf] 0.0
    %8019 = vst [vmem:[#allocation3 + $0x6c] sm:$0xf] 0.0
    %8020 = vst [vmem:[#allocation3 + $0x70] sm:$0xf] 0.0
    %8021 = vst [vmem:[#allocation3 + $0x74] sm:$0xf] 0.0
    %8022 = vst [vmem:[#allocation3 + $0x78] sm:$0xf] 0.0
    %8023 = vst [vmem:[#allocation3 + $0x7c] sm:$0xf] 0.0
    %8024 = vst [vmem:[#allocation3 + $0x80] sm:$0xf] 0.0
    %8025 = vst [vmem:[#allocation3 + $0x84] sm:$0xf] 0.0
    %8026 = vst [vmem:[#allocation3 + $0x88] sm:$0xf] 0.0
    %8027 = vst [vmem:[#allocation3 + $0x8c] sm:$0xf] 0.0
    %8028 = vst [vmem:[#allocation3 + $0x90] sm:$0xf] 0.0
    %8029 = vst [vmem:[#allocation3 + $0x94] sm:$0xf] 0.0
    %8030 = vst [vmem:[#allocation3 + $0x98] sm:$0xf] 0.0
    %8031 = vst [vmem:[#allocation3 + $0x9c] sm:$0xf] 0.0
    %8032 = vst [vmem:[#allocation3 + $0xa0] sm:$0xf] 0.0
    %8033 = vst [vmem:[#allocation3 + $0xa4] sm:$0xf] 0.0
    %8034 = vst [vmem:[#allocation3 + $0xa8] sm:$0xf] 0.0
    %8035 = vst [vmem:[#allocation3 + $0xac] sm:$0xf] 0.0
    %8036 = vst [vmem:[#allocation3 + $0xb0] sm:$0xf] 0.0
    %8037 = vst [vmem:[#allocation3 + $0xb4] sm:$0xf] 0.0
    %8038 = vst [vmem:[#allocation3 + $0xb8] sm:$0xf] 0.0
    %8039 = vst [vmem:[#allocation3 + $0xbc] sm:$0xf] 0.0
    %8040 = vst [vmem:[#allocation3 + $0xc0] sm:$0xf] 0.0
    %8041 = vst [vmem:[#allocation3 + $0xc4] sm:$0xf] 0.0
    %8042 = vst [vmem:[#allocation3 + $0xc8] sm:$0xf] 0.0
    %8043 = vst [vmem:[#allocation3 + $0xcc] sm:$0xf] 0.0
    %8044 = vst [vmem:[#allocation3 + $0xd0] sm:$0xf] 0.0
    %8045 = vst [vmem:[#allocation3 + $0xd4] sm:$0xf] 0.0
    %8046 = vst [vmem:[#allocation3 + $0xd8] sm:$0xf] 0.0
    %8047 = vst [vmem:[#allocation3 + $0xdc] sm:$0xf] 0.0
    %8048 = vst [vmem:[#allocation3 + $0xe0] sm:$0xf] 0.0
    %8049 = vst [vmem:[#allocation3 + $0xe4] sm:$0xf] 0.0
    %8050 = vst [vmem:[#allocation3 + $0xe8] sm:$0xf] 0.0
    %8051 = vst [vmem:[#allocation3 + $0xec] sm:$0xf] 0.0
    %8052 = vst [vmem:[#allocation3 + $0xf0] sm:$0xf] 0.0
    %8053 = vst [vmem:[#allocation3 + $0xf4] sm:$0xf] 0.0
    %8054 = vst [vmem:[#allocation3 + $0xf8] sm:$0xf] 0.0
    %8055 = vst [vmem:[#allocation3 + $0xfc] sm:$0xf] 0.0
    %8056 = vst [vmem:[#allocation3 + $0x100] sm:$0xf] 0.0
    %8057 = vst [vmem:[#allocation3 + $0x104] sm:$0xf] 0.0
    %8058 = vst [vmem:[#allocation3 + $0x108] sm:$0xf] 0.0
    %8059 = vst [vmem:[#allocation3 + $0x10c] sm:$0xf] 0.0
    %8060 = vst [vmem:[#allocation3 + $0x110] sm:$0xf] 0.0
    %8061 = vst [vmem:[#allocation3 + $0x114] sm:$0xf] 0.0
    %8062 = vst [vmem:[#allocation3 + $0x118] sm:$0xf] 0.0
    %8063 = vst [vmem:[#allocation3 + $0x11c] sm:$0xf] 0.0
    %8064 = vst [vmem:[#allocation3 + $0x120] sm:$0xf] 0.0
    %8065 = vst [vmem:[#allocation3 + $0x124] sm:$0xf] 0.0
    %8066 = vst [vmem:[#allocation3 + $0x128] sm:$0xf] 0.0
    %8067 = vst [vmem:[#allocation3 + $0x12c] sm:$0xf] 0.0
    %8068 = vst [vmem:[#allocation3 + $0x130] sm:$0xf] 0.0
    %8069 = vst [vmem:[#allocation3 + $0x134] sm:$0xf] 0.0
    %8070 = vst [vmem:[#allocation3 + $0x138] sm:$0xf] 0.0
    %8071 = vst [vmem:[#allocation3 + $0x13c] sm:$0xf] 0.0
    %8072 = vst [vmem:[#allocation3 + $0x140] sm:$0xf] 0.0
    %v8075 = vcombine.low %v7966, %v7967
    %v8077 = vunpack.c.l.s4 1983009808
    %v8078 = vunpack.c.0.s8 %v8077
    %v8079 = vlaneseq
    %v8080 = vshrl.u32 %v8079, 7
    %v8081 = vsub.s32 %v8078, %v8080
    %v8082 = vrot.slane %v8075, %v8081
    %s8084 = scalar_lea.vmem [#allocation3], 40
    %8085 = vst [vmem:[%s8084] sm:$0xf] %v8082
    %v8086 = vcombine.high %v8082, %v8082
    %s8088 = scalar_lea.vmem [#allocation3], 44
    %8089 = vst [vmem:[%s8088] sm:$0xf] %v8086
    %v8090 = vcombine.high %v7966, %v7967
    %v8092 = vunpack.c.l.s4 1983009808
    %v8093 = vunpack.c.0.s8 %v8092
    %v8094 = vlaneseq
    %v8095 = vshrl.u32 %v8094, 7
    %v8096 = vsub.s32 %v8093, %v8095
    %v8097 = vrot.slane %v8090, %v8096
    %s8099 = scalar_lea.vmem [#allocation3], 48
    %8100 = vst [vmem:[%s8099] sm:$0xf] %v8097
    %v8101 = vcombine.high %v8097, %v8097
    %s8103 = scalar_lea.vmem [#allocation3], 52
    %8104 = vst [vmem:[%s8103] sm:$0xf] %v8101
    %v8107 = vcombine.low %v7968, %v7969
    %v8109 = vunpack.c.l.s4 1983009808
    %v8110 = vunpack.c.0.s8 %v8109
    %v8111 = vlaneseq
    %v8112 = vshrl.u32 %v8111, 7
    %v8113 = vsub.s32 %v8110, %v8112
    %v8114 = vrot.slane %v8107, %v8113
    %s8116 = scalar_lea.vmem [#allocation3], 56
    %8117 = vst [vmem:[%s8116] sm:$0xf] %v8114
    %v8118 = vcombine.high %v8114, %v8114
    %s8120 = scalar_lea.vmem [#allocation3], 60
    %8121 = vst [vmem:[%s8120] sm:$0xf] %v8118
    %v8122 = vcombine.high %v7968, %v7969
    %v8124 = vunpack.c.l.s4 1983009808
    %v8125 = vunpack.c.0.s8 %v8124
    %v8126 = vlaneseq
    %v8127 = vshrl.u32 %v8126, 7
    %v8128 = vsub.s32 %v8125, %v8127
    %v8129 = vrot.slane %v8122, %v8128
    %s8131 = scalar_lea.vmem [#allocation3], 64
    %8132 = vst [vmem:[%s8131] sm:$0xf] %v8129
    %v8133 = vcombine.high %v8129, %v8129
    %s8135 = scalar_lea.vmem [#allocation3], 76
    %8136 = vst [vmem:[%s8135] sm:$0xf] %v8133
    %v8139 = vcombine.low %v7970, %v7971
    %v8141 = vunpack.c.l.s4 1983009808
    %v8142 = vunpack.c.0.s8 %v8141
    %v8143 = vlaneseq
    %v8144 = vshrl.u32 %v8143, 7
    %v8145 = vsub.s32 %v8142, %v8144
    %v8146 = vrot.slane %v8139, %v8145
    %s8148 = scalar_lea.vmem [#allocation3], 80
    %8149 = vst [vmem:[%s8148] sm:$0xf] %v8146
    %v8150 = vcombine.high %v8146, %v8146
    %s8152 = scalar_lea.vmem [#allocation3], 84
    %8153 = vst [vmem:[%s8152] sm:$0xf] %v8150
    %v8154 = vcombine.high %v7970, %v7971
    %v8156 = vunpack.c.l.s4 1983009808
    %v8157 = vunpack.c.0.s8 %v8156
    %v8158 = vlaneseq
    %v8159 = vshrl.u32 %v8158, 7
    %v8160 = vsub.s32 %v8157, %v8159
    %v8161 = vrot.slane %v8154, %v8160
    %s8163 = scalar_lea.vmem [#allocation3], 88
    %8164 = vst [vmem:[%s8163] sm:$0xf] %v8161
    %v8165 = vcombine.high %v8161, %v8161
    %s8167 = scalar_lea.vmem [#allocation3], 92
    %8168 = vst [vmem:[%s8167] sm:$0xf] %v8165
    %v8171 = vcombine.low %v7972, %v7973
    %v8173 = vunpack.c.l.s4 1983009808
    %v8174 = vunpack.c.0.s8 %v8173
    %v8175 = vlaneseq
    %v8176 = vshrl.u32 %v8175, 7
    %v8177 = vsub.s32 %v8174, %v8176
    %v8178 = vrot.slane %v8171, %v8177
    %s8180 = scalar_lea.vmem [#allocation3], 96
    %8181 = vst [vmem:[%s8180] sm:$0xf] %v8178
    %v8182 = vcombine.high %v8178, %v8178
    %s8184 = scalar_lea.vmem [#allocation3], 100
    %8185 = vst [vmem:[%s8184] sm:$0xf] %v8182
    %v8186 = vcombine.high %v7972, %v7973
    %v8188 = vunpack.c.l.s4 1983009808
    %v8189 = vunpack.c.0.s8 %v8188
    %v8190 = vlaneseq
    %v8191 = vshrl.u32 %v8190, 7
    %v8192 = vsub.s32 %v8189, %v8191
    %v8193 = vrot.slane %v8186, %v8192
    %s8195 = scalar_lea.vmem [#allocation3], 112
    %8196 = vst [vmem:[%s8195] sm:$0xf] %v8193
    %v8197 = vcombine.high %v8193, %v8193
    %s8199 = scalar_lea.vmem [#allocation3], 116
    %8200 = vst [vmem:[%s8199] sm:$0xf] %v8197
    %v8203 = vcombine.low %v7974, %v7975
    %v8205 = vunpack.c.l.s4 1983009808
    %v8206 = vunpack.c.0.s8 %v8205
    %v8207 = vlaneseq
    %v8208 = vshrl.u32 %v8207, 7
    %v8209 = vsub.s32 %v8206, %v8208
    %v8210 = vrot.slane %v8203, %v8209
    %s8212 = scalar_lea.vmem [#allocation3], 120
    %8213 = vst [vmem:[%s8212] sm:$0xf] %v8210
    %v8214 = vcombine.high %v8210, %v8210
    %s8216 = scalar_lea.vmem [#allocation3], 124
    %8217 = vst [vmem:[%s8216] sm:$0xf] %v8214
    %v8218 = vcombine.high %v7974, %v7975
    %v8220 = vunpack.c.l.s4 1983009808
    %v8221 = vunpack.c.0.s8 %v8220
    %v8222 = vlaneseq
    %v8223 = vshrl.u32 %v8222, 7
    %v8224 = vsub.s32 %v8221, %v8223
    %v8225 = vrot.slane %v8218, %v8224
    %s8227 = scalar_lea.vmem [#allocation3], 128
    %8228 = vst [vmem:[%s8227] sm:$0xf] %v8225
    %v8229 = vcombine.high %v8225, %v8225
    %s8231 = scalar_lea.vmem [#allocation3], 132
    %8232 = vst [vmem:[%s8231] sm:$0xf] %v8229
    %v8235 = vcombine.low %v7976, %v7977
    %v8237 = vunpack.c.l.s4 1983009808
    %v8238 = vunpack.c.0.s8 %v8237
    %v8239 = vlaneseq
    %v8240 = vshrl.u32 %v8239, 7
    %v8241 = vsub.s32 %v8238, %v8240
    %v8242 = vrot.slane %v8235, %v8241
    %s8244 = scalar_lea.vmem [#allocation3], 136
    %8245 = vst [vmem:[%s8244] sm:$0xf] %v8242
    %v8246 = vcombine.high %v8242, %v8242
    %s8248 = scalar_lea.vmem [#allocation3], 148
    %8249 = vst [vmem:[%s8248] sm:$0xf] %v8246
    %v8250 = vcombine.high %v7976, %v7977
    %v8252 = vunpack.c.l.s4 1983009808
    %v8253 = vunpack.c.0.s8 %v8252
    %v8254 = vlaneseq
    %v8255 = vshrl.u32 %v8254, 7
    %v8256 = vsub.s32 %v8253, %v8255
    %v8257 = vrot.slane %v8250, %v8256
    %s8259 = scalar_lea.vmem [#allocation3], 152
    %8260 = vst [vmem:[%s8259] sm:$0xf] %v8257
    %v8261 = vcombine.high %v8257, %v8257
    %s8263 = scalar_lea.vmem [#allocation3], 156
    %8264 = vst [vmem:[%s8263] sm:$0xf] %v8261
    %v8267 = vcombine.low %v7978, %v7979
    %v8269 = vunpack.c.l.s4 1983009808
    %v8270 = vunpack.c.0.s8 %v8269
    %v8271 = vlaneseq
    %v8272 = vshrl.u32 %v8271, 7
    %v8273 = vsub.s32 %v8270, %v8272
    %v8274 = vrot.slane %v8267, %v8273
    %s8276 = scalar_lea.vmem [#allocation3], 160
    %8277 = vst [vmem:[%s8276] sm:$0xf] %v8274
    %v8278 = vcombine.high %v8274, %v8274
    %s8280 = scalar_lea.vmem [#allocation3], 164
    %8281 = vst [vmem:[%s8280] sm:$0xf] %v8278
    %v8282 = vcombine.high %v7978, %v7979
    %v8284 = vunpack.c.l.s4 1983009808
    %v8285 = vunpack.c.0.s8 %v8284
    %v8286 = vlaneseq
    %v8287 = vshrl.u32 %v8286, 7
    %v8288 = vsub.s32 %v8285, %v8287
    %v8289 = vrot.slane %v8282, %v8288
    %s8291 = scalar_lea.vmem [#allocation3], 168
    %8292 = vst [vmem:[%s8291] sm:$0xf] %v8289
    %v8293 = vcombine.high %v8289, %v8289
    %s8295 = scalar_lea.vmem [#allocation3], 172
    %8296 = vst [vmem:[%s8295] sm:$0xf] %v8293
    %v8299 = vcombine.low %v7980, %v7981
    %v8301 = vunpack.c.l.s4 1983009808
    %v8302 = vunpack.c.0.s8 %v8301
    %v8303 = vlaneseq
    %v8304 = vshrl.u32 %v8303, 7
    %v8305 = vsub.s32 %v8302, %v8304
    %v8306 = vrot.slane %v8299, %v8305
    %s8308 = scalar_lea.vmem [#allocation3], 184
    %8309 = vst [vmem:[%s8308] sm:$0xf] %v8306
    %v8310 = vcombine.high %v8306, %v8306
    %s8312 = scalar_lea.vmem [#allocation3], 188
    %8313 = vst [vmem:[%s8312] sm:$0xf] %v8310
    %v8314 = vcombine.high %v7980, %v7981
    %v8316 = vunpack.c.l.s4 1983009808
    %v8317 = vunpack.c.0.s8 %v8316
    %v8318 = vlaneseq
    %v8319 = vshrl.u32 %v8318, 7
    %v8320 = vsub.s32 %v8317, %v8319
    %v8321 = vrot.slane %v8314, %v8320
    %s8323 = scalar_lea.vmem [#allocation3], 192
    %8324 = vst [vmem:[%s8323] sm:$0xf] %v8321
    %v8325 = vcombine.high %v8321, %v8321
    %s8327 = scalar_lea.vmem [#allocation3], 196
    %8328 = vst [vmem:[%s8327] sm:$0xf] %v8325
    %v8331 = vcombine.low %v7982, %v7983
    %v8333 = vunpack.c.l.s4 1983009808
    %v8334 = vunpack.c.0.s8 %v8333
    %v8335 = vlaneseq
    %v8336 = vshrl.u32 %v8335, 7
    %v8337 = vsub.s32 %v8334, %v8336
    %v8338 = vrot.slane %v8331, %v8337
    %s8340 = scalar_lea.vmem [#allocation3], 200
    %8341 = vst [vmem:[%s8340] sm:$0xf] %v8338
    %v8342 = vcombine.high %v8338, %v8338
    %s8344 = scalar_lea.vmem [#allocation3], 204
    %8345 = vst [vmem:[%s8344] sm:$0xf] %v8342
    %v8346 = vcombine.high %v7982, %v7983
    %v8348 = vunpack.c.l.s4 1983009808
    %v8349 = vunpack.c.0.s8 %v8348
    %v8350 = vlaneseq
    %v8351 = vshrl.u32 %v8350, 7
    %v8352 = vsub.s32 %v8349, %v8351
    %v8353 = vrot.slane %v8346, %v8352
    %s8355 = scalar_lea.vmem [#allocation3], 208
    %8356 = vst [vmem:[%s8355] sm:$0xf] %v8353
    %v8357 = vcombine.high %v8353, %v8353
    %s8359 = scalar_lea.vmem [#allocation3], 220
    %8360 = vst [vmem:[%s8359] sm:$0xf] %v8357
    %v8363 = vcombine.low %v7984, %v7985
    %v8365 = vunpack.c.l.s4 1983009808
    %v8366 = vunpack.c.0.s8 %v8365
    %v8367 = vlaneseq
    %v8368 = vshrl.u32 %v8367, 7
    %v8369 = vsub.s32 %v8366, %v8368
    %v8370 = vrot.slane %v8363, %v8369
    %s8372 = scalar_lea.vmem [#allocation3], 224
    %8373 = vst [vmem:[%s8372] sm:$0xf] %v8370
    %v8374 = vcombine.high %v8370, %v8370
    %s8376 = scalar_lea.vmem [#allocation3], 228
    %8377 = vst [vmem:[%s8376] sm:$0xf] %v8374
    %v8378 = vcombine.high %v7984, %v7985
    %v8380 = vunpack.c.l.s4 1983009808
    %v8381 = vunpack.c.0.s8 %v8380
    %v8382 = vlaneseq
    %v8383 = vshrl.u32 %v8382, 7
    %v8384 = vsub.s32 %v8381, %v8383
    %v8385 = vrot.slane %v8378, %v8384
    %s8387 = scalar_lea.vmem [#allocation3], 232
    %8388 = vst [vmem:[%s8387] sm:$0xf] %v8385
    %v8389 = vcombine.high %v8385, %v8385
    %s8391 = scalar_lea.vmem [#allocation3], 236
    %8392 = vst [vmem:[%s8391] sm:$0xf] %v8389
    %v8395 = vcombine.low %v7986, %v7987
    %v8397 = vunpack.c.l.s4 1983009808
    %v8398 = vunpack.c.0.s8 %v8397
    %v8399 = vlaneseq
    %v8400 = vshrl.u32 %v8399, 7
    %v8401 = vsub.s32 %v8398, %v8400
    %v8402 = vrot.slane %v8395, %v8401
    %s8404 = scalar_lea.vmem [#allocation3], 240
    %8405 = vst [vmem:[%s8404] sm:$0xf] %v8402
    %v8406 = vcombine.high %v8402, %v8402
    %s8408 = scalar_lea.vmem [#allocation3], 244
    %8409 = vst [vmem:[%s8408] sm:$0xf] %v8406
    %v8410 = vcombine.high %v7986, %v7987
    %v8412 = vunpack.c.l.s4 1983009808
    %v8413 = vunpack.c.0.s8 %v8412
    %v8414 = vlaneseq
    %v8415 = vshrl.u32 %v8414, 7
    %v8416 = vsub.s32 %v8413, %v8415
    %v8417 = vrot.slane %v8410, %v8416
    %s8419 = scalar_lea.vmem [#allocation3], 256
    %8420 = vst [vmem:[%s8419] sm:$0xf] %v8417
    %v8421 = vcombine.high %v8417, %v8417
    %s8423 = scalar_lea.vmem [#allocation3], 260
    %8424 = vst [vmem:[%s8423] sm:$0xf] %v8421
    %v8427 = vcombine.low %v7988, %v7989
    %v8429 = vunpack.c.l.s4 1983009808
    %v8430 = vunpack.c.0.s8 %v8429
    %v8431 = vlaneseq
    %v8432 = vshrl.u32 %v8431, 7
    %v8433 = vsub.s32 %v8430, %v8432
    %v8434 = vrot.slane %v8427, %v8433
    %s8436 = scalar_lea.vmem [#allocation3], 264
    %8437 = vst [vmem:[%s8436] sm:$0xf] %v8434
    %v8438 = vcombine.high %v8434, %v8434
    %s8440 = scalar_lea.vmem [#allocation3], 268
    %8441 = vst [vmem:[%s8440] sm:$0xf] %v8438
    %v8442 = vcombine.high %v7988, %v7989
    %v8444 = vunpack.c.l.s4 1983009808
    %v8445 = vunpack.c.0.s8 %v8444
    %v8446 = vlaneseq
    %v8447 = vshrl.u32 %v8446, 7
    %v8448 = vsub.s32 %v8445, %v8447
    %v8449 = vrot.slane %v8442, %v8448
    %s8451 = scalar_lea.vmem [#allocation3], 272
    %8452 = vst [vmem:[%s8451] sm:$0xf] %v8449
    %v8453 = vcombine.high %v8449, %v8449
    %s8455 = scalar_lea.vmem [#allocation3], 276
    %8456 = vst [vmem:[%s8455] sm:$0xf] %v8453
    %v8459 = vcombine.low %v7990, %v7991
    %v8461 = vunpack.c.l.s4 1983009808
    %v8462 = vunpack.c.0.s8 %v8461
    %v8463 = vlaneseq
    %v8464 = vshrl.u32 %v8463, 7
    %v8465 = vsub.s32 %v8462, %v8464
    %v8466 = vrot.slane %v8459, %v8465
    %s8468 = scalar_lea.vmem [#allocation3], 280
    %8469 = vst [vmem:[%s8468] sm:$0xf] %v8466
    %v8470 = vld [vmem:[#allocation3] sm:$0xf]
    %v8471 = vld [vmem:[#allocation3 + $0x4] sm:$0xf]
    %v8472 = vld [vmem:[#allocation3 + $0x8] sm:$0xf]
    %v8473 = vld [vmem:[#allocation3 + $0xc] sm:$0xf]
    %v8474 = vld [vmem:[#allocation3 + $0x10] sm:$0xf]
    %v8475 = vld [vmem:[#allocation3 + $0x14] sm:$0xf]
    %v8476 = vld [vmem:[#allocation3 + $0x18] sm:$0xf]
    %v8477 = vld [vmem:[#allocation3 + $0x1c] sm:$0xf]
    %v8478 = vld [vmem:[#allocation3 + $0x20] sm:$0xf]
    %v8479 = vld [vmem:[#allocation3 + $0x24] sm:$0xf]
    %v8480 = vld [vmem:[#allocation3 + $0x28] sm:$0xf]
    %v8481 = vld [vmem:[#allocation3 + $0x2c] sm:$0xf]
    %v8482 = vld [vmem:[#allocation3 + $0x30] sm:$0xf]
    %v8483 = vld [vmem:[#allocation3 + $0x34] sm:$0xf]
    %v8484 = vld [vmem:[#allocation3 + $0x38] sm:$0xf]
    %v8485 = vld [vmem:[#allocation3 + $0x3c] sm:$0xf]
    %v8486 = vld [vmem:[#allocation3 + $0x40] sm:$0xf]
    %v8487 = vld [vmem:[#allocation3 + $0x44] sm:$0xf]
    %v8488 = vld [vmem:[#allocation3 + $0x48] sm:$0xf]
    %v8489 = vld [vmem:[#allocation3 + $0x4c] sm:$0xf]
    %v8490 = vld [vmem:[#allocation3 + $0x50] sm:$0xf]
    %v8491 = vld [vmem:[#allocation3 + $0x54] sm:$0xf]
    %v8492 = vld [vmem:[#allocation3 + $0x58] sm:$0xf]
    %v8493 = vld [vmem:[#allocation3 + $0x5c] sm:$0xf]
    %v8494 = vld [vmem:[#allocation3 + $0x60] sm:$0xf]
    %v8495 = vld [vmem:[#allocation3 + $0x64] sm:$0xf]
    %v8496 = vld [vmem:[#allocation3 + $0x68] sm:$0xf]
    %v8497 = vld [vmem:[#allocation3 + $0x6c] sm:$0xf]
    %v8498 = vld [vmem:[#allocation3 + $0x70] sm:$0xf]
    %v8499 = vld [vmem:[#allocation3 + $0x74] sm:$0xf]
    %v8500 = vld [vmem:[#allocation3 + $0x78] sm:$0xf]
    %v8501 = vld [vmem:[#allocation3 + $0x7c] sm:$0xf]
    %v8502 = vld [vmem:[#allocation3 + $0x80] sm:$0xf]
    %v8503 = vld [vmem:[#allocation3 + $0x84] sm:$0xf]
    %v8504 = vld [vmem:[#allocation3 + $0x88] sm:$0xf]
    %v8505 = vld [vmem:[#allocation3 + $0x8c] sm:$0xf]
    %v8506 = vld [vmem:[#allocation3 + $0x90] sm:$0xf]
    %v8507 = vld [vmem:[#allocation3 + $0x94] sm:$0xf]
    %v8508 = vld [vmem:[#allocation3 + $0x98] sm:$0xf]
    %v8509 = vld [vmem:[#allocation3 + $0x9c] sm:$0xf]
    %v8510 = vld [vmem:[#allocation3 + $0xa0] sm:$0xf]
    %v8511 = vld [vmem:[#allocation3 + $0xa4] sm:$0xf]
    %v8512 = vld [vmem:[#allocation3 + $0xa8] sm:$0xf]
    %v8513 = vld [vmem:[#allocation3 + $0xac] sm:$0xf]
    %v8514 = vld [vmem:[#allocation3 + $0xb0] sm:$0xf]
    %v8515 = vld [vmem:[#allocation3 + $0xb4] sm:$0xf]
    %v8516 = vld [vmem:[#allocation3 + $0xb8] sm:$0xf]
    %v8517 = vld [vmem:[#allocation3 + $0xbc] sm:$0xf]
    %v8518 = vld [vmem:[#allocation3 + $0xc0] sm:$0xf]
    %v8519 = vld [vmem:[#allocation3 + $0xc4] sm:$0xf]
    %v8520 = vld [vmem:[#allocation3 + $0xc8] sm:$0xf]
    %v8521 = vld [vmem:[#allocation3 + $0xcc] sm:$0xf]
    %v8522 = vld [vmem:[#allocation3 + $0xd0] sm:$0xf]
    %v8523 = vld [vmem:[#allocation3 + $0xd4] sm:$0xf]
    %v8524 = vld [vmem:[#allocation3 + $0xd8] sm:$0xf]
    %v8525 = vld [vmem:[#allocation3 + $0xdc] sm:$0xf]
    %v8526 = vld [vmem:[#allocation3 + $0xe0] sm:$0xf]
    %v8527 = vld [vmem:[#allocation3 + $0xe4] sm:$0xf]
    %v8528 = vld [vmem:[#allocation3 + $0xe8] sm:$0xf]
    %v8529 = vld [vmem:[#allocation3 + $0xec] sm:$0xf]
    %v8530 = vld [vmem:[#allocation3 + $0xf0] sm:$0xf]
    %v8531 = vld [vmem:[#allocation3 + $0xf4] sm:$0xf]
    %v8532 = vld [vmem:[#allocation3 + $0xf8] sm:$0xf]
    %v8533 = vld [vmem:[#allocation3 + $0xfc] sm:$0xf]
    %v8534 = vld [vmem:[#allocation3 + $0x100] sm:$0xf]
    %v8535 = vld [vmem:[#allocation3 + $0x104] sm:$0xf]
    %v8536 = vld [vmem:[#allocation3 + $0x108] sm:$0xf]
    %v8537 = vld [vmem:[#allocation3 + $0x10c] sm:$0xf]
    %v8538 = vld [vmem:[#allocation3 + $0x110] sm:$0xf]
    %v8539 = vld [vmem:[#allocation3 + $0x114] sm:$0xf]
    %v8540 = vld [vmem:[#allocation3 + $0x118] sm:$0xf]
    %v8541 = vld [vmem:[#allocation3 + $0x11c] sm:$0xf]
    %v8542 = vld [vmem:[#allocation3 + $0x120] sm:$0xf]
    %v8543 = vld [vmem:[#allocation3 + $0x124] sm:$0xf]
    %v8544 = vld [vmem:[#allocation3 + $0x128] sm:$0xf]
    %v8545 = vld [vmem:[#allocation3 + $0x12c] sm:$0xf]
    %v8546 = vld [vmem:[#allocation3 + $0x130] sm:$0xf]
    %v8547 = vld [vmem:[#allocation3 + $0x134] sm:$0xf]
    %v8548 = vld [vmem:[#allocation3 + $0x138] sm:$0xf]
    %v8549 = vld [vmem:[#allocation3 + $0x13c] sm:$0xf]
    %v8550 = vld [vmem:[#allocation3 + $0x140] sm:$0xf]
    %v8600 = vcombine.low %v8470, %v8471
    %v8601 = vcombine.low %v8472, %v8473
    %v8603 = vunpack.c.l.s4 1983009808
    %v8604 = vunpack.c.0.s8 %v8603
    %v8605 = vlaneseq
    %v8606 = vshrl.u32 %v8605, 7
    %v8607 = vsub.s32 %v8604, %v8606
    %v8608 = vrot.slane %v8600, %v8607
    %v8610 = vunpack.c.l.s4 1983009808
    %v8611 = vunpack.c.0.s8 %v8610
    %v8612 = vlaneseq
    %v8613 = vshrl.u32 %v8612, 7
    %v8614 = vsub.s32 %v8611, %v8613
    %v8615 = vrot.slane %v8601, %v8614
    %v8616 = vcombine.low %v8608, %v8615
    %v8617 = vcombine.high %v8608, %v8615
    %v8618 = vcombine.low %v8474, %v8475
    %v8619 = vcombine.low %v8476, %v8479
    %v8621 = vunpack.c.l.s4 1983009808
    %v8622 = vunpack.c.0.s8 %v8621
    %v8623 = vlaneseq
    %v8624 = vshrl.u32 %v8623, 7
    %v8625 = vsub.s32 %v8622, %v8624
    %v8626 = vrot.slane %v8618, %v8625
    %v8628 = vunpack.c.l.s4 1983009808
    %v8629 = vunpack.c.0.s8 %v8628
    %v8630 = vlaneseq
    %v8631 = vshrl.u32 %v8630, 7
    %v8632 = vsub.s32 %v8629, %v8631
    %v8633 = vrot.slane %v8619, %v8632
    %v8634 = vcombine.low %v8626, %v8633
    %v8635 = vcombine.high %v8626, %v8633
    %v8636 = vcombine.low %v8480, %v8481
    %v8637 = vcombine.low %v8482, %v8483
    %v8639 = vunpack.c.l.s4 1983009808
    %v8640 = vunpack.c.0.s8 %v8639
    %v8641 = vlaneseq
    %v8642 = vshrl.u32 %v8641, 7
    %v8643 = vsub.s32 %v8640, %v8642
    %v8644 = vrot.slane %v8636, %v8643
    %v8646 = vunpack.c.l.s4 1983009808
    %v8647 = vunpack.c.0.s8 %v8646
    %v8648 = vlaneseq
    %v8649 = vshrl.u32 %v8648, 7
    %v8650 = vsub.s32 %v8647, %v8649
    %v8651 = vrot.slane %v8637, %v8650
    %v8652 = vcombine.low %v8644, %v8651
    %v8653 = vcombine.high %v8644, %v8651
    %v8654 = vcombine.low %v8484, %v8485
    %v8655 = vcombine.low %v8488, %v8489
    %v8657 = vunpack.c.l.s4 1983009808
    %v8658 = vunpack.c.0.s8 %v8657
    %v8659 = vlaneseq
    %v8660 = vshrl.u32 %v8659, 7
    %v8661 = vsub.s32 %v8658, %v8660
    %v8662 = vrot.slane %v8654, %v8661
    %v8664 = vunpack.c.l.s4 1983009808
    %v8665 = vunpack.c.0.s8 %v8664
    %v8666 = vlaneseq
    %v8667 = vshrl.u32 %v8666, 7
    %v8668 = vsub.s32 %v8665, %v8667
    %v8669 = vrot.slane %v8655, %v8668
    %v8670 = vcombine.low %v8662, %v8669
    %v8671 = vcombine.high %v8662, %v8669
    %v8672 = vcombine.low %v8490, %v8491
    %v8673 = vcombine.low %v8492, %v8493
    %v8675 = vunpack.c.l.s4 1983009808
    %v8676 = vunpack.c.0.s8 %v8675
    %v8677 = vlaneseq
    %v8678 = vshrl.u32 %v8677, 7
    %v8679 = vsub.s32 %v8676, %v8678
    %v8680 = vrot.slane %v8672, %v8679
    %v8682 = vunpack.c.l.s4 1983009808
    %v8683 = vunpack.c.0.s8 %v8682
    %v8684 = vlaneseq
    %v8685 = vshrl.u32 %v8684, 7
    %v8686 = vsub.s32 %v8683, %v8685
    %v8687 = vrot.slane %v8673, %v8686
    %v8688 = vcombine.low %v8680, %v8687
    %v8689 = vcombine.high %v8680, %v8687
    %v8690 = vcombine.low %v8494, %v8497
    %v8691 = vcombine.low %v8498, %v8499
    %v8693 = vunpack.c.l.s4 1983009808
    %v8694 = vunpack.c.0.s8 %v8693
    %v8695 = vlaneseq
    %v8696 = vshrl.u32 %v8695, 7
    %v8697 = vsub.s32 %v8694, %v8696
    %v8698 = vrot.slane %v8690, %v8697
    %v8700 = vunpack.c.l.s4 1983009808
    %v8701 = vunpack.c.0.s8 %v8700
    %v8702 = vlaneseq
    %v8703 = vshrl.u32 %v8702, 7
    %v8704 = vsub.s32 %v8701, %v8703
    %v8705 = vrot.slane %v8691, %v8704
    %v8706 = vcombine.low %v8698, %v8705
    %v8707 = vcombine.high %v8698, %v8705
    %v8708 = vcombine.low %v8500, %v8501
    %v8709 = vcombine.low %v8502, %v8503
    %v8711 = vunpack.c.l.s4 1983009808
    %v8712 = vunpack.c.0.s8 %v8711
    %v8713 = vlaneseq
    %v8714 = vshrl.u32 %v8713, 7
    %v8715 = vsub.s32 %v8712, %v8714
    %v8716 = vrot.slane %v8708, %v8715
    %v8718 = vunpack.c.l.s4 1983009808
    %v8719 = vunpack.c.0.s8 %v8718
    %v8720 = vlaneseq
    %v8721 = vshrl.u32 %v8720, 7
    %v8722 = vsub.s32 %v8719, %v8721
    %v8723 = vrot.slane %v8709, %v8722
    %v8724 = vcombine.low %v8716, %v8723
    %v8725 = vcombine.high %v8716, %v8723
    %v8726 = vcombine.low %v8506, %v8507
    %v8727 = vcombine.low %v8508, %v8509
    %v8729 = vunpack.c.l.s4 1983009808
    %v8730 = vunpack.c.0.s8 %v8729
    %v8731 = vlaneseq
    %v8732 = vshrl.u32 %v8731, 7
    %v8733 = vsub.s32 %v8730, %v8732
    %v8734 = vrot.slane %v8726, %v8733
    %v8736 = vunpack.c.l.s4 1983009808
    %v8737 = vunpack.c.0.s8 %v8736
    %v8738 = vlaneseq
    %v8739 = vshrl.u32 %v8738, 7
    %v8740 = vsub.s32 %v8737, %v8739
    %v8741 = vrot.slane %v8727, %v8740
    %v8742 = vcombine.low %v8734, %v8741
    %v8743 = vcombine.high %v8734, %v8741
    %v8744 = vcombine.low %v8510, %v8511
    %v8745 = vcombine.low %v8512, %v8515
    %v8747 = vunpack.c.l.s4 1983009808
    %v8748 = vunpack.c.0.s8 %v8747
    %v8749 = vlaneseq
    %v8750 = vshrl.u32 %v8749, 7
    %v8751 = vsub.s32 %v8748, %v8750
    %v8752 = vrot.slane %v8744, %v8751
    %v8754 = vunpack.c.l.s4 1983009808
    %v8755 = vunpack.c.0.s8 %v8754
    %v8756 = vlaneseq
    %v8757 = vshrl.u32 %v8756, 7
    %v8758 = vsub.s32 %v8755, %v8757
    %v8759 = vrot.slane %v8745, %v8758
    %v8760 = vcombine.low %v8752, %v8759
    %v8761 = vcombine.high %v8752, %v8759
    %v8762 = vcombine.low %v8516, %v8517
    %v8763 = vcombine.low %v8518, %v8519
    %v8765 = vunpack.c.l.s4 1983009808
    %v8766 = vunpack.c.0.s8 %v8765
    %v8767 = vlaneseq
    %v8768 = vshrl.u32 %v8767, 7
    %v8769 = vsub.s32 %v8766, %v8768
    %v8770 = vrot.slane %v8762, %v8769
    %v8772 = vunpack.c.l.s4 1983009808
    %v8773 = vunpack.c.0.s8 %v8772
    %v8774 = vlaneseq
    %v8775 = vshrl.u32 %v8774, 7
    %v8776 = vsub.s32 %v8773, %v8775
    %v8777 = vrot.slane %v8763, %v8776
    %v8778 = vcombine.low %v8770, %v8777
    %v8779 = vcombine.high %v8770, %v8777
    %v8780 = vcombine.low %v8520, %v8521
    %v8781 = vcombine.low %v8524, %v8525
    %v8783 = vunpack.c.l.s4 1983009808
    %v8784 = vunpack.c.0.s8 %v8783
    %v8785 = vlaneseq
    %v8786 = vshrl.u32 %v8785, 7
    %v8787 = vsub.s32 %v8784, %v8786
    %v8788 = vrot.slane %v8780, %v8787
    %v8790 = vunpack.c.l.s4 1983009808
    %v8791 = vunpack.c.0.s8 %v8790
    %v8792 = vlaneseq
    %v8793 = vshrl.u32 %v8792, 7
    %v8794 = vsub.s32 %v8791, %v8793
    %v8795 = vrot.slane %v8781, %v8794
    %v8796 = vcombine.low %v8788, %v8795
    %v8797 = vcombine.high %v8788, %v8795
    %v8798 = vcombine.low %v8526, %v8527
    %v8799 = vcombine.low %v8528, %v8529
    %v8801 = vunpack.c.l.s4 1983009808
    %v8802 = vunpack.c.0.s8 %v8801
    %v8803 = vlaneseq
    %v8804 = vshrl.u32 %v8803, 7
    %v8805 = vsub.s32 %v8802, %v8804
    %v8806 = vrot.slane %v8798, %v8805
    %v8808 = vunpack.c.l.s4 1983009808
    %v8809 = vunpack.c.0.s8 %v8808
    %v8810 = vlaneseq
    %v8811 = vshrl.u32 %v8810, 7
    %v8812 = vsub.s32 %v8809, %v8811
    %v8813 = vrot.slane %v8799, %v8812
    %v8814 = vcombine.low %v8806, %v8813
    %v8815 = vcombine.high %v8806, %v8813
    %v8817 = vunpack.c.l.s4 1983009808
    %v8818 = vunpack.c.0.s8 %v8817
    %v8819 = vlaneseq
    %v8820 = vshrl.u32 %v8819, 7
    %v8821 = vsub.s32 %v8818, %v8820
    %v8822 = vrot.slane %v8530, %v8821
    %v8823 = vcombine.high %v8822, %v8822
    %v8850 = vpack.c.bf16 %v8634, %v8616
    %v8851 = vpack.c.bf16 %v8635, %v8617
    %v8852 = vpack.c.bf16 %v8670, %v8652
    %v8853 = vpack.c.bf16 %v8671, %v8653
    %v8854 = vpack.c.bf16 %v8706, %v8688
    %v8855 = vpack.c.bf16 %v8707, %v8689
    %v8856 = vpack.c.bf16 %v8742, %v8724
    %v8857 = vpack.c.bf16 %v8743, %v8725
    %v8858 = vpack.c.bf16 %v8778, %v8760
    %v8859 = vpack.c.bf16 %v8779, %v8761
    %v8860 = vpack.c.bf16 %v8814, %v8796
    %v8861 = vpack.c.bf16 %v8815, %v8797
    %v8862 = vpack.c.bf16 %v8822, %v8822
    %v8863 = vpack.c.bf16 %v8823, %v8823
    %v8871 = vcombine.low %v8471, %v8472
    %v8872 = vcombine.low %v8473, %v8474
    %v8874 = vunpack.c.l.s4 1983009808
    %v8875 = vunpack.c.0.s8 %v8874
    %v8876 = vlaneseq
    %v8877 = vshrl.u32 %v8876, 7
    %v8878 = vsub.s32 %v8875, %v8877
    %v8879 = vrot.slane %v8871, %v8878
    %v8881 = vunpack.c.l.s4 1983009808
    %v8882 = vunpack.c.0.s8 %v8881
    %v8883 = vlaneseq
    %v8884 = vshrl.u32 %v8883, 7
    %v8885 = vsub.s32 %v8882, %v8884
    %v8886 = vrot.slane %v8872, %v8885
    %v8887 = vcombine.low %v8879, %v8886
    %v8888 = vcombine.high %v8879, %v8886
    %v8889 = vcombine.low %v8475, %v8476
    %v8890 = vcombine.low %v8477, %v8480
    %v8892 = vunpack.c.l.s4 1983009808
    %v8893 = vunpack.c.0.s8 %v8892
    %v8894 = vlaneseq
    %v8895 = vshrl.u32 %v8894, 7
    %v8896 = vsub.s32 %v8893, %v8895
    %v8897 = vrot.slane %v8889, %v8896
    %v8899 = vunpack.c.l.s4 1983009808
    %v8900 = vunpack.c.0.s8 %v8899
    %v8901 = vlaneseq
    %v8902 = vshrl.u32 %v8901, 7
    %v8903 = vsub.s32 %v8900, %v8902
    %v8904 = vrot.slane %v8890, %v8903
    %v8905 = vcombine.low %v8897, %v8904
    %v8906 = vcombine.high %v8897, %v8904
    %v8907 = vcombine.low %v8481, %v8482
    %v8908 = vcombine.low %v8483, %v8484
    %v8910 = vunpack.c.l.s4 1983009808
    %v8911 = vunpack.c.0.s8 %v8910
    %v8912 = vlaneseq
    %v8913 = vshrl.u32 %v8912, 7
    %v8914 = vsub.s32 %v8911, %v8913
    %v8915 = vrot.slane %v8907, %v8914
    %v8917 = vunpack.c.l.s4 1983009808
    %v8918 = vunpack.c.0.s8 %v8917
    %v8919 = vlaneseq
    %v8920 = vshrl.u32 %v8919, 7
    %v8921 = vsub.s32 %v8918, %v8920
    %v8922 = vrot.slane %v8908, %v8921
    %v8923 = vcombine.low %v8915, %v8922
    %v8924 = vcombine.high %v8915, %v8922
    %v8925 = vcombine.low %v8485, %v8486
    %v8926 = vcombine.low %v8489, %v8490
    %v8928 = vunpack.c.l.s4 1983009808
    %v8929 = vunpack.c.0.s8 %v8928
    %v8930 = vlaneseq
    %v8931 = vshrl.u32 %v8930, 7
    %v8932 = vsub.s32 %v8929, %v8931
    %v8933 = vrot.slane %v8925, %v8932
    %v8935 = vunpack.c.l.s4 1983009808
    %v8936 = vunpack.c.0.s8 %v8935
    %v8937 = vlaneseq
    %v8938 = vshrl.u32 %v8937, 7
    %v8939 = vsub.s32 %v8936, %v8938
    %v8940 = vrot.slane %v8926, %v8939
    %v8941 = vcombine.low %v8933, %v8940
    %v8942 = vcombine.high %v8933, %v8940
    %v8943 = vcombine.low %v8491, %v8492
    %v8944 = vcombine.low %v8493, %v8494
    %v8946 = vunpack.c.l.s4 1983009808
    %v8947 = vunpack.c.0.s8 %v8946
    %v8948 = vlaneseq
    %v8949 = vshrl.u32 %v8948, 7
    %v8950 = vsub.s32 %v8947, %v8949
    %v8951 = vrot.slane %v8943, %v8950
    %v8953 = vunpack.c.l.s4 1983009808
    %v8954 = vunpack.c.0.s8 %v8953
    %v8955 = vlaneseq
    %v8956 = vshrl.u32 %v8955, 7
    %v8957 = vsub.s32 %v8954, %v8956
    %v8958 = vrot.slane %v8944, %v8957
    %v8959 = vcombine.low %v8951, %v8958
    %v8960 = vcombine.high %v8951, %v8958
    %v8961 = vcombine.low %v8495, %v8498
    %v8962 = vcombine.low %v8499, %v8500
    %v8964 = vunpack.c.l.s4 1983009808
    %v8965 = vunpack.c.0.s8 %v8964
    %v8966 = vlaneseq
    %v8967 = vshrl.u32 %v8966, 7
    %v8968 = vsub.s32 %v8965, %v8967
    %v8969 = vrot.slane %v8961, %v8968
    %v8971 = vunpack.c.l.s4 1983009808
    %v8972 = vunpack.c.0.s8 %v8971
    %v8973 = vlaneseq
    %v8974 = vshrl.u32 %v8973, 7
    %v8975 = vsub.s32 %v8972, %v8974
    %v8976 = vrot.slane %v8962, %v8975
    %v8977 = vcombine.low %v8969, %v8976
    %v8978 = vcombine.high %v8969, %v8976
    %v8979 = vcombine.low %v8501, %v8502
    %v8980 = vcombine.low %v8503, %v8504
    %v8982 = vunpack.c.l.s4 1983009808
    %v8983 = vunpack.c.0.s8 %v8982
    %v8984 = vlaneseq
    %v8985 = vshrl.u32 %v8984, 7
    %v8986 = vsub.s32 %v8983, %v8985
    %v8987 = vrot.slane %v8979, %v8986
    %v8989 = vunpack.c.l.s4 1983009808
    %v8990 = vunpack.c.0.s8 %v8989
    %v8991 = vlaneseq
    %v8992 = vshrl.u32 %v8991, 7
    %v8993 = vsub.s32 %v8990, %v8992
    %v8994 = vrot.slane %v8980, %v8993
    %v8995 = vcombine.low %v8987, %v8994
    %v8996 = vcombine.high %v8987, %v8994
    %v8997 = vcombine.low %v8507, %v8508
    %v8998 = vcombine.low %v8509, %v8510
    %v9000 = vunpack.c.l.s4 1983009808
    %v9001 = vunpack.c.0.s8 %v9000
    %v9002 = vlaneseq
    %v9003 = vshrl.u32 %v9002, 7
    %v9004 = vsub.s32 %v9001, %v9003
    %v9005 = vrot.slane %v8997, %v9004
    %v9007 = vunpack.c.l.s4 1983009808
    %v9008 = vunpack.c.0.s8 %v9007
    %v9009 = vlaneseq
    %v9010 = vshrl.u32 %v9009, 7
    %v9011 = vsub.s32 %v9008, %v9010
    %v9012 = vrot.slane %v8998, %v9011
    %v9013 = vcombine.low %v9005, %v9012
    %v9014 = vcombine.high %v9005, %v9012
    %v9015 = vcombine.low %v8511, %v8512
    %v9016 = vcombine.low %v8513, %v8516
    %v9018 = vunpack.c.l.s4 1983009808
    %v9019 = vunpack.c.0.s8 %v9018
    %v9020 = vlaneseq
    %v9021 = vshrl.u32 %v9020, 7
    %v9022 = vsub.s32 %v9019, %v9021
    %v9023 = vrot.slane %v9015, %v9022
    %v9025 = vunpack.c.l.s4 1983009808
    %v9026 = vunpack.c.0.s8 %v9025
    %v9027 = vlaneseq
    %v9028 = vshrl.u32 %v9027, 7
    %v9029 = vsub.s32 %v9026, %v9028
    %v9030 = vrot.slane %v9016, %v9029
    %v9031 = vcombine.low %v9023, %v9030
    %v9032 = vcombine.high %v9023, %v9030
    %v9033 = vcombine.low %v8517, %v8518
    %v9034 = vcombine.low %v8519, %v8520
    %v9036 = vunpack.c.l.s4 1983009808
    %v9037 = vunpack.c.0.s8 %v9036
    %v9038 = vlaneseq
    %v9039 = vshrl.u32 %v9038, 7
    %v9040 = vsub.s32 %v9037, %v9039
    %v9041 = vrot.slane %v9033, %v9040
    %v9043 = vunpack.c.l.s4 1983009808
    %v9044 = vunpack.c.0.s8 %v9043
    %v9045 = vlaneseq
    %v9046 = vshrl.u32 %v9045, 7
    %v9047 = vsub.s32 %v9044, %v9046
    %v9048 = vrot.slane %v9034, %v9047
    %v9049 = vcombine.low %v9041, %v9048
    %v9050 = vcombine.high %v9041, %v9048
    %v9051 = vcombine.low %v8521, %v8522
    %v9052 = vcombine.low %v8525, %v8526
    %v9054 = vunpack.c.l.s4 1983009808
    %v9055 = vunpack.c.0.s8 %v9054
    %v9056 = vlaneseq
    %v9057 = vshrl.u32 %v9056, 7
    %v9058 = vsub.s32 %v9055, %v9057
    %v9059 = vrot.slane %v9051, %v9058
    %v9061 = vunpack.c.l.s4 1983009808
    %v9062 = vunpack.c.0.s8 %v9061
    %v9063 = vlaneseq
    %v9064 = vshrl.u32 %v9063, 7
    %v9065 = vsub.s32 %v9062, %v9064
    %v9066 = vrot.slane %v9052, %v9065
    %v9067 = vcombine.low %v9059, %v9066
    %v9068 = vcombine.high %v9059, %v9066
    %v9069 = vcombine.low %v8527, %v8528
    %v9070 = vcombine.low %v8529, %v8530
    %v9072 = vunpack.c.l.s4 1983009808
    %v9073 = vunpack.c.0.s8 %v9072
    %v9074 = vlaneseq
    %v9075 = vshrl.u32 %v9074, 7
    %v9076 = vsub.s32 %v9073, %v9075
    %v9077 = vrot.slane %v9069, %v9076
    %v9079 = vunpack.c.l.s4 1983009808
    %v9080 = vunpack.c.0.s8 %v9079
    %v9081 = vlaneseq
    %v9082 = vshrl.u32 %v9081, 7
    %v9083 = vsub.s32 %v9080, %v9082
    %v9084 = vrot.slane %v9070, %v9083
    %v9085 = vcombine.low %v9077, %v9084
    %v9086 = vcombine.high %v9077, %v9084
    %v9088 = vunpack.c.l.s4 1983009808
    %v9089 = vunpack.c.0.s8 %v9088
    %v9090 = vlaneseq
    %v9091 = vshrl.u32 %v9090, 7
    %v9092 = vsub.s32 %v9089, %v9091
    %v9093 = vrot.slane %v8531, %v9092
    %v9094 = vcombine.high %v9093, %v9093
    %v9121 = vpack.c.bf16 %v8905, %v8887
    %v9122 = vpack.c.bf16 %v8906, %v8888
    %v9123 = vpack.c.bf16 %v8941, %v8923
    %v9124 = vpack.c.bf16 %v8942, %v8924
    %v9125 = vpack.c.bf16 %v8977, %v8959
    %v9126 = vpack.c.bf16 %v8978, %v8960
    %v9127 = vpack.c.bf16 %v9013, %v8995
    %v9128 = vpack.c.bf16 %v9014, %v8996
    %v9129 = vpack.c.bf16 %v9049, %v9031
    %v9130 = vpack.c.bf16 %v9050, %v9032
    %v9131 = vpack.c.bf16 %v9085, %v9067
    %v9132 = vpack.c.bf16 %v9086, %v9068
    %v9133 = vpack.c.bf16 %v9093, %v9093
    %v9134 = vpack.c.bf16 %v9094, %v9094
    %v9142 = vcombine.low %v8615, %v8626
    %v9143 = vcombine.high %v8615, %v8626
    %v9144 = vcombine.low %v8476, %v8477
    %v9145 = vcombine.low %v8478, %v8481
    %v9147 = vunpack.c.l.s4 1983009808
    %v9148 = vunpack.c.0.s8 %v9147
    %v9149 = vlaneseq
    %v9150 = vshrl.u32 %v9149, 7
    %v9151 = vsub.s32 %v9148, %v9150
    %v9152 = vrot.slane %v9144, %v9151
    %v9154 = vunpack.c.l.s4 1983009808
    %v9155 = vunpack.c.0.s8 %v9154
    %v9156 = vlaneseq
    %v9157 = vshrl.u32 %v9156, 7
    %v9158 = vsub.s32 %v9155, %v9157
    %v9159 = vrot.slane %v9145, %v9158
    %v9160 = vcombine.low %v9152, %v9159
    %v9161 = vcombine.high %v9152, %v9159
    %v9162 = vcombine.low %v8651, %v8662
    %v9163 = vcombine.high %v8651, %v8662
    %v9164 = vcombine.low %v8486, %v8487
    %v9166 = vunpack.c.l.s4 1983009808
    %v9167 = vunpack.c.0.s8 %v9166
    %v9168 = vlaneseq
    %v9169 = vshrl.u32 %v9168, 7
    %v9170 = vsub.s32 %v9167, %v9169
    %v9171 = vrot.slane %v9164, %v9170
    %v9172 = vcombine.low %v9171, %v8680
    %v9173 = vcombine.high %v9171, %v8680
    %v9174 = vcombine.low %v8494, %v8495
    %v9176 = vunpack.c.l.s4 1983009808
    %v9177 = vunpack.c.0.s8 %v9176
    %v9178 = vlaneseq
    %v9179 = vshrl.u32 %v9178, 7
    %v9180 = vsub.s32 %v9177, %v9179
    %v9181 = vrot.slane %v9174, %v9180
    %v9182 = vcombine.low %v8687, %v9181
    %v9183 = vcombine.high %v8687, %v9181
    %v9184 = vcombine.low %v8496, %v8499
    %v9186 = vunpack.c.l.s4 1983009808
    %v9187 = vunpack.c.0.s8 %v9186
    %v9188 = vlaneseq
    %v9189 = vshrl.u32 %v9188, 7
    %v9190 = vsub.s32 %v9187, %v9189
    %v9191 = vrot.slane %v9184, %v9190
    %v9192 = vcombine.low %v9191, %v8716
    %v9193 = vcombine.high %v9191, %v8716
    %v9194 = vcombine.low %v8504, %v8505
    %v9196 = vunpack.c.l.s4 1983009808
    %v9197 = vunpack.c.0.s8 %v9196
    %v9198 = vlaneseq
    %v9199 = vshrl.u32 %v9198, 7
    %v9200 = vsub.s32 %v9197, %v9199
    %v9201 = vrot.slane %v9194, %v9200
    %v9202 = vcombine.low %v8723, %v9201
    %v9203 = vcombine.high %v8723, %v9201
    %v9204 = vcombine.low %v8741, %v8752
    %v9205 = vcombine.high %v8741, %v8752
    %v9206 = vcombine.low %v8512, %v8513
    %v9207 = vcombine.low %v8514, %v8517
    %v9209 = vunpack.c.l.s4 1983009808
    %v9210 = vunpack.c.0.s8 %v9209
    %v9211 = vlaneseq
    %v9212 = vshrl.u32 %v9211, 7
    %v9213 = vsub.s32 %v9210, %v9212
    %v9214 = vrot.slane %v9206, %v9213
    %v9216 = vunpack.c.l.s4 1983009808
    %v9217 = vunpack.c.0.s8 %v9216
    %v9218 = vlaneseq
    %v9219 = vshrl.u32 %v9218, 7
    %v9220 = vsub.s32 %v9217, %v9219
    %v9221 = vrot.slane %v9207, %v9220
    %v9222 = vcombine.low %v9214, %v9221
    %v9223 = vcombine.high %v9214, %v9221
    %v9224 = vcombine.low %v8777, %v8788
    %v9225 = vcombine.high %v8777, %v8788
    %v9226 = vcombine.low %v8522, %v8523
    %v9228 = vunpack.c.l.s4 1983009808
    %v9229 = vunpack.c.0.s8 %v9228
    %v9230 = vlaneseq
    %v9231 = vshrl.u32 %v9230, 7
    %v9232 = vsub.s32 %v9229, %v9231
    %v9233 = vrot.slane %v9226, %v9232
    %v9234 = vcombine.low %v9233, %v8806
    %v9235 = vcombine.high %v9233, %v8806
    %v9236 = vcombine.low %v8530, %v8531
    %v9238 = vunpack.c.l.s4 1983009808
    %v9239 = vunpack.c.0.s8 %v9238
    %v9240 = vlaneseq
    %v9241 = vshrl.u32 %v9240, 7
    %v9242 = vsub.s32 %v9239, %v9241
    %v9243 = vrot.slane %v9236, %v9242
    %v9244 = vcombine.low %v8813, %v9243
    %v9245 = vcombine.high %v8813, %v9243
    %v9247 = vunpack.c.l.s4 1983009808
    %v9248 = vunpack.c.0.s8 %v9247
    %v9249 = vlaneseq
    %v9250 = vshrl.u32 %v9249, 7
    %v9251 = vsub.s32 %v9248, %v9250
    %v9252 = vrot.slane %v8532, %v9251
    %v9253 = vcombine.high %v9252, %v9252
    %v9280 = vpack.c.bf16 %v9160, %v9142
    %v9281 = vpack.c.bf16 %v9161, %v9143
    %v9282 = vpack.c.bf16 %v9172, %v9162
    %v9283 = vpack.c.bf16 %v9173, %v9163
    %v9284 = vpack.c.bf16 %v9192, %v9182
    %v9285 = vpack.c.bf16 %v9193, %v9183
    %v9286 = vpack.c.bf16 %v9204, %v9202
    %v9287 = vpack.c.bf16 %v9205, %v9203
    %v9288 = vpack.c.bf16 %v9224, %v9222
    %v9289 = vpack.c.bf16 %v9225, %v9223
    %v9290 = vpack.c.bf16 %v9244, %v9234
    %v9291 = vpack.c.bf16 %v9245, %v9235
    %v9292 = vpack.c.bf16 %v9252, %v9252
    %v9293 = vpack.c.bf16 %v9253, %v9253
    %v9301 = vcombine.low %v8479, %v8480
    %v9303 = vunpack.c.l.s4 1983009808
    %v9304 = vunpack.c.0.s8 %v9303
    %v9305 = vlaneseq
    %v9306 = vshrl.u32 %v9305, 7
    %v9307 = vsub.s32 %v9304, %v9306
    %v9308 = vrot.slane %v9301, %v9307
    %v9309 = vcombine.low %v9308, %v8915
    %v9310 = vcombine.high %v9308, %v8915
    %v9311 = vcombine.low %v8485, %v8488
    %v9313 = vunpack.c.l.s4 1983009808
    %v9314 = vunpack.c.0.s8 %v9313
    %v9315 = vlaneseq
    %v9316 = vshrl.u32 %v9315, 7
    %v9317 = vsub.s32 %v9314, %v9316
    %v9318 = vrot.slane %v9311, %v9317
    %v9319 = vcombine.low %v8922, %v9318
    %v9320 = vcombine.high %v8922, %v9318
    %v9321 = vcombine.low %v8940, %v8951
    %v9322 = vcombine.high %v8940, %v8951
    %v9323 = vcombine.low %v8497, %v8498
    %v9325 = vunpack.c.l.s4 1983009808
    %v9326 = vunpack.c.0.s8 %v9325
    %v9327 = vlaneseq
    %v9328 = vshrl.u32 %v9327, 7
    %v9329 = vsub.s32 %v9326, %v9328
    %v9330 = vrot.slane %v9323, %v9329
    %v9331 = vcombine.low %v8958, %v9330
    %v9332 = vcombine.high %v8958, %v9330
    %v9333 = vcombine.low %v8976, %v8987
    %v9334 = vcombine.high %v8976, %v8987
    %v9335 = vcombine.low %v8503, %v8506
    %v9337 = vunpack.c.l.s4 1983009808
    %v9338 = vunpack.c.0.s8 %v9337
    %v9339 = vlaneseq
    %v9340 = vshrl.u32 %v9339, 7
    %v9341 = vsub.s32 %v9338, %v9340
    %v9342 = vrot.slane %v9335, %v9341
    %v9343 = vcombine.low %v9342, %v9005
    %v9344 = vcombine.high %v9342, %v9005
    %v9345 = vcombine.low %v9012, %v9023
    %v9346 = vcombine.high %v9012, %v9023
    %v9347 = vcombine.low %v8515, %v8516
    %v9349 = vunpack.c.l.s4 1983009808
    %v9350 = vunpack.c.0.s8 %v9349
    %v9351 = vlaneseq
    %v9352 = vshrl.u32 %v9351, 7
    %v9353 = vsub.s32 %v9350, %v9352
    %v9354 = vrot.slane %v9347, %v9353
    %v9355 = vcombine.low %v9354, %v9041
    %v9356 = vcombine.high %v9354, %v9041
    %v9357 = vcombine.low %v8521, %v8524
    %v9359 = vunpack.c.l.s4 1983009808
    %v9360 = vunpack.c.0.s8 %v9359
    %v9361 = vlaneseq
    %v9362 = vshrl.u32 %v9361, 7
    %v9363 = vsub.s32 %v9360, %v9362
    %v9364 = vrot.slane %v9357, %v9363
    %v9365 = vcombine.low %v9048, %v9364
    %v9366 = vcombine.high %v9048, %v9364
    %v9367 = vcombine.low %v9066, %v9077
    %v9368 = vcombine.high %v9066, %v9077
    %v9369 = vcombine.low %v8533, %v8534
    %v9371 = vunpack.c.l.s4 1983009808
    %v9372 = vunpack.c.0.s8 %v9371
    %v9373 = vlaneseq
    %v9374 = vshrl.u32 %v9373, 7
    %v9375 = vsub.s32 %v9372, %v9374
    %v9376 = vrot.slane %v9369, %v9375
    %v9377 = vcombine.low %v9084, %v9376
    %v9378 = vcombine.high %v9084, %v9376
    %v9379 = vcombine.low %v8535, %v8536
    %v9380 = vcombine.low %v8537, %v8538
    %v9382 = vunpack.c.l.s4 1983009808
    %v9383 = vunpack.c.0.s8 %v9382
    %v9384 = vlaneseq
    %v9385 = vshrl.u32 %v9384, 7
    %v9386 = vsub.s32 %v9383, %v9385
    %v9387 = vrot.slane %v9379, %v9386
    %v9389 = vunpack.c.l.s4 1983009808
    %v9390 = vunpack.c.0.s8 %v9389
    %v9391 = vlaneseq
    %v9392 = vshrl.u32 %v9391, 7
    %v9393 = vsub.s32 %v9390, %v9392
    %v9394 = vrot.slane %v9380, %v9393
    %v9395 = vcombine.low %v9387, %v9394
    %v9396 = vcombine.high %v9387, %v9394
    %v9398 = vunpack.c.l.s4 1983009808
    %v9399 = vunpack.c.0.s8 %v9398
    %v9400 = vlaneseq
    %v9401 = vshrl.u32 %v9400, 7
    %v9402 = vsub.s32 %v9399, %v9401
    %v9403 = vrot.slane %v8539, %v9402
    %v9404 = vcombine.high %v9403, %v9403
    %v9431 = vpack.c.bf16 %v9319, %v9309
    %v9432 = vpack.c.bf16 %v9320, %v9310
    %v9433 = vpack.c.bf16 %v9331, %v9321
    %v9434 = vpack.c.bf16 %v9332, %v9322
    %v9435 = vpack.c.bf16 %v9343, %v9333
    %v9436 = vpack.c.bf16 %v9344, %v9334
    %v9437 = vpack.c.bf16 %v9355, %v9345
    %v9438 = vpack.c.bf16 %v9356, %v9346
    %v9439 = vpack.c.bf16 %v9367, %v9365
    %v9440 = vpack.c.bf16 %v9368, %v9366
    %v9441 = vpack.c.bf16 %v9395, %v9377
    %v9442 = vpack.c.bf16 %v9396, %v9378
    %v9443 = vpack.c.bf16 %v9403, %v9403
    %v9444 = vpack.c.bf16 %v9404, %v9404
    %v9446 = vcombine.low %v8486, %v8489
    %v9448 = vunpack.c.l.s4 1983009808
    %v9449 = vunpack.c.0.s8 %v9448
    %v9450 = vlaneseq
    %v9451 = vshrl.u32 %v9450, 7
    %v9452 = vsub.s32 %v9449, %v9451
    %v9453 = vrot.slane %v9446, %v9452
    %v9454 = vcombine.low %v8662, %v9453
    %v9455 = vcombine.high %v8662, %v9453
    %v9456 = vcombine.low %v9181, %v8705
    %v9457 = vcombine.high %v9181, %v8705
    %v9458 = vcombine.low %v8504, %v8507
    %v9460 = vunpack.c.l.s4 1983009808
    %v9461 = vunpack.c.0.s8 %v9460
    %v9462 = vlaneseq
    %v9463 = vshrl.u32 %v9462, 7
    %v9464 = vsub.s32 %v9461, %v9463
    %v9465 = vrot.slane %v9458, %v9464
    %v9466 = vcombine.low %v9465, %v8741
    %v9467 = vcombine.high %v9465, %v8741
    %v9468 = vcombine.low %v8752, %v9214
    %v9469 = vcombine.high %v8752, %v9214
    %v9470 = vcombine.low %v8522, %v8525
    %v9472 = vunpack.c.l.s4 1983009808
    %v9473 = vunpack.c.0.s8 %v9472
    %v9474 = vlaneseq
    %v9475 = vshrl.u32 %v9474, 7
    %v9476 = vsub.s32 %v9473, %v9475
    %v9477 = vrot.slane %v9470, %v9476
    %v9478 = vcombine.low %v8788, %v9477
    %v9479 = vcombine.high %v8788, %v9477
    %v9480 = vcombine.low %v8534, %v8535
    %v9482 = vunpack.c.l.s4 1983009808
    %v9483 = vunpack.c.0.s8 %v9482
    %v9484 = vlaneseq
    %v9485 = vshrl.u32 %v9484, 7
    %v9486 = vsub.s32 %v9483, %v9485
    %v9487 = vrot.slane %v9480, %v9486
    %v9488 = vcombine.low %v9243, %v9487
    %v9489 = vcombine.high %v9243, %v9487
    %v9490 = vcombine.low %v8536, %v8537
    %v9491 = vcombine.low %v8538, %v8539
    %v9493 = vunpack.c.l.s4 1983009808
    %v9494 = vunpack.c.0.s8 %v9493
    %v9495 = vlaneseq
    %v9496 = vshrl.u32 %v9495, 7
    %v9497 = vsub.s32 %v9494, %v9496
    %v9498 = vrot.slane %v9490, %v9497
    %v9500 = vunpack.c.l.s4 1983009808
    %v9501 = vunpack.c.0.s8 %v9500
    %v9502 = vlaneseq
    %v9503 = vshrl.u32 %v9502, 7
    %v9504 = vsub.s32 %v9501, %v9503
    %v9505 = vrot.slane %v9491, %v9504
    %v9506 = vcombine.low %v9498, %v9505
    %v9507 = vcombine.high %v9498, %v9505
    %v9509 = vunpack.c.l.s4 1983009808
    %v9510 = vunpack.c.0.s8 %v9509
    %v9511 = vlaneseq
    %v9512 = vshrl.u32 %v9511, 7
    %v9513 = vsub.s32 %v9510, %v9512
    %v9514 = vrot.slane %v8540, %v9513
    %v9515 = vcombine.high %v9514, %v9514
    %v9532 = vpack.c.bf16 %v9454, %v8652
    %v9533 = vpack.c.bf16 %v9455, %v8653
    %v9534 = vpack.c.bf16 %v9456, %v8688
    %v9535 = vpack.c.bf16 %v9457, %v8689
    %v9536 = vpack.c.bf16 %v9466, %v8724
    %v9537 = vpack.c.bf16 %v9467, %v8725
    %v9538 = vpack.c.bf16 %v8778, %v9468
    %v9539 = vpack.c.bf16 %v8779, %v9469
    %v9540 = vpack.c.bf16 %v8814, %v9478
    %v9541 = vpack.c.bf16 %v8815, %v9479
    %v9542 = vpack.c.bf16 %v9506, %v9488
    %v9543 = vpack.c.bf16 %v9507, %v9489
    %v9544 = vpack.c.bf16 %v9514, %v9514
    %v9545 = vpack.c.bf16 %v9515, %v9515
    %v9547 = vcombine.low %v8487, %v8490
    %v9549 = vunpack.c.l.s4 1983009808
    %v9550 = vunpack.c.0.s8 %v9549
    %v9551 = vlaneseq
    %v9552 = vshrl.u32 %v9551, 7
    %v9553 = vsub.s32 %v9550, %v9552
    %v9554 = vrot.slane %v9547, %v9553
    %v9555 = vcombine.low %v8933, %v9554
    %v9556 = vcombine.high %v8933, %v9554
    %v9557 = vcombine.low %v8495, %v8496
    %v9559 = vunpack.c.l.s4 1983009808
    %v9560 = vunpack.c.0.s8 %v9559
    %v9561 = vlaneseq
    %v9562 = vshrl.u32 %v9561, 7
    %v9563 = vsub.s32 %v9560, %v9562
    %v9564 = vrot.slane %v9557, %v9563
    %v9565 = vcombine.low %v9564, %v8976
    %v9566 = vcombine.high %v9564, %v8976
    %v9567 = vcombine.low %v8505, %v8508
    %v9569 = vunpack.c.l.s4 1983009808
    %v9570 = vunpack.c.0.s8 %v9569
    %v9571 = vlaneseq
    %v9572 = vshrl.u32 %v9571, 7
    %v9573 = vsub.s32 %v9570, %v9572
    %v9574 = vrot.slane %v9567, %v9573
    %v9575 = vcombine.low %v9574, %v9012
    %v9576 = vcombine.high %v9574, %v9012
    %v9577 = vcombine.low %v8513, %v8514
    %v9579 = vunpack.c.l.s4 1983009808
    %v9580 = vunpack.c.0.s8 %v9579
    %v9581 = vlaneseq
    %v9582 = vshrl.u32 %v9581, 7
    %v9583 = vsub.s32 %v9580, %v9582
    %v9584 = vrot.slane %v9577, %v9583
    %v9585 = vcombine.low %v9023, %v9584
    %v9586 = vcombine.high %v9023, %v9584
    %v9587 = vcombine.low %v8523, %v8526
    %v9589 = vunpack.c.l.s4 1983009808
    %v9590 = vunpack.c.0.s8 %v9589
    %v9591 = vlaneseq
    %v9592 = vshrl.u32 %v9591, 7
    %v9593 = vsub.s32 %v9590, %v9592
    %v9594 = vrot.slane %v9587, %v9593
    %v9595 = vcombine.low %v9059, %v9594
    %v9596 = vcombine.high %v9059, %v9594
    %v9597 = vcombine.low %v8531, %v8532
    %v9599 = vunpack.c.l.s4 1983009808
    %v9600 = vunpack.c.0.s8 %v9599
    %v9601 = vlaneseq
    %v9602 = vshrl.u32 %v9601, 7
    %v9603 = vsub.s32 %v9600, %v9602
    %v9604 = vrot.slane %v9597, %v9603
    %v9605 = vcombine.low %v9604, %v9387
    %v9606 = vcombine.high %v9604, %v9387
    %v9607 = vcombine.low %v8539, %v8540
    %v9609 = vunpack.c.l.s4 1983009808
    %v9610 = vunpack.c.0.s8 %v9609
    %v9611 = vlaneseq
    %v9612 = vshrl.u32 %v9611, 7
    %v9613 = vsub.s32 %v9610, %v9612
    %v9614 = vrot.slane %v9607, %v9613
    %v9615 = vcombine.low %v9394, %v9614
    %v9616 = vcombine.high %v9394, %v9614
    %v9618 = vunpack.c.l.s4 1983009808
    %v9619 = vunpack.c.0.s8 %v9618
    %v9620 = vlaneseq
    %v9621 = vshrl.u32 %v9620, 7
    %v9622 = vsub.s32 %v9619, %v9621
    %v9623 = vrot.slane %v8541, %v9622
    %v9624 = vcombine.high %v9623, %v9623
    %v9641 = vpack.c.bf16 %v9555, %v8923
    %v9642 = vpack.c.bf16 %v9556, %v8924
    %v9643 = vpack.c.bf16 %v9565, %v8959
    %v9644 = vpack.c.bf16 %v9566, %v8960
    %v9645 = vpack.c.bf16 %v9575, %v8995
    %v9646 = vpack.c.bf16 %v9576, %v8996
    %v9647 = vpack.c.bf16 %v9049, %v9585
    %v9648 = vpack.c.bf16 %v9050, %v9586
    %v9649 = vpack.c.bf16 %v9085, %v9595
    %v9650 = vpack.c.bf16 %v9086, %v9596
    %v9651 = vpack.c.bf16 %v9615, %v9605
    %v9652 = vpack.c.bf16 %v9616, %v9606
    %v9653 = vpack.c.bf16 %v9623, %v9623
    %v9654 = vpack.c.bf16 %v9624, %v9624
    %v9662 = vcombine.low %v8669, %v8680
    %v9663 = vcombine.high %v8669, %v8680
    %v9664 = vcombine.low %v8687, %v8698
    %v9665 = vcombine.high %v8687, %v8698
    %v9666 = vcombine.low %v8705, %v8716
    %v9667 = vcombine.high %v8705, %v8716
    %v9668 = vcombine.low %v8723, %v8734
    %v9669 = vcombine.high %v8723, %v8734
    %v9670 = vcombine.low %v8759, %v8770
    %v9671 = vcombine.high %v8759, %v8770
    %v9672 = vcombine.low %v8795, %v8806
    %v9673 = vcombine.high %v8795, %v8806
    %v9674 = vcombine.low %v8530, %v8533
    %v9676 = vunpack.c.l.s4 1983009808
    %v9677 = vunpack.c.0.s8 %v9676
    %v9678 = vlaneseq
    %v9679 = vshrl.u32 %v9678, 7
    %v9680 = vsub.s32 %v9677, %v9679
    %v9681 = vrot.slane %v9674, %v9680
    %v9682 = vcombine.low %v8813, %v9681
    %v9683 = vcombine.high %v8813, %v9681
    %v9684 = vcombine.low %v9487, %v9498
    %v9685 = vcombine.high %v9487, %v9498
    %v9686 = vcombine.low %v8542, %v8543
    %v9688 = vunpack.c.l.s4 1983009808
    %v9689 = vunpack.c.0.s8 %v9688
    %v9690 = vlaneseq
    %v9691 = vshrl.u32 %v9690, 7
    %v9692 = vsub.s32 %v9689, %v9691
    %v9693 = vrot.slane %v9686, %v9692
    %v9694 = vcombine.low %v9505, %v9693
    %v9695 = vcombine.high %v9505, %v9693
    %v9696 = vcombine.low %v8544, %v8545
    %v9697 = vcombine.low %v8546, %v8547
    %v9699 = vunpack.c.l.s4 1983009808
    %v9700 = vunpack.c.0.s8 %v9699
    %v9701 = vlaneseq
    %v9702 = vshrl.u32 %v9701, 7
    %v9703 = vsub.s32 %v9700, %v9702
    %v9704 = vrot.slane %v9696, %v9703
    %v9706 = vunpack.c.l.s4 1983009808
    %v9707 = vunpack.c.0.s8 %v9706
    %v9708 = vlaneseq
    %v9709 = vshrl.u32 %v9708, 7
    %v9710 = vsub.s32 %v9707, %v9709
    %v9711 = vrot.slane %v9697, %v9710
    %v9712 = vcombine.low %v9704, %v9711
    %v9713 = vcombine.high %v9704, %v9711
    %v9715 = vunpack.c.l.s4 1983009808
    %v9716 = vunpack.c.0.s8 %v9715
    %v9717 = vlaneseq
    %v9718 = vshrl.u32 %v9717, 7
    %v9719 = vsub.s32 %v9716, %v9718
    %v9720 = vrot.slane %v8548, %v9719
    %v9721 = vcombine.high %v9720, %v9720
    %v9744 = vpack.c.bf16 %v9664, %v9662
    %v9745 = vpack.c.bf16 %v9665, %v9663
    %v9746 = vpack.c.bf16 %v9668, %v9666
    %v9747 = vpack.c.bf16 %v9669, %v9667
    %v9748 = vpack.c.bf16 %v9670, %v9204
    %v9749 = vpack.c.bf16 %v9671, %v9205
    %v9750 = vpack.c.bf16 %v9672, %v9224
    %v9751 = vpack.c.bf16 %v9673, %v9225
    %v9752 = vpack.c.bf16 %v9684, %v9682
    %v9753 = vpack.c.bf16 %v9685, %v9683
    %v9754 = vpack.c.bf16 %v9712, %v9694
    %v9755 = vpack.c.bf16 %v9713, %v9695
    %v9756 = vpack.c.bf16 %v9720, %v9720
    %v9757 = vpack.c.bf16 %v9721, %v9721
    %v9759 = vcombine.low %v8958, %v8969
    %v9760 = vcombine.high %v8958, %v8969
    %v9761 = vcombine.low %v8994, %v9005
    %v9762 = vcombine.high %v8994, %v9005
    %v9763 = vcombine.low %v9030, %v9041
    %v9764 = vcombine.high %v9030, %v9041
    %v9765 = vcombine.low %v9048, %v9059
    %v9766 = vcombine.high %v9048, %v9059
    %v9767 = vcombine.low %v8531, %v8534
    %v9769 = vunpack.c.l.s4 1983009808
    %v9770 = vunpack.c.0.s8 %v9769
    %v9771 = vlaneseq
    %v9772 = vshrl.u32 %v9771, 7
    %v9773 = vsub.s32 %v9770, %v9772
    %v9774 = vrot.slane %v9767, %v9773
    %v9775 = vcombine.low %v9084, %v9774
    %v9776 = vcombine.high %v9084, %v9774
    %v9777 = vcombine.low %v8543, %v8544
    %v9779 = vunpack.c.l.s4 1983009808
    %v9780 = vunpack.c.0.s8 %v9779
    %v9781 = vlaneseq
    %v9782 = vshrl.u32 %v9781, 7
    %v9783 = vsub.s32 %v9780, %v9782
    %v9784 = vrot.slane %v9777, %v9783
    %v9785 = vcombine.low %v9614, %v9784
    %v9786 = vcombine.high %v9614, %v9784
    %v9787 = vcombine.low %v8545, %v8546
    %v9788 = vcombine.low %v8547, %v8548
    %v9790 = vunpack.c.l.s4 1983009808
    %v9791 = vunpack.c.0.s8 %v9790
    %v9792 = vlaneseq
    %v9793 = vshrl.u32 %v9792, 7
    %v9794 = vsub.s32 %v9791, %v9793
    %v9795 = vrot.slane %v9787, %v9794
    %v9797 = vunpack.c.l.s4 1983009808
    %v9798 = vunpack.c.0.s8 %v9797
    %v9799 = vlaneseq
    %v9800 = vshrl.u32 %v9799, 7
    %v9801 = vsub.s32 %v9798, %v9800
    %v9802 = vrot.slane %v9788, %v9801
    %v9803 = vcombine.low %v9795, %v9802
    %v9804 = vcombine.high %v9795, %v9802
    %v9806 = vunpack.c.l.s4 1983009808
    %v9807 = vunpack.c.0.s8 %v9806
    %v9808 = vlaneseq
    %v9809 = vshrl.u32 %v9808, 7
    %v9810 = vsub.s32 %v9807, %v9809
    %v9811 = vrot.slane %v8549, %v9810
    %v9812 = vcombine.high %v9811, %v9811
    %v9829 = vpack.c.bf16 %v9759, %v9321
    %v9830 = vpack.c.bf16 %v9760, %v9322
    %v9831 = vpack.c.bf16 %v9761, %v9333
    %v9832 = vpack.c.bf16 %v9762, %v9334
    %v9833 = vpack.c.bf16 %v9763, %v9345
    %v9834 = vpack.c.bf16 %v9764, %v9346
    %v9835 = vpack.c.bf16 %v9367, %v9765
    %v9836 = vpack.c.bf16 %v9368, %v9766
    %v9837 = vpack.c.bf16 %v9395, %v9775
    %v9838 = vpack.c.bf16 %v9396, %v9776
    %v9839 = vpack.c.bf16 %v9803, %v9785
    %v9840 = vpack.c.bf16 %v9804, %v9786
    %v9841 = vpack.c.bf16 %v9811, %v9811
    %v9842 = vpack.c.bf16 %v9812, %v9812
    %v9844 = vcombine.low %v9181, %v9191
    %v9845 = vcombine.high %v9181, %v9191
    %v9846 = vcombine.low %v9201, %v8741
    %v9847 = vcombine.high %v9201, %v8741
    %v9848 = vcombine.low %v9221, %v8777
    %v9849 = vcombine.high %v9221, %v8777
    %v9850 = vcombine.low %v8788, %v9233
    %v9851 = vcombine.high %v8788, %v9233
    %v9852 = vcombine.low %v8532, %v8535
    %v9854 = vunpack.c.l.s4 1983009808
    %v9855 = vunpack.c.0.s8 %v9854
    %v9856 = vlaneseq
    %v9857 = vshrl.u32 %v9856, 7
    %v9858 = vsub.s32 %v9855, %v9857
    %v9859 = vrot.slane %v9852, %v9858
    %v9860 = vcombine.low %v9243, %v9859
    %v9861 = vcombine.high %v9243, %v9859
    %v9862 = vcombine.low %v8540, %v8541
    %v9864 = vunpack.c.l.s4 1983009808
    %v9865 = vunpack.c.0.s8 %v9864
    %v9866 = vlaneseq
    %v9867 = vshrl.u32 %v9866, 7
    %v9868 = vsub.s32 %v9865, %v9867
    %v9869 = vrot.slane %v9862, %v9868
    %v9870 = vcombine.low %v9869, %v9704
    %v9871 = vcombine.high %v9869, %v9704
    %v9872 = vcombine.low %v8548, %v8549
    %v9874 = vunpack.c.l.s4 1983009808
    %v9875 = vunpack.c.0.s8 %v9874
    %v9876 = vlaneseq
    %v9877 = vshrl.u32 %v9876, 7
    %v9878 = vsub.s32 %v9875, %v9877
    %v9879 = vrot.slane %v9872, %v9878
    %v9880 = vcombine.low %v9711, %v9879
    %v9881 = vcombine.high %v9711, %v9879
    %v9883 = vunpack.c.l.s4 1983009808
    %v9884 = vunpack.c.0.s8 %v9883
    %v9885 = vlaneseq
    %v9886 = vshrl.u32 %v9885, 7
    %v9887 = vsub.s32 %v9884, %v9886
    %v9888 = vrot.slane %v8550, %v9887
    %v9889 = vcombine.high %v9888, %v9888
    %v9906 = vpack.c.bf16 %v9844, %v8688
    %v9907 = vpack.c.bf16 %v9845, %v8689
    %v9908 = vpack.c.bf16 %v9846, %v8724
    %v9909 = vpack.c.bf16 %v9847, %v8725
    %v9910 = vpack.c.bf16 %v9848, %v9468
    %v9911 = vpack.c.bf16 %v9849, %v9469
    %v9912 = vpack.c.bf16 %v8814, %v9850
    %v9913 = vpack.c.bf16 %v8815, %v9851
    %v9914 = vpack.c.bf16 %v9506, %v9860
    %v9915 = vpack.c.bf16 %v9507, %v9861
    %v9916 = vpack.c.bf16 %v9880, %v9870
    %v9917 = vpack.c.bf16 %v9881, %v9871
    %v9918 = vpack.c.bf16 %v9888, %v9888
    %v9919 = vpack.c.bf16 %v9889, %v9889
    %v9920 = vld [vmem:[%s7] sm:$0xf]
    %v9921 = vld [vmem:[%s7 + $0x4] sm:$0xf]
    %v9922 = vld [vmem:[%s7 + $0x8] sm:$0xf]
    %v9923 = vld [vmem:[%s7 + $0xc] sm:$0xf]
    %v9924 = vld [vmem:[%s7 + $0x10] sm:$0xf]
    %v9925 = vld [vmem:[%s7 + $0x14] sm:$0xf]
    %v9926 = vld [vmem:[%s7 + $0x18] sm:$0xf]
    %v9927 = vld [vmem:[%s7 + $0x1c] sm:$0xf]
    %v9928 = vld [vmem:[%s7 + $0x20] sm:$0xf]
    %v9929 = vld [vmem:[%s7 + $0x24] sm:$0xf]
    %v9930 = vld [vmem:[%s7 + $0x28] sm:$0xf]
    %v9931 = vld [vmem:[%s7 + $0x2c] sm:$0xf]
    %v9932 = vld [vmem:[%s7 + $0x30] sm:$0xf]
    %v9933 = vld [vmem:[%s7 + $0x34] sm:$0xf]
    %v9934 = vld [vmem:[%s7 + $0x38] sm:$0xf]
    %v9935 = vld [vmem:[%s7 + $0x3c] sm:$0xf]
    %v9936 = vld [vmem:[%s7 + $0x40] sm:$0xf]
    %v9937 = vld [vmem:[%s7 + $0x44] sm:$0xf]
    %v9938 = vld [vmem:[%s7 + $0x48] sm:$0xf]
    %v9939 = vld [vmem:[%s7 + $0x4c] sm:$0xf]
    %v9940 = vld [vmem:[%s7 + $0x50] sm:$0xf]
    %v9941 = vld [vmem:[%s7 + $0x54] sm:$0xf]
    %v9942 = vld [vmem:[%s7 + $0x58] sm:$0xf]
    %v9943 = vld [vmem:[%s7 + $0x5c] sm:$0xf]
    %v9944 = vld [vmem:[%s7 + $0x60] sm:$0xf]
    %v9945 = vld [vmem:[%s7 + $0x64] sm:$0xf]
    %v9946 = vld [vmem:[%s7 + $0x68] sm:$0xf]
    %v9947 = vld [vmem:[%s7 + $0x6c] sm:$0xf]
    %v9948 = vld [vmem:[%s7 + $0x70] sm:$0xf]
    %v9949 = vld [vmem:[%s7 + $0x74] sm:$0xf]
    %v9950 = vld [vmem:[%s7 + $0x78] sm:$0xf]
    %v9951 = vld [vmem:[%s7 + $0x7c] sm:$0xf]
    %v9952 = vld [vmem:[%s7 + $0x80] sm:$0xf]
    %v9953 = vld [vmem:[%s7 + $0x84] sm:$0xf]
    %v9954 = vld [vmem:[%s7 + $0x88] sm:$0xf]
    %v9955 = vld [vmem:[%s7 + $0x8c] sm:$0xf]
    %v9956 = vld [vmem:[%s7 + $0x90] sm:$0xf]
    %v9957 = vld [vmem:[%s7 + $0x94] sm:$0xf]
    %v9958 = vld [vmem:[%s7 + $0x98] sm:$0xf]
    %v9959 = vld [vmem:[%s7 + $0x9c] sm:$0xf]
    %v9960 = vld [vmem:[%s7 + $0xa0] sm:$0xf]
    %v9961 = vld [vmem:[%s7 + $0xa4] sm:$0xf]
    %v9962 = vld [vmem:[%s7 + $0xa8] sm:$0xf]
    %v9963 = vld [vmem:[%s7 + $0xac] sm:$0xf]
    %v9964 = vld [vmem:[%s7 + $0xb0] sm:$0xf]
    %v9965 = vld [vmem:[%s7 + $0xb4] sm:$0xf]
    %v9966 = vld [vmem:[%s7 + $0xb8] sm:$0xf]
    %v9967 = vld [vmem:[%s7 + $0xbc] sm:$0xf]
    %v9968 = vld [vmem:[%s7 + $0xc0] sm:$0xf]
    %v9969 = vld [vmem:[%s7 + $0xc4] sm:$0xf]
    %v9970 = vld [vmem:[%s7 + $0xc8] sm:$0xf]
    %v9971 = vld [vmem:[%s7 + $0xcc] sm:$0xf]
    %v9972 = vld [vmem:[%s7 + $0xd0] sm:$0xf]
    %v9973 = vld [vmem:[%s7 + $0xd4] sm:$0xf]
    %v9974 = vld [vmem:[%s7 + $0xd8] sm:$0xf]
    %v9975 = vld [vmem:[%s7 + $0xdc] sm:$0xf]
    %v9976 = vld [vmem:[%s7 + $0xe0] sm:$0xf]
    %v9977 = vld [vmem:[%s7 + $0xe4] sm:$0xf]
    %v9978 = vld [vmem:[%s7 + $0xe8] sm:$0xf]
    %v9979 = vld [vmem:[%s7 + $0xec] sm:$0xf]
    %v9980 = vld [vmem:[%s7 + $0xf0] sm:$0xf]
    %v9981 = vld [vmem:[%s7 + $0xf4] sm:$0xf]
    %v9982 = vld [vmem:[%s7 + $0xf8] sm:$0xf]
    %v9983 = vld [vmem:[%s7 + $0xfc] sm:$0xf]
    %v9984 = vld [vmem:[%s7 + $0x100] sm:$0xf]
    %v9985 = vld [vmem:[%s7 + $0x104] sm:$0xf]
    %v9986 = vld [vmem:[%s7 + $0x108] sm:$0xf]
    %v9987 = vld [vmem:[%s7 + $0x10c] sm:$0xf]
    %v9988 = vld [vmem:[%s7 + $0x110] sm:$0xf]
    %v9989 = vld [vmem:[%s7 + $0x114] sm:$0xf]
    %v9990 = vld [vmem:[%s7 + $0x118] sm:$0xf]
    %v9991 = vld [vmem:[%s7 + $0x11c] sm:$0xf]
    %v9992 = vld [vmem:[%s7 + $0x120] sm:$0xf]
    %v9993 = vld [vmem:[%s7 + $0x124] sm:$0xf]
    %v9994 = vld [vmem:[%s7 + $0x128] sm:$0xf]
    %v9995 = vld [vmem:[%s7 + $0x12c] sm:$0xf]
    %v9996 = vld [vmem:[%s7 + $0x130] sm:$0xf]
    %v9997 = vld [vmem:[%s7 + $0x134] sm:$0xf]
    %v9998 = vld [vmem:[%s7 + $0x138] sm:$0xf]
    %v9999 = vld [vmem:[%s7 + $0x13c] sm:$0xf]
    %v10000 = vld [vmem:[%s7 + $0x140] sm:$0xf]
    %v10001 = vld [vmem:[%s7 + $0x144] sm:$0xf]
    %v10002 = vld [vmem:[%s7 + $0x148] sm:$0xf]
    %v10003 = vld [vmem:[%s7 + $0x14c] sm:$0xf]
    %v10004 = vld [vmem:[%s7 + $0x150] sm:$0xf]
    %v10005 = vld [vmem:[%s7 + $0x154] sm:$0xf]
    %v10006 = vld [vmem:[%s7 + $0x158] sm:$0xf]
    %v10007 = vld [vmem:[%s7 + $0x15c] sm:$0xf]
    %v10008 = vld [vmem:[%s7 + $0x160] sm:$0xf]
    %v10009 = vld [vmem:[%s7 + $0x164] sm:$0xf]
    %v10010 = vld [vmem:[%s7 + $0x168] sm:$0xf]
    %v10011 = vld [vmem:[%s7 + $0x16c] sm:$0xf]
    %v10012 = vld [vmem:[%s7 + $0x170] sm:$0xf]
    %v10013 = vld [vmem:[%s7 + $0x174] sm:$0xf]
    %v10014 = vld [vmem:[%s7 + $0x178] sm:$0xf]
    %v10015 = vld [vmem:[%s7 + $0x17c] sm:$0xf]
    %v10016 = vld [vmem:[%s7 + $0x180] sm:$0xf]
    %v10017 = vld [vmem:[%s7 + $0x184] sm:$0xf]
    %v10018 = vld [vmem:[%s7 + $0x188] sm:$0xf]
    %v10019 = vld [vmem:[%s7 + $0x18c] sm:$0xf]
    %v10020 = vld [vmem:[%s7 + $0x190] sm:$0xf]
    %v10021 = vld [vmem:[%s7 + $0x194] sm:$0xf]
    %v10022 = vld [vmem:[%s7 + $0x198] sm:$0xf]
    %v10023 = vld [vmem:[%s7 + $0x19c] sm:$0xf]
    %v10024 = vld [vmem:[%s7 + $0x1a0] sm:$0xf]
    %v10025 = vld [vmem:[%s7 + $0x1a4] sm:$0xf]
    %v10026 = vld [vmem:[%s7 + $0x1a8] sm:$0xf]
    %v10027 = vld [vmem:[%s7 + $0x1ac] sm:$0xf]
    %v10028 = vld [vmem:[%s7 + $0x1b0] sm:$0xf]
    %v10029 = vld [vmem:[%s7 + $0x1b4] sm:$0xf]
    %v10030 = vld [vmem:[%s7 + $0x1b8] sm:$0xf]
    %v10031 = vld [vmem:[%s7 + $0x1bc] sm:$0xf]
    %v10032 = vld [vmem:[%s7 + $0x1c0] sm:$0xf]
    %v10033 = vld [vmem:[%s7 + $0x1c4] sm:$0xf]
    %v10034 = vld [vmem:[%s7 + $0x1c8] sm:$0xf]
    %v10035 = vld [vmem:[%s7 + $0x1cc] sm:$0xf]
    %v10036 = vld [vmem:[%s7 + $0x1d0] sm:$0xf]
    %v10037 = vld [vmem:[%s7 + $0x1d4] sm:$0xf]
    %v10038 = vld [vmem:[%s7 + $0x1d8] sm:$0xf]
    %v10039 = vld [vmem:[%s7 + $0x1dc] sm:$0xf]
    %v10040 = vld [vmem:[%s7 + $0x1e0] sm:$0xf]
    %v10041 = vld [vmem:[%s7 + $0x1e4] sm:$0xf]
    %v10042 = vld [vmem:[%s7 + $0x1e8] sm:$0xf]
    %v10043 = vld [vmem:[%s7 + $0x1ec] sm:$0xf]
    %v10044 = vld [vmem:[%s7 + $0x1f0] sm:$0xf]
    %v10045 = vld [vmem:[%s7 + $0x1f4] sm:$0xf]
    %v10046 = vld [vmem:[%s7 + $0x1f8] sm:$0xf]
    %v10047 = vld [vmem:[%s7 + $0x1fc] sm:$0xf]
    %v10048 = vld [vmem:[%s7 + $0x200] sm:$0xf]
    %v10049 = vld [vmem:[%s7 + $0x204] sm:$0xf]
    %v10050 = vld [vmem:[%s7 + $0x208] sm:$0xf]
    %v10051 = vld [vmem:[%s7 + $0x20c] sm:$0xf]
    %v10052 = vld [vmem:[%s7 + $0x210] sm:$0xf]
    %v10053 = vld [vmem:[%s7 + $0x214] sm:$0xf]
    %v10054 = vld [vmem:[%s7 + $0x218] sm:$0xf]
    %v10055 = vld [vmem:[%s7 + $0x21c] sm:$0xf]
    %v10056 = vld [vmem:[%s7 + $0x220] sm:$0xf]
    %v10057 = vld [vmem:[%s7 + $0x224] sm:$0xf]
    %v10058 = vld [vmem:[%s7 + $0x228] sm:$0xf]
    %v10059 = vld [vmem:[%s7 + $0x22c] sm:$0xf]
    %v10060 = vld [vmem:[%s7 + $0x230] sm:$0xf]
    %v10061 = vld [vmem:[%s7 + $0x234] sm:$0xf]
    %v10062 = vld [vmem:[%s7 + $0x238] sm:$0xf]
    %v10063 = vld [vmem:[%s7 + $0x23c] sm:$0xf]
    %v10064 = vld [vmem:[%s7 + $0x240] sm:$0xf]
    %v10065 = vld [vmem:[%s7 + $0x244] sm:$0xf]
    %v10066 = vld [vmem:[%s7 + $0x248] sm:$0xf]
    %v10067 = vld [vmem:[%s7 + $0x24c] sm:$0xf]
    %v10068 = vld [vmem:[%s7 + $0x250] sm:$0xf]
    %v10069 = vld [vmem:[%s7 + $0x254] sm:$0xf]
    %v10070 = vld [vmem:[%s7 + $0x258] sm:$0xf]
    %v10071 = vld [vmem:[%s7 + $0x25c] sm:$0xf]
    %v10072 = vld [vmem:[%s7 + $0x260] sm:$0xf]
    %v10073 = vld [vmem:[%s7 + $0x264] sm:$0xf]
    %v10074 = vld [vmem:[%s7 + $0x268] sm:$0xf]
    %v10075 = vld [vmem:[%s7 + $0x26c] sm:$0xf]
    %v10076 = vld [vmem:[%s7 + $0x270] sm:$0xf]
    %v10077 = vld [vmem:[%s7 + $0x274] sm:$0xf]
    %v10078 = vld [vmem:[%s7 + $0x278] sm:$0xf]
    %v10079 = vld [vmem:[%s7 + $0x27c] sm:$0xf]
    %v10080 = vld [vmem:[%s7 + $0x280] sm:$0xf]
    %v10081 = vld [vmem:[%s7 + $0x284] sm:$0xf]
    %v10082 = vld [vmem:[%s7 + $0x288] sm:$0xf]
    %v10083 = vld [vmem:[%s7 + $0x28c] sm:$0xf]
    %v10084 = vld [vmem:[%s7 + $0x290] sm:$0xf]
    %v10085 = vld [vmem:[%s7 + $0x294] sm:$0xf]
    %v10086 = vld [vmem:[%s7 + $0x298] sm:$0xf]
    %v10087 = vld [vmem:[%s7 + $0x29c] sm:$0xf]
    %v10088 = vld [vmem:[%s7 + $0x2a0] sm:$0xf]
    %v10089 = vld [vmem:[%s7 + $0x2a4] sm:$0xf]
    %v10090 = vld [vmem:[%s7 + $0x2a8] sm:$0xf]
    %v10091 = vld [vmem:[%s7 + $0x2ac] sm:$0xf]
    %v10092 = vld [vmem:[%s7 + $0x2b0] sm:$0xf]
    %v10093 = vld [vmem:[%s7 + $0x2b4] sm:$0xf]
    %v10094 = vld [vmem:[%s7 + $0x2b8] sm:$0xf]
    %v10095 = vld [vmem:[%s7 + $0x2bc] sm:$0xf]
    %v10096 = vld [vmem:[%s7 + $0x2c0] sm:$0xf]
    %v10097 = vld [vmem:[%s7 + $0x2c4] sm:$0xf]
    %v10098 = vld [vmem:[%s7 + $0x2c8] sm:$0xf]
    %v10099 = vld [vmem:[%s7 + $0x2cc] sm:$0xf]
    %v10100 = vld [vmem:[%s7 + $0x2d0] sm:$0xf]
    %v10101 = vld [vmem:[%s7 + $0x2d4] sm:$0xf]
    %v10102 = vld [vmem:[%s7 + $0x2d8] sm:$0xf]
    %v10103 = vld [vmem:[%s7 + $0x2dc] sm:$0xf]
    %v10104 = vld [vmem:[%s7 + $0x2e0] sm:$0xf]
    %v10105 = vld [vmem:[%s7 + $0x2e4] sm:$0xf]
    %v10106 = vld [vmem:[%s7 + $0x2e8] sm:$0xf]
    %v10107 = vld [vmem:[%s7 + $0x2ec] sm:$0xf]
    %v10108 = vld [vmem:[%s7 + $0x2f0] sm:$0xf]
    %v10109 = vld [vmem:[%s7 + $0x2f4] sm:$0xf]
    %v10110 = vld [vmem:[%s7 + $0x2f8] sm:$0xf]
    %v10111 = vld [vmem:[%s7 + $0x2fc] sm:$0xf]
    %v10112 = vld [vmem:[%s7 + $0x300] sm:$0xf]
    %v10113 = vld [vmem:[%s7 + $0x304] sm:$0xf]
    %v10114 = vld [vmem:[%s7 + $0x308] sm:$0xf]
    %v10115 = vld [vmem:[%s7 + $0x30c] sm:$0xf]
    %v10116 = vld [vmem:[%s7 + $0x310] sm:$0xf]
    %v10117 = vld [vmem:[%s7 + $0x314] sm:$0xf]
    %v10118 = vld [vmem:[%s7 + $0x318] sm:$0xf]
    %v10119 = vld [vmem:[%s7 + $0x31c] sm:$0xf]
    %v10120 = vld [vmem:[%s7 + $0x320] sm:$0xf]
    %v10121 = vld [vmem:[%s7 + $0x324] sm:$0xf]
    %v10122 = vld [vmem:[%s7 + $0x328] sm:$0xf]
    %v10123 = vld [vmem:[%s7 + $0x32c] sm:$0xf]
    %v10124 = vld [vmem:[%s7 + $0x330] sm:$0xf]
    %v10125 = vld [vmem:[%s7 + $0x334] sm:$0xf]
    %v10126 = vld [vmem:[%s7 + $0x338] sm:$0xf]
    %v10127 = vld [vmem:[%s7 + $0x33c] sm:$0xf]
    %v10128 = vld [vmem:[%s7 + $0x340] sm:$0xf]
    %v10129 = vld [vmem:[%s7 + $0x344] sm:$0xf]
    %v10130 = vld [vmem:[%s7 + $0x348] sm:$0xf]
    %v10131 = vld [vmem:[%s7 + $0x34c] sm:$0xf]
    %v10132 = vld [vmem:[%s7 + $0x350] sm:$0xf]
    %v10133 = vld [vmem:[%s7 + $0x354] sm:$0xf]
    %v10134 = vld [vmem:[%s7 + $0x358] sm:$0xf]
    %v10135 = vld [vmem:[%s7 + $0x35c] sm:$0xf]
    %v10136 = vld [vmem:[%s7 + $0x360] sm:$0xf]
    %v10137 = vld [vmem:[%s7 + $0x364] sm:$0xf]
    %v10138 = vld [vmem:[%s7 + $0x368] sm:$0xf]
    %v10139 = vld [vmem:[%s7 + $0x36c] sm:$0xf]
    %v10140 = vld [vmem:[%s7 + $0x370] sm:$0xf]
    %v10141 = vld [vmem:[%s7 + $0x374] sm:$0xf]
    %v10142 = vld [vmem:[%s7 + $0x378] sm:$0xf]
    %v10143 = vld [vmem:[%s7 + $0x37c] sm:$0xf]
    %v10144 = vld [vmem:[%s7 + $0x380] sm:$0xf]
    %v10145 = vld [vmem:[%s7 + $0x384] sm:$0xf]
    %v10146 = vld [vmem:[%s7 + $0x388] sm:$0xf]
    %v10147 = vld [vmem:[%s7 + $0x38c] sm:$0xf]
    %v10148 = vld [vmem:[%s7 + $0x390] sm:$0xf]
    %v10149 = vld [vmem:[%s7 + $0x394] sm:$0xf]
    %v10150 = vld [vmem:[%s7 + $0x398] sm:$0xf]
    %v10151 = vld [vmem:[%s7 + $0x39c] sm:$0xf]
    %v10152 = vld [vmem:[%s7 + $0x3a0] sm:$0xf]
    %v10153 = vld [vmem:[%s7 + $0x3a4] sm:$0xf]
    %v10154 = vld [vmem:[%s7 + $0x3a8] sm:$0xf]
    %v10155 = vld [vmem:[%s7 + $0x3ac] sm:$0xf]
    %v10156 = vld [vmem:[%s7 + $0x3b0] sm:$0xf]
    %v10157 = vld [vmem:[%s7 + $0x3b4] sm:$0xf]
    %v10158 = vld [vmem:[%s7 + $0x3b8] sm:$0xf]
    %v10159 = vld [vmem:[%s7 + $0x3bc] sm:$0xf]
    %v10160 = vld [vmem:[%s7 + $0x3c0] sm:$0xf]
    %v10161 = vld [vmem:[%s7 + $0x3c4] sm:$0xf]
    %v10162 = vld [vmem:[%s7 + $0x3c8] sm:$0xf]
    %v10163 = vld [vmem:[%s7 + $0x3cc] sm:$0xf]
    %v10164 = vld [vmem:[%s7 + $0x3d0] sm:$0xf]
    %v10165 = vld [vmem:[%s7 + $0x3d4] sm:$0xf]
    %v10166 = vld [vmem:[%s7 + $0x3d8] sm:$0xf]
    %v10167 = vld [vmem:[%s7 + $0x3dc] sm:$0xf]
    %v10168 = vld [vmem:[%s7 + $0x3e0] sm:$0xf]
    %v10169 = vld [vmem:[%s7 + $0x3e4] sm:$0xf]
    %v10170 = vld [vmem:[%s7 + $0x3e8] sm:$0xf]
    %v10171 = vld [vmem:[%s7 + $0x3ec] sm:$0xf]
    %v10172 = vld [vmem:[%s7 + $0x3f0] sm:$0xf]
    %v10173 = vld [vmem:[%s7 + $0x3f4] sm:$0xf]
    %v10174 = vld [vmem:[%s7 + $0x3f8] sm:$0xf]
    %v10175 = vld [vmem:[%s7 + $0x3fc] sm:$0xf]
    %v10176 = vld [vmem:[%s7 + $0x400] sm:$0xf]
    %v10177 = vld [vmem:[%s7 + $0x404] sm:$0xf]
    %v10178 = vld [vmem:[%s7 + $0x408] sm:$0xf]
    %v10179 = vld [vmem:[%s7 + $0x40c] sm:$0xf]
    %v10180 = vld [vmem:[%s7 + $0x410] sm:$0xf]
    %v10181 = vld [vmem:[%s7 + $0x414] sm:$0xf]
    %v10182 = vld [vmem:[%s7 + $0x418] sm:$0xf]
    %v10183 = vld [vmem:[%s7 + $0x41c] sm:$0xf]
    %v10184 = vld [vmem:[%s7 + $0x420] sm:$0xf]
    %v10185 = vld [vmem:[%s7 + $0x424] sm:$0xf]
    %v10186 = vld [vmem:[%s7 + $0x428] sm:$0xf]
    %v10187 = vld [vmem:[%s7 + $0x42c] sm:$0xf]
    %v10188 = vld [vmem:[%s7 + $0x430] sm:$0xf]
    %v10189 = vld [vmem:[%s7 + $0x434] sm:$0xf]
    %v10190 = vld [vmem:[%s7 + $0x438] sm:$0xf]
    %v10191 = vld [vmem:[%s7 + $0x43c] sm:$0xf]
    %v10192 = vld [vmem:[%s7 + $0x440] sm:$0xf]
    %v10193 = vld [vmem:[%s7 + $0x444] sm:$0xf]
    %v10194 = vld [vmem:[%s7 + $0x448] sm:$0xf]
    %v10195 = vld [vmem:[%s7 + $0x44c] sm:$0xf]
    %v10196 = vld [vmem:[%s7 + $0x450] sm:$0xf]
    %v10197 = vld [vmem:[%s7 + $0x454] sm:$0xf]
    %v10198 = vld [vmem:[%s7 + $0x458] sm:$0xf]
    %v10199 = vld [vmem:[%s7 + $0x45c] sm:$0xf]
    %v10200 = vld [vmem:[%s7 + $0x460] sm:$0xf]
    %v10201 = vld [vmem:[%s7 + $0x464] sm:$0xf]
    %v10202 = vld [vmem:[%s7 + $0x468] sm:$0xf]
    %v10203 = vld [vmem:[%s7 + $0x46c] sm:$0xf]
    %v10204 = vld [vmem:[%s7 + $0x470] sm:$0xf]
    %v10205 = vld [vmem:[%s7 + $0x474] sm:$0xf]
    %v10206 = vld [vmem:[%s7 + $0x478] sm:$0xf]
    %v10207 = vld [vmem:[%s7 + $0x47c] sm:$0xf]
    %v10496 = vunpack.c.l.b16 %v9920
    %v10497 = vunpack.c.l.b16 %v9921
    %v10498 = vunpack.c.l.b16 %v9922
    %v10499 = vunpack.c.l.b16 %v9923
    %v10500 = vunpack.c.l.b16 %v9924
    %v10501 = vunpack.c.l.b16 %v9925
    %v10502 = vunpack.c.l.b16 %v9926
    %v10503 = vunpack.c.l.b16 %v9927
    %v10504 = vunpack.c.l.b16 %v9928
    %v10505 = vunpack.c.l.b16 %v9929
    %v10506 = vunpack.c.l.b16 %v9930
    %v10507 = vunpack.c.l.b16 %v9931
    %v10508 = vunpack.c.l.b16 %v9932
    %v10509 = vunpack.c.l.b16 %v9933
    %v10510 = vunpack.c.l.b16 %v9934
    %v10511 = vunpack.c.l.b16 %v9935
    %v10512 = vunpack.c.l.b16 %v9936
    %v10513 = vunpack.c.l.b16 %v9937
    %v10514 = vunpack.c.l.b16 %v9938
    %v10515 = vunpack.c.l.b16 %v9939
    %v10516 = vunpack.c.l.b16 %v9940
    %v10517 = vunpack.c.l.b16 %v9941
    %v10518 = vunpack.c.l.b16 %v9942
    %v10519 = vunpack.c.l.b16 %v9943
    %v10520 = vunpack.c.l.b16 %v9944
    %v10521 = vunpack.c.l.b16 %v9945
    %v10522 = vunpack.c.l.b16 %v9946
    %v10523 = vunpack.c.l.b16 %v9947
    %v10524 = vunpack.c.l.b16 %v9948
    %v10525 = vunpack.c.l.b16 %v9949
    %v10526 = vunpack.c.l.b16 %v9950
    %v10527 = vunpack.c.l.b16 %v9951
    %v10528 = vunpack.c.l.b16 %v9952
    %v10529 = vunpack.c.l.b16 %v9953
    %v10530 = vunpack.c.l.b16 %v9954
    %v10531 = vunpack.c.l.b16 %v9955
    %v10532 = vunpack.c.l.b16 %v9956
    %v10533 = vunpack.c.l.b16 %v9957
    %v10534 = vunpack.c.l.b16 %v9958
    %v10535 = vunpack.c.l.b16 %v9959
    %v10536 = vunpack.c.l.b16 %v9960
    %v10537 = vunpack.c.l.b16 %v9961
    %v10538 = vunpack.c.l.b16 %v9962
    %v10539 = vunpack.c.l.b16 %v9963
    %v10540 = vunpack.c.l.b16 %v9964
    %v10541 = vunpack.c.l.b16 %v9965
    %v10542 = vunpack.c.l.b16 %v9966
    %v10543 = vunpack.c.l.b16 %v9967
    %v10544 = vunpack.c.l.b16 %v9968
    %v10545 = vunpack.c.l.b16 %v9969
    %v10546 = vunpack.c.l.b16 %v9970
    %v10547 = vunpack.c.l.b16 %v9971
    %v10548 = vunpack.c.l.b16 %v9972
    %v10549 = vunpack.c.l.b16 %v9973
    %v10550 = vunpack.c.l.b16 %v9974
    %v10551 = vunpack.c.l.b16 %v9975
    %v10552 = vunpack.c.l.b16 %v9976
    %v10553 = vunpack.c.l.b16 %v9977
    %v10554 = vunpack.c.l.b16 %v9978
    %v10555 = vunpack.c.l.b16 %v9979
    %v10556 = vunpack.c.l.b16 %v9980
    %v10557 = vunpack.c.l.b16 %v9981
    %v10558 = vunpack.c.l.b16 %v9982
    %v10559 = vunpack.c.l.b16 %v9983
    %v10560 = vunpack.c.l.b16 %v9984
    %v10561 = vunpack.c.l.b16 %v9985
    %v10562 = vunpack.c.l.b16 %v9986
    %v10563 = vunpack.c.l.b16 %v9987
    %v10564 = vunpack.c.l.b16 %v9988
    %v10565 = vunpack.c.l.b16 %v9989
    %v10566 = vunpack.c.l.b16 %v9990
    %v10567 = vunpack.c.l.b16 %v9991
    %v10568 = vunpack.c.l.b16 %v9992
    %v10569 = vunpack.c.l.b16 %v9993
    %v10570 = vunpack.c.l.b16 %v9994
    %v10571 = vunpack.c.l.b16 %v9995
    %v10572 = vunpack.c.l.b16 %v9996
    %v10573 = vunpack.c.l.b16 %v9997
    %v10574 = vunpack.c.l.b16 %v9998
    %v10575 = vunpack.c.l.b16 %v9999
    %v10576 = vunpack.c.l.b16 %v10000
    %v10577 = vunpack.c.l.b16 %v10001
    %v10578 = vunpack.c.l.b16 %v10002
    %v10579 = vunpack.c.l.b16 %v10003
    %v10580 = vunpack.c.l.b16 %v10004
    %v10581 = vunpack.c.l.b16 %v10005
    %v10582 = vunpack.c.l.b16 %v10006
    %v10583 = vunpack.c.l.b16 %v10007
    %v10584 = vunpack.c.l.b16 %v10008
    %v10585 = vunpack.c.l.b16 %v10009
    %v10586 = vunpack.c.l.b16 %v10010
    %v10587 = vunpack.c.l.b16 %v10011
    %v10588 = vunpack.c.l.b16 %v10012
    %v10589 = vunpack.c.l.b16 %v10013
    %v10590 = vunpack.c.l.b16 %v10014
    %v10591 = vunpack.c.l.b16 %v10015
    %v10592 = vunpack.c.l.b16 %v10016
    %v10593 = vunpack.c.l.b16 %v10017
    %v10594 = vunpack.c.l.b16 %v10018
    %v10595 = vunpack.c.l.b16 %v10019
    %v10596 = vunpack.c.l.b16 %v10020
    %v10597 = vunpack.c.l.b16 %v10021
    %v10598 = vunpack.c.l.b16 %v10022
    %v10599 = vunpack.c.l.b16 %v10023
    %v10600 = vunpack.c.l.b16 %v10024
    %v10601 = vunpack.c.l.b16 %v10025
    %v10602 = vunpack.c.l.b16 %v10026
    %v10603 = vunpack.c.l.b16 %v10027
    %v10604 = vunpack.c.l.b16 %v10028
    %v10605 = vunpack.c.l.b16 %v10029
    %v10606 = vunpack.c.l.b16 %v10030
    %v10607 = vunpack.c.l.b16 %v10031
    %v10608 = vunpack.c.l.b16 %v10032
    %v10609 = vunpack.c.l.b16 %v10033
    %v10610 = vunpack.c.l.b16 %v10034
    %v10611 = vunpack.c.l.b16 %v10035
    %v10612 = vunpack.c.l.b16 %v10036
    %v10613 = vunpack.c.l.b16 %v10037
    %v10614 = vunpack.c.l.b16 %v10038
    %v10615 = vunpack.c.l.b16 %v10039
    %v10616 = vunpack.c.l.b16 %v10040
    %v10617 = vunpack.c.l.b16 %v10041
    %v10618 = vunpack.c.l.b16 %v10042
    %v10619 = vunpack.c.l.b16 %v10043
    %v10620 = vunpack.c.l.b16 %v10044
    %v10621 = vunpack.c.l.b16 %v10045
    %v10622 = vunpack.c.l.b16 %v10046
    %v10623 = vunpack.c.l.b16 %v10047
    %v10624 = vunpack.c.l.b16 %v10048
    %v10625 = vunpack.c.l.b16 %v10049
    %v10626 = vunpack.c.l.b16 %v10050
    %v10627 = vunpack.c.l.b16 %v10051
    %v10628 = vunpack.c.l.b16 %v10052
    %v10629 = vunpack.c.l.b16 %v10053
    %v10630 = vunpack.c.l.b16 %v10054
    %v10631 = vunpack.c.l.b16 %v10055
    %v10632 = vunpack.c.l.b16 %v10056
    %v10633 = vunpack.c.l.b16 %v10057
    %v10634 = vunpack.c.l.b16 %v10058
    %v10635 = vunpack.c.l.b16 %v10059
    %v10636 = vunpack.c.l.b16 %v10060
    %v10637 = vunpack.c.l.b16 %v10061
    %v10638 = vunpack.c.l.b16 %v10062
    %v10639 = vunpack.c.l.b16 %v10063
    %v10640 = vunpack.c.l.b16 %v10064
    %v10641 = vunpack.c.l.b16 %v10065
    %v10642 = vunpack.c.l.b16 %v10066
    %v10643 = vunpack.c.l.b16 %v10067
    %v10644 = vunpack.c.l.b16 %v10068
    %v10645 = vunpack.c.l.b16 %v10069
    %v10646 = vunpack.c.l.b16 %v10070
    %v10647 = vunpack.c.l.b16 %v10071
    %v10648 = vunpack.c.l.b16 %v10072
    %v10649 = vunpack.c.l.b16 %v10073
    %v10650 = vunpack.c.l.b16 %v10074
    %v10651 = vunpack.c.l.b16 %v10075
    %v10652 = vunpack.c.l.b16 %v10076
    %v10653 = vunpack.c.l.b16 %v10077
    %v10654 = vunpack.c.l.b16 %v10078
    %v10655 = vunpack.c.l.b16 %v10079
    %v10656 = vunpack.c.l.b16 %v10080
    %v10657 = vunpack.c.l.b16 %v10081
    %v10658 = vunpack.c.l.b16 %v10082
    %v10659 = vunpack.c.l.b16 %v10083
    %v10660 = vunpack.c.l.b16 %v10084
    %v10661 = vunpack.c.l.b16 %v10085
    %v10662 = vunpack.c.l.b16 %v10086
    %v10663 = vunpack.c.l.b16 %v10087
    %v10664 = vunpack.c.l.b16 %v10088
    %v10665 = vunpack.c.l.b16 %v10089
    %v10666 = vunpack.c.l.b16 %v10090
    %v10667 = vunpack.c.l.b16 %v10091
    %v10668 = vunpack.c.l.b16 %v10092
    %v10669 = vunpack.c.l.b16 %v10093
    %v10670 = vunpack.c.l.b16 %v10094
    %v10671 = vunpack.c.l.b16 %v10095
    %v10672 = vunpack.c.l.b16 %v10096
    %v10673 = vunpack.c.l.b16 %v10097
    %v10674 = vunpack.c.l.b16 %v10098
    %v10675 = vunpack.c.l.b16 %v10099
    %v10676 = vunpack.c.l.b16 %v10100
    %v10677 = vunpack.c.l.b16 %v10101
    %v10678 = vunpack.c.l.b16 %v10102
    %v10679 = vunpack.c.l.b16 %v10103
    %v10680 = vunpack.c.l.b16 %v10104
    %v10681 = vunpack.c.l.b16 %v10105
    %v10682 = vunpack.c.l.b16 %v10106
    %v10683 = vunpack.c.l.b16 %v10107
    %v10684 = vunpack.c.l.b16 %v10108
    %v10685 = vunpack.c.l.b16 %v10109
    %v10686 = vunpack.c.l.b16 %v10110
    %v10687 = vunpack.c.l.b16 %v10111
    %v10688 = vunpack.c.l.b16 %v10112
    %v10689 = vunpack.c.l.b16 %v10113
    %v10690 = vunpack.c.l.b16 %v10114
    %v10691 = vunpack.c.l.b16 %v10115
    %v10692 = vunpack.c.l.b16 %v10116
    %v10693 = vunpack.c.l.b16 %v10117
    %v10694 = vunpack.c.l.b16 %v10118
    %v10695 = vunpack.c.l.b16 %v10119
    %v10696 = vunpack.c.l.b16 %v10120
    %v10697 = vunpack.c.l.b16 %v10121
    %v10698 = vunpack.c.l.b16 %v10122
    %v10699 = vunpack.c.l.b16 %v10123
    %v10700 = vunpack.c.l.b16 %v10124
    %v10701 = vunpack.c.l.b16 %v10125
    %v10702 = vunpack.c.l.b16 %v10126
    %v10703 = vunpack.c.l.b16 %v10127
    %v10704 = vunpack.c.l.b16 %v10128
    %v10705 = vunpack.c.l.b16 %v10129
    %v10706 = vunpack.c.l.b16 %v10130
    %v10707 = vunpack.c.l.b16 %v10131
    %v10708 = vunpack.c.l.b16 %v10132
    %v10709 = vunpack.c.l.b16 %v10133
    %v10710 = vunpack.c.l.b16 %v10134
    %v10711 = vunpack.c.l.b16 %v10135
    %v10712 = vunpack.c.l.b16 %v10136
    %v10713 = vunpack.c.l.b16 %v10137
    %v10714 = vunpack.c.l.b16 %v10138
    %v10715 = vunpack.c.l.b16 %v10139
    %v10716 = vunpack.c.l.b16 %v10140
    %v10717 = vunpack.c.l.b16 %v10141
    %v10718 = vunpack.c.l.b16 %v10142
    %v10719 = vunpack.c.l.b16 %v10143
    %v10720 = vunpack.c.l.b16 %v10144
    %v10721 = vunpack.c.l.b16 %v10145
    %v10722 = vunpack.c.l.b16 %v10146
    %v10723 = vunpack.c.l.b16 %v10147
    %v10724 = vunpack.c.l.b16 %v10148
    %v10725 = vunpack.c.l.b16 %v10149
    %v10726 = vunpack.c.l.b16 %v10150
    %v10727 = vunpack.c.l.b16 %v10151
    %v10728 = vunpack.c.l.b16 %v10152
    %v10729 = vunpack.c.l.b16 %v10153
    %v10730 = vunpack.c.l.b16 %v10154
    %v10731 = vunpack.c.l.b16 %v10155
    %v10732 = vunpack.c.l.b16 %v10156
    %v10733 = vunpack.c.l.b16 %v10157
    %v10734 = vunpack.c.l.b16 %v10158
    %v10735 = vunpack.c.l.b16 %v10159
    %v10736 = vunpack.c.l.b16 %v10160
    %v10737 = vunpack.c.l.b16 %v10161
    %v10738 = vunpack.c.l.b16 %v10162
    %v10739 = vunpack.c.l.b16 %v10163
    %v10740 = vunpack.c.l.b16 %v10164
    %v10741 = vunpack.c.l.b16 %v10165
    %v10742 = vunpack.c.l.b16 %v10166
    %v10743 = vunpack.c.l.b16 %v10167
    %v10744 = vunpack.c.l.b16 %v10168
    %v10745 = vunpack.c.l.b16 %v10169
    %v10746 = vunpack.c.l.b16 %v10170
    %v10747 = vunpack.c.l.b16 %v10171
    %v10748 = vunpack.c.l.b16 %v10172
    %v10749 = vunpack.c.l.b16 %v10173
    %v10750 = vunpack.c.l.b16 %v10174
    %v10751 = vunpack.c.l.b16 %v10175
    %v10752 = vunpack.c.l.b16 %v10176
    %v10753 = vunpack.c.l.b16 %v10177
    %v10754 = vunpack.c.l.b16 %v10178
    %v10755 = vunpack.c.l.b16 %v10179
    %v10756 = vunpack.c.l.b16 %v10180
    %v10757 = vunpack.c.l.b16 %v10181
    %v10758 = vunpack.c.l.b16 %v10182
    %v10759 = vunpack.c.l.b16 %v10183
    %v10760 = vunpack.c.l.b16 %v10184
    %v10761 = vunpack.c.l.b16 %v10185
    %v10762 = vunpack.c.l.b16 %v10186
    %v10763 = vunpack.c.l.b16 %v10187
    %v10764 = vunpack.c.l.b16 %v10188
    %v10765 = vunpack.c.l.b16 %v10189
    %v10766 = vunpack.c.l.b16 %v10190
    %v10767 = vunpack.c.l.b16 %v10191
    %v10768 = vunpack.c.l.b16 %v10192
    %v10769 = vunpack.c.l.b16 %v10193
    %v10770 = vunpack.c.l.b16 %v10194
    %v10771 = vunpack.c.l.b16 %v10195
    %v10772 = vunpack.c.l.b16 %v10196
    %v10773 = vunpack.c.l.b16 %v10197
    %v10774 = vunpack.c.l.b16 %v10198
    %v10775 = vunpack.c.l.b16 %v10199
    %v10776 = vunpack.c.l.b16 %v10200
    %v10777 = vunpack.c.l.b16 %v10201
    %v10778 = vunpack.c.l.b16 %v10202
    %v10779 = vunpack.c.l.b16 %v10203
    %v10780 = vunpack.c.l.b16 %v10204
    %v10781 = vunpack.c.l.b16 %v10205
    %v10782 = vunpack.c.l.b16 %v10206
    %v10783 = vunpack.c.l.b16 %v10207
    %v10784 = vpack.c.b16 %v10497, %v10496
    %v10785 = vpack.c.b16 %v10499, %v10498
    %v10786 = vpack.c.b16 %v10501, %v10500
    %v10787 = vpack.c.b16 %v10503, %v10502
    %v10788 = vpack.c.b16 %v10505, %v10504
    %v10789 = vpack.c.b16 %v10507, %v10506
    %v10790 = vpack.c.b16 %v10509, %v10508
    %v10791 = vpack.c.b16 %v10511, %v10510
    %v10792 = vpack.c.b16 %v10513, %v10512
    %v10793 = vpack.c.b16 %v10515, %v10514
    %v10794 = vpack.c.b16 %v10517, %v10516
    %v10795 = vpack.c.b16 %v10519, %v10518
    %v10796 = vpack.c.b16 %v10521, %v10520
    %v10797 = vpack.c.b16 %v10523, %v10522
    %v10798 = vpack.c.b16 %v10525, %v10524
    %v10799 = vpack.c.b16 %v10527, %v10526
    %v10800 = vpack.c.b16 %v10529, %v10528
    %v10801 = vpack.c.b16 %v10531, %v10530
    %v10802 = vpack.c.b16 %v10533, %v10532
    %v10803 = vpack.c.b16 %v10535, %v10534
    %v10804 = vpack.c.b16 %v10537, %v10536
    %v10805 = vpack.c.b16 %v10539, %v10538
    %v10806 = vpack.c.b16 %v10541, %v10540
    %v10807 = vpack.c.b16 %v10543, %v10542
    %v10808 = vpack.c.b16 %v10545, %v10544
    %v10809 = vpack.c.b16 %v10547, %v10546
    %v10810 = vpack.c.b16 %v10549, %v10548
    %v10811 = vpack.c.b16 %v10551, %v10550
    %v10812 = vpack.c.b16 %v10553, %v10552
    %v10813 = vpack.c.b16 %v10555, %v10554
    %v10814 = vpack.c.b16 %v10557, %v10556
    %v10815 = vpack.c.b16 %v10559, %v10558
    %v10816 = vpack.c.b16 %v10561, %v10560
    %v10817 = vpack.c.b16 %v10563, %v10562
    %v10818 = vpack.c.b16 %v10565, %v10564
    %v10819 = vpack.c.b16 %v10567, %v10566
    %v10820 = vpack.c.b16 %v10569, %v10568
    %v10821 = vpack.c.b16 %v10571, %v10570
    %v10822 = vpack.c.b16 %v10573, %v10572
    %v10823 = vpack.c.b16 %v10575, %v10574
    %v10824 = vpack.c.b16 %v10577, %v10576
    %v10825 = vpack.c.b16 %v10579, %v10578
    %v10826 = vpack.c.b16 %v10581, %v10580
    %v10827 = vpack.c.b16 %v10583, %v10582
    %v10828 = vpack.c.b16 %v10585, %v10584
    %v10829 = vpack.c.b16 %v10587, %v10586
    %v10830 = vpack.c.b16 %v10589, %v10588
    %v10831 = vpack.c.b16 %v10591, %v10590
    %v10832 = vpack.c.b16 %v10593, %v10592
    %v10833 = vpack.c.b16 %v10595, %v10594
    %v10834 = vpack.c.b16 %v10597, %v10596
    %v10835 = vpack.c.b16 %v10599, %v10598
    %v10836 = vpack.c.b16 %v10601, %v10600
    %v10837 = vpack.c.b16 %v10603, %v10602
    %v10838 = vpack.c.b16 %v10605, %v10604
    %v10839 = vpack.c.b16 %v10607, %v10606
    %v10840 = vpack.c.b16 %v10609, %v10608
    %v10841 = vpack.c.b16 %v10611, %v10610
    %v10842 = vpack.c.b16 %v10613, %v10612
    %v10843 = vpack.c.b16 %v10615, %v10614
    %v10844 = vpack.c.b16 %v10617, %v10616
    %v10845 = vpack.c.b16 %v10619, %v10618
    %v10846 = vpack.c.b16 %v10621, %v10620
    %v10847 = vpack.c.b16 %v10623, %v10622
    %v10848 = vpack.c.b16 %v10625, %v10624
    %v10849 = vpack.c.b16 %v10627, %v10626
    %v10850 = vpack.c.b16 %v10629, %v10628
    %v10851 = vpack.c.b16 %v10631, %v10630
    %v10852 = vpack.c.b16 %v10633, %v10632
    %v10853 = vpack.c.b16 %v10635, %v10634
    %v10854 = vpack.c.b16 %v10637, %v10636
    %v10855 = vpack.c.b16 %v10639, %v10638
    %v10856 = vpack.c.b16 %v10641, %v10640
    %v10857 = vpack.c.b16 %v10643, %v10642
    %v10858 = vpack.c.b16 %v10645, %v10644
    %v10859 = vpack.c.b16 %v10647, %v10646
    %v10860 = vpack.c.b16 %v10649, %v10648
    %v10861 = vpack.c.b16 %v10651, %v10650
    %v10862 = vpack.c.b16 %v10653, %v10652
    %v10863 = vpack.c.b16 %v10655, %v10654
    %v10864 = vpack.c.b16 %v10657, %v10656
    %v10865 = vpack.c.b16 %v10659, %v10658
    %v10866 = vpack.c.b16 %v10661, %v10660
    %v10867 = vpack.c.b16 %v10663, %v10662
    %v10868 = vpack.c.b16 %v10665, %v10664
    %v10869 = vpack.c.b16 %v10667, %v10666
    %v10870 = vpack.c.b16 %v10669, %v10668
    %v10871 = vpack.c.b16 %v10671, %v10670
    %v10872 = vpack.c.b16 %v10673, %v10672
    %v10873 = vpack.c.b16 %v10675, %v10674
    %v10874 = vpack.c.b16 %v10677, %v10676
    %v10875 = vpack.c.b16 %v10679, %v10678
    %v10876 = vpack.c.b16 %v10681, %v10680
    %v10877 = vpack.c.b16 %v10683, %v10682
    %v10878 = vpack.c.b16 %v10685, %v10684
    %v10879 = vpack.c.b16 %v10687, %v10686
    %v10880 = vpack.c.b16 %v10689, %v10688
    %v10881 = vpack.c.b16 %v10691, %v10690
    %v10882 = vpack.c.b16 %v10693, %v10692
    %v10883 = vpack.c.b16 %v10695, %v10694
    %v10884 = vpack.c.b16 %v10697, %v10696
    %v10885 = vpack.c.b16 %v10699, %v10698
    %v10886 = vpack.c.b16 %v10701, %v10700
    %v10887 = vpack.c.b16 %v10703, %v10702
    %v10888 = vpack.c.b16 %v10705, %v10704
    %v10889 = vpack.c.b16 %v10707, %v10706
    %v10890 = vpack.c.b16 %v10709, %v10708
    %v10891 = vpack.c.b16 %v10711, %v10710
    %v10892 = vpack.c.b16 %v10713, %v10712
    %v10893 = vpack.c.b16 %v10715, %v10714
    %v10894 = vpack.c.b16 %v10717, %v10716
    %v10895 = vpack.c.b16 %v10719, %v10718
    %v10896 = vpack.c.b16 %v10721, %v10720
    %v10897 = vpack.c.b16 %v10723, %v10722
    %v10898 = vpack.c.b16 %v10725, %v10724
    %v10899 = vpack.c.b16 %v10727, %v10726
    %v10900 = vpack.c.b16 %v10729, %v10728
    %v10901 = vpack.c.b16 %v10731, %v10730
    %v10902 = vpack.c.b16 %v10733, %v10732
    %v10903 = vpack.c.b16 %v10735, %v10734
    %v10904 = vpack.c.b16 %v10737, %v10736
    %v10905 = vpack.c.b16 %v10739, %v10738
    %v10906 = vpack.c.b16 %v10741, %v10740
    %v10907 = vpack.c.b16 %v10743, %v10742
    %v10908 = vpack.c.b16 %v10745, %v10744
    %v10909 = vpack.c.b16 %v10747, %v10746
    %v10910 = vpack.c.b16 %v10749, %v10748
    %v10911 = vpack.c.b16 %v10751, %v10750
    %v10912 = vpack.c.b16 %v10753, %v10752
    %v10913 = vpack.c.b16 %v10755, %v10754
    %v10914 = vpack.c.b16 %v10757, %v10756
    %v10915 = vpack.c.b16 %v10759, %v10758
    %v10916 = vpack.c.b16 %v10761, %v10760
    %v10917 = vpack.c.b16 %v10763, %v10762
    %v10918 = vpack.c.b16 %v10765, %v10764
    %v10919 = vpack.c.b16 %v10767, %v10766
    %v10920 = vpack.c.b16 %v10769, %v10768
    %v10921 = vpack.c.b16 %v10771, %v10770
    %v10922 = vpack.c.b16 %v10773, %v10772
    %v10923 = vpack.c.b16 %v10775, %v10774
    %v10924 = vpack.c.b16 %v10777, %v10776
    %v10925 = vpack.c.b16 %v10779, %v10778
    %v10926 = vpack.c.b16 %v10781, %v10780
    %v10927 = vpack.c.b16 %v10783, %v10782
    %11072 = vmatprep.subr.bf16.mxu0 0
    %11073 = vmatpush1.bf16.msra.mxu0 %v10784
    %11074 = vmatprep.subr.bf16.mxu0 0
    %11075 = vmatpush1.bf16.msra.mxu0 %v10785
    %11076 = vmatprep.subr.bf16.mxu0 0
    %11077 = vmatpush1.bf16.msra.mxu0 %v10786
    %11078 = vmatprep.subr.bf16.mxu0 0
    %11079 = vmatpush1.bf16.msra.mxu0 %v10787
    %11080 = vmatprep.subr.bf16.mxu0 0
    %11081 = vmatpush1.bf16.msra.mxu0 %v10788
    %11082 = vmatprep.subr.bf16.mxu0 0
    %11083 = vmatpush1.bf16.msra.mxu0 %v10789
    %11084 = vmatprep.subr.bf16.mxu0 0
    %11085 = vmatpush1.bf16.msra.mxu0 %v10790
    %11086 = vmatprep.subr.bf16.mxu0 0
    %11087 = vmatpush1.bf16.msra.mxu0 %v10791
    %11088 = vmatprep.subr.bf16.mxu0 0
    %11089 = vmatpush1.bf16.msra.mxu0 %v10792
    %11090 = vmatprep.subr.bf16.mxu0 0
    %11091 = vmatpush1.bf16.msra.mxu0 %v10793
    %11092 = vmatprep.subr.bf16.mxu0 0
    %11093 = vmatpush1.bf16.msra.mxu0 %v10794
    %11094 = vmatprep.subr.bf16.mxu0 0
    %11095 = vmatpush1.bf16.msra.mxu0 %v10795
    %11096 = vmatprep.subr.bf16.mxu0 0
    %11097 = vmatpush1.bf16.msra.mxu0 %v10796
    %11098 = vmatprep.subr.bf16.mxu0 0
    %11099 = vmatpush1.bf16.msra.mxu0 %v10797
    %11100 = vmatprep.subr.bf16.mxu0 0
    %11101 = vmatpush1.bf16.msra.mxu0 %v10798
    %11102 = vmatprep.subr.bf16.mxu0 0
    %11103 = vmatpush1.bf16.msra.mxu0 %v10799
    %11104 = vmatprep.mubr.bf16.mxu0 %v8851
    %11105 = vmatmul.mubr.bf16.gmra.mrb[0].mxu0 %v8850
    %v11106 = vpop.f32.mrb[0].mxu0
    %v11107 = vadd.f32 0.0, %v11106
    %v11108 = vpop.f32.mrb[0].mxu0
    %v11109 = vpop.f32.mrb[0].mxu0
    %v11110 = vadd.f32 0.0, %v11109
    %v11111 = vpop.f32.mrb[0].mxu0
    %11112 = vmatprep.mubr.bf16.mxu0 %v8853
    %11113 = vmatmul.mubr.bf16.gmra.mrb[0].mxu0 %v8852
    %v11114 = vpop.f32.mrb[0].mxu0
    %v11115 = vadd.f32 0.0, %v11114
    %v11116 = vpop.f32.mrb[0].mxu0
    %v11117 = vpop.f32.mrb[0].mxu0
    %v11118 = vadd.f32 0.0, %v11117
    %v11119 = vpop.f32.mrb[0].mxu0
    %11120 = vmatprep.mubr.bf16.mxu0 %v8855
    %11121 = vmatmul.mubr.bf16.gmra.mrb[0].mxu0 %v8854
    %v11122 = vpop.f32.mrb[0].mxu0
    %v11123 = vadd.f32 0.0, %v11122
    %v11124 = vpop.f32.mrb[0].mxu0
    %v11125 = vpop.f32.mrb[0].mxu0
    %v11126 = vadd.f32 0.0, %v11125
    %v11127 = vpop.f32.mrb[0].mxu0
    %11128 = vmatprep.mubr.bf16.mxu0 %v8857
    %11129 = vmatmul.mubr.bf16.gmra.mrb[0].mxu0 %v8856
    %v11130 = vpop.f32.mrb[0].mxu0
    %v11131 = vadd.f32 0.0, %v11130
    %v11132 = vpop.f32.mrb[0].mxu0
    %v11133 = vpop.f32.mrb[0].mxu0
    %v11134 = vadd.f32 0.0, %v11133
    %v11135 = vpop.f32.mrb[0].mxu0
    %11136 = vmatprep.mubr.bf16.mxu0 %v8859
    %11137 = vmatmul.mubr.bf16.gmra.mrb[0].mxu0 %v8858
    %v11138 = vpop.f32.mrb[0].mxu0
    %v11139 = vadd.f32 0.0, %v11138
    %v11140 = vpop.f32.mrb[0].mxu0
    %v11141 = vpop.f32.mrb[0].mxu0
    %v11142 = vadd.f32 0.0, %v11141
    %v11143 = vpop.f32.mrb[0].mxu0
    %11144 = vmatprep.mubr.bf16.mxu0 %v8861
    %11145 = vmatmul.mubr.bf16.gmra.mrb[0].mxu0 %v8860
    %v11146 = vpop.f32.mrb[0].mxu0
    %v11147 = vadd.f32 0.0, %v11146
    %v11148 = vpop.f32.mrb[0].mxu0
    %v11149 = vpop.f32.mrb[0].mxu0
    %v11150 = vadd.f32 0.0, %v11149
    %v11151 = vpop.f32.mrb[0].mxu0
    %11152 = vmatprep.mubr.bf16.mxu0 %v8863
    %11153 = vmatmul.mubr.bf16.gmra.mrb[0].mxu0 %v8862
    %v11154 = vpop.f32.mrb[0].mxu0
    %v11155 = vadd.f32 0.0, %v11154
    %v11156 = vpop.f32.mrb[0].mxu0
    %v11157 = vpop.f32.mrb[0].mxu0
    %v11158 = vpop.f32.mrb[0].mxu0
    %11159 = vdwg.mxu0
    %11160 = vmatprep.subr.bf16.mxu0 0
    %11161 = vmatpush1.bf16.msra.mxu0 %v10800
    %11162 = vmatprep.subr.bf16.mxu0 0
    %11163 = vmatpush1.bf16.msra.mxu0 %v10801
    %11164 = vmatprep.subr.bf16.mxu0 0
    %11165 = vmatpush1.bf16.msra.mxu0 %v10802
    %11166 = vmatprep.subr.bf16.mxu0 0
    %11167 = vmatpush1.bf16.msra.mxu0 %v10803
    %11168 = vmatprep.subr.bf16.mxu0 0
    %11169 = vmatpush1.bf16.msra.mxu0 %v10804
    %11170 = vmatprep.subr.bf16.mxu0 0
    %11171 = vmatpush1.bf16.msra.mxu0 %v10805
    %11172 = vmatprep.subr.bf16.mxu0 0
    %11173 = vmatpush1.bf16.msra.mxu0 %v10806
    %11174 = vmatprep.subr.bf16.mxu0 0
    %11175 = vmatpush1.bf16.msra.mxu0 %v10807
    %11176 = vmatprep.subr.bf16.mxu0 0
    %11177 = vmatpush1.bf16.msra.mxu0 %v10808
    %11178 = vmatprep.subr.bf16.mxu0 0
    %11179 = vmatpush1.bf16.msra.mxu0 %v10809
    %11180 = vmatprep.subr.bf16.mxu0 0
    %11181 = vmatpush1.bf16.msra.mxu0 %v10810
    %11182 = vmatprep.subr.bf16.mxu0 0
    %11183 = vmatpush1.bf16.msra.mxu0 %v10811
    %11184 = vmatprep.subr.bf16.mxu0 0
    %11185 = vmatpush1.bf16.msra.mxu0 %v10812
    %11186 = vmatprep.subr.bf16.mxu0 0
    %11187 = vmatpush1.bf16.msra.mxu0 %v10813
    %11188 = vmatprep.subr.bf16.mxu0 0
    %11189 = vmatpush1.bf16.msra.mxu0 %v10814
    %11190 = vmatprep.subr.bf16.mxu0 0
    %11191 = vmatpush1.bf16.msra.mxu0 %v10815
    %11192 = vmatprep.mubr.bf16.mxu0 %v9122
    %11193 = vmatmul.mubr.bf16.gmra.mrb[0].mxu0 %v9121
    %v11194 = vpop.f32.mrb[0].mxu0
    %v11195 = vadd.f32 %v11107, %v11194
    %v11196 = vpop.f32.mrb[0].mxu0
    %v11197 = vpop.f32.mrb[0].mxu0
    %v11198 = vadd.f32 %v11110, %v11197
    %v11199 = vpop.f32.mrb[0].mxu0
    %11200 = vmatprep.mubr.bf16.mxu0 %v9124
    %11201 = vmatmul.mubr.bf16.gmra.mrb[0].mxu0 %v9123
    %v11202 = vpop.f32.mrb[0].mxu0
    %v11203 = vadd.f32 %v11115, %v11202
    %v11204 = vpop.f32.mrb[0].mxu0
    %v11205 = vpop.f32.mrb[0].mxu0
    %v11206 = vadd.f32 %v11118, %v11205
    %v11207 = vpop.f32.mrb[0].mxu0
    %11208 = vmatprep.mubr.bf16.mxu0 %v9126
    %11209 = vmatmul.mubr.bf16.gmra.mrb[0].mxu0 %v9125
    %v11210 = vpop.f32.mrb[0].mxu0
    %v11211 = vadd.f32 %v11123, %v11210
    %v11212 = vpop.f32.mrb[0].mxu0
    %v11213 = vpop.f32.mrb[0].mxu0
    %v11214 = vadd.f32 %v11126, %v11213
    %v11215 = vpop.f32.mrb[0].mxu0
    %11216 = vmatprep.mubr.bf16.mxu0 %v9128
    %11217 = vmatmul.mubr.bf16.gmra.mrb[0].mxu0 %v9127
    %v11218 = vpop.f32.mrb[0].mxu0
    %v11219 = vadd.f32 %v11131, %v11218
    %v11220 = vpop.f32.mrb[0].mxu0
    %v11221 = vpop.f32.mrb[0].mxu0
    %v11222 = vadd.f32 %v11134, %v11221
    %v11223 = vpop.f32.mrb[0].mxu0
    %11224 = vmatprep.mubr.bf16.mxu0 %v9130
    %11225 = vmatmul.mubr.bf16.gmra.mrb[0].mxu0 %v9129
    %v11226 = vpop.f32.mrb[0].mxu0
    %v11227 = vadd.f32 %v11139, %v11226
    %v11228 = vpop.f32.mrb[0].mxu0
    %v11229 = vpop.f32.mrb[0].mxu0
    %v11230 = vadd.f32 %v11142, %v11229
    %v11231 = vpop.f32.mrb[0].mxu0
    %11232 = vmatprep.mubr.bf16.mxu0 %v9132
    %11233 = vmatmul.mubr.bf16.gmra.mrb[0].mxu0 %v9131
    %v11234 = vpop.f32.mrb[0].mxu0
    %v11235 = vadd.f32 %v11147, %v11234
    %v11236 = vpop.f32.mrb[0].mxu0
    %v11237 = vpop.f32.mrb[0].mxu0
    %v11238 = vadd.f32 %v11150, %v11237
    %v11239 = vpop.f32.mrb[0].mxu0
    %11240 = vmatprep.mubr.bf16.mxu0 %v9134
    %11241 = vmatmul.mubr.bf16.gmra.mrb[0].mxu0 %v9133
    %v11242 = vpop.f32.mrb[0].mxu0
    %v11243 = vadd.f32 %v11155, %v11242
    %v11244 = vpop.f32.mrb[0].mxu0
    %v11245 = vpop.f32.mrb[0].mxu0
    %v11246 = vpop.f32.mrb[0].mxu0
    %11247 = vdwg.mxu0
    %11248 = vmatprep.subr.bf16.mxu0 0
    %11249 = vmatpush1.bf16.msra.mxu0 %v10816
    %11250 = vmatprep.subr.bf16.mxu0 0
    %11251 = vmatpush1.bf16.msra.mxu0 %v10817
    %11252 = vmatprep.subr.bf16.mxu0 0
    %11253 = vmatpush1.bf16.msra.mxu0 %v10818
    %11254 = vmatprep.subr.bf16.mxu0 0
    %11255 = vmatpush1.bf16.msra.mxu0 %v10819
    %11256 = vmatprep.subr.bf16.mxu0 0
    %11257 = vmatpush1.bf16.msra.mxu0 %v10820
    %11258 = vmatprep.subr.bf16.mxu0 0
    %11259 = vmatpush1.bf16.msra.mxu0 %v10821
    %11260 = vmatprep.subr.bf16.mxu0 0
    %11261 = vmatpush1.bf16.msra.mxu0 %v10822
    %11262 = vmatprep.subr.bf16.mxu0 0
    %11263 = vmatpush1.bf16.msra.mxu0 %v10823
    %11264 = vmatprep.subr.bf16.mxu0 0
    %11265 = vmatpush1.bf16.msra.mxu0 %v10824
    %11266 = vmatprep.subr.bf16.mxu0 0
    %11267 = vmatpush1.bf16.msra.mxu0 %v10825
    %11268 = vmatprep.subr.bf16.mxu0 0
    %11269 = vmatpush1.bf16.msra.mxu0 %v10826
    %11270 = vmatprep.subr.bf16.mxu0 0
    %11271 = vmatpush1.bf16.msra.mxu0 %v10827
    %11272 = vmatprep.subr.bf16.mxu0 0
    %11273 = vmatpush1.bf16.msra.mxu0 %v10828
    %11274 = vmatprep.subr.bf16.mxu0 0
    %11275 = vmatpush1.bf16.msra.mxu0 %v10829
    %11276 = vmatprep.subr.bf16.mxu0 0
    %11277 = vmatpush1.bf16.msra.mxu0 %v10830
    %11278 = vmatprep.subr.bf16.mxu0 0
    %11279 = vmatpush1.bf16.msra.mxu0 %v10831
    %11280 = vmatprep.mubr.bf16.mxu0 %v9281
    %11281 = vmatmul.mubr.bf16.gmra.mrb[0].mxu0 %v9280
    %v11282 = vpop.f32.mrb[0].mxu0
    %v11283 = vadd.f32 %v11195, %v11282
    %v11284 = vpop.f32.mrb[0].mxu0
    %v11285 = vpop.f32.mrb[0].mxu0
    %v11286 = vadd.f32 %v11198, %v11285
    %v11287 = vpop.f32.mrb[0].mxu0
    %11288 = vmatprep.mubr.bf16.mxu0 %v9283
    %11289 = vmatmul.mubr.bf16.gmra.mrb[0].mxu0 %v9282
    %v11290 = vpop.f32.mrb[0].mxu0
    %v11291 = vadd.f32 %v11203, %v11290
    %v11292 = vpop.f32.mrb[0].mxu0
    %v11293 = vpop.f32.mrb[0].mxu0
    %v11294 = vadd.f32 %v11206, %v11293
    %v11295 = vpop.f32.mrb[0].mxu0
    %11296 = vmatprep.mubr.bf16.mxu0 %v9285
    %11297 = vmatmul.mubr.bf16.gmra.mrb[0].mxu0 %v9284
    %v11298 = vpop.f32.mrb[0].mxu0
    %v11299 = vadd.f32 %v11211, %v11298
    %v11300 = vpop.f32.mrb[0].mxu0
    %v11301 = vpop.f32.mrb[0].mxu0
    %v11302 = vadd.f32 %v11214, %v11301
    %v11303 = vpop.f32.mrb[0].mxu0
    %11304 = vmatprep.mubr.bf16.mxu0 %v9287
    %11305 = vmatmul.mubr.bf16.gmra.mrb[0].mxu0 %v9286
    %v11306 = vpop.f32.mrb[0].mxu0
    %v11307 = vadd.f32 %v11219, %v11306
    %v11308 = vpop.f32.mrb[0].mxu0
    %v11309 = vpop.f32.mrb[0].mxu0
    %v11310 = vadd.f32 %v11222, %v11309
    %v11311 = vpop.f32.mrb[0].mxu0
    %11312 = vmatprep.mubr.bf16.mxu0 %v9289
    %11313 = vmatmul.mubr.bf16.gmra.mrb[0].mxu0 %v9288
    %v11314 = vpop.f32.mrb[0].mxu0
    %v11315 = vadd.f32 %v11227, %v11314
    %v11316 = vpop.f32.mrb[0].mxu0
    %v11317 = vpop.f32.mrb[0].mxu0
    %v11318 = vadd.f32 %v11230, %v11317
    %v11319 = vpop.f32.mrb[0].mxu0
    %11320 = vmatprep.mubr.bf16.mxu0 %v9291
    %11321 = vmatmul.mubr.bf16.gmra.mrb[0].mxu0 %v9290
    %v11322 = vpop.f32.mrb[0].mxu0
    %v11323 = vadd.f32 %v11235, %v11322
    %v11324 = vpop.f32.mrb[0].mxu0
    %v11325 = vpop.f32.mrb[0].mxu0
    %v11326 = vadd.f32 %v11238, %v11325
    %v11327 = vpop.f32.mrb[0].mxu0
    %11328 = vmatprep.mubr.bf16.mxu0 %v9293
    %11329 = vmatmul.mubr.bf16.gmra.mrb[0].mxu0 %v9292
    %v11330 = vpop.f32.mrb[0].mxu0
    %v11331 = vadd.f32 %v11243, %v11330
    %v11332 = vpop.f32.mrb[0].mxu0
    %v11333 = vpop.f32.mrb[0].mxu0
    %v11334 = vpop.f32.mrb[0].mxu0
    %11335 = vdwg.mxu0
    %11336 = vmatprep.subr.bf16.mxu0 0
    %11337 = vmatpush1.bf16.msra.mxu0 %v10832
    %11338 = vmatprep.subr.bf16.mxu0 0
    %11339 = vmatpush1.bf16.msra.mxu0 %v10833
    %11340 = vmatprep.subr.bf16.mxu0 0
    %11341 = vmatpush1.bf16.msra.mxu0 %v10834
    %11342 = vmatprep.subr.bf16.mxu0 0
    %11343 = vmatpush1.bf16.msra.mxu0 %v10835
    %11344 = vmatprep.subr.bf16.mxu0 0
    %11345 = vmatpush1.bf16.msra.mxu0 %v10836
    %11346 = vmatprep.subr.bf16.mxu0 0
    %11347 = vmatpush1.bf16.msra.mxu0 %v10837
    %11348 = vmatprep.subr.bf16.mxu0 0
    %11349 = vmatpush1.bf16.msra.mxu0 %v10838
    %11350 = vmatprep.subr.bf16.mxu0 0
    %11351 = vmatpush1.bf16.msra.mxu0 %v10839
    %11352 = vmatprep.subr.bf16.mxu0 0
    %11353 = vmatpush1.bf16.msra.mxu0 %v10840
    %11354 = vmatprep.subr.bf16.mxu0 0
    %11355 = vmatpush1.bf16.msra.mxu0 %v10841
    %11356 = vmatprep.subr.bf16.mxu0 0
    %11357 = vmatpush1.bf16.msra.mxu0 %v10842
    %11358 = vmatprep.subr.bf16.mxu0 0
    %11359 = vmatpush1.bf16.msra.mxu0 %v10843
    %11360 = vmatprep.subr.bf16.mxu0 0
    %11361 = vmatpush1.bf16.msra.mxu0 %v10844
    %11362 = vmatprep.subr.bf16.mxu0 0
    %11363 = vmatpush1.bf16.msra.mxu0 %v10845
    %11364 = vmatprep.subr.bf16.mxu0 0
    %11365 = vmatpush1.bf16.msra.mxu0 %v10846
    %11366 = vmatprep.subr.bf16.mxu0 0
    %11367 = vmatpush1.bf16.msra.mxu0 %v10847
    %11368 = vmatprep.mubr.bf16.mxu0 %v9432
    %11369 = vmatmul.mubr.bf16.gmra.mrb[0].mxu0 %v9431
    %v11370 = vpop.f32.mrb[0].mxu0
    %v11371 = vadd.f32 %v11283, %v11370
    %v11372 = vpop.f32.mrb[0].mxu0
    %v11373 = vpop.f32.mrb[0].mxu0
    %v11374 = vadd.f32 %v11286, %v11373
    %v11375 = vpop.f32.mrb[0].mxu0
    %11376 = vmatprep.mubr.bf16.mxu0 %v9434
    %11377 = vmatmul.mubr.bf16.gmra.mrb[0].mxu0 %v9433
    %v11378 = vpop.f32.mrb[0].mxu0
    %v11379 = vadd.f32 %v11291, %v11378
    %v11380 = vpop.f32.mrb[0].mxu0
    %v11381 = vpop.f32.mrb[0].mxu0
    %v11382 = vadd.f32 %v11294, %v11381
    %v11383 = vpop.f32.mrb[0].mxu0
    %11384 = vmatprep.mubr.bf16.mxu0 %v9436
    %11385 = vmatmul.mubr.bf16.gmra.mrb[0].mxu0 %v9435
    %v11386 = vpop.f32.mrb[0].mxu0
    %v11387 = vadd.f32 %v11299, %v11386
    %v11388 = vpop.f32.mrb[0].mxu0
    %v11389 = vpop.f32.mrb[0].mxu0
    %v11390 = vadd.f32 %v11302, %v11389
    %v11391 = vpop.f32.mrb[0].mxu0
    %11392 = vmatprep.mubr.bf16.mxu0 %v9438
    %11393 = vmatmul.mubr.bf16.gmra.mrb[0].mxu0 %v9437
    %v11394 = vpop.f32.mrb[0].mxu0
    %v11395 = vadd.f32 %v11307, %v11394
    %v11396 = vpop.f32.mrb[0].mxu0
    %v11397 = vpop.f32.mrb[0].mxu0
    %v11398 = vadd.f32 %v11310, %v11397
    %v11399 = vpop.f32.mrb[0].mxu0
    %11400 = vmatprep.mubr.bf16.mxu0 %v9440
    %11401 = vmatmul.mubr.bf16.gmra.mrb[0].mxu0 %v9439
    %v11402 = vpop.f32.mrb[0].mxu0
    %v11403 = vadd.f32 %v11315, %v11402
    %v11404 = vpop.f32.mrb[0].mxu0
    %v11405 = vpop.f32.mrb[0].mxu0
    %v11406 = vadd.f32 %v11318, %v11405
    %v11407 = vpop.f32.mrb[0].mxu0
    %11408 = vmatprep.mubr.bf16.mxu0 %v9442
    %11409 = vmatmul.mubr.bf16.gmra.mrb[0].mxu0 %v9441
    %v11410 = vpop.f32.mrb[0].mxu0
    %v11411 = vadd.f32 %v11323, %v11410
    %v11412 = vpop.f32.mrb[0].mxu0
    %v11413 = vpop.f32.mrb[0].mxu0
    %v11414 = vadd.f32 %v11326, %v11413
    %v11415 = vpop.f32.mrb[0].mxu0
    %11416 = vmatprep.mubr.bf16.mxu0 %v9444
    %11417 = vmatmul.mubr.bf16.gmra.mrb[0].mxu0 %v9443
    %v11418 = vpop.f32.mrb[0].mxu0
    %v11419 = vadd.f32 %v11331, %v11418
    %v11420 = vpop.f32.mrb[0].mxu0
    %v11421 = vpop.f32.mrb[0].mxu0
    %v11422 = vpop.f32.mrb[0].mxu0
    %11423 = vdwg.mxu0
    %11424 = vmatprep.subr.bf16.mxu0 0
    %11425 = vmatpush1.bf16.msra.mxu0 %v10848
    %11426 = vmatprep.subr.bf16.mxu0 0
    %11427 = vmatpush1.bf16.msra.mxu0 %v10849
    %11428 = vmatprep.subr.bf16.mxu0 0
    %11429 = vmatpush1.bf16.msra.mxu0 %v10850
    %11430 = vmatprep.subr.bf16.mxu0 0
    %11431 = vmatpush1.bf16.msra.mxu0 %v10851
    %11432 = vmatprep.subr.bf16.mxu0 0
    %11433 = vmatpush1.bf16.msra.mxu0 %v10852
    %11434 = vmatprep.subr.bf16.mxu0 0
    %11435 = vmatpush1.bf16.msra.mxu0 %v10853
    %11436 = vmatprep.subr.bf16.mxu0 0
    %11437 = vmatpush1.bf16.msra.mxu0 %v10854
    %11438 = vmatprep.subr.bf16.mxu0 0
    %11439 = vmatpush1.bf16.msra.mxu0 %v10855
    %11440 = vmatprep.subr.bf16.mxu0 0
    %11441 = vmatpush1.bf16.msra.mxu0 %v10856
    %11442 = vmatprep.subr.bf16.mxu0 0
    %11443 = vmatpush1.bf16.msra.mxu0 %v10857
    %11444 = vmatprep.subr.bf16.mxu0 0
    %11445 = vmatpush1.bf16.msra.mxu0 %v10858
    %11446 = vmatprep.subr.bf16.mxu0 0
    %11447 = vmatpush1.bf16.msra.mxu0 %v10859
    %11448 = vmatprep.subr.bf16.mxu0 0
    %11449 = vmatpush1.bf16.msra.mxu0 %v10860
    %11450 = vmatprep.subr.bf16.mxu0 0
    %11451 = vmatpush1.bf16.msra.mxu0 %v10861
    %11452 = vmatprep.subr.bf16.mxu0 0
    %11453 = vmatpush1.bf16.msra.mxu0 %v10862
    %11454 = vmatprep.subr.bf16.mxu0 0
    %11455 = vmatpush1.bf16.msra.mxu0 %v10863
    %11456 = vmatprep.mubr.bf16.mxu0 %v9533
    %11457 = vmatmul.mubr.bf16.gmra.mrb[0].mxu0 %v9532
    %v11458 = vpop.f32.mrb[0].mxu0
    %v11459 = vadd.f32 %v11371, %v11458
    %v11460 = vpop.f32.mrb[0].mxu0
    %v11461 = vpop.f32.mrb[0].mxu0
    %v11462 = vadd.f32 %v11374, %v11461
    %v11463 = vpop.f32.mrb[0].mxu0
    %11464 = vmatprep.mubr.bf16.mxu0 %v9535
    %11465 = vmatmul.mubr.bf16.gmra.mrb[0].mxu0 %v9534
    %v11466 = vpop.f32.mrb[0].mxu0
    %v11467 = vadd.f32 %v11379, %v11466
    %v11468 = vpop.f32.mrb[0].mxu0
    %v11469 = vpop.f32.mrb[0].mxu0
    %v11470 = vadd.f32 %v11382, %v11469
    %v11471 = vpop.f32.mrb[0].mxu0
    %11472 = vmatprep.mubr.bf16.mxu0 %v9537
    %11473 = vmatmul.mubr.bf16.gmra.mrb[0].mxu0 %v9536
    %v11474 = vpop.f32.mrb[0].mxu0
    %v11475 = vadd.f32 %v11387, %v11474
    %v11476 = vpop.f32.mrb[0].mxu0
    %v11477 = vpop.f32.mrb[0].mxu0
    %v11478 = vadd.f32 %v11390, %v11477
    %v11479 = vpop.f32.mrb[0].mxu0
    %11480 = vmatprep.mubr.bf16.mxu0 %v9539
    %11481 = vmatmul.mubr.bf16.gmra.mrb[0].mxu0 %v9538
    %v11482 = vpop.f32.mrb[0].mxu0
    %v11483 = vadd.f32 %v11395, %v11482
    %v11484 = vpop.f32.mrb[0].mxu0
    %v11485 = vpop.f32.mrb[0].mxu0
    %v11486 = vadd.f32 %v11398, %v11485
    %v11487 = vpop.f32.mrb[0].mxu0
    %11488 = vmatprep.mubr.bf16.mxu0 %v9541
    %11489 = vmatmul.mubr.bf16.gmra.mrb[0].mxu0 %v9540
    %v11490 = vpop.f32.mrb[0].mxu0
    %v11491 = vadd.f32 %v11403, %v11490
    %v11492 = vpop.f32.mrb[0].mxu0
    %v11493 = vpop.f32.mrb[0].mxu0
    %v11494 = vadd.f32 %v11406, %v11493
    %v11495 = vpop.f32.mrb[0].mxu0
    %11496 = vmatprep.mubr.bf16.mxu0 %v9543
    %11497 = vmatmul.mubr.bf16.gmra.mrb[0].mxu0 %v9542
    %v11498 = vpop.f32.mrb[0].mxu0
    %v11499 = vadd.f32 %v11411, %v11498
    %v11500 = vpop.f32.mrb[0].mxu0
    %v11501 = vpop.f32.mrb[0].mxu0
    %v11502 = vadd.f32 %v11414, %v11501
    %v11503 = vpop.f32.mrb[0].mxu0
    %11504 = vmatprep.mubr.bf16.mxu0 %v9545
    %11505 = vmatmul.mubr.bf16.gmra.mrb[0].mxu0 %v9544
    %v11506 = vpop.f32.mrb[0].mxu0
    %v11507 = vadd.f32 %v11419, %v11506
    %v11508 = vpop.f32.mrb[0].mxu0
    %v11509 = vpop.f32.mrb[0].mxu0
    %v11510 = vpop.f32.mrb[0].mxu0
    %11511 = vdwg.mxu0
    %11512 = vmatprep.subr.bf16.mxu0 0
    %11513 = vmatpush1.bf16.msra.mxu0 %v10864
    %11514 = vmatprep.subr.bf16.mxu0 0
    %11515 = vmatpush1.bf16.msra.mxu0 %v10865
    %11516 = vmatprep.subr.bf16.mxu0 0
    %11517 = vmatpush1.bf16.msra.mxu0 %v10866
    %11518 = vmatprep.subr.bf16.mxu0 0
    %11519 = vmatpush1.bf16.msra.mxu0 %v10867
    %11520 = vmatprep.subr.bf16.mxu0 0
    %11521 = vmatpush1.bf16.msra.mxu0 %v10868
    %11522 = vmatprep.subr.bf16.mxu0 0
    %11523 = vmatpush1.bf16.msra.mxu0 %v10869
    %11524 = vmatprep.subr.bf16.mxu0 0
    %11525 = vmatpush1.bf16.msra.mxu0 %v10870
    %11526 = vmatprep.subr.bf16.mxu0 0
    %11527 = vmatpush1.bf16.msra.mxu0 %v10871
    %11528 = vmatprep.subr.bf16.mxu0 0
    %11529 = vmatpush1.bf16.msra.mxu0 %v10872
    %11530 = vmatprep.subr.bf16.mxu0 0
    %11531 = vmatpush1.bf16.msra.mxu0 %v10873
    %11532 = vmatprep.subr.bf16.mxu0 0
    %11533 = vmatpush1.bf16.msra.mxu0 %v10874
    %11534 = vmatprep.subr.bf16.mxu0 0
    %11535 = vmatpush1.bf16.msra.mxu0 %v10875
    %11536 = vmatprep.subr.bf16.mxu0 0
    %11537 = vmatpush1.bf16.msra.mxu0 %v10876
    %11538 = vmatprep.subr.bf16.mxu0 0
    %11539 = vmatpush1.bf16.msra.mxu0 %v10877
    %11540 = vmatprep.subr.bf16.mxu0 0
    %11541 = vmatpush1.bf16.msra.mxu0 %v10878
    %11542 = vmatprep.subr.bf16.mxu0 0
    %11543 = vmatpush1.bf16.msra.mxu0 %v10879
    %11544 = vmatprep.mubr.bf16.mxu0 %v9642
    %11545 = vmatmul.mubr.bf16.gmra.mrb[0].mxu0 %v9641
    %v11546 = vpop.f32.mrb[0].mxu0
    %v11547 = vadd.f32 %v11459, %v11546
    %v11548 = vpop.f32.mrb[0].mxu0
    %v11549 = vpop.f32.mrb[0].mxu0
    %v11550 = vadd.f32 %v11462, %v11549
    %v11551 = vpop.f32.mrb[0].mxu0
    %11552 = vmatprep.mubr.bf16.mxu0 %v9644
    %11553 = vmatmul.mubr.bf16.gmra.mrb[0].mxu0 %v9643
    %v11554 = vpop.f32.mrb[0].mxu0
    %v11555 = vadd.f32 %v11467, %v11554
    %v11556 = vpop.f32.mrb[0].mxu0
    %v11557 = vpop.f32.mrb[0].mxu0
    %v11558 = vadd.f32 %v11470, %v11557
    %v11559 = vpop.f32.mrb[0].mxu0
    %11560 = vmatprep.mubr.bf16.mxu0 %v9646
    %11561 = vmatmul.mubr.bf16.gmra.mrb[0].mxu0 %v9645
    %v11562 = vpop.f32.mrb[0].mxu0
    %v11563 = vadd.f32 %v11475, %v11562
    %v11564 = vpop.f32.mrb[0].mxu0
    %v11565 = vpop.f32.mrb[0].mxu0
    %v11566 = vadd.f32 %v11478, %v11565
    %v11567 = vpop.f32.mrb[0].mxu0
    %11568 = vmatprep.mubr.bf16.mxu0 %v9648
    %11569 = vmatmul.mubr.bf16.gmra.mrb[0].mxu0 %v9647
    %v11570 = vpop.f32.mrb[0].mxu0
    %v11571 = vadd.f32 %v11483, %v11570
    %v11572 = vpop.f32.mrb[0].mxu0
    %v11573 = vpop.f32.mrb[0].mxu0
    %v11574 = vadd.f32 %v11486, %v11573
    %v11575 = vpop.f32.mrb[0].mxu0
    %11576 = vmatprep.mubr.bf16.mxu0 %v9650
    %11577 = vmatmul.mubr.bf16.gmra.mrb[0].mxu0 %v9649
    %v11578 = vpop.f32.mrb[0].mxu0
    %v11579 = vadd.f32 %v11491, %v11578
    %v11580 = vpop.f32.mrb[0].mxu0
    %v11581 = vpop.f32.mrb[0].mxu0
    %v11582 = vadd.f32 %v11494, %v11581
    %v11583 = vpop.f32.mrb[0].mxu0
    %11584 = vmatprep.mubr.bf16.mxu0 %v9652
    %11585 = vmatmul.mubr.bf16.gmra.mrb[0].mxu0 %v9651
    %v11586 = vpop.f32.mrb[0].mxu0
    %v11587 = vadd.f32 %v11499, %v11586
    %v11588 = vpop.f32.mrb[0].mxu0
    %v11589 = vpop.f32.mrb[0].mxu0
    %v11590 = vadd.f32 %v11502, %v11589
    %v11591 = vpop.f32.mrb[0].mxu0
    %11592 = vmatprep.mubr.bf16.mxu0 %v9654
    %11593 = vmatmul.mubr.bf16.gmra.mrb[0].mxu0 %v9653
    %v11594 = vpop.f32.mrb[0].mxu0
    %v11595 = vadd.f32 %v11507, %v11594
    %v11596 = vpop.f32.mrb[0].mxu0
    %v11597 = vpop.f32.mrb[0].mxu0
    %v11598 = vpop.f32.mrb[0].mxu0
    %11599 = vdwg.mxu0
    %11600 = vmatprep.subr.bf16.mxu0 0
    %11601 = vmatpush1.bf16.msra.mxu0 %v10880
    %11602 = vmatprep.subr.bf16.mxu0 0
    %11603 = vmatpush1.bf16.msra.mxu0 %v10881
    %11604 = vmatprep.subr.bf16.mxu0 0
    %11605 = vmatpush1.bf16.msra.mxu0 %v10882
    %11606 = vmatprep.subr.bf16.mxu0 0
    %11607 = vmatpush1.bf16.msra.mxu0 %v10883
    %11608 = vmatprep.subr.bf16.mxu0 0
    %11609 = vmatpush1.bf16.msra.mxu0 %v10884
    %11610 = vmatprep.subr.bf16.mxu0 0
    %11611 = vmatpush1.bf16.msra.mxu0 %v10885
    %11612 = vmatprep.subr.bf16.mxu0 0
    %11613 = vmatpush1.bf16.msra.mxu0 %v10886
    %11614 = vmatprep.subr.bf16.mxu0 0
    %11615 = vmatpush1.bf16.msra.mxu0 %v10887
    %11616 = vmatprep.subr.bf16.mxu0 0
    %11617 = vmatpush1.bf16.msra.mxu0 %v10888
    %11618 = vmatprep.subr.bf16.mxu0 0
    %11619 = vmatpush1.bf16.msra.mxu0 %v10889
    %11620 = vmatprep.subr.bf16.mxu0 0
    %11621 = vmatpush1.bf16.msra.mxu0 %v10890
    %11622 = vmatprep.subr.bf16.mxu0 0
    %11623 = vmatpush1.bf16.msra.mxu0 %v10891
    %11624 = vmatprep.subr.bf16.mxu0 0
    %11625 = vmatpush1.bf16.msra.mxu0 %v10892
    %11626 = vmatprep.subr.bf16.mxu0 0
    %11627 = vmatpush1.bf16.msra.mxu0 %v10893
    %11628 = vmatprep.subr.bf16.mxu0 0
    %11629 = vmatpush1.bf16.msra.mxu0 %v10894
    %11630 = vmatprep.subr.bf16.mxu0 0
    %11631 = vmatpush1.bf16.msra.mxu0 %v10895
    %11632 = vmatprep.mubr.bf16.mxu0 %v9745
    %11633 = vmatmul.mubr.bf16.gmra.mrb[0].mxu0 %v9744
    %v11634 = vpop.f32.mrb[0].mxu0
    %v11635 = vadd.f32 %v11547, %v11634
    %v11636 = vpop.f32.mrb[0].mxu0
    %v11637 = vpop.f32.mrb[0].mxu0
    %v11638 = vadd.f32 %v11550, %v11637
    %v11639 = vpop.f32.mrb[0].mxu0
    %11640 = vmatprep.mubr.bf16.mxu0 %v9747
    %11641 = vmatmul.mubr.bf16.gmra.mrb[0].mxu0 %v9746
    %v11642 = vpop.f32.mrb[0].mxu0
    %v11643 = vadd.f32 %v11555, %v11642
    %v11644 = vpop.f32.mrb[0].mxu0
    %v11645 = vpop.f32.mrb[0].mxu0
    %v11646 = vadd.f32 %v11558, %v11645
    %v11647 = vpop.f32.mrb[0].mxu0
    %11648 = vmatprep.mubr.bf16.mxu0 %v9749
    %11649 = vmatmul.mubr.bf16.gmra.mrb[0].mxu0 %v9748
    %v11650 = vpop.f32.mrb[0].mxu0
    %v11651 = vadd.f32 %v11563, %v11650
    %v11652 = vpop.f32.mrb[0].mxu0
    %v11653 = vpop.f32.mrb[0].mxu0
    %v11654 = vadd.f32 %v11566, %v11653
    %v11655 = vpop.f32.mrb[0].mxu0
    %11656 = vmatprep.mubr.bf16.mxu0 %v9751
    %11657 = vmatmul.mubr.bf16.gmra.mrb[0].mxu0 %v9750
    %v11658 = vpop.f32.mrb[0].mxu0
    %v11659 = vadd.f32 %v11571, %v11658
    %v11660 = vpop.f32.mrb[0].mxu0
    %v11661 = vpop.f32.mrb[0].mxu0
    %v11662 = vadd.f32 %v11574, %v11661
    %v11663 = vpop.f32.mrb[0].mxu0
    %11664 = vmatprep.mubr.bf16.mxu0 %v9753
    %11665 = vmatmul.mubr.bf16.gmra.mrb[0].mxu0 %v9752
    %v11666 = vpop.f32.mrb[0].mxu0
    %v11667 = vadd.f32 %v11579, %v11666
    %v11668 = vpop.f32.mrb[0].mxu0
    %v11669 = vpop.f32.mrb[0].mxu0
    %v11670 = vadd.f32 %v11582, %v11669
    %v11671 = vpop.f32.mrb[0].mxu0
    %11672 = vmatprep.mubr.bf16.mxu0 %v9755
    %11673 = vmatmul.mubr.bf16.gmra.mrb[0].mxu0 %v9754
    %v11674 = vpop.f32.mrb[0].mxu0
    %v11675 = vadd.f32 %v11587, %v11674
    %v11676 = vpop.f32.mrb[0].mxu0
    %v11677 = vpop.f32.mrb[0].mxu0
    %v11678 = vadd.f32 %v11590, %v11677
    %v11679 = vpop.f32.mrb[0].mxu0
    %11680 = vmatprep.mubr.bf16.mxu0 %v9757
    %11681 = vmatmul.mubr.bf16.gmra.mrb[0].mxu0 %v9756
    %v11682 = vpop.f32.mrb[0].mxu0
    %v11683 = vadd.f32 %v11595, %v11682
    %v11684 = vpop.f32.mrb[0].mxu0
    %v11685 = vpop.f32.mrb[0].mxu0
    %v11686 = vpop.f32.mrb[0].mxu0
    %11687 = vdwg.mxu0
    %11688 = vmatprep.subr.bf16.mxu0 0
    %11689 = vmatpush1.bf16.msra.mxu0 %v10896
    %11690 = vmatprep.subr.bf16.mxu0 0
    %11691 = vmatpush1.bf16.msra.mxu0 %v10897
    %11692 = vmatprep.subr.bf16.mxu0 0
    %11693 = vmatpush1.bf16.msra.mxu0 %v10898
    %11694 = vmatprep.subr.bf16.mxu0 0
    %11695 = vmatpush1.bf16.msra.mxu0 %v10899
    %11696 = vmatprep.subr.bf16.mxu0 0
    %11697 = vmatpush1.bf16.msra.mxu0 %v10900
    %11698 = vmatprep.subr.bf16.mxu0 0
    %11699 = vmatpush1.bf16.msra.mxu0 %v10901
    %11700 = vmatprep.subr.bf16.mxu0 0
    %11701 = vmatpush1.bf16.msra.mxu0 %v10902
    %11702 = vmatprep.subr.bf16.mxu0 0
    %11703 = vmatpush1.bf16.msra.mxu0 %v10903
    %11704 = vmatprep.subr.bf16.mxu0 0
    %11705 = vmatpush1.bf16.msra.mxu0 %v10904
    %11706 = vmatprep.subr.bf16.mxu0 0
    %11707 = vmatpush1.bf16.msra.mxu0 %v10905
    %11708 = vmatprep.subr.bf16.mxu0 0
    %11709 = vmatpush1.bf16.msra.mxu0 %v10906
    %11710 = vmatprep.subr.bf16.mxu0 0
    %11711 = vmatpush1.bf16.msra.mxu0 %v10907
    %11712 = vmatprep.subr.bf16.mxu0 0
    %11713 = vmatpush1.bf16.msra.mxu0 %v10908
    %11714 = vmatprep.subr.bf16.mxu0 0
    %11715 = vmatpush1.bf16.msra.mxu0 %v10909
    %11716 = vmatprep.subr.bf16.mxu0 0
    %11717 = vmatpush1.bf16.msra.mxu0 %v10910
    %11718 = vmatprep.subr.bf16.mxu0 0
    %11719 = vmatpush1.bf16.msra.mxu0 %v10911
    %11720 = vmatprep.mubr.bf16.mxu0 %v9830
    %11721 = vmatmul.mubr.bf16.gmra.mrb[0].mxu0 %v9829
    %v11722 = vpop.f32.mrb[0].mxu0
    %v11723 = vadd.f32 %v11635, %v11722
    %v11724 = vpop.f32.mrb[0].mxu0
    %v11725 = vpop.f32.mrb[0].mxu0
    %v11726 = vadd.f32 %v11638, %v11725
    %v11727 = vpop.f32.mrb[0].mxu0
    %11728 = vmatprep.mubr.bf16.mxu0 %v9832
    %11729 = vmatmul.mubr.bf16.gmra.mrb[0].mxu0 %v9831
    %v11730 = vpop.f32.mrb[0].mxu0
    %v11731 = vadd.f32 %v11643, %v11730
    %v11732 = vpop.f32.mrb[0].mxu0
    %v11733 = vpop.f32.mrb[0].mxu0
    %v11734 = vadd.f32 %v11646, %v11733
    %v11735 = vpop.f32.mrb[0].mxu0
    %11736 = vmatprep.mubr.bf16.mxu0 %v9834
    %11737 = vmatmul.mubr.bf16.gmra.mrb[0].mxu0 %v9833
    %v11738 = vpop.f32.mrb[0].mxu0
    %v11739 = vadd.f32 %v11651, %v11738
    %v11740 = vpop.f32.mrb[0].mxu0
    %v11741 = vpop.f32.mrb[0].mxu0
    %v11742 = vadd.f32 %v11654, %v11741
    %v11743 = vpop.f32.mrb[0].mxu0
    %11744 = vmatprep.mubr.bf16.mxu0 %v9836
    %11745 = vmatmul.mubr.bf16.gmra.mrb[0].mxu0 %v9835
    %v11746 = vpop.f32.mrb[0].mxu0
    %v11747 = vadd.f32 %v11659, %v11746
    %v11748 = vpop.f32.mrb[0].mxu0
    %v11749 = vpop.f32.mrb[0].mxu0
    %v11750 = vadd.f32 %v11662, %v11749
    %v11751 = vpop.f32.mrb[0].mxu0
    %11752 = vmatprep.mubr.bf16.mxu0 %v9838
    %11753 = vmatmul.mubr.bf16.gmra.mrb[0].mxu0 %v9837
    %v11754 = vpop.f32.mrb[0].mxu0
    %v11755 = vadd.f32 %v11667, %v11754
    %v11756 = vpop.f32.mrb[0].mxu0
    %v11757 = vpop.f32.mrb[0].mxu0
    %v11758 = vadd.f32 %v11670, %v11757
    %v11759 = vpop.f32.mrb[0].mxu0
    %11760 = vmatprep.mubr.bf16.mxu0 %v9840
    %11761 = vmatmul.mubr.bf16.gmra.mrb[0].mxu0 %v9839
    %v11762 = vpop.f32.mrb[0].mxu0
    %v11763 = vadd.f32 %v11675, %v11762
    %v11764 = vpop.f32.mrb[0].mxu0
    %v11765 = vpop.f32.mrb[0].mxu0
    %v11766 = vadd.f32 %v11678, %v11765
    %v11767 = vpop.f32.mrb[0].mxu0
    %11768 = vmatprep.mubr.bf16.mxu0 %v9842
    %11769 = vmatmul.mubr.bf16.gmra.mrb[0].mxu0 %v9841
    %v11770 = vpop.f32.mrb[0].mxu0
    %v11771 = vadd.f32 %v11683, %v11770
    %v11772 = vpop.f32.mrb[0].mxu0
    %v11773 = vpop.f32.mrb[0].mxu0
    %v11774 = vpop.f32.mrb[0].mxu0
    %11775 = vdwg.mxu0
    %11776 = vmatprep.subr.bf16.mxu0 0
    %11777 = vmatpush1.bf16.msra.mxu0 %v10912
    %11778 = vmatprep.subr.bf16.mxu0 0
    %11779 = vmatpush1.bf16.msra.mxu0 %v10913
    %11780 = vmatprep.subr.bf16.mxu0 0
    %11781 = vmatpush1.bf16.msra.mxu0 %v10914
    %11782 = vmatprep.subr.bf16.mxu0 0
    %11783 = vmatpush1.bf16.msra.mxu0 %v10915
    %11784 = vmatprep.subr.bf16.mxu0 0
    %11785 = vmatpush1.bf16.msra.mxu0 %v10916
    %11786 = vmatprep.subr.bf16.mxu0 0
    %11787 = vmatpush1.bf16.msra.mxu0 %v10917
    %11788 = vmatprep.subr.bf16.mxu0 0
    %11789 = vmatpush1.bf16.msra.mxu0 %v10918
    %11790 = vmatprep.subr.bf16.mxu0 0
    %11791 = vmatpush1.bf16.msra.mxu0 %v10919
    %11792 = vmatprep.subr.bf16.mxu0 0
    %11793 = vmatpush1.bf16.msra.mxu0 %v10920
    %11794 = vmatprep.subr.bf16.mxu0 0
    %11795 = vmatpush1.bf16.msra.mxu0 %v10921
    %11796 = vmatprep.subr.bf16.mxu0 0
    %11797 = vmatpush1.bf16.msra.mxu0 %v10922
    %11798 = vmatprep.subr.bf16.mxu0 0
    %11799 = vmatpush1.bf16.msra.mxu0 %v10923
    %11800 = vmatprep.subr.bf16.mxu0 0
    %11801 = vmatpush1.bf16.msra.mxu0 %v10924
    %11802 = vmatprep.subr.bf16.mxu0 0
    %11803 = vmatpush1.bf16.msra.mxu0 %v10925
    %11804 = vmatprep.subr.bf16.mxu0 0
    %11805 = vmatpush1.bf16.msra.mxu0 %v10926
    %11806 = vmatprep.subr.bf16.mxu0 0
    %11807 = vmatpush1.bf16.msra.mxu0 %v10927
    %11808 = vmatprep.mubr.bf16.mxu0 %v9907
    %11809 = vmatmul.mubr.bf16.gmra.mrb[0].mxu0 %v9906
    %v11810 = vpop.f32.mrb[0].mxu0
    %v11811 = vadd.f32 %v11723, %v11810
    %v11812 = vpop.f32.mrb[0].mxu0
    %v11813 = vpop.f32.mrb[0].mxu0
    %v11814 = vadd.f32 %v11726, %v11813
    %v11815 = vpop.f32.mrb[0].mxu0
    %11816 = vmatprep.mubr.bf16.mxu0 %v9909
    %11817 = vmatmul.mubr.bf16.gmra.mrb[0].mxu0 %v9908
    %v11818 = vpop.f32.mrb[0].mxu0
    %v11819 = vadd.f32 %v11731, %v11818
    %v11820 = vpop.f32.mrb[0].mxu0
    %v11821 = vpop.f32.mrb[0].mxu0
    %v11822 = vadd.f32 %v11734, %v11821
    %v11823 = vpop.f32.mrb[0].mxu0
    %11824 = vmatprep.mubr.bf16.mxu0 %v9911
    %11825 = vmatmul.mubr.bf16.gmra.mrb[0].mxu0 %v9910
    %v11826 = vpop.f32.mrb[0].mxu0
    %v11827 = vadd.f32 %v11739, %v11826
    %v11828 = vpop.f32.mrb[0].mxu0
    %v11829 = vpop.f32.mrb[0].mxu0
    %v11830 = vadd.f32 %v11742, %v11829
    %v11831 = vpop.f32.mrb[0].mxu0
    %11832 = vmatprep.mubr.bf16.mxu0 %v9913
    %11833 = vmatmul.mubr.bf16.gmra.mrb[0].mxu0 %v9912
    %v11834 = vpop.f32.mrb[0].mxu0
    %v11835 = vadd.f32 %v11747, %v11834
    %v11836 = vpop.f32.mrb[0].mxu0
    %v11837 = vpop.f32.mrb[0].mxu0
    %v11838 = vadd.f32 %v11750, %v11837
    %v11839 = vpop.f32.mrb[0].mxu0
    %11840 = vmatprep.mubr.bf16.mxu0 %v9915
    %11841 = vmatmul.mubr.bf16.gmra.mrb[0].mxu0 %v9914
    %v11842 = vpop.f32.mrb[0].mxu0
    %v11843 = vadd.f32 %v11755, %v11842
    %v11844 = vpop.f32.mrb[0].mxu0
    %v11845 = vpop.f32.mrb[0].mxu0
    %v11846 = vadd.f32 %v11758, %v11845
    %v11847 = vpop.f32.mrb[0].mxu0
    %11848 = vmatprep.mubr.bf16.mxu0 %v9917
    %11849 = vmatmul.mubr.bf16.gmra.mrb[0].mxu0 %v9916
    %v11850 = vpop.f32.mrb[0].mxu0
    %v11851 = vadd.f32 %v11763, %v11850
    %v11852 = vpop.f32.mrb[0].mxu0
    %v11853 = vpop.f32.mrb[0].mxu0
    %v11854 = vadd.f32 %v11766, %v11853
    %v11855 = vpop.f32.mrb[0].mxu0
    %11856 = vmatprep.mubr.bf16.mxu0 %v9919
    %11857 = vmatmul.mubr.bf16.gmra.mrb[0].mxu0 %v9918
    %v11858 = vpop.f32.mrb[0].mxu0
    %v11859 = vadd.f32 %v11771, %v11858
    %v11860 = vpop.f32.mrb[0].mxu0
    %v11861 = vpop.f32.mrb[0].mxu0
    %v11862 = vpop.f32.mrb[0].mxu0
    %11863 = vdwg.mxu0
    %v11864 = vtanh.pop %v11811
    %v11865 = vtanh.pop %v11814
    %v11866 = vtanh.pop %v11819
    %v11867 = vtanh.pop %v11822
    %v11868 = vtanh.pop %v11827
    %v11869 = vtanh.pop %v11830
    %v11870 = vtanh.pop %v11835
    %v11871 = vtanh.pop %v11838
    %v11872 = vtanh.pop %v11843
    %v11873 = vtanh.pop %v11846
    %v11874 = vtanh.pop %v11851
    %v11875 = vtanh.pop %v11854
    %v11876 = vtanh.pop %v11859
    %vm11877 = vcmask 130048
    %11878 = vst.msk [vmem:[%s8] sm:$0xff] %vm11877, %v11864
    %11879 = vst.msk [vmem:[%s8 + $0x8] sm:$0xff] %vm11877, %v11865
    %11880 = vst.msk [vmem:[%s8 + $0x10] sm:$0xff] %vm11877, %v11866
    %11881 = vst.msk [vmem:[%s8 + $0x18] sm:$0xff] %vm11877, %v11867
    %11882 = vst.msk [vmem:[%s8 + $0x20] sm:$0xff] %vm11877, %v11868
    %11883 = vst.msk [vmem:[%s8 + $0x28] sm:$0xff] %vm11877, %v11869
    %11884 = vst.msk [vmem:[%s8 + $0x30] sm:$0xff] %vm11877, %v11870
    %11885 = vst.msk [vmem:[%s8 + $0x38] sm:$0xff] %vm11877, %v11871
    %11886 = vst.msk [vmem:[%s8 + $0x40] sm:$0xff] %vm11877, %v11872
    %11887 = vst.msk [vmem:[%s8 + $0x48] sm:$0xff] %vm11877, %v11873
    %11888 = vst.msk [vmem:[%s8 + $0x50] sm:$0xff] %vm11877, %v11874
    %11889 = vst.msk [vmem:[%s8 + $0x58] sm:$0xff] %vm11877, %v11875
    %vm11890 = vcmask 123904
    %11891 = vst.msk [vmem:[%s8 + $0x60] sm:$0x3] %vm11890, %v11876
    // Predicated region
    $region62: #{generator_forward.1} parent=1 // pred_check
      _
    $region63: #{generator_forward.1} parent=1 // pred_check_branch
      %11893 = sbr.rel (0) target = $region65
    $region64: #{generator_forward.1} parent=1 // pred_region
      _
    $region65: #{generator_forward.1} parent=1 // pred_fallthru
      _
    // Predicated region
    $region66: #{generator_forward.1} parent=1 // pred_check
      _
    $region67: #{generator_forward.1} parent=1 // pred_check_branch
      %11895 = sbr.rel (0) target = $region69
    $region68: #{generator_forward.1} parent=1 // pred_region
      _
    $region69: #{generator_forward.1} parent=1 // pred_fallthru
      _
    %11896 = vsyncpa [#allocation5], 1
    %11897 = vsyncpa [#allocation7], 1
    %11898 = vsyncpa [#allocation10], 1
    %11899 = vsyncpa [#allocation13], 1

</llo_original>
